<compile_context>
chip_gen: v7x
topology: tpu7x:2x2x1
jax: 0.10.0
libtpu: 0.0.40
codegen_flags: <defaults>
</compile_context>

<pallas_src>
import numpy as np
import jax
import jax.numpy as jnp
from jax.experimental import pallas as pl
from jax.experimental.pallas import tpu as pltpu

_VMEM_LIMIT = 32 * 1024 * 1024  # safe on v5e / v6e / v7x


def _round_up(x, m):
    return (x + m - 1) // m * m


# ----------------------------------------------------------------------------
# Fused Pallas kernel: layer1 -> layer2 -> fc, one sample per grid step.
# ----------------------------------------------------------------------------
def _convnet_kernel(x_ref, r1_ref, s1_ref, r2_ref, s2_ref, rfc_ref, fcb_ref,
                    o_ref, x1s_ref):
    """Per-step / resident shapes:
      x_ref   : (1, 4, 8, 28)  bf16  input rows (padded to 32) split by row mod 4
      r1_ref  : (5, 28, 512)   bf16  layer1 block-Toeplitz rhs  [dy, x_in, lane]
      s1_ref  : (1, 256)       f32   layer1 folded BN shift, tiled over x_out
      r2_ref  : (5, 256, 512)  bf16  layer2 block-Toeplitz rhs  [dy, lane_in, lane]
      s2_ref  : (1, 256)       f32   layer2 folded BN shift, tiled over x_out
      rfc_ref : (7, 256, NCP)  bf16  fc weights per pooled row
      fcb_ref : (1, NCP)       f32   fc bias (lane padded)
      o_ref   : (1, 1, NCP)    f32   logits
      x1s_ref : (2, 9, 256)    f32   scratch: layer1 pooled output, row-parity
                                     split, zero rows at 0 and 8 (conv padding)
    Matmul output lanes are (pool_parity, x_out, channel) with each parity half
    padded to 256 lanes, so column pooling is a max of the two lane halves.
    """
    f32 = jnp.float32
    bf16 = jnp.bfloat16

    # ---------------- layer 1: Conv(1->16,5x5,p2) + BN + ReLU + MaxPool2 -----
    # conv row y1 = 4*m + 2*g + alpha (g = pooled-row parity, alpha = pool row);
    # tap dy needs padded input row 4*m + t with t = 2*g + alpha + dy.
    acc1 = [[None, None], [None, None]]            # [g][alpha] -> (7, 512) f32
    for dy in range(5):
        r1_dy = r1_ref[dy]                         # (28, 512) bf16
        for g in range(2):
            for alpha in range(2):
                t = 2 * g + alpha + dy
                lhs = x_ref[0, t & 3, (t >> 2):(t >> 2) + 7, :]   # (7, 28) bf16
                z = jnp.dot(lhs, r1_dy, preferred_element_type=f32)
                acc1[g][alpha] = z if acc1[g][alpha] is None else acc1[g][alpha] + z

    for g in range(2):
        p = jnp.maximum(acc1[g][0], acc1[g][1])        # pool over rows
        p = jnp.maximum(p[:, :256], p[:, 256:])        # pool over columns
        x1_g = jnp.maximum(p + s1_ref[...], 0.0)       # folded BN shift + ReLU
        x1s_ref[g, 0:1, :] = jnp.zeros((1, 256), f32)  # top zero-pad row
        x1s_ref[g, 1:8, :] = x1_g                      # 7 data rows
        x1s_ref[g, 8:9, :] = jnp.zeros((1, 256), f32)  # bottom zero-pad row

    # ---------------- layer 2: Conv(16->32,5x5,p2) + BN + ReLU + MaxPool2 ----
    # conv row y2 = 2*yo2 + alpha2; tap dy2 needs layer1 row 2*yo2 + u with
    # u = alpha2 + dy2 - 2  ->  parity plane g = u & 1, row offset h = (u-g)//2.
    acc2 = [None, None]                            # [alpha2] -> (7, 512) f32
    for dy2 in range(5):
        r2_dy = r2_ref[dy2]                        # (256, 512) bf16
        for a2 in range(2):
            u = a2 + dy2 - 2
            g = u & 1
            h = (u - g) // 2                       # -1, 0 or 1
            lhs = x1s_ref[g, 1 + h:8 + h, :].astype(bf16)     # (7, 256)
            z = jnp.dot(lhs, r2_dy, preferred_element_type=f32)
            acc2[a2] = z if acc2[a2] is None else acc2[a2] + z

    p2 = jnp.maximum(acc2[0], acc2[1])
    p2 = jnp.maximum(p2[:, :256], p2[:, 256:])
    x2 = jnp.maximum(p2 + s2_ref[...], 0.0).astype(bf16)     # (7, 256)

    # ---------------- fc: Linear(7*7*32 -> num_classes) ----------------------
    logit = fcb_ref[...]                           # (1, NCP) f32
    for r in range(7):
        logit = logit + jnp.dot(x2[r:r + 1, :], rfc_ref[r],
                                preferred_element_type=f32)
    o_ref[0] = logit


# ----------------------------------------------------------------------------
# Plain-JAX glue: BN folding, block-Toeplitz weight construction, input split.
# ----------------------------------------------------------------------------
def _fold_bn(conv_bias, gamma, beta, mean, var, eps=1e-5):
    scale = gamma / jnp.sqrt(var + eps)
    shift = scale * (conv_bias - mean) + beta
    return scale, shift


def _layer1_toeplitz(w1_oihw, scale1):
    """(16,1,5,5) -> (5, 28, 512): rhs[dy, x_in, b*256 + xo*16 + c]."""
    w = w1_oihw[:, 0, :, :] * scale1[:, None, None]          # (c=16, dy=5, dx=5)
    sel = np.zeros((28, 2, 16, 5), np.float32)               # [x_in, b, xo, dx]
    for b in range(2):
        for xo in range(14):
            for dx in range(5):
                x_in = 2 * xo + b + dx - 2
                if 0 <= x_in < 28:
                    sel[x_in, b, xo, dx] = 1.0
    r1 = jnp.einsum('xbod,cyd->yxboc', jnp.asarray(sel), w)  # (5,28,2,16,16)
    return r1.reshape(5, 28, 512)


def _layer2_toeplitz(w2_oihw, scale2):
    """(32,16,5,5) -> (5, 256, 512): rhs[dy, xi*16+ci, b*256 + xo*32 + co]."""
    w = w2_oihw * scale2[:, None, None, None]                # (co=32, ci=16, 5, 5)
    sel = np.zeros((14, 2, 8, 5), np.float32)                # [xi, b, xo, dx]
    for b in range(2):
        for xo in range(7):
            for dx in range(5):
                xi = 2 * xo + b + dx - 2
                if 0 <= xi < 14:
                    sel[xi, b, xo, dx] = 1.0
    r2 = jnp.einsum('ibod,kcyd->yicbok', jnp.asarray(sel), w)  # (5,14,16,2,8,32)
    r2 = r2.reshape(5, 224, 512)
    return jnp.pad(r2, ((0, 0), (0, 32), (0, 0)))              # (5, 256, 512)


def _fc_weights(fc_w, ncp):
    """(nc, 7*7*32) torch Linear weight (NCHW flatten) -> (7, 256, ncp)."""
    nc = fc_w.shape[0]
    w = fc_w.reshape(nc, 32, 7, 7)                           # (c, co, yo, xo)
    w = jnp.transpose(w, (2, 3, 1, 0))                       # (yo, xo, co, c)
    w = jnp.pad(w, ((0, 0), (0, 1), (0, 0), (0, ncp - nc)))  # xo 7->8, c -> ncp
    return w.reshape(7, 256, ncp)


def _split_input(x_nchw):
    """(N,1,28,28) -> (N,4,8,28): rows zero-padded to 32, split by (row mod 4)."""
    x = x_nchw[:, 0, :, :]
    x = jnp.pad(x, ((0, 0), (2, 2), (0, 0)))                 # (N, 32, 28)
    x = x.reshape(x.shape[0], 8, 4, 28)                      # padded row = 4*m + q
    return jnp.transpose(x, (0, 2, 1, 3))                    # (N, 4, 8, 28)


def convnet_forward(x_nchw, params):
    n = x_nchw.shape[0]
    nc = params["fcw"].shape[0]
    ncp = _round_up(nc, 128)                                  # lane-dense logits

    scale1, shift1 = _fold_bn(params["cb1"], params["g1"], params["be1"],
                              params["m1"], params["v1"])
    scale2, shift2 = _fold_bn(params["cb2"], params["g2"], params["be2"],
                              params["m2"], params["v2"])

    xq = _split_input(x_nchw).astype(jnp.bfloat16)
    r1 = _layer1_toeplitz(params["w1"], scale1).astype(jnp.bfloat16)
    r2 = _layer2_toeplitz(params["w2"], scale2).astype(jnp.bfloat16)
    rfc = _fc_weights(params["fcw"], ncp).astype(jnp.bfloat16)
    s1 = jnp.tile(shift1, 16).reshape(1, 256).astype(jnp.float32)
    s2 = jnp.tile(shift2, 8).reshape(1, 256).astype(jnp.float32)
    fcb = jnp.pad(params["fcb"], (0, ncp - nc)).reshape(1, ncp).astype(jnp.float32)

    flops = n * 2 * (20 * 7 * 28 * 512 + 10 * 7 * 256 * 512 + 7 * 256 * ncp)
    bytes_accessed = (n * (4 * 8 * 28 * 2 + ncp * 4)
                      + (5 * 28 * 512 + 5 * 256 * 512 + 7 * 256 * ncp) * 2
                      + (2 * 256 + ncp) * 4)
    cost = pl.CostEstimate(flops=flops, transcendentals=0,
                           bytes_accessed=bytes_accessed)

    out = pl.pallas_call(
        _convnet_kernel,
        out_shape=jax.ShapeDtypeStruct((n, 1, ncp), jnp.float32),
        grid=(n,),
        in_specs=[
            pl.BlockSpec((1, 4, 8, 28), lambda i: (i, 0, 0, 0)),   # streamed input
            pl.BlockSpec((5, 28, 512), lambda i: (0, 0, 0)),       # resident weights
            pl.BlockSpec((1, 256), lambda i: (0, 0)),
            pl.BlockSpec((5, 256, 512), lambda i: (0, 0, 0)),
            pl.BlockSpec((1, 256), lambda i: (0, 0)),
            pl.BlockSpec((7, 256, ncp), lambda i: (0, 0, 0)),
            pl.BlockSpec((1, ncp), lambda i: (0, 0)),
        ],
        out_specs=pl.BlockSpec((1, 1, ncp), lambda i: (i, 0, 0)),
        scratch_shapes=[pltpu.VMEM((2, 9, 256), jnp.float32)],
        compiler_params=pltpu.CompilerParams(
            dimension_semantics=("parallel",),
            vmem_limit_bytes=_VMEM_LIMIT),
        cost_estimate=cost,
    )(xq, r1, s1, r2, s2, rfc, fcb)
    return out.reshape(n, ncp)[:, :nc]


# ----------------------------------------------------------------------------
# Pure-JAX reference (f32) for a runtime sanity check, and parameter init.
# ----------------------------------------------------------------------------
def _reference_forward(x, params, eps=1e-5):
    def conv(h, w, b):
        y = jax.lax.conv_general_dilated(
            h, w, window_strides=(1, 1), padding=((2, 2), (2, 2)),
            dimension_numbers=("NCHW", "OIHW", "NCHW"))
        return y + b[None, :, None, None]

    def bn(y, g, be, m, v):
        s = g / jnp.sqrt(v + eps)
        return y * s[None, :, None, None] + (be - m * s)[None, :, None, None]

    def pool(y):
        return jax.lax.reduce_window(y, -jnp.inf, jax.lax.max,
                                     (1, 1, 2, 2), (1, 1, 2, 2), "VALID")

    h = pool(jnp.maximum(bn(conv(x, params["w1"], params["cb1"]), params["g1"],
                            params["be1"], params["m1"], params["v1"]), 0.0))
    h = pool(jnp.maximum(bn(conv(h, params["w2"], params["cb2"]), params["g2"],
                            params["be2"], params["m2"], params["v2"]), 0.0))
    h = h.reshape(h.shape[0], -1)
    return h @ params["fcw"].T + params["fcb"]


def init_params(key, num_classes=10):
    ks = jax.random.split(key, 16)
    f32 = jnp.float32
    return {
        "w1":  0.1 * jax.random.normal(ks[0], (16, 1, 5, 5), f32),
        "cb1": 0.1 * jax.random.normal(ks[1], (16,), f32),
        "g1":  1.0 + 0.1 * jax.random.normal(ks[2], (16,), f32),
        "be1": 0.1 * jax.random.normal(ks[3], (16,), f32),
        "m1":  0.1 * jax.random.normal(ks[4], (16,), f32),
        "v1":  1.0 + 0.1 * jnp.abs(jax.random.normal(ks[5], (16,), f32)),
        "w2":  0.05 * jax.random.normal(ks[6], (32, 16, 5, 5), f32),
        "cb2": 0.1 * jax.random.normal(ks[7], (32,), f32),
        "g2":  1.0 + 0.1 * jax.random.normal(ks[8], (32,), f32),
        "be2": 0.1 * jax.random.normal(ks[9], (32,), f32),
        "m2":  0.1 * jax.random.normal(ks[10], (32,), f32),
        "v2":  1.0 + 0.1 * jnp.abs(jax.random.normal(ks[11], (32,), f32)),
        "fcw": 0.02 * jax.random.normal(ks[12], (num_classes, 7 * 7 * 32), f32),
        "fcb": 0.1 * jax.random.normal(ks[13], (num_classes,), f32),
    }


if __name__ == "__main__":
    key = jax.random.PRNGKey(0)
    pkey, xkey = jax.random.split(key)
    params = init_params(pkey)
    # The module's fc layer (7*7*32) fixes the spatial size at 28x28, Cin=1.
    x = jax.random.normal(xkey, (2, 1, 28, 28), jnp.float32)

    logits = jax.jit(convnet_forward)(x, params)
    logits = jax.block_until_ready(logits)
    assert logits.shape == (2, 10) and logits.dtype == jnp.float32

    ref = jax.block_until_ready(jax.jit(_reference_forward)(x, params))
    err = float(jnp.max(jnp.abs(logits - ref)))
    assert err < 0.08, f"max |logits - f32 reference| = {err}"
    print("KERNEL_OK")
</pallas_src>

<mosaic_0001>
module attributes {stable_mosaic.version = 11 : i64} {
  func.func @_convnet_kernel(%arg0: i32, %arg1: memref<1x4x8x28xbf16, #tpu.memory_space<vmem>>, %arg2: memref<5x28x512xbf16, #tpu.memory_space<vmem>>, %arg3: memref<1x256xf32, #tpu.memory_space<vmem>>, %arg4: memref<5x256x512xbf16, #tpu.memory_space<vmem>>, %arg5: memref<1x256xf32, #tpu.memory_space<vmem>>, %arg6: memref<7x256x128xbf16, #tpu.memory_space<vmem>>, %arg7: memref<1x128xf32, #tpu.memory_space<vmem>>, %arg8: memref<1x1x128xf32, #tpu.memory_space<vmem>>, %arg9: memref<2x9x256xf32, #tpu.memory_space<vmem>>) attributes {dimension_semantics = [#tpu.dimension_semantics<parallel>], iteration_bounds = array<i64: 2>, scalar_prefetch = 0 : i64, scratch_operands = 1 : i64, tpu.core_type = #tpu.core_type<tc>, window_params = [{transform_indices = @transform_0, window_bounds = array<i64: 1, 4, 8, 28>}, {pipeline_mode = #tpu.pipeline_mode<synchronous>, transform_indices = @transform_1, window_bounds = array<i64: 5, 28, 512>}, {pipeline_mode = #tpu.pipeline_mode<synchronous>, transform_indices = @transform_2, window_bounds = array<i64: 1, 256>}, {pipeline_mode = #tpu.pipeline_mode<synchronous>, transform_indices = @transform_3, window_bounds = array<i64: 5, 256, 512>}, {pipeline_mode = #tpu.pipeline_mode<synchronous>, transform_indices = @transform_4, window_bounds = array<i64: 1, 256>}, {pipeline_mode = #tpu.pipeline_mode<synchronous>, transform_indices = @transform_5, window_bounds = array<i64: 7, 256, 128>}, {pipeline_mode = #tpu.pipeline_mode<synchronous>, transform_indices = @transform_6, window_bounds = array<i64: 1, 128>}, {transform_indices = @transform_7, window_bounds = array<i64: 1, 1, 128>}]} {
    %c0 = arith.constant 0 : index
    %c0_0 = arith.constant 0 : index
    %c0_1 = arith.constant 0 : index
    %0 = vector.load %arg2[%c0, %c0_0, %c0_1] : memref<5x28x512xbf16, #tpu.memory_space<vmem>>, vector<1x28x512xbf16>
    %1 = vector.shape_cast %0 : vector<1x28x512xbf16> to vector<28x512xbf16>
    %c0_2 = arith.constant 0 : index
    %c0_3 = arith.constant 0 : index
    %c0_4 = arith.constant 0 : index
    %c0_5 = arith.constant 0 : index
    %2 = vector.load %arg1[%c0_2, %c0_3, %c0_4, %c0_5] : memref<1x4x8x28xbf16, #tpu.memory_space<vmem>>, vector<1x1x7x28xbf16>
    %3 = vector.shape_cast %2 : vector<1x1x7x28xbf16> to vector<7x28xbf16>
    %cst = arith.constant dense<0.000000e+00> : vector<7x512xf32>
    %4 = tpu.matmul %3, %1, %cst {dimension_numbers = #tpu.dot_dimension_numbers<[1], [0], [0], [1], [0, 0, 1, 1], [], []>} : vector<7x28xbf16>, vector<28x512xbf16>, vector<7x512xf32> -> vector<7x512xf32>
    %c0_6 = arith.constant 0 : index
    %c1 = arith.constant 1 : index
    %c0_7 = arith.constant 0 : index
    %c0_8 = arith.constant 0 : index
    %5 = vector.load %arg1[%c0_6, %c1, %c0_7, %c0_8] : memref<1x4x8x28xbf16, #tpu.memory_space<vmem>>, vector<1x1x7x28xbf16>
    %6 = vector.shape_cast %5 : vector<1x1x7x28xbf16> to vector<7x28xbf16>
    %cst_9 = arith.constant dense<0.000000e+00> : vector<7x512xf32>
    %7 = tpu.matmul %6, %1, %cst_9 {dimension_numbers = #tpu.dot_dimension_numbers<[1], [0], [0], [1], [0, 0, 1, 1], [], []>} : vector<7x28xbf16>, vector<28x512xbf16>, vector<7x512xf32> -> vector<7x512xf32>
    %c0_10 = arith.constant 0 : index
    %c2 = arith.constant 2 : index
    %c0_11 = arith.constant 0 : index
    %c0_12 = arith.constant 0 : index
    %8 = vector.load %arg1[%c0_10, %c2, %c0_11, %c0_12] : memref<1x4x8x28xbf16, #tpu.memory_space<vmem>>, vector<1x1x7x28xbf16>
    %9 = vector.shape_cast %8 : vector<1x1x7x28xbf16> to vector<7x28xbf16>
    %cst_13 = arith.constant dense<0.000000e+00> : vector<7x512xf32>
    %10 = tpu.matmul %9, %1, %cst_13 {dimension_numbers = #tpu.dot_dimension_numbers<[1], [0], [0], [1], [0, 0, 1, 1], [], []>} : vector<7x28xbf16>, vector<28x512xbf16>, vector<7x512xf32> -> vector<7x512xf32>
    %c0_14 = arith.constant 0 : index
    %c3 = arith.constant 3 : index
    %c0_15 = arith.constant 0 : index
    %c0_16 = arith.constant 0 : index
    %11 = vector.load %arg1[%c0_14, %c3, %c0_15, %c0_16] : memref<1x4x8x28xbf16, #tpu.memory_space<vmem>>, vector<1x1x7x28xbf16>
    %12 = vector.shape_cast %11 : vector<1x1x7x28xbf16> to vector<7x28xbf16>
    %cst_17 = arith.constant dense<0.000000e+00> : vector<7x512xf32>
    %13 = tpu.matmul %12, %1, %cst_17 {dimension_numbers = #tpu.dot_dimension_numbers<[1], [0], [0], [1], [0, 0, 1, 1], [], []>} : vector<7x28xbf16>, vector<28x512xbf16>, vector<7x512xf32> -> vector<7x512xf32>
    %c1_18 = arith.constant 1 : index
    %c0_19 = arith.constant 0 : index
    %c0_20 = arith.constant 0 : index
    %14 = vector.load %arg2[%c1_18, %c0_19, %c0_20] : memref<5x28x512xbf16, #tpu.memory_space<vmem>>, vector<1x28x512xbf16>
    %15 = vector.shape_cast %14 : vector<1x28x512xbf16> to vector<28x512xbf16>
    %c0_21 = arith.constant 0 : index
    %c1_22 = arith.constant 1 : index
    %c0_23 = arith.constant 0 : index
    %c0_24 = arith.constant 0 : index
    %16 = vector.load %arg1[%c0_21, %c1_22, %c0_23, %c0_24] : memref<1x4x8x28xbf16, #tpu.memory_space<vmem>>, vector<1x1x7x28xbf16>
    %17 = vector.shape_cast %16 : vector<1x1x7x28xbf16> to vector<7x28xbf16>
    %cst_25 = arith.constant dense<0.000000e+00> : vector<7x512xf32>
    %18 = tpu.matmul %17, %15, %cst_25 {dimension_numbers = #tpu.dot_dimension_numbers<[1], [0], [0], [1], [0, 0, 1, 1], [], []>} : vector<7x28xbf16>, vector<28x512xbf16>, vector<7x512xf32> -> vector<7x512xf32>
    %19 = arith.addf %4, %18 : vector<7x512xf32>
    %c0_26 = arith.constant 0 : index
    %c2_27 = arith.constant 2 : index
    %c0_28 = arith.constant 0 : index
    %c0_29 = arith.constant 0 : index
    %20 = vector.load %arg1[%c0_26, %c2_27, %c0_28, %c0_29] : memref<1x4x8x28xbf16, #tpu.memory_space<vmem>>, vector<1x1x7x28xbf16>
    %21 = vector.shape_cast %20 : vector<1x1x7x28xbf16> to vector<7x28xbf16>
    %cst_30 = arith.constant dense<0.000000e+00> : vector<7x512xf32>
    %22 = tpu.matmul %21, %15, %cst_30 {dimension_numbers = #tpu.dot_dimension_numbers<[1], [0], [0], [1], [0, 0, 1, 1], [], []>} : vector<7x28xbf16>, vector<28x512xbf16>, vector<7x512xf32> -> vector<7x512xf32>
    %23 = arith.addf %7, %22 : vector<7x512xf32>
    %c0_31 = arith.constant 0 : index
    %c3_32 = arith.constant 3 : index
    %c0_33 = arith.constant 0 : index
    %c0_34 = arith.constant 0 : index
    %24 = vector.load %arg1[%c0_31, %c3_32, %c0_33, %c0_34] : memref<1x4x8x28xbf16, #tpu.memory_space<vmem>>, vector<1x1x7x28xbf16>
    %25 = vector.shape_cast %24 : vector<1x1x7x28xbf16> to vector<7x28xbf16>
    %cst_35 = arith.constant dense<0.000000e+00> : vector<7x512xf32>
    %26 = tpu.matmul %25, %15, %cst_35 {dimension_numbers = #tpu.dot_dimension_numbers<[1], [0], [0], [1], [0, 0, 1, 1], [], []>} : vector<7x28xbf16>, vector<28x512xbf16>, vector<7x512xf32> -> vector<7x512xf32>
    %27 = arith.addf %10, %26 : vector<7x512xf32>
    %c0_36 = arith.constant 0 : index
    %c0_37 = arith.constant 0 : index
    %c1_38 = arith.constant 1 : index
    %c0_39 = arith.constant 0 : index
    %28 = vector.load %arg1[%c0_36, %c0_37, %c1_38, %c0_39] : memref<1x4x8x28xbf16, #tpu.memory_space<vmem>>, vector<1x1x7x28xbf16>
    %29 = vector.shape_cast %28 : vector<1x1x7x28xbf16> to vector<7x28xbf16>
    %cst_40 = arith.constant dense<0.000000e+00> : vector<7x512xf32>
    %30 = tpu.matmul %29, %15, %cst_40 {dimension_numbers = #tpu.dot_dimension_numbers<[1], [0], [0], [1], [0, 0, 1, 1], [], []>} : vector<7x28xbf16>, vector<28x512xbf16>, vector<7x512xf32> -> vector<7x512xf32>
    %31 = arith.addf %13, %30 : vector<7x512xf32>
    %c2_41 = arith.constant 2 : index
    %c0_42 = arith.constant 0 : index
    %c0_43 = arith.constant 0 : index
    %32 = vector.load %arg2[%c2_41, %c0_42, %c0_43] : memref<5x28x512xbf16, #tpu.memory_space<vmem>>, vector<1x28x512xbf16>
    %33 = vector.shape_cast %32 : vector<1x28x512xbf16> to vector<28x512xbf16>
    %c0_44 = arith.constant 0 : index
    %c2_45 = arith.constant 2 : index
    %c0_46 = arith.constant 0 : index
    %c0_47 = arith.constant 0 : index
    %34 = vector.load %arg1[%c0_44, %c2_45, %c0_46, %c0_47] : memref<1x4x8x28xbf16, #tpu.memory_space<vmem>>, vector<1x1x7x28xbf16>
    %35 = vector.shape_cast %34 : vector<1x1x7x28xbf16> to vector<7x28xbf16>
    %cst_48 = arith.constant dense<0.000000e+00> : vector<7x512xf32>
    %36 = tpu.matmul %35, %33, %cst_48 {dimension_numbers = #tpu.dot_dimension_numbers<[1], [0], [0], [1], [0, 0, 1, 1], [], []>} : vector<7x28xbf16>, vector<28x512xbf16>, vector<7x512xf32> -> vector<7x512xf32>
    %37 = arith.addf %19, %36 : vector<7x512xf32>
    %c0_49 = arith.constant 0 : index
    %c3_50 = arith.constant 3 : index
    %c0_51 = arith.constant 0 : index
    %c0_52 = arith.constant 0 : index
    %38 = vector.load %arg1[%c0_49, %c3_50, %c0_51, %c0_52] : memref<1x4x8x28xbf16, #tpu.memory_space<vmem>>, vector<1x1x7x28xbf16>
    %39 = vector.shape_cast %38 : vector<1x1x7x28xbf16> to vector<7x28xbf16>
    %cst_53 = arith.constant dense<0.000000e+00> : vector<7x512xf32>
    %40 = tpu.matmul %39, %33, %cst_53 {dimension_numbers = #tpu.dot_dimension_numbers<[1], [0], [0], [1], [0, 0, 1, 1], [], []>} : vector<7x28xbf16>, vector<28x512xbf16>, vector<7x512xf32> -> vector<7x512xf32>
    %41 = arith.addf %23, %40 : vector<7x512xf32>
    %c0_54 = arith.constant 0 : index
    %c0_55 = arith.constant 0 : index
    %c1_56 = arith.constant 1 : index
    %c0_57 = arith.constant 0 : index
    %42 = vector.load %arg1[%c0_54, %c0_55, %c1_56, %c0_57] : memref<1x4x8x28xbf16, #tpu.memory_space<vmem>>, vector<1x1x7x28xbf16>
    %43 = vector.shape_cast %42 : vector<1x1x7x28xbf16> to vector<7x28xbf16>
    %cst_58 = arith.constant dense<0.000000e+00> : vector<7x512xf32>
    %44 = tpu.matmul %43, %33, %cst_58 {dimension_numbers = #tpu.dot_dimension_numbers<[1], [0], [0], [1], [0, 0, 1, 1], [], []>} : vector<7x28xbf16>, vector<28x512xbf16>, vector<7x512xf32> -> vector<7x512xf32>
    %45 = arith.addf %27, %44 : vector<7x512xf32>
    %c0_59 = arith.constant 0 : index
    %c1_60 = arith.constant 1 : index
    %c1_61 = arith.constant 1 : index
    %c0_62 = arith.constant 0 : index
    %46 = vector.load %arg1[%c0_59, %c1_60, %c1_61, %c0_62] : memref<1x4x8x28xbf16, #tpu.memory_space<vmem>>, vector<1x1x7x28xbf16>
    %47 = vector.shape_cast %46 : vector<1x1x7x28xbf16> to vector<7x28xbf16>
    %cst_63 = arith.constant dense<0.000000e+00> : vector<7x512xf32>
    %48 = tpu.matmul %47, %33, %cst_63 {dimension_numbers = #tpu.dot_dimension_numbers<[1], [0], [0], [1], [0, 0, 1, 1], [], []>} : vector<7x28xbf16>, vector<28x512xbf16>, vector<7x512xf32> -> vector<7x512xf32>
    %49 = arith.addf %31, %48 : vector<7x512xf32>
    %c3_64 = arith.constant 3 : index
    %c0_65 = arith.constant 0 : index
    %c0_66 = arith.constant 0 : index
    %50 = vector.load %arg2[%c3_64, %c0_65, %c0_66] : memref<5x28x512xbf16, #tpu.memory_space<vmem>>, vector<1x28x512xbf16>
    %51 = vector.shape_cast %50 : vector<1x28x512xbf16> to vector<28x512xbf16>
    %c0_67 = arith.constant 0 : index
    %c3_68 = arith.constant 3 : index
    %c0_69 = arith.constant 0 : index
    %c0_70 = arith.constant 0 : index
    %52 = vector.load %arg1[%c0_67, %c3_68, %c0_69, %c0_70] : memref<1x4x8x28xbf16, #tpu.memory_space<vmem>>, vector<1x1x7x28xbf16>
    %53 = vector.shape_cast %52 : vector<1x1x7x28xbf16> to vector<7x28xbf16>
    %cst_71 = arith.constant dense<0.000000e+00> : vector<7x512xf32>
    %54 = tpu.matmul %53, %51, %cst_71 {dimension_numbers = #tpu.dot_dimension_numbers<[1], [0], [0], [1], [0, 0, 1, 1], [], []>} : vector<7x28xbf16>, vector<28x512xbf16>, vector<7x512xf32> -> vector<7x512xf32>
    %55 = arith.addf %37, %54 : vector<7x512xf32>
    %c0_72 = arith.constant 0 : index
    %c0_73 = arith.constant 0 : index
    %c1_74 = arith.constant 1 : index
    %c0_75 = arith.constant 0 : index
    %56 = vector.load %arg1[%c0_72, %c0_73, %c1_74, %c0_75] : memref<1x4x8x28xbf16, #tpu.memory_space<vmem>>, vector<1x1x7x28xbf16>
    %57 = vector.shape_cast %56 : vector<1x1x7x28xbf16> to vector<7x28xbf16>
    %cst_76 = arith.constant dense<0.000000e+00> : vector<7x512xf32>
    %58 = tpu.matmul %57, %51, %cst_76 {dimension_numbers = #tpu.dot_dimension_numbers<[1], [0], [0], [1], [0, 0, 1, 1], [], []>} : vector<7x28xbf16>, vector<28x512xbf16>, vector<7x512xf32> -> vector<7x512xf32>
    %59 = arith.addf %41, %58 : vector<7x512xf32>
    %c0_77 = arith.constant 0 : index
    %c1_78 = arith.constant 1 : index
    %c1_79 = arith.constant 1 : index
    %c0_80 = arith.constant 0 : index
    %60 = vector.load %arg1[%c0_77, %c1_78, %c1_79, %c0_80] : memref<1x4x8x28xbf16, #tpu.memory_space<vmem>>, vector<1x1x7x28xbf16>
    %61 = vector.shape_cast %60 : vector<1x1x7x28xbf16> to vector<7x28xbf16>
    %cst_81 = arith.constant dense<0.000000e+00> : vector<7x512xf32>
    %62 = tpu.matmul %61, %51, %cst_81 {dimension_numbers = #tpu.dot_dimension_numbers<[1], [0], [0], [1], [0, 0, 1, 1], [], []>} : vector<7x28xbf16>, vector<28x512xbf16>, vector<7x512xf32> -> vector<7x512xf32>
    %63 = arith.addf %45, %62 : vector<7x512xf32>
    %c0_82 = arith.constant 0 : index
    %c2_83 = arith.constant 2 : index
    %c1_84 = arith.constant 1 : index
    %c0_85 = arith.constant 0 : index
    %64 = vector.load %arg1[%c0_82, %c2_83, %c1_84, %c0_85] : memref<1x4x8x28xbf16, #tpu.memory_space<vmem>>, vector<1x1x7x28xbf16>
    %65 = vector.shape_cast %64 : vector<1x1x7x28xbf16> to vector<7x28xbf16>
    %cst_86 = arith.constant dense<0.000000e+00> : vector<7x512xf32>
    %66 = tpu.matmul %65, %51, %cst_86 {dimension_numbers = #tpu.dot_dimension_numbers<[1], [0], [0], [1], [0, 0, 1, 1], [], []>} : vector<7x28xbf16>, vector<28x512xbf16>, vector<7x512xf32> -> vector<7x512xf32>
    %67 = arith.addf %49, %66 : vector<7x512xf32>
    %c4 = arith.constant 4 : index
    %c0_87 = arith.constant 0 : index
    %c0_88 = arith.constant 0 : index
    %68 = vector.load %arg2[%c4, %c0_87, %c0_88] : memref<5x28x512xbf16, #tpu.memory_space<vmem>>, vector<1x28x512xbf16>
    %69 = vector.shape_cast %68 : vector<1x28x512xbf16> to vector<28x512xbf16>
    %c0_89 = arith.constant 0 : index
    %c0_90 = arith.constant 0 : index
    %c1_91 = arith.constant 1 : index
    %c0_92 = arith.constant 0 : index
    %70 = vector.load %arg1[%c0_89, %c0_90, %c1_91, %c0_92] : memref<1x4x8x28xbf16, #tpu.memory_space<vmem>>, vector<1x1x7x28xbf16>
    %71 = vector.shape_cast %70 : vector<1x1x7x28xbf16> to vector<7x28xbf16>
    %cst_93 = arith.constant dense<0.000000e+00> : vector<7x512xf32>
    %72 = tpu.matmul %71, %69, %cst_93 {dimension_numbers = #tpu.dot_dimension_numbers<[1], [0], [0], [1], [0, 0, 1, 1], [], []>} : vector<7x28xbf16>, vector<28x512xbf16>, vector<7x512xf32> -> vector<7x512xf32>
    %73 = arith.addf %55, %72 : vector<7x512xf32>
    %c0_94 = arith.constant 0 : index
    %c1_95 = arith.constant 1 : index
    %c1_96 = arith.constant 1 : index
    %c0_97 = arith.constant 0 : index
    %74 = vector.load %arg1[%c0_94, %c1_95, %c1_96, %c0_97] : memref<1x4x8x28xbf16, #tpu.memory_space<vmem>>, vector<1x1x7x28xbf16>
    %75 = vector.shape_cast %74 : vector<1x1x7x28xbf16> to vector<7x28xbf16>
    %cst_98 = arith.constant dense<0.000000e+00> : vector<7x512xf32>
    %76 = tpu.matmul %75, %69, %cst_98 {dimension_numbers = #tpu.dot_dimension_numbers<[1], [0], [0], [1], [0, 0, 1, 1], [], []>} : vector<7x28xbf16>, vector<28x512xbf16>, vector<7x512xf32> -> vector<7x512xf32>
    %77 = arith.addf %59, %76 : vector<7x512xf32>
    %c0_99 = arith.constant 0 : index
    %c2_100 = arith.constant 2 : index
    %c1_101 = arith.constant 1 : index
    %c0_102 = arith.constant 0 : index
    %78 = vector.load %arg1[%c0_99, %c2_100, %c1_101, %c0_102] : memref<1x4x8x28xbf16, #tpu.memory_space<vmem>>, vector<1x1x7x28xbf16>
    %79 = vector.shape_cast %78 : vector<1x1x7x28xbf16> to vector<7x28xbf16>
    %cst_103 = arith.constant dense<0.000000e+00> : vector<7x512xf32>
    %80 = tpu.matmul %79, %69, %cst_103 {dimension_numbers = #tpu.dot_dimension_numbers<[1], [0], [0], [1], [0, 0, 1, 1], [], []>} : vector<7x28xbf16>, vector<28x512xbf16>, vector<7x512xf32> -> vector<7x512xf32>
    %81 = arith.addf %63, %80 : vector<7x512xf32>
    %c0_104 = arith.constant 0 : index
    %c3_105 = arith.constant 3 : index
    %c1_106 = arith.constant 1 : index
    %c0_107 = arith.constant 0 : index
    %82 = vector.load %arg1[%c0_104, %c3_105, %c1_106, %c0_107] : memref<1x4x8x28xbf16, #tpu.memory_space<vmem>>, vector<1x1x7x28xbf16>
    %83 = vector.shape_cast %82 : vector<1x1x7x28xbf16> to vector<7x28xbf16>
    %cst_108 = arith.constant dense<0.000000e+00> : vector<7x512xf32>
    %84 = tpu.matmul %83, %69, %cst_108 {dimension_numbers = #tpu.dot_dimension_numbers<[1], [0], [0], [1], [0, 0, 1, 1], [], []>} : vector<7x28xbf16>, vector<28x512xbf16>, vector<7x512xf32> -> vector<7x512xf32>
    %85 = arith.addf %67, %84 : vector<7x512xf32>
    %86 = arith.maximumf %73, %77 : vector<7x512xf32>
    %87 = vector.extract_strided_slice %86 {offsets = [0, 0], sizes = [7, 256], strides = [1, 1]} : vector<7x512xf32> to vector<7x256xf32>
    %88 = vector.extract_strided_slice %86 {offsets = [0, 256], sizes = [7, 256], strides = [1, 1]} : vector<7x512xf32> to vector<7x256xf32>
    %89 = arith.maximumf %87, %88 : vector<7x256xf32>
    %c0_109 = arith.constant 0 : index
    %c0_110 = arith.constant 0 : index
    %90 = vector.load %arg3[%c0_109, %c0_110] : memref<1x256xf32, #tpu.memory_space<vmem>>, vector<1x256xf32>
    %91 = vector.broadcast %90 : vector<1x256xf32> to vector<7x256xf32>
    %92 = arith.addf %89, %91 : vector<7x256xf32>
    %cst_111 = arith.constant 0.000000e+00 : f32
    %93 = vector.broadcast %cst_111 : f32 to vector<7x256xf32>
    %94 = arith.maximumf %92, %93 : vector<7x256xf32>
    %cst_112 = arith.constant 0.000000e+00 : f32
    %95 = vector.broadcast %cst_112 : f32 to vector<1x256xf32>
    %c0_113 = arith.constant 0 : index
    %c0_114 = arith.constant 0 : index
    %c0_115 = arith.constant 0 : index
    %96 = vector.load %arg9[%c0_113, %c0_114, %c0_115] : memref<2x9x256xf32, #tpu.memory_space<vmem>>, vector<1x1x256xf32>
    %97 = vector.shape_cast %96 : vector<1x1x256xf32> to vector<1x256xf32>
    %98 = vector.shape_cast %95 : vector<1x256xf32> to vector<1x1x256xf32>
    tpu.vector_store %arg9[%c0_113, %c0_114, %c0_115], %98 {strides = array<i32>} : memref<2x9x256xf32, #tpu.memory_space<vmem>>, vector<1x1x256xf32>,
    %c0_116 = arith.constant 0 : index
    %c1_117 = arith.constant 1 : index
    %c0_118 = arith.constant 0 : index
    %99 = vector.load %arg9[%c0_116, %c1_117, %c0_118] : memref<2x9x256xf32, #tpu.memory_space<vmem>>, vector<1x7x256xf32>
    %100 = vector.shape_cast %99 : vector<1x7x256xf32> to vector<7x256xf32>
    %101 = vector.shape_cast %94 : vector<7x256xf32> to vector<1x7x256xf32>
    tpu.vector_store %arg9[%c0_116, %c1_117, %c0_118], %101 {strides = array<i32>} : memref<2x9x256xf32, #tpu.memory_space<vmem>>, vector<1x7x256xf32>,
    %cst_119 = arith.constant 0.000000e+00 : f32
    %102 = vector.broadcast %cst_119 : f32 to vector<1x256xf32>
    %c0_120 = arith.constant 0 : index
    %c8 = arith.constant 8 : index
    %c0_121 = arith.constant 0 : index
    %103 = vector.load %arg9[%c0_120, %c8, %c0_121] : memref<2x9x256xf32, #tpu.memory_space<vmem>>, vector<1x1x256xf32>
    %104 = vector.shape_cast %103 : vector<1x1x256xf32> to vector<1x256xf32>
    %105 = vector.shape_cast %102 : vector<1x256xf32> to vector<1x1x256xf32>
    tpu.vector_store %arg9[%c0_120, %c8, %c0_121], %105 {strides = array<i32>} : memref<2x9x256xf32, #tpu.memory_space<vmem>>, vector<1x1x256xf32>,
    %106 = arith.maximumf %81, %85 : vector<7x512xf32>
    %107 = vector.extract_strided_slice %106 {offsets = [0, 0], sizes = [7, 256], strides = [1, 1]} : vector<7x512xf32> to vector<7x256xf32>
    %108 = vector.extract_strided_slice %106 {offsets = [0, 256], sizes = [7, 256], strides = [1, 1]} : vector<7x512xf32> to vector<7x256xf32>
    %109 = arith.maximumf %107, %108 : vector<7x256xf32>
    %c0_122 = arith.constant 0 : index
    %c0_123 = arith.constant 0 : index
    %110 = vector.load %arg3[%c0_122, %c0_123] : memref<1x256xf32, #tpu.memory_space<vmem>>, vector<1x256xf32>
    %111 = vector.broadcast %110 : vector<1x256xf32> to vector<7x256xf32>
    %112 = arith.addf %109, %111 : vector<7x256xf32>
    %cst_124 = arith.constant 0.000000e+00 : f32
    %113 = vector.broadcast %cst_124 : f32 to vector<7x256xf32>
    %114 = arith.maximumf %112, %113 : vector<7x256xf32>
    %cst_125 = arith.constant 0.000000e+00 : f32
    %115 = vector.broadcast %cst_125 : f32 to vector<1x256xf32>
    %c1_126 = arith.constant 1 : index
    %c0_127 = arith.constant 0 : index
    %c0_128 = arith.constant 0 : index
    %116 = vector.load %arg9[%c1_126, %c0_127, %c0_128] : memref<2x9x256xf32, #tpu.memory_space<vmem>>, vector<1x1x256xf32>
    %117 = vector.shape_cast %116 : vector<1x1x256xf32> to vector<1x256xf32>
    %118 = vector.shape_cast %115 : vector<1x256xf32> to vector<1x1x256xf32>
    tpu.vector_store %arg9[%c1_126, %c0_127, %c0_128], %118 {strides = array<i32>} : memref<2x9x256xf32, #tpu.memory_space<vmem>>, vector<1x1x256xf32>,
    %c1_129 = arith.constant 1 : index
    %c1_130 = arith.constant 1 : index
    %c0_131 = arith.constant 0 : index
    %119 = vector.load %arg9[%c1_129, %c1_130, %c0_131] : memref<2x9x256xf32, #tpu.memory_space<vmem>>, vector<1x7x256xf32>
    %120 = vector.shape_cast %119 : vector<1x7x256xf32> to vector<7x256xf32>
    %121 = vector.shape_cast %114 : vector<7x256xf32> to vector<1x7x256xf32>
    tpu.vector_store %arg9[%c1_129, %c1_130, %c0_131], %121 {strides = array<i32>} : memref<2x9x256xf32, #tpu.memory_space<vmem>>, vector<1x7x256xf32>,
    %cst_132 = arith.constant 0.000000e+00 : f32
    %122 = vector.broadcast %cst_132 : f32 to vector<1x256xf32>
    %c1_133 = arith.constant 1 : index
    %c8_134 = arith.constant 8 : index
    %c0_135 = arith.constant 0 : index
    %123 = vector.load %arg9[%c1_133, %c8_134, %c0_135] : memref<2x9x256xf32, #tpu.memory_space<vmem>>, vector<1x1x256xf32>
    %124 = vector.shape_cast %123 : vector<1x1x256xf32> to vector<1x256xf32>
    %125 = vector.shape_cast %122 : vector<1x256xf32> to vector<1x1x256xf32>
    tpu.vector_store %arg9[%c1_133, %c8_134, %c0_135], %125 {strides = array<i32>} : memref<2x9x256xf32, #tpu.memory_space<vmem>>, vector<1x1x256xf32>,
    %c0_136 = arith.constant 0 : index
    %c0_137 = arith.constant 0 : index
    %c0_138 = arith.constant 0 : index
    %126 = vector.load %arg4[%c0_136, %c0_137, %c0_138] : memref<5x256x512xbf16, #tpu.memory_space<vmem>>, vector<1x256x512xbf16>
    %127 = vector.shape_cast %126 : vector<1x256x512xbf16> to vector<256x512xbf16>
    %c0_139 = arith.constant 0 : index
    %c0_140 = arith.constant 0 : index
    %c0_141 = arith.constant 0 : index
    %128 = vector.load %arg9[%c0_139, %c0_140, %c0_141] : memref<2x9x256xf32, #tpu.memory_space<vmem>>, vector<1x7x256xf32>
    %129 = vector.shape_cast %128 : vector<1x7x256xf32> to vector<7x256xf32>
    %130 = arith.truncf %129 : vector<7x256xf32> to vector<7x256xbf16>
    %cst_142 = arith.constant dense<0.000000e+00> : vector<7x512xf32>
    %131 = tpu.matmul %130, %127, %cst_142 {dimension_numbers = #tpu.dot_dimension_numbers<[1], [0], [0], [1], [0, 0, 1, 1], [], []>} : vector<7x256xbf16>, vector<256x512xbf16>, vector<7x512xf32> -> vector<7x512xf32>
    %c1_143 = arith.constant 1 : index
    %c0_144 = arith.constant 0 : index
    %c0_145 = arith.constant 0 : index
    %132 = vector.load %arg9[%c1_143, %c0_144, %c0_145] : memref<2x9x256xf32, #tpu.memory_space<vmem>>, vector<1x7x256xf32>
    %133 = vector.shape_cast %132 : vector<1x7x256xf32> to vector<7x256xf32>
    %134 = arith.truncf %133 : vector<7x256xf32> to vector<7x256xbf16>
    %cst_146 = arith.constant dense<0.000000e+00> : vector<7x512xf32>
    %135 = tpu.matmul %134, %127, %cst_146 {dimension_numbers = #tpu.dot_dimension_numbers<[1], [0], [0], [1], [0, 0, 1, 1], [], []>} : vector<7x256xbf16>, vector<256x512xbf16>, vector<7x512xf32> -> vector<7x512xf32>
    %c1_147 = arith.constant 1 : index
    %c0_148 = arith.constant 0 : index
    %c0_149 = arith.constant 0 : index
    %136 = vector.load %arg4[%c1_147, %c0_148, %c0_149] : memref<5x256x512xbf16, #tpu.memory_space<vmem>>, vector<1x256x512xbf16>
    %137 = vector.shape_cast %136 : vector<1x256x512xbf16> to vector<256x512xbf16>
    %c1_150 = arith.constant 1 : index
    %c0_151 = arith.constant 0 : index
    %c0_152 = arith.constant 0 : index
    %138 = vector.load %arg9[%c1_150, %c0_151, %c0_152] : memref<2x9x256xf32, #tpu.memory_space<vmem>>, vector<1x7x256xf32>
    %139 = vector.shape_cast %138 : vector<1x7x256xf32> to vector<7x256xf32>
    %140 = arith.truncf %139 : vector<7x256xf32> to vector<7x256xbf16>
    %cst_153 = arith.constant dense<0.000000e+00> : vector<7x512xf32>
    %141 = tpu.matmul %140, %137, %cst_153 {dimension_numbers = #tpu.dot_dimension_numbers<[1], [0], [0], [1], [0, 0, 1, 1], [], []>} : vector<7x256xbf16>, vector<256x512xbf16>, vector<7x512xf32> -> vector<7x512xf32>
    %142 = arith.addf %131, %141 : vector<7x512xf32>
    %c0_154 = arith.constant 0 : index
    %c1_155 = arith.constant 1 : index
    %c0_156 = arith.constant 0 : index
    %143 = vector.load %arg9[%c0_154, %c1_155, %c0_156] : memref<2x9x256xf32, #tpu.memory_space<vmem>>, vector<1x7x256xf32>
    %144 = vector.shape_cast %143 : vector<1x7x256xf32> to vector<7x256xf32>
    %145 = arith.truncf %144 : vector<7x256xf32> to vector<7x256xbf16>
    %cst_157 = arith.constant dense<0.000000e+00> : vector<7x512xf32>
    %146 = tpu.matmul %145, %137, %cst_157 {dimension_numbers = #tpu.dot_dimension_numbers<[1], [0], [0], [1], [0, 0, 1, 1], [], []>} : vector<7x256xbf16>, vector<256x512xbf16>, vector<7x512xf32> -> vector<7x512xf32>
    %147 = arith.addf %135, %146 : vector<7x512xf32>
    %c2_158 = arith.constant 2 : index
    %c0_159 = arith.constant 0 : index
    %c0_160 = arith.constant 0 : index
    %148 = vector.load %arg4[%c2_158, %c0_159, %c0_160] : memref<5x256x512xbf16, #tpu.memory_space<vmem>>, vector<1x256x512xbf16>
    %149 = vector.shape_cast %148 : vector<1x256x512xbf16> to vector<256x512xbf16>
    %c0_161 = arith.constant 0 : index
    %c1_162 = arith.constant 1 : index
    %c0_163 = arith.constant 0 : index
    %150 = vector.load %arg9[%c0_161, %c1_162, %c0_163] : memref<2x9x256xf32, #tpu.memory_space<vmem>>, vector<1x7x256xf32>
    %151 = vector.shape_cast %150 : vector<1x7x256xf32> to vector<7x256xf32>
    %152 = arith.truncf %151 : vector<7x256xf32> to vector<7x256xbf16>
    %cst_164 = arith.constant dense<0.000000e+00> : vector<7x512xf32>
    %153 = tpu.matmul %152, %149, %cst_164 {dimension_numbers = #tpu.dot_dimension_numbers<[1], [0], [0], [1], [0, 0, 1, 1], [], []>} : vector<7x256xbf16>, vector<256x512xbf16>, vector<7x512xf32> -> vector<7x512xf32>
    %154 = arith.addf %142, %153 : vector<7x512xf32>
    %c1_165 = arith.constant 1 : index
    %c1_166 = arith.constant 1 : index
    %c0_167 = arith.constant 0 : index
    %155 = vector.load %arg9[%c1_165, %c1_166, %c0_167] : memref<2x9x256xf32, #tpu.memory_space<vmem>>, vector<1x7x256xf32>
    %156 = vector.shape_cast %155 : vector<1x7x256xf32> to vector<7x256xf32>
    %157 = arith.truncf %156 : vector<7x256xf32> to vector<7x256xbf16>
    %cst_168 = arith.constant dense<0.000000e+00> : vector<7x512xf32>
    %158 = tpu.matmul %157, %149, %cst_168 {dimension_numbers = #tpu.dot_dimension_numbers<[1], [0], [0], [1], [0, 0, 1, 1], [], []>} : vector<7x256xbf16>, vector<256x512xbf16>, vector<7x512xf32> -> vector<7x512xf32>
    %159 = arith.addf %147, %158 : vector<7x512xf32>
    %c3_169 = arith.constant 3 : index
    %c0_170 = arith.constant 0 : index
    %c0_171 = arith.constant 0 : index
    %160 = vector.load %arg4[%c3_169, %c0_170, %c0_171] : memref<5x256x512xbf16, #tpu.memory_space<vmem>>, vector<1x256x512xbf16>
    %161 = vector.shape_cast %160 : vector<1x256x512xbf16> to vector<256x512xbf16>
    %c1_172 = arith.constant 1 : index
    %c1_173 = arith.constant 1 : index
    %c0_174 = arith.constant 0 : index
    %162 = vector.load %arg9[%c1_172, %c1_173, %c0_174] : memref<2x9x256xf32, #tpu.memory_space<vmem>>, vector<1x7x256xf32>
    %163 = vector.shape_cast %162 : vector<1x7x256xf32> to vector<7x256xf32>
    %164 = arith.truncf %163 : vector<7x256xf32> to vector<7x256xbf16>
    %cst_175 = arith.constant dense<0.000000e+00> : vector<7x512xf32>
    %165 = tpu.matmul %164, %161, %cst_175 {dimension_numbers = #tpu.dot_dimension_numbers<[1], [0], [0], [1], [0, 0, 1, 1], [], []>} : vector<7x256xbf16>, vector<256x512xbf16>, vector<7x512xf32> -> vector<7x512xf32>
    %166 = arith.addf %154, %165 : vector<7x512xf32>
    %c0_176 = arith.constant 0 : index
    %c2_177 = arith.constant 2 : index
    %c0_178 = arith.constant 0 : index
    %167 = vector.load %arg9[%c0_176, %c2_177, %c0_178] : memref<2x9x256xf32, #tpu.memory_space<vmem>>, vector<1x7x256xf32>
    %168 = vector.shape_cast %167 : vector<1x7x256xf32> to vector<7x256xf32>
    %169 = arith.truncf %168 : vector<7x256xf32> to vector<7x256xbf16>
    %cst_179 = arith.constant dense<0.000000e+00> : vector<7x512xf32>
    %170 = tpu.matmul %169, %161, %cst_179 {dimension_numbers = #tpu.dot_dimension_numbers<[1], [0], [0], [1], [0, 0, 1, 1], [], []>} : vector<7x256xbf16>, vector<256x512xbf16>, vector<7x512xf32> -> vector<7x512xf32>
    %171 = arith.addf %159, %170 : vector<7x512xf32>
    %c4_180 = arith.constant 4 : index
    %c0_181 = arith.constant 0 : index
    %c0_182 = arith.constant 0 : index
    %172 = vector.load %arg4[%c4_180, %c0_181, %c0_182] : memref<5x256x512xbf16, #tpu.memory_space<vmem>>, vector<1x256x512xbf16>
    %173 = vector.shape_cast %172 : vector<1x256x512xbf16> to vector<256x512xbf16>
    %c0_183 = arith.constant 0 : index
    %c2_184 = arith.constant 2 : index
    %c0_185 = arith.constant 0 : index
    %174 = vector.load %arg9[%c0_183, %c2_184, %c0_185] : memref<2x9x256xf32, #tpu.memory_space<vmem>>, vector<1x7x256xf32>
    %175 = vector.shape_cast %174 : vector<1x7x256xf32> to vector<7x256xf32>
    %176 = arith.truncf %175 : vector<7x256xf32> to vector<7x256xbf16>
    %cst_186 = arith.constant dense<0.000000e+00> : vector<7x512xf32>
    %177 = tpu.matmul %176, %173, %cst_186 {dimension_numbers = #tpu.dot_dimension_numbers<[1], [0], [0], [1], [0, 0, 1, 1], [], []>} : vector<7x256xbf16>, vector<256x512xbf16>, vector<7x512xf32> -> vector<7x512xf32>
    %178 = arith.addf %166, %177 : vector<7x512xf32>
    %c1_187 = arith.constant 1 : index
    %c2_188 = arith.constant 2 : index
    %c0_189 = arith.constant 0 : index
    %179 = vector.load %arg9[%c1_187, %c2_188, %c0_189] : memref<2x9x256xf32, #tpu.memory_space<vmem>>, vector<1x7x256xf32>
    %180 = vector.shape_cast %179 : vector<1x7x256xf32> to vector<7x256xf32>
    %181 = arith.truncf %180 : vector<7x256xf32> to vector<7x256xbf16>
    %cst_190 = arith.constant dense<0.000000e+00> : vector<7x512xf32>
    %182 = tpu.matmul %181, %173, %cst_190 {dimension_numbers = #tpu.dot_dimension_numbers<[1], [0], [0], [1], [0, 0, 1, 1], [], []>} : vector<7x256xbf16>, vector<256x512xbf16>, vector<7x512xf32> -> vector<7x512xf32>
    %183 = arith.addf %171, %182 : vector<7x512xf32>
    %184 = arith.maximumf %178, %183 : vector<7x512xf32>
    %185 = vector.extract_strided_slice %184 {offsets = [0, 0], sizes = [7, 256], strides = [1, 1]} : vector<7x512xf32> to vector<7x256xf32>
    %186 = vector.extract_strided_slice %184 {offsets = [0, 256], sizes = [7, 256], strides = [1, 1]} : vector<7x512xf32> to vector<7x256xf32>
    %187 = arith.maximumf %185, %186 : vector<7x256xf32>
    %c0_191 = arith.constant 0 : index
    %c0_192 = arith.constant 0 : index
    %188 = vector.load %arg5[%c0_191, %c0_192] : memref<1x256xf32, #tpu.memory_space<vmem>>, vector<1x256xf32>
    %189 = vector.broadcast %188 : vector<1x256xf32> to vector<7x256xf32>
    %190 = arith.addf %187, %189 : vector<7x256xf32>
    %cst_193 = arith.constant 0.000000e+00 : f32
    %191 = vector.broadcast %cst_193 : f32 to vector<7x256xf32>
    %192 = arith.maximumf %190, %191 : vector<7x256xf32>
    %193 = arith.truncf %192 : vector<7x256xf32> to vector<7x256xbf16>
    %c0_194 = arith.constant 0 : index
    %c0_195 = arith.constant 0 : index
    %194 = vector.load %arg7[%c0_194, %c0_195] : memref<1x128xf32, #tpu.memory_space<vmem>>, vector<1x128xf32>
    %195 = vector.extract_strided_slice %193 {offsets = [0, 0], sizes = [1, 256], strides = [1, 1]} : vector<7x256xbf16> to vector<1x256xbf16>
    %c0_196 = arith.constant 0 : index
    %c0_197 = arith.constant 0 : index
    %c0_198 = arith.constant 0 : index
    %196 = vector.load %arg6[%c0_196, %c0_197, %c0_198] : memref<7x256x128xbf16, #tpu.memory_space<vmem>>, vector<1x256x128xbf16>
    %197 = vector.shape_cast %196 : vector<1x256x128xbf16> to vector<256x128xbf16>
    %cst_199 = arith.constant dense<0.000000e+00> : vector<1x128xf32>
    %198 = tpu.matmul %195, %197, %cst_199 {dimension_numbers = #tpu.dot_dimension_numbers<[1], [0], [0], [1], [0, 0, 1, 1], [], []>} : vector<1x256xbf16>, vector<256x128xbf16>, vector<1x128xf32> -> vector<1x128xf32>
    %199 = arith.addf %194, %198 : vector<1x128xf32>
    %200 = vector.extract_strided_slice %193 {offsets = [1, 0], sizes = [1, 256], strides = [1, 1]} : vector<7x256xbf16> to vector<1x256xbf16>
    %c1_200 = arith.constant 1 : index
    %c0_201 = arith.constant 0 : index
    %c0_202 = arith.constant 0 : index
    %201 = vector.load %arg6[%c1_200, %c0_201, %c0_202] : memref<7x256x128xbf16, #tpu.memory_space<vmem>>, vector<1x256x128xbf16>
    %202 = vector.shape_cast %201 : vector<1x256x128xbf16> to vector<256x128xbf16>
    %cst_203 = arith.constant dense<0.000000e+00> : vector<1x128xf32>
    %203 = tpu.matmul %200, %202, %cst_203 {dimension_numbers = #tpu.dot_dimension_numbers<[1], [0], [0], [1], [0, 0, 1, 1], [], []>} : vector<1x256xbf16>, vector<256x128xbf16>, vector<1x128xf32> -> vector<1x128xf32>
    %204 = arith.addf %199, %203 : vector<1x128xf32>
    %205 = vector.extract_strided_slice %193 {offsets = [2, 0], sizes = [1, 256], strides = [1, 1]} : vector<7x256xbf16> to vector<1x256xbf16>
    %c2_204 = arith.constant 2 : index
    %c0_205 = arith.constant 0 : index
    %c0_206 = arith.constant 0 : index
    %206 = vector.load %arg6[%c2_204, %c0_205, %c0_206] : memref<7x256x128xbf16, #tpu.memory_space<vmem>>, vector<1x256x128xbf16>
    %207 = vector.shape_cast %206 : vector<1x256x128xbf16> to vector<256x128xbf16>
    %cst_207 = arith.constant dense<0.000000e+00> : vector<1x128xf32>
    %208 = tpu.matmul %205, %207, %cst_207 {dimension_numbers = #tpu.dot_dimension_numbers<[1], [0], [0], [1], [0, 0, 1, 1], [], []>} : vector<1x256xbf16>, vector<256x128xbf16>, vector<1x128xf32> -> vector<1x128xf32>
    %209 = arith.addf %204, %208 : vector<1x128xf32>
    %210 = vector.extract_strided_slice %193 {offsets = [3, 0], sizes = [1, 256], strides = [1, 1]} : vector<7x256xbf16> to vector<1x256xbf16>
    %c3_208 = arith.constant 3 : index
    %c0_209 = arith.constant 0 : index
    %c0_210 = arith.constant 0 : index
    %211 = vector.load %arg6[%c3_208, %c0_209, %c0_210] : memref<7x256x128xbf16, #tpu.memory_space<vmem>>, vector<1x256x128xbf16>
    %212 = vector.shape_cast %211 : vector<1x256x128xbf16> to vector<256x128xbf16>
    %cst_211 = arith.constant dense<0.000000e+00> : vector<1x128xf32>
    %213 = tpu.matmul %210, %212, %cst_211 {dimension_numbers = #tpu.dot_dimension_numbers<[1], [0], [0], [1], [0, 0, 1, 1], [], []>} : vector<1x256xbf16>, vector<256x128xbf16>, vector<1x128xf32> -> vector<1x128xf32>
    %214 = arith.addf %209, %213 : vector<1x128xf32>
    %215 = vector.extract_strided_slice %193 {offsets = [4, 0], sizes = [1, 256], strides = [1, 1]} : vector<7x256xbf16> to vector<1x256xbf16>
    %c4_212 = arith.constant 4 : index
    %c0_213 = arith.constant 0 : index
    %c0_214 = arith.constant 0 : index
    %216 = vector.load %arg6[%c4_212, %c0_213, %c0_214] : memref<7x256x128xbf16, #tpu.memory_space<vmem>>, vector<1x256x128xbf16>
    %217 = vector.shape_cast %216 : vector<1x256x128xbf16> to vector<256x128xbf16>
    %cst_215 = arith.constant dense<0.000000e+00> : vector<1x128xf32>
    %218 = tpu.matmul %215, %217, %cst_215 {dimension_numbers = #tpu.dot_dimension_numbers<[1], [0], [0], [1], [0, 0, 1, 1], [], []>} : vector<1x256xbf16>, vector<256x128xbf16>, vector<1x128xf32> -> vector<1x128xf32>
    %219 = arith.addf %214, %218 : vector<1x128xf32>
    %220 = vector.extract_strided_slice %193 {offsets = [5, 0], sizes = [1, 256], strides = [1, 1]} : vector<7x256xbf16> to vector<1x256xbf16>
    %c5 = arith.constant 5 : index
    %c0_216 = arith.constant 0 : index
    %c0_217 = arith.constant 0 : index
    %221 = vector.load %arg6[%c5, %c0_216, %c0_217] : memref<7x256x128xbf16, #tpu.memory_space<vmem>>, vector<1x256x128xbf16>
    %222 = vector.shape_cast %221 : vector<1x256x128xbf16> to vector<256x128xbf16>
    %cst_218 = arith.constant dense<0.000000e+00> : vector<1x128xf32>
    %223 = tpu.matmul %220, %222, %cst_218 {dimension_numbers = #tpu.dot_dimension_numbers<[1], [0], [0], [1], [0, 0, 1, 1], [], []>} : vector<1x256xbf16>, vector<256x128xbf16>, vector<1x128xf32> -> vector<1x128xf32>
    %224 = arith.addf %219, %223 : vector<1x128xf32>
    %225 = vector.extract_strided_slice %193 {offsets = [6, 0], sizes = [1, 256], strides = [1, 1]} : vector<7x256xbf16> to vector<1x256xbf16>
    %c6 = arith.constant 6 : index
    %c0_219 = arith.constant 0 : index
    %c0_220 = arith.constant 0 : index
    %226 = vector.load %arg6[%c6, %c0_219, %c0_220] : memref<7x256x128xbf16, #tpu.memory_space<vmem>>, vector<1x256x128xbf16>
    %227 = vector.shape_cast %226 : vector<1x256x128xbf16> to vector<256x128xbf16>
    %cst_221 = arith.constant dense<0.000000e+00> : vector<1x128xf32>
    %228 = tpu.matmul %225, %227, %cst_221 {dimension_numbers = #tpu.dot_dimension_numbers<[1], [0], [0], [1], [0, 0, 1, 1], [], []>} : vector<1x256xbf16>, vector<256x128xbf16>, vector<1x128xf32> -> vector<1x128xf32>
    %229 = arith.addf %224, %228 : vector<1x128xf32>
    %c0_222 = arith.constant 0 : index
    %c0_223 = arith.constant 0 : index
    %c0_224 = arith.constant 0 : index
    %230 = vector.load %arg8[%c0_222, %c0_223, %c0_224] : memref<1x1x128xf32, #tpu.memory_space<vmem>>, vector<1x1x128xf32>
    %231 = vector.shape_cast %230 : vector<1x1x128xf32> to vector<1x128xf32>
    %232 = vector.shape_cast %229 : vector<1x128xf32> to vector<1x1x128xf32>
    tpu.vector_store %arg8[%c0_222, %c0_223, %c0_224], %232 {strides = array<i32>} : memref<1x1x128xf32, #tpu.memory_space<vmem>>, vector<1x1x128xf32>,
    return
  }
  func.func @transform_0(%arg0: i32) -> (i32, i32, i32, i32) {
    %c0_i32 = arith.constant 0 : i32
    %c0_i32_0 = arith.constant 0 : i32
    %c0_i32_1 = arith.constant 0 : i32
    %c0_i32_2 = arith.constant 0 : i32
    return %arg0, %c0_i32, %c0_i32_0, %c0_i32_1 : i32, i32, i32, i32
  }
  func.func @transform_1(%arg0: i32) -> (i32, i32, i32) {
    %c0_i32 = arith.constant 0 : i32
    %c0_i32_0 = arith.constant 0 : i32
    %c0_i32_1 = arith.constant 0 : i32
    %c0_i32_2 = arith.constant 0 : i32
    return %c0_i32, %c0_i32_0, %c0_i32_1 : i32, i32, i32
  }
  func.func @transform_2(%arg0: i32) -> (i32, i32) {
    %c0_i32 = arith.constant 0 : i32
    %c0_i32_0 = arith.constant 0 : i32
    %c0_i32_1 = arith.constant 0 : i32
    return %c0_i32, %c0_i32_0 : i32, i32
  }
  func.func @transform_3(%arg0: i32) -> (i32, i32, i32) {
    %c0_i32 = arith.constant 0 : i32
    %c0_i32_0 = arith.constant 0 : i32
    %c0_i32_1 = arith.constant 0 : i32
    %c0_i32_2 = arith.constant 0 : i32
    return %c0_i32, %c0_i32_0, %c0_i32_1 : i32, i32, i32
  }
  func.func @transform_4(%arg0: i32) -> (i32, i32) {
    %c0_i32 = arith.constant 0 : i32
    %c0_i32_0 = arith.constant 0 : i32
    %c0_i32_1 = arith.constant 0 : i32
    return %c0_i32, %c0_i32_0 : i32, i32
  }
  func.func @transform_5(%arg0: i32) -> (i32, i32, i32) {
    %c0_i32 = arith.constant 0 : i32
    %c0_i32_0 = arith.constant 0 : i32
    %c0_i32_1 = arith.constant 0 : i32
    %c0_i32_2 = arith.constant 0 : i32
    return %c0_i32, %c0_i32_0, %c0_i32_1 : i32, i32, i32
  }
  func.func @transform_6(%arg0: i32) -> (i32, i32) {
    %c0_i32 = arith.constant 0 : i32
    %c0_i32_0 = arith.constant 0 : i32
    %c0_i32_1 = arith.constant 0 : i32
    return %c0_i32, %c0_i32_0 : i32, i32
  }
  func.func @transform_7(%arg0: i32) -> (i32, i32, i32) {
    %c0_i32 = arith.constant 0 : i32
    %c0_i32_0 = arith.constant 0 : i32
    %c0_i32_1 = arith.constant 0 : i32
    return %arg0, %c0_i32, %c0_i32_0 : i32, i32, i32
  }
}

</mosaic_0001>

<llo_original>
// kernel: tile.13
$region0: #{tile.13}
  #allocation0 [shape = 's32[1]{0}', space=sflag, size = 0x4, scoped, tag = 'scoped memory for tile.13']
  %s0 = inlined_call_operand.vmem [shape: f32[16], index: 0, kind: input, shape index: {}]
  %s1 = inlined_call_operand.vmem [shape: f32[16,16], index: 1, kind: output, shape index: {}]
  // Predicated region
  $region2: #{tile.13} parent=0 // pred_check
    _
  $region3: #{tile.13} parent=0 // pred_check_branch
    %3 = sbr.rel (0) target = $region5
  $region4: #{tile.13} parent=0 // pred_region
    _
  $region5: #{tile.13} parent=0 // pred_fallthru
    _
  %v4 = vld [vmem:[%s0] ss:$0 sm:$0xff]
  %5 = vst [vmem:[%s1] sm:$0xff] %v4
  %s6 = scalar_lea.vmem %s1, 8
  %7 = vst [vmem:[%s6] sm:$0xff] %v4

// kernel: tile.14
$region0: #{tile.14}
  %s0 = inlined_call_operand.vmem [shape: f32[16,16], index: 0, kind: input, shape index: {}]
  %s1 = inlined_call_operand.vmem [shape: f32[1,256], index: 1, kind: output, shape index: {}]
  $region1: #{tile.14} parent=0
    #allocation0 [shape = 'u8[8192]{0}', space=vmem, size = 0x2000, scoped, tag = 'scoped mem for output reshape']
    %s2 = smov 3
    %v3 = vld [vmem:[%s0] ss:$8 sm:%s2]
    %vm4 = vcmask 130048
    %5 = vst.msk [vmem:[#allocation0] ss:$8 sm:$0x3] %vm4, %v3
    %s6 = scalar_lea.vmem %s0, 7
    %s7 = smov 3
    %v8 = vld [vmem:[%s6] ss:$8 sm:%s7]
    %9 = vrot.lane.b32.xlu0 %v8, 112
    %v10 = vpop.permute.xlu0 %9
    %vm11 = vcmask 1048448
    %12 = vst.msk [vmem:[#allocation0] ss:$8 sm:$0x3] %vm11, %v10
    %s13 = scalar_lea.vmem %s0, 6
    %s14 = smov 3
    %v15 = vld [vmem:[%s13] ss:$8 sm:%s14]
    %16 = vrot.lane.b32.xlu0 %v15, 96
    %v17 = vpop.permute.xlu0 %16
    %vm18 = vcmask 917248
    %19 = vst.msk [vmem:[#allocation0] ss:$8 sm:$0x3] %vm18, %v17
    %s20 = scalar_lea.vmem %s0, 5
    %s21 = smov 3
    %v22 = vld [vmem:[%s20] ss:$8 sm:%s21]
    %23 = vrot.lane.b32.xlu0 %v22, 80
    %v24 = vpop.permute.xlu0 %23
    %vm25 = vcmask 786048
    %26 = vst.msk [vmem:[#allocation0] ss:$8 sm:$0x3] %vm25, %v24
    %s27 = scalar_lea.vmem %s0, 4
    %s28 = smov 3
    %v29 = vld [vmem:[%s27] ss:$8 sm:%s28]
    %30 = vrot.lane.b32.xlu0 %v29, 64
    %v31 = vpop.permute.xlu0 %30
    %vm32 = vcmask 654848
    %33 = vst.msk [vmem:[#allocation0] ss:$8 sm:$0x3] %vm32, %v31
    %s34 = scalar_lea.vmem %s0, 3
    %s35 = smov 3
    %v36 = vld [vmem:[%s34] ss:$8 sm:%s35]
    %37 = vrot.lane.b32.xlu0 %v36, 48
    %v38 = vpop.permute.xlu0 %37
    %vm39 = vcmask 523648
    %40 = vst.msk [vmem:[#allocation0] ss:$8 sm:$0x3] %vm39, %v38
    %s41 = scalar_lea.vmem %s0, 2
    %s42 = smov 3
    %v43 = vld [vmem:[%s41] ss:$8 sm:%s42]
    %44 = vrot.lane.b32.xlu0 %v43, 32
    %v45 = vpop.permute.xlu0 %44
    %vm46 = vcmask 392448
    %47 = vst.msk [vmem:[#allocation0] ss:$8 sm:$0x3] %vm46, %v45
    %s48 = scalar_lea.vmem %s0, 1
    %s49 = smov 3
    %v50 = vld [vmem:[%s48] ss:$8 sm:%s49]
    %51 = vrot.lane.b32.xlu0 %v50, 16
    %v52 = vpop.permute.xlu0 %51
    %vm53 = vcmask 261248
    %54 = vst.msk [vmem:[#allocation0] ss:$8 sm:$0x3] %vm53, %v52
    %s56 = sshllo.u32 0, 1
    %v58 = vld [vmem:[#allocation0] sm:%s56]
    %s59 = sshllo.u32 0, 1
    %60 = vst [vmem:[%s1] sm:%s59] %v58
    %s61 = scalar_lea.vmem [#allocation0], 8
    %v62 = vld [vmem:[%s61] sm:%s56]
    %s63 = sshllo.u32 0, 1
    %s64 = scalar_lea.vmem %s1, 1
    %65 = vst [vmem:[%s64] sm:%s63] %v62

// kernel: tile.18
$region0: #{tile.18}
  #allocation0 [shape = 's32[1]{0}', space=sflag, size = 0x4, scoped, tag = 'scoped memory for tile.18']
  %s0 = inlined_call_operand.vmem [shape: f32[32], index: 0, kind: input, shape index: {}]
  %s1 = inlined_call_operand.vmem [shape: f32[8,32], index: 1, kind: output, shape index: {}]
  // Predicated region
  $region2: #{tile.18} parent=0 // pred_check
    _
  $region3: #{tile.18} parent=0 // pred_check_branch
    %3 = sbr.rel (0) target = $region5
  $region4: #{tile.18} parent=0 // pred_region
    _
  $region5: #{tile.18} parent=0 // pred_fallthru
    _
  %v4 = vld [vmem:[%s0] ss:$0 sm:$0xff]
  %5 = vst [vmem:[%s1] sm:$0xff] %v4

// kernel: tile.19
$region0: #{tile.19}
  %s0 = inlined_call_operand.vmem [shape: f32[8,32], index: 0, kind: input, shape index: {}]
  %s1 = inlined_call_operand.vmem [shape: f32[1,256], index: 1, kind: output, shape index: {}]
  $region1: #{tile.19} parent=0
    #allocation0 [shape = 'u8[8192]{0}', space=vmem, size = 0x2000, scoped, tag = 'scoped mem for output reshape']
    %s2 = smov 3
    %v3 = vld [vmem:[%s0] ss:$4 sm:%s2]
    %vm4 = vcmask 261120
    %5 = vst.msk [vmem:[#allocation0] ss:$8 sm:$0x3] %vm4, %v3
    %s6 = scalar_lea.vmem %s0, 3
    %s7 = smov 3
    %v8 = vld [vmem:[%s6] ss:$4 sm:%s7]
    %9 = vrot.lane.b32.xlu0 %v8, 96
    %v10 = vpop.permute.xlu0 %9
    %vm11 = vcmask 1048320
    %12 = vst.msk [vmem:[#allocation0] ss:$8 sm:$0x3] %vm11, %v10
    %s13 = scalar_lea.vmem %s0, 2
    %s14 = smov 3
    %v15 = vld [vmem:[%s13] ss:$4 sm:%s14]
    %16 = vrot.lane.b32.xlu0 %v15, 64
    %v17 = vpop.permute.xlu0 %16
    %vm18 = vcmask 785920
    %19 = vst.msk [vmem:[#allocation0] ss:$8 sm:$0x3] %vm18, %v17
    %s20 = scalar_lea.vmem %s0, 1
    %s21 = smov 3
    %v22 = vld [vmem:[%s20] ss:$4 sm:%s21]
    %23 = vrot.lane.b32.xlu0 %v22, 32
    %v24 = vpop.permute.xlu0 %23
    %vm25 = vcmask 523520
    %26 = vst.msk [vmem:[#allocation0] ss:$8 sm:$0x3] %vm25, %v24
    %s28 = sshllo.u32 0, 1
    %v30 = vld [vmem:[#allocation0] sm:%s28]
    %s31 = sshllo.u32 0, 1
    %32 = vst [vmem:[%s1] sm:%s31] %v30
    %s33 = scalar_lea.vmem [#allocation0], 8
    %v34 = vld [vmem:[%s33] sm:%s28]
    %s35 = sshllo.u32 0, 1
    %s36 = scalar_lea.vmem %s1, 1
    %37 = vst [vmem:[%s36] sm:%s35] %v34

// kernel: convnet_forward.1
$region0: #{convnet_forward.1}
  #allocation0 [shape = 'u32[]', space=smem, size = 0x4, offset = 0x4, fixed_abs, tag = 'smem constant byte address 0x4 - core index']
  #allocation1 [shape = 'u32[144,128]{1,0:T(1,128)}', space=vmem, size = 0x12000, scoped, tag = 'internal scratch']
  #allocation2 [shape = 'f32[2,9,256]{2,1,0:T(8,128)}', space=vmem, size = 0x8000, scoped, tag = 'scratch operand']
  %s0 = inlined_call_operand.vmem [shape: bf16[2,4,8,28], index: 0, kind: input, shape index: {}]
  %s1 = inlined_call_operand.vmem [shape: bf16[5,28,512], index: 1, kind: input, shape index: {}]
  %s2 = inlined_call_operand.vmem [shape: f32[1,256], index: 2, kind: input, shape index: {}]
  %s3 = inlined_call_operand.vmem [shape: bf16[5,256,512], index: 3, kind: input, shape index: {}]
  %s4 = inlined_call_operand.vmem [shape: f32[1,256], index: 4, kind: input, shape index: {}]
  %s5 = inlined_call_operand.vmem [shape: bf16[7,256,128], index: 5, kind: input, shape index: {}]
  %s6 = inlined_call_operand.vmem [shape: f32[1,128], index: 6, kind: input, shape index: {}]
  %s7 = inlined_call_operand.hbm [shape: f32[2,1,128], index: 7, kind: output, shape index: {}]
  %s8 = sld [smem:[#allocation0]]
  $region61: #{convnet_forward.1} parent=0
    _
  %s10 = ssub.s32 1, %s8
  %s11 = scalar_select 0, %s10, %s8
  $region1: #{convnet_forward.1} parent=0
    #allocation3 [shape = 'u8[1024]{0}', space=vmem, size = 0x400, scoped, tag = 'output window, operand 0']
    #allocation4 [shape = 's32[2]{0}', space=sflag, size = 0x8, scoped, tag = 'scoped memory for convnet_forward.1']
    %12 = vsyncpa [#allocation4], 0
    %s13 = scalar_lea.sflag [#allocation4], 1
    %14 = vsyncpa %s13, 0
    loop: start=0, step=1, limit=4
    $region2: #{convnet_forward.1} parent=1 // loop_pre_header
      _
    $region3: #{convnet_forward.1} parent=1 // loop_header
      %s16 = sphi 0, %s20
      %p17 = scmp.ge.s32.totalorder %s16, 4
      %s26 = sphi 0, %s28
      %s29 = sphi 0, %s26
      %s30 = sphi 0, %s29
      %s46 = sphi 0, %s30
      %s50 = sphi 0, %s50
      %s52 = sphi 0, %s50
      %s53 = sphi 0, %s52
      %s67 = sphi 0, %s53
      %s71 = sphi 0, %s71
      %s73 = sphi 0, %s71
      %s74 = sphi 0, %s73
      %s88 = sphi 0, %s74
      %s92 = sphi 0, %s92
      %s94 = sphi 0, %s92
      %s95 = sphi 0, %s94
      %s109 = sphi 0, %s95
      %s113 = sphi 0, %s113
      %s115 = sphi 0, %s113
      %s116 = sphi 0, %s115
      %s130 = sphi 0, %s116
      %s134 = sphi 0, %s134
      %s136 = sphi 0, %s134
      %s137 = sphi 0, %s136
      %s151 = sphi 0, %s137
      %s155 = sphi 0, %s155
      %s157 = sphi 0, %s155
      %s158 = sphi 0, %s157
      %s172 = sphi 0, %s158
      %s178 = sphi 0, %s180
      %s181 = sphi 0, %s178
      %s182 = sphi 0, %s181
      %s198 = sphi 0, %s182
    $region4: #{convnet_forward.1} parent=1 // loop_header_branch
      %19 = sbr.rel (%p17) target = $region8
    $region5: #{convnet_forward.1} parent=1 // loop_body
      %s21 = ssub.s32 %s16, 1
      %s22 = ssub.s32 %s16, 2
      %s23 = sadd.s32 %s16, 1
      %s24 = ssub.s32 %s16, %s23
      %p25 = scmp.eq.s32.totalorder %s24, 0
      %s27 = sadd.s32 %s26, 1
      %s28 = scalar_select %p25, %s26, %s27
      %p31 = pneg %p25
      %p32 = scmp.eq.s32.totalorder %s16, 1
      %p33 = por %p31, %p32
      %p34 = scmp.ne.s32.totalorder %s26, %s29
      %p35 = scmp.eq.s32.totalorder %s16, 0
      %p36 = por %p34, %p35
      %p37 = scmp.ne.s32.totalorder %s26, %s29
      %p38 = scmp.eq.s32.totalorder %s21, 1
      %p39 = por %p37, %p38
      %p40 = scmp.ne.s32.totalorder %s29, %s30
      %p41 = scmp.eq.s32.totalorder %s21, 0
      %p42 = por %p40, %p41
      %p43 = scmp.ne.s32.totalorder %s29, %s30
      %p44 = scmp.eq.s32.totalorder %s22, 1
      %p45 = por %p43, %p44
      %p47 = scmp.ne.s32.totalorder %s30, %s46
      %p48 = scmp.eq.s32.totalorder %s22, 0
      %p49 = por %p47, %p48
      %s51 = sadd.s32 %s50, 1
      %p54 = scmp.eq.s32.totalorder %s16, 1
      %p55 = scmp.ne.s32.totalorder %s50, %s52
      %p56 = scmp.eq.s32.totalorder %s16, 0
      %p57 = por %p55, %p56
      %p58 = scmp.ne.s32.totalorder %s50, %s52
      %p59 = scmp.eq.s32.totalorder %s21, 1
      %p60 = por %p58, %p59
      %p61 = scmp.ne.s32.totalorder %s52, %s53
      %p62 = scmp.eq.s32.totalorder %s21, 0
      %p63 = por %p61, %p62
      %p64 = scmp.ne.s32.totalorder %s52, %s53
      %p65 = scmp.eq.s32.totalorder %s22, 1
      %p66 = por %p64, %p65
      %p68 = scmp.ne.s32.totalorder %s53, %s67
      %p69 = scmp.eq.s32.totalorder %s22, 0
      %p70 = por %p68, %p69
      %s72 = sadd.s32 %s71, 1
      %p75 = scmp.eq.s32.totalorder %s16, 1
      %p76 = scmp.ne.s32.totalorder %s71, %s73
      %p77 = scmp.eq.s32.totalorder %s16, 0
      %p78 = por %p76, %p77
      %p79 = scmp.ne.s32.totalorder %s71, %s73
      %p80 = scmp.eq.s32.totalorder %s21, 1
      %p81 = por %p79, %p80
      %p82 = scmp.ne.s32.totalorder %s73, %s74
      %p83 = scmp.eq.s32.totalorder %s21, 0
      %p84 = por %p82, %p83
      %p85 = scmp.ne.s32.totalorder %s73, %s74
      %p86 = scmp.eq.s32.totalorder %s22, 1
      %p87 = por %p85, %p86
      %p89 = scmp.ne.s32.totalorder %s74, %s88
      %p90 = scmp.eq.s32.totalorder %s22, 0
      %p91 = por %p89, %p90
      %s93 = sadd.s32 %s92, 1
      %p96 = scmp.eq.s32.totalorder %s16, 1
      %p97 = scmp.ne.s32.totalorder %s92, %s94
      %p98 = scmp.eq.s32.totalorder %s16, 0
      %p99 = por %p97, %p98
      %p100 = scmp.ne.s32.totalorder %s92, %s94
      %p101 = scmp.eq.s32.totalorder %s21, 1
      %p102 = por %p100, %p101
      %p103 = scmp.ne.s32.totalorder %s94, %s95
      %p104 = scmp.eq.s32.totalorder %s21, 0
      %p105 = por %p103, %p104
      %p106 = scmp.ne.s32.totalorder %s94, %s95
      %p107 = scmp.eq.s32.totalorder %s22, 1
      %p108 = por %p106, %p107
      %p110 = scmp.ne.s32.totalorder %s95, %s109
      %p111 = scmp.eq.s32.totalorder %s22, 0
      %p112 = por %p110, %p111
      %s114 = sadd.s32 %s113, 1
      %p117 = scmp.eq.s32.totalorder %s16, 1
      %p118 = scmp.ne.s32.totalorder %s113, %s115
      %p119 = scmp.eq.s32.totalorder %s16, 0
      %p120 = por %p118, %p119
      %p121 = scmp.ne.s32.totalorder %s113, %s115
      %p122 = scmp.eq.s32.totalorder %s21, 1
      %p123 = por %p121, %p122
      %p124 = scmp.ne.s32.totalorder %s115, %s116
      %p125 = scmp.eq.s32.totalorder %s21, 0
      %p126 = por %p124, %p125
      %p127 = scmp.ne.s32.totalorder %s115, %s116
      %p128 = scmp.eq.s32.totalorder %s22, 1
      %p129 = por %p127, %p128
      %p131 = scmp.ne.s32.totalorder %s116, %s130
      %p132 = scmp.eq.s32.totalorder %s22, 0
      %p133 = por %p131, %p132
      %s135 = sadd.s32 %s134, 1
      %p138 = scmp.eq.s32.totalorder %s16, 1
      %p139 = scmp.ne.s32.totalorder %s134, %s136
      %p140 = scmp.eq.s32.totalorder %s16, 0
      %p141 = por %p139, %p140
      %p142 = scmp.ne.s32.totalorder %s134, %s136
      %p143 = scmp.eq.s32.totalorder %s21, 1
      %p144 = por %p142, %p143
      %p145 = scmp.ne.s32.totalorder %s136, %s137
      %p146 = scmp.eq.s32.totalorder %s21, 0
      %p147 = por %p145, %p146
      %p148 = scmp.ne.s32.totalorder %s136, %s137
      %p149 = scmp.eq.s32.totalorder %s22, 1
      %p150 = por %p148, %p149
      %p152 = scmp.ne.s32.totalorder %s137, %s151
      %p153 = scmp.eq.s32.totalorder %s22, 0
      %p154 = por %p152, %p153
      %s156 = sadd.s32 %s155, 1
      %p159 = scmp.eq.s32.totalorder %s16, 1
      %p160 = scmp.ne.s32.totalorder %s155, %s157
      %p161 = scmp.eq.s32.totalorder %s16, 0
      %p162 = por %p160, %p161
      %p163 = scmp.ne.s32.totalorder %s155, %s157
      %p164 = scmp.eq.s32.totalorder %s21, 1
      %p165 = por %p163, %p164
      %p166 = scmp.ne.s32.totalorder %s157, %s158
      %p167 = scmp.eq.s32.totalorder %s21, 0
      %p168 = por %p166, %p167
      %p169 = scmp.ne.s32.totalorder %s157, %s158
      %p170 = scmp.eq.s32.totalorder %s22, 1
      %p171 = por %p169, %p170
      %p173 = scmp.ne.s32.totalorder %s158, %s172
      %p174 = scmp.eq.s32.totalorder %s22, 0
      %p175 = por %p173, %p174
      %s176 = ssub.s32 %s16, %s23
      %p177 = scmp.eq.s32.totalorder %s176, 0
      %s179 = sadd.s32 %s178, 1
      %s180 = scalar_select %p177, %s178, %s179
      %p183 = pneg %p177
      %p184 = scmp.eq.s32.totalorder %s16, 1
      %p185 = por %p183, %p184
      %p186 = scmp.ne.s32.totalorder %s178, %s181
      %p187 = scmp.eq.s32.totalorder %s16, 0
      %p188 = por %p186, %p187
      %p189 = scmp.ne.s32.totalorder %s178, %s181
      %p190 = scmp.eq.s32.totalorder %s21, 1
      %p191 = por %p189, %p190
      %p192 = scmp.ne.s32.totalorder %s181, %s182
      %p193 = scmp.eq.s32.totalorder %s21, 0
      %p194 = por %p192, %p193
      %p195 = scmp.ne.s32.totalorder %s181, %s182
      %p196 = scmp.eq.s32.totalorder %s22, 1
      %p197 = por %p195, %p196
      %p199 = scmp.ne.s32.totalorder %s182, %s198
      %p200 = scmp.eq.s32.totalorder %s22, 0
      %p201 = por %p199, %p200
      %p202 = scmp.le.s32.totalorder 1, %s16
      %p203 = scmp.lt.s32.totalorder %s16, 3
      %p204 = pnand %p202, %p203
      %p205 = pneg %p204
      // Predicated region
      $region9: #{convnet_forward.1} parent=5 // pred_check
        _
      $region10: #{convnet_forward.1} parent=5 // pred_check_branch
        %207 = sbr.rel (%p204) target = $region12
      $region11: #{convnet_forward.1} parent=5 // pred_region
        %s208 = ssub.s32 %s16, 1
        // Predicated region
        $region13: #{convnet_forward.1} parent=11 // pred_check
          %p209 = pneg %p63
        $region14: #{convnet_forward.1} parent=11 // pred_check_branch
          %211 = sbr.rel (%p209) target = $region16
        $region15: #{convnet_forward.1} parent=11 // pred_region
          _
        $region16: #{convnet_forward.1} parent=11 // pred_fallthru
          _
        // Predicated region
        $region17: #{convnet_forward.1} parent=11 // pred_check
          %p212 = pneg %p84
        $region18: #{convnet_forward.1} parent=11 // pred_check_branch
          %214 = sbr.rel (%p212) target = $region20
        $region19: #{convnet_forward.1} parent=11 // pred_region
          _
        $region20: #{convnet_forward.1} parent=11 // pred_fallthru
          _
        // Predicated region
        $region21: #{convnet_forward.1} parent=11 // pred_check
          %p215 = pneg %p105
        $region22: #{convnet_forward.1} parent=11 // pred_check_branch
          %217 = sbr.rel (%p215) target = $region24
        $region23: #{convnet_forward.1} parent=11 // pred_region
          _
        $region24: #{convnet_forward.1} parent=11 // pred_fallthru
          _
        // Predicated region
        $region25: #{convnet_forward.1} parent=11 // pred_check
          %p218 = pneg %p126
        $region26: #{convnet_forward.1} parent=11 // pred_check_branch
          %220 = sbr.rel (%p218) target = $region28
        $region27: #{convnet_forward.1} parent=11 // pred_region
          _
        $region28: #{convnet_forward.1} parent=11 // pred_fallthru
          _
        // Predicated region
        $region29: #{convnet_forward.1} parent=11 // pred_check
          %p221 = pneg %p147
        $region30: #{convnet_forward.1} parent=11 // pred_check_branch
          %223 = sbr.rel (%p221) target = $region32
        $region31: #{convnet_forward.1} parent=11 // pred_region
          _
        $region32: #{convnet_forward.1} parent=11 // pred_fallthru
          _
        // Predicated region
        $region33: #{convnet_forward.1} parent=11 // pred_check
          %p224 = pneg %p168
        $region34: #{convnet_forward.1} parent=11 // pred_check_branch
          %226 = sbr.rel (%p224) target = $region36
        $region35: #{convnet_forward.1} parent=11 // pred_region
          _
        $region36: #{convnet_forward.1} parent=11 // pred_fallthru
          _
      $region12: #{convnet_forward.1} parent=5 // pred_fallthru
        _
      %p227 = scmp.lt.s32.totalorder %s16, 2
      // Predicated region
      $region37: #{convnet_forward.1} parent=5 // pred_check
        %p228 = pneg %p227
      $region38: #{convnet_forward.1} parent=5 // pred_check_branch
        %230 = sbr.rel (%p228) target = $region40
      $region39: #{convnet_forward.1} parent=5 // pred_region
        // Predicated region
        $region41: #{convnet_forward.1} parent=39 // pred_check
          %p231 = pneg %p36
        $region42: #{convnet_forward.1} parent=39 // pred_check_branch
          %233 = sbr.rel (%p231) target = $region44
        $region43: #{convnet_forward.1} parent=39 // pred_region
          %p234 = scmp.lt.s32.totalorder %s16, 1
          %s235 = scalar_select %p234, %s16, 1
          %s236 = smul.addr %s235, 4
          %s237 = smul.addr %s236, 4
          %s238 = scalar_lea.vmem %s0, %s237
        $region44: #{convnet_forward.1} parent=39 // pred_fallthru
          _
      $region40: #{convnet_forward.1} parent=5 // pred_fallthru
        _
      %p239 = scmp.le.s32.totalorder 1, %s16
      %p240 = scmp.lt.s32.totalorder %s16, 3
      %p241 = pnand %p239, %p240
      %p242 = pneg %p241
      // Predicated region
      $region45: #{convnet_forward.1} parent=5 // pred_check
        _
      $region46: #{convnet_forward.1} parent=5 // pred_check_branch
        %244 = sbr.rel (%p241) target = $region48
      $region47: #{convnet_forward.1} parent=5 // pred_region
        %s245 = ssub.s32 %s16, 1
        %p246 = scmp.lt.s32.totalorder %s21, 1
        %s247 = scalar_select %p246, %s21, 1
        %s248 = smul.addr %s247, 4
        %s249 = smul.addr %s248, 4
        %s250 = scalar_lea.vmem %s0, %s249
        %p251 = pneg %p42
        %p252 = pneg %p39
        %p253 = pneg %p63
        %p254 = pneg %p60
        %p255 = pneg %p84
        %p256 = pneg %p81
        %p257 = pneg %p105
        %p258 = pneg %p102
        %p259 = pneg %p126
        %p260 = pneg %p123
        %p261 = pneg %p147
        %p262 = pneg %p144
        %p263 = pneg %p168
        %p264 = pneg %p165
        %p265 = pneg %p194
        %p266 = pneg %p191
        %s267 = sand.u32 %s181, 1
        %s268 = scalar_lea.sflag [#allocation4], %s267
        %s269 = sand.u32 %s181, 1
        %s270 = scalar_lea.vmem [#allocation3], %s269
        %p271 = scmp.lt.s32.totalorder %s21, 1
        %s272 = scalar_select %p271, %s21, 1
        %s273 = smul.addr %s272, 4
        %s274 = smul.addr %s273, 4
        %s275 = scalar_lea.vmem %s0, %s274
        %v277 = vld [vmem:[%s1] sm:$0xff]
        %v278 = vld [vmem:[%s1 + $0x8] sm:$0xff]
        %v279 = vld [vmem:[%s1 + $0x10] sm:$0xff]
        %v280 = vld [vmem:[%s1 + $0x18] sm:$0xff]
        %v281 = vld [vmem:[%s1 + $0x20] sm:$0xff]
        %v282 = vld [vmem:[%s1 + $0x28] sm:$0xff]
        %v283 = vld [vmem:[%s1 + $0x30] sm:$0x33]
        %v284 = vld [vmem:[%s1 + $0x38] sm:$0x33]
        %v285 = vld [vmem:[%s275] sm:$0xf]
        %s286 = scalar_lea.vmem %s275, 4
        %v287 = vld [vmem:[%s286] sm:$0xf]
        %s288 = scalar_lea.vmem %s275, 8
        %v289 = vld [vmem:[%s288] sm:$0xf]
        %s290 = scalar_lea.vmem %s275, 12
        %v291 = vld [vmem:[%s290] sm:$0xf]
        %s292 = scalar_lea.vmem %s1, 64
        %v293 = vld [vmem:[%s292] sm:$0xff]
        %v294 = vld [vmem:[%s292 + $0x8] sm:$0xff]
        %v295 = vld [vmem:[%s292 + $0x10] sm:$0xff]
        %v296 = vld [vmem:[%s292 + $0x18] sm:$0xff]
        %v297 = vld [vmem:[%s292 + $0x20] sm:$0xff]
        %v298 = vld [vmem:[%s292 + $0x28] sm:$0xff]
        %v299 = vld [vmem:[%s292 + $0x30] sm:$0x33]
        %v300 = vld [vmem:[%s292 + $0x38] sm:$0x33]
        %v309 = vunpack.c.l.b16 %v293
        %v310 = vunpack.c.h.b16 %v293
        %v311 = vunpack.c.l.b16 %v294
        %v312 = vunpack.c.h.b16 %v294
        %v313 = vunpack.c.l.b16 %v295
        %v314 = vunpack.c.h.b16 %v295
        %v315 = vunpack.c.l.b16 %v296
        %v316 = vunpack.c.h.b16 %v296
        %v317 = vunpack.c.l.b16 %v297
        %v318 = vunpack.c.h.b16 %v297
        %v319 = vunpack.c.l.b16 %v298
        %v320 = vunpack.c.h.b16 %v298
        %v321 = vunpack.c.l.b16 %v299
        %v322 = vunpack.c.h.b16 %v299
        %v323 = vunpack.c.l.b16 %v300
        %v324 = vunpack.c.h.b16 %v300
        %v325 = vpack.c.b16 %v313, %v309
        %v326 = vpack.c.b16 %v314, %v310
        %v327 = vpack.c.b16 %v315, %v311
        %v328 = vpack.c.b16 %v316, %v312
        %v329 = vpack.c.b16 %v321, %v317
        %v330 = vpack.c.b16 %v322, %v318
        %v331 = vpack.c.b16 %v323, %v319
        %v332 = vpack.c.b16 %v324, %v320
        %vm337 = vcmask 228352
        %v339 = vsel %vm337, %v287, 0
        %vm341 = vcmask 1045504
        %v343 = vsel %vm341, %v329, 0
        %v346 = vsel %vm341, %v330, 0
        %v349 = vsel %vm341, %v331, 0
        %v352 = vsel %vm341, %v332, 0
        %354 = vmatprep.subr.bf16.mxu0 %v326
        %355 = vmatpush1.bf16.msra.mxu0 %v325
        %356 = vmatprep.subr.bf16.mxu0 %v346
        %357 = vmatpush1.bf16.msra.mxu0 %v343
        %358 = vmatprep.subr.bf16.mxu0 0
        %359 = vmatpush1.bf16.msra.mxu0 0
        %360 = vmatprep.subr.bf16.mxu0 0
        %361 = vmatpush1.bf16.msra.mxu0 0
        %362 = vmatprep.subr.bf16.mxu0 0
        %363 = vmatpush1.bf16.msra.mxu0 0
        %364 = vmatprep.subr.bf16.mxu0 0
        %365 = vmatpush1.bf16.msra.mxu0 0
        %366 = vmatprep.subr.bf16.mxu0 0
        %367 = vmatpush1.bf16.msra.mxu0 0
        %368 = vmatprep.subr.bf16.mxu0 0
        %369 = vmatpush1.bf16.msra.mxu0 0
        %370 = vmatprep.subr.bf16.mxu0 0
        %371 = vmatpush1.bf16.msra.mxu0 0
        %372 = vmatprep.subr.bf16.mxu0 0
        %373 = vmatpush1.bf16.msra.mxu0 0
        %374 = vmatprep.subr.bf16.mxu0 0
        %375 = vmatpush1.bf16.msra.mxu0 0
        %376 = vmatprep.subr.bf16.mxu0 0
        %377 = vmatpush1.bf16.msra.mxu0 0
        %378 = vmatprep.subr.bf16.mxu0 0
        %379 = vmatpush1.bf16.msra.mxu0 0
        %380 = vmatprep.subr.bf16.mxu0 0
        %381 = vmatpush1.bf16.msra.mxu0 0
        %382 = vmatprep.subr.bf16.mxu0 0
        %383 = vmatpush1.bf16.msra.mxu0 0
        %384 = vmatprep.subr.bf16.mxu0 0
        %385 = vmatpush1.bf16.msra.mxu0 0
        %386 = vmatprep.mubr.bf16.mxu0 0
        %387 = vmatmul.mubr.bf16.gmra.mrb[0].mxu0 %v339
        %v388 = vpop.f32.mrb[0].mxu0
        %v389 = vadd.f32 0.0, %v388
        %v390 = vpop.f32.mrb[0].mxu0
        %v391 = vadd.f32 0.0, %v390
        %v392 = vpop.f32.mrb[0].mxu0
        %v393 = vpop.f32.mrb[0].mxu0
        %394 = vdwg.mxu0
        %395 = vmatprep.subr.bf16.mxu0 %v328
        %396 = vmatpush1.bf16.msra.mxu0 %v327
        %397 = vmatprep.subr.bf16.mxu0 %v352
        %398 = vmatpush1.bf16.msra.mxu0 %v349
        %399 = vmatprep.subr.bf16.mxu0 0
        %400 = vmatpush1.bf16.msra.mxu0 0
        %401 = vmatprep.subr.bf16.mxu0 0
        %402 = vmatpush1.bf16.msra.mxu0 0
        %403 = vmatprep.subr.bf16.mxu0 0
        %404 = vmatpush1.bf16.msra.mxu0 0
        %405 = vmatprep.subr.bf16.mxu0 0
        %406 = vmatpush1.bf16.msra.mxu0 0
        %407 = vmatprep.subr.bf16.mxu0 0
        %408 = vmatpush1.bf16.msra.mxu0 0
        %409 = vmatprep.subr.bf16.mxu0 0
        %410 = vmatpush1.bf16.msra.mxu0 0
        %411 = vmatprep.subr.bf16.mxu0 0
        %412 = vmatpush1.bf16.msra.mxu0 0
        %413 = vmatprep.subr.bf16.mxu0 0
        %414 = vmatpush1.bf16.msra.mxu0 0
        %415 = vmatprep.subr.bf16.mxu0 0
        %416 = vmatpush1.bf16.msra.mxu0 0
        %417 = vmatprep.subr.bf16.mxu0 0
        %418 = vmatpush1.bf16.msra.mxu0 0
        %419 = vmatprep.subr.bf16.mxu0 0
        %420 = vmatpush1.bf16.msra.mxu0 0
        %421 = vmatprep.subr.bf16.mxu0 0
        %422 = vmatpush1.bf16.msra.mxu0 0
        %423 = vmatprep.subr.bf16.mxu0 0
        %424 = vmatpush1.bf16.msra.mxu0 0
        %425 = vmatprep.subr.bf16.mxu0 0
        %426 = vmatpush1.bf16.msra.mxu0 0
        %427 = vmatprep.mubr.bf16.mxu0 0
        %428 = vmatmul.mubr.bf16.gmra.mrb[0].mxu0 %v339
        %v429 = vpop.f32.mrb[0].mxu0
        %v430 = vadd.f32 0.0, %v429
        %v431 = vpop.f32.mrb[0].mxu0
        %v432 = vadd.f32 0.0, %v431
        %v433 = vpop.f32.mrb[0].mxu0
        %v434 = vpop.f32.mrb[0].mxu0
        %435 = vdwg.mxu0
        %v444 = vunpack.c.l.b16 %v277
        %v445 = vunpack.c.h.b16 %v277
        %v446 = vunpack.c.l.b16 %v278
        %v447 = vunpack.c.h.b16 %v278
        %v448 = vunpack.c.l.b16 %v279
        %v449 = vunpack.c.h.b16 %v279
        %v450 = vunpack.c.l.b16 %v280
        %v451 = vunpack.c.h.b16 %v280
        %v452 = vunpack.c.l.b16 %v281
        %v453 = vunpack.c.h.b16 %v281
        %v454 = vunpack.c.l.b16 %v282
        %v455 = vunpack.c.h.b16 %v282
        %v456 = vunpack.c.l.b16 %v283
        %v457 = vunpack.c.h.b16 %v283
        %v458 = vunpack.c.l.b16 %v284
        %v459 = vunpack.c.h.b16 %v284
        %v460 = vpack.c.b16 %v448, %v444
        %v461 = vpack.c.b16 %v449, %v445
        %v462 = vpack.c.b16 %v450, %v446
        %v463 = vpack.c.b16 %v451, %v447
        %v464 = vpack.c.b16 %v456, %v452
        %v465 = vpack.c.b16 %v457, %v453
        %v466 = vpack.c.b16 %v458, %v454
        %v467 = vpack.c.b16 %v459, %v455
        %v473 = vsel %vm337, %v285, 0
        %v476 = vsel %vm341, %v464, 0
        %v479 = vsel %vm341, %v465, 0
        %v482 = vsel %vm341, %v466, 0
        %v485 = vsel %vm341, %v467, 0
        %487 = vmatprep.subr.bf16.mxu0 %v461
        %488 = vmatpush1.bf16.msra.mxu0 %v460
        %489 = vmatprep.subr.bf16.mxu0 %v479
        %490 = vmatpush1.bf16.msra.mxu0 %v476
        %491 = vmatprep.subr.bf16.mxu0 0
        %492 = vmatpush1.bf16.msra.mxu0 0
        %493 = vmatprep.subr.bf16.mxu0 0
        %494 = vmatpush1.bf16.msra.mxu0 0
        %495 = vmatprep.subr.bf16.mxu0 0
        %496 = vmatpush1.bf16.msra.mxu0 0
        %497 = vmatprep.subr.bf16.mxu0 0
        %498 = vmatpush1.bf16.msra.mxu0 0
        %499 = vmatprep.subr.bf16.mxu0 0
        %500 = vmatpush1.bf16.msra.mxu0 0
        %501 = vmatprep.subr.bf16.mxu0 0
        %502 = vmatpush1.bf16.msra.mxu0 0
        %503 = vmatprep.subr.bf16.mxu0 0
        %504 = vmatpush1.bf16.msra.mxu0 0
        %505 = vmatprep.subr.bf16.mxu0 0
        %506 = vmatpush1.bf16.msra.mxu0 0
        %507 = vmatprep.subr.bf16.mxu0 0
        %508 = vmatpush1.bf16.msra.mxu0 0
        %509 = vmatprep.subr.bf16.mxu0 0
        %510 = vmatpush1.bf16.msra.mxu0 0
        %511 = vmatprep.subr.bf16.mxu0 0
        %512 = vmatpush1.bf16.msra.mxu0 0
        %513 = vmatprep.subr.bf16.mxu0 0
        %514 = vmatpush1.bf16.msra.mxu0 0
        %515 = vmatprep.subr.bf16.mxu0 0
        %516 = vmatpush1.bf16.msra.mxu0 0
        %517 = vmatprep.subr.bf16.mxu0 0
        %518 = vmatpush1.bf16.msra.mxu0 0
        %519 = vmatprep.mubr.bf16.mxu0 0
        %520 = vmatmul.mubr.bf16.gmra.mrb[0].mxu0 %v473
        %v521 = vpop.f32.mrb[0].mxu0
        %v522 = vadd.f32 %v389, %v521
        %v523 = vpop.f32.mrb[0].mxu0
        %v524 = vadd.f32 %v391, %v523
        %v525 = vpop.f32.mrb[0].mxu0
        %v526 = vpop.f32.mrb[0].mxu0
        %527 = vdwg.mxu0
        %528 = vmatprep.subr.bf16.mxu0 %v463
        %529 = vmatpush1.bf16.msra.mxu0 %v462
        %530 = vmatprep.subr.bf16.mxu0 %v485
        %531 = vmatpush1.bf16.msra.mxu0 %v482
        %532 = vmatprep.subr.bf16.mxu0 0
        %533 = vmatpush1.bf16.msra.mxu0 0
        %534 = vmatprep.subr.bf16.mxu0 0
        %535 = vmatpush1.bf16.msra.mxu0 0
        %536 = vmatprep.subr.bf16.mxu0 0
        %537 = vmatpush1.bf16.msra.mxu0 0
        %538 = vmatprep.subr.bf16.mxu0 0
        %539 = vmatpush1.bf16.msra.mxu0 0
        %540 = vmatprep.subr.bf16.mxu0 0
        %541 = vmatpush1.bf16.msra.mxu0 0
        %542 = vmatprep.subr.bf16.mxu0 0
        %543 = vmatpush1.bf16.msra.mxu0 0
        %544 = vmatprep.subr.bf16.mxu0 0
        %545 = vmatpush1.bf16.msra.mxu0 0
        %546 = vmatprep.subr.bf16.mxu0 0
        %547 = vmatpush1.bf16.msra.mxu0 0
        %548 = vmatprep.subr.bf16.mxu0 0
        %549 = vmatpush1.bf16.msra.mxu0 0
        %550 = vmatprep.subr.bf16.mxu0 0
        %551 = vmatpush1.bf16.msra.mxu0 0
        %552 = vmatprep.subr.bf16.mxu0 0
        %553 = vmatpush1.bf16.msra.mxu0 0
        %554 = vmatprep.subr.bf16.mxu0 0
        %555 = vmatpush1.bf16.msra.mxu0 0
        %556 = vmatprep.subr.bf16.mxu0 0
        %557 = vmatpush1.bf16.msra.mxu0 0
        %558 = vmatprep.subr.bf16.mxu0 0
        %559 = vmatpush1.bf16.msra.mxu0 0
        %560 = vmatprep.mubr.bf16.mxu0 0
        %561 = vmatmul.mubr.bf16.gmra.mrb[0].mxu0 %v473
        %v562 = vpop.f32.mrb[0].mxu0
        %v563 = vadd.f32 %v430, %v562
        %v564 = vpop.f32.mrb[0].mxu0
        %v565 = vadd.f32 %v432, %v564
        %v566 = vpop.f32.mrb[0].mxu0
        %v567 = vpop.f32.mrb[0].mxu0
        %568 = vdwg.mxu0
        %v570 = vsel %vm337, %v289, 0
        %572 = vmatprep.subr.bf16.mxu0 %v326
        %573 = vmatpush1.bf16.msra.mxu0 %v325
        %574 = vmatprep.subr.bf16.mxu0 %v346
        %575 = vmatpush1.bf16.msra.mxu0 %v343
        %576 = vmatprep.subr.bf16.mxu0 0
        %577 = vmatpush1.bf16.msra.mxu0 0
        %578 = vmatprep.subr.bf16.mxu0 0
        %579 = vmatpush1.bf16.msra.mxu0 0
        %580 = vmatprep.subr.bf16.mxu0 0
        %581 = vmatpush1.bf16.msra.mxu0 0
        %582 = vmatprep.subr.bf16.mxu0 0
        %583 = vmatpush1.bf16.msra.mxu0 0
        %584 = vmatprep.subr.bf16.mxu0 0
        %585 = vmatpush1.bf16.msra.mxu0 0
        %586 = vmatprep.subr.bf16.mxu0 0
        %587 = vmatpush1.bf16.msra.mxu0 0
        %588 = vmatprep.subr.bf16.mxu0 0
        %589 = vmatpush1.bf16.msra.mxu0 0
        %590 = vmatprep.subr.bf16.mxu0 0
        %591 = vmatpush1.bf16.msra.mxu0 0
        %592 = vmatprep.subr.bf16.mxu0 0
        %593 = vmatpush1.bf16.msra.mxu0 0
        %594 = vmatprep.subr.bf16.mxu0 0
        %595 = vmatpush1.bf16.msra.mxu0 0
        %596 = vmatprep.subr.bf16.mxu0 0
        %597 = vmatpush1.bf16.msra.mxu0 0
        %598 = vmatprep.subr.bf16.mxu0 0
        %599 = vmatpush1.bf16.msra.mxu0 0
        %600 = vmatprep.subr.bf16.mxu0 0
        %601 = vmatpush1.bf16.msra.mxu0 0
        %602 = vmatprep.subr.bf16.mxu0 0
        %603 = vmatpush1.bf16.msra.mxu0 0
        %604 = vmatprep.mubr.bf16.mxu0 0
        %605 = vmatmul.mubr.bf16.gmra.mrb[0].mxu0 %v570
        %v606 = vpop.f32.mrb[0].mxu0
        %v607 = vadd.f32 0.0, %v606
        %v608 = vpop.f32.mrb[0].mxu0
        %v609 = vadd.f32 0.0, %v608
        %v610 = vpop.f32.mrb[0].mxu0
        %v611 = vpop.f32.mrb[0].mxu0
        %612 = vdwg.mxu0
        %613 = vmatprep.subr.bf16.mxu0 %v328
        %614 = vmatpush1.bf16.msra.mxu0 %v327
        %615 = vmatprep.subr.bf16.mxu0 %v352
        %616 = vmatpush1.bf16.msra.mxu0 %v349
        %617 = vmatprep.subr.bf16.mxu0 0
        %618 = vmatpush1.bf16.msra.mxu0 0
        %619 = vmatprep.subr.bf16.mxu0 0
        %620 = vmatpush1.bf16.msra.mxu0 0
        %621 = vmatprep.subr.bf16.mxu0 0
        %622 = vmatpush1.bf16.msra.mxu0 0
        %623 = vmatprep.subr.bf16.mxu0 0
        %624 = vmatpush1.bf16.msra.mxu0 0
        %625 = vmatprep.subr.bf16.mxu0 0
        %626 = vmatpush1.bf16.msra.mxu0 0
        %627 = vmatprep.subr.bf16.mxu0 0
        %628 = vmatpush1.bf16.msra.mxu0 0
        %629 = vmatprep.subr.bf16.mxu0 0
        %630 = vmatpush1.bf16.msra.mxu0 0
        %631 = vmatprep.subr.bf16.mxu0 0
        %632 = vmatpush1.bf16.msra.mxu0 0
        %633 = vmatprep.subr.bf16.mxu0 0
        %634 = vmatpush1.bf16.msra.mxu0 0
        %635 = vmatprep.subr.bf16.mxu0 0
        %636 = vmatpush1.bf16.msra.mxu0 0
        %637 = vmatprep.subr.bf16.mxu0 0
        %638 = vmatpush1.bf16.msra.mxu0 0
        %639 = vmatprep.subr.bf16.mxu0 0
        %640 = vmatpush1.bf16.msra.mxu0 0
        %641 = vmatprep.subr.bf16.mxu0 0
        %642 = vmatpush1.bf16.msra.mxu0 0
        %643 = vmatprep.subr.bf16.mxu0 0
        %644 = vmatpush1.bf16.msra.mxu0 0
        %645 = vmatprep.mubr.bf16.mxu0 0
        %646 = vmatmul.mubr.bf16.gmra.mrb[0].mxu0 %v570
        %v647 = vpop.f32.mrb[0].mxu0
        %v648 = vadd.f32 0.0, %v647
        %v649 = vpop.f32.mrb[0].mxu0
        %v650 = vadd.f32 0.0, %v649
        %v651 = vpop.f32.mrb[0].mxu0
        %v652 = vpop.f32.mrb[0].mxu0
        %653 = vdwg.mxu0
        %654 = vmatprep.subr.bf16.mxu0 %v461
        %655 = vmatpush1.bf16.msra.mxu0 %v460
        %656 = vmatprep.subr.bf16.mxu0 %v479
        %657 = vmatpush1.bf16.msra.mxu0 %v476
        %658 = vmatprep.subr.bf16.mxu0 0
        %659 = vmatpush1.bf16.msra.mxu0 0
        %660 = vmatprep.subr.bf16.mxu0 0
        %661 = vmatpush1.bf16.msra.mxu0 0
        %662 = vmatprep.subr.bf16.mxu0 0
        %663 = vmatpush1.bf16.msra.mxu0 0
        %664 = vmatprep.subr.bf16.mxu0 0
        %665 = vmatpush1.bf16.msra.mxu0 0
        %666 = vmatprep.subr.bf16.mxu0 0
        %667 = vmatpush1.bf16.msra.mxu0 0
        %668 = vmatprep.subr.bf16.mxu0 0
        %669 = vmatpush1.bf16.msra.mxu0 0
        %670 = vmatprep.subr.bf16.mxu0 0
        %671 = vmatpush1.bf16.msra.mxu0 0
        %672 = vmatprep.subr.bf16.mxu0 0
        %673 = vmatpush1.bf16.msra.mxu0 0
        %674 = vmatprep.subr.bf16.mxu0 0
        %675 = vmatpush1.bf16.msra.mxu0 0
        %676 = vmatprep.subr.bf16.mxu0 0
        %677 = vmatpush1.bf16.msra.mxu0 0
        %678 = vmatprep.subr.bf16.mxu0 0
        %679 = vmatpush1.bf16.msra.mxu0 0
        %680 = vmatprep.subr.bf16.mxu0 0
        %681 = vmatpush1.bf16.msra.mxu0 0
        %682 = vmatprep.subr.bf16.mxu0 0
        %683 = vmatpush1.bf16.msra.mxu0 0
        %684 = vmatprep.subr.bf16.mxu0 0
        %685 = vmatpush1.bf16.msra.mxu0 0
        %686 = vmatprep.mubr.bf16.mxu0 0
        %687 = vmatmul.mubr.bf16.gmra.mrb[0].mxu0 %v339
        %v688 = vpop.f32.mrb[0].mxu0
        %v689 = vadd.f32 %v607, %v688
        %v690 = vpop.f32.mrb[0].mxu0
        %v691 = vadd.f32 %v609, %v690
        %v692 = vpop.f32.mrb[0].mxu0
        %v693 = vpop.f32.mrb[0].mxu0
        %694 = vdwg.mxu0
        %695 = vmatprep.subr.bf16.mxu0 %v463
        %696 = vmatpush1.bf16.msra.mxu0 %v462
        %697 = vmatprep.subr.bf16.mxu0 %v485
        %698 = vmatpush1.bf16.msra.mxu0 %v482
        %699 = vmatprep.subr.bf16.mxu0 0
        %700 = vmatpush1.bf16.msra.mxu0 0
        %701 = vmatprep.subr.bf16.mxu0 0
        %702 = vmatpush1.bf16.msra.mxu0 0
        %703 = vmatprep.subr.bf16.mxu0 0
        %704 = vmatpush1.bf16.msra.mxu0 0
        %705 = vmatprep.subr.bf16.mxu0 0
        %706 = vmatpush1.bf16.msra.mxu0 0
        %707 = vmatprep.subr.bf16.mxu0 0
        %708 = vmatpush1.bf16.msra.mxu0 0
        %709 = vmatprep.subr.bf16.mxu0 0
        %710 = vmatpush1.bf16.msra.mxu0 0
        %711 = vmatprep.subr.bf16.mxu0 0
        %712 = vmatpush1.bf16.msra.mxu0 0
        %713 = vmatprep.subr.bf16.mxu0 0
        %714 = vmatpush1.bf16.msra.mxu0 0
        %715 = vmatprep.subr.bf16.mxu0 0
        %716 = vmatpush1.bf16.msra.mxu0 0
        %717 = vmatprep.subr.bf16.mxu0 0
        %718 = vmatpush1.bf16.msra.mxu0 0
        %719 = vmatprep.subr.bf16.mxu0 0
        %720 = vmatpush1.bf16.msra.mxu0 0
        %721 = vmatprep.subr.bf16.mxu0 0
        %722 = vmatpush1.bf16.msra.mxu0 0
        %723 = vmatprep.subr.bf16.mxu0 0
        %724 = vmatpush1.bf16.msra.mxu0 0
        %725 = vmatprep.subr.bf16.mxu0 0
        %726 = vmatpush1.bf16.msra.mxu0 0
        %727 = vmatprep.mubr.bf16.mxu0 0
        %728 = vmatmul.mubr.bf16.gmra.mrb[0].mxu0 %v339
        %v729 = vpop.f32.mrb[0].mxu0
        %v730 = vadd.f32 %v648, %v729
        %v731 = vpop.f32.mrb[0].mxu0
        %v732 = vadd.f32 %v650, %v731
        %v733 = vpop.f32.mrb[0].mxu0
        %v734 = vpop.f32.mrb[0].mxu0
        %735 = vdwg.mxu0
        %v737 = vsel %vm337, %v291, 0
        %739 = vmatprep.subr.bf16.mxu0 %v326
        %740 = vmatpush1.bf16.msra.mxu0 %v325
        %741 = vmatprep.subr.bf16.mxu0 %v346
        %742 = vmatpush1.bf16.msra.mxu0 %v343
        %743 = vmatprep.subr.bf16.mxu0 0
        %744 = vmatpush1.bf16.msra.mxu0 0
        %745 = vmatprep.subr.bf16.mxu0 0
        %746 = vmatpush1.bf16.msra.mxu0 0
        %747 = vmatprep.subr.bf16.mxu0 0
        %748 = vmatpush1.bf16.msra.mxu0 0
        %749 = vmatprep.subr.bf16.mxu0 0
        %750 = vmatpush1.bf16.msra.mxu0 0
        %751 = vmatprep.subr.bf16.mxu0 0
        %752 = vmatpush1.bf16.msra.mxu0 0
        %753 = vmatprep.subr.bf16.mxu0 0
        %754 = vmatpush1.bf16.msra.mxu0 0
        %755 = vmatprep.subr.bf16.mxu0 0
        %756 = vmatpush1.bf16.msra.mxu0 0
        %757 = vmatprep.subr.bf16.mxu0 0
        %758 = vmatpush1.bf16.msra.mxu0 0
        %759 = vmatprep.subr.bf16.mxu0 0
        %760 = vmatpush1.bf16.msra.mxu0 0
        %761 = vmatprep.subr.bf16.mxu0 0
        %762 = vmatpush1.bf16.msra.mxu0 0
        %763 = vmatprep.subr.bf16.mxu0 0
        %764 = vmatpush1.bf16.msra.mxu0 0
        %765 = vmatprep.subr.bf16.mxu0 0
        %766 = vmatpush1.bf16.msra.mxu0 0
        %767 = vmatprep.subr.bf16.mxu0 0
        %768 = vmatpush1.bf16.msra.mxu0 0
        %769 = vmatprep.subr.bf16.mxu0 0
        %770 = vmatpush1.bf16.msra.mxu0 0
        %771 = vmatprep.mubr.bf16.mxu0 0
        %772 = vmatmul.mubr.bf16.gmra.mrb[0].mxu0 %v737
        %v773 = vpop.f32.mrb[0].mxu0
        %v774 = vadd.f32 0.0, %v773
        %v775 = vpop.f32.mrb[0].mxu0
        %v776 = vadd.f32 0.0, %v775
        %v777 = vpop.f32.mrb[0].mxu0
        %v778 = vpop.f32.mrb[0].mxu0
        %779 = vdwg.mxu0
        %780 = vmatprep.subr.bf16.mxu0 %v328
        %781 = vmatpush1.bf16.msra.mxu0 %v327
        %782 = vmatprep.subr.bf16.mxu0 %v352
        %783 = vmatpush1.bf16.msra.mxu0 %v349
        %784 = vmatprep.subr.bf16.mxu0 0
        %785 = vmatpush1.bf16.msra.mxu0 0
        %786 = vmatprep.subr.bf16.mxu0 0
        %787 = vmatpush1.bf16.msra.mxu0 0
        %788 = vmatprep.subr.bf16.mxu0 0
        %789 = vmatpush1.bf16.msra.mxu0 0
        %790 = vmatprep.subr.bf16.mxu0 0
        %791 = vmatpush1.bf16.msra.mxu0 0
        %792 = vmatprep.subr.bf16.mxu0 0
        %793 = vmatpush1.bf16.msra.mxu0 0
        %794 = vmatprep.subr.bf16.mxu0 0
        %795 = vmatpush1.bf16.msra.mxu0 0
        %796 = vmatprep.subr.bf16.mxu0 0
        %797 = vmatpush1.bf16.msra.mxu0 0
        %798 = vmatprep.subr.bf16.mxu0 0
        %799 = vmatpush1.bf16.msra.mxu0 0
        %800 = vmatprep.subr.bf16.mxu0 0
        %801 = vmatpush1.bf16.msra.mxu0 0
        %802 = vmatprep.subr.bf16.mxu0 0
        %803 = vmatpush1.bf16.msra.mxu0 0
        %804 = vmatprep.subr.bf16.mxu0 0
        %805 = vmatpush1.bf16.msra.mxu0 0
        %806 = vmatprep.subr.bf16.mxu0 0
        %807 = vmatpush1.bf16.msra.mxu0 0
        %808 = vmatprep.subr.bf16.mxu0 0
        %809 = vmatpush1.bf16.msra.mxu0 0
        %810 = vmatprep.subr.bf16.mxu0 0
        %811 = vmatpush1.bf16.msra.mxu0 0
        %812 = vmatprep.mubr.bf16.mxu0 0
        %813 = vmatmul.mubr.bf16.gmra.mrb[0].mxu0 %v737
        %v814 = vpop.f32.mrb[0].mxu0
        %v815 = vadd.f32 0.0, %v814
        %v816 = vpop.f32.mrb[0].mxu0
        %v817 = vadd.f32 0.0, %v816
        %v818 = vpop.f32.mrb[0].mxu0
        %v819 = vpop.f32.mrb[0].mxu0
        %820 = vdwg.mxu0
        %821 = vmatprep.subr.bf16.mxu0 %v461
        %822 = vmatpush1.bf16.msra.mxu0 %v460
        %823 = vmatprep.subr.bf16.mxu0 %v479
        %824 = vmatpush1.bf16.msra.mxu0 %v476
        %825 = vmatprep.subr.bf16.mxu0 0
        %826 = vmatpush1.bf16.msra.mxu0 0
        %827 = vmatprep.subr.bf16.mxu0 0
        %828 = vmatpush1.bf16.msra.mxu0 0
        %829 = vmatprep.subr.bf16.mxu0 0
        %830 = vmatpush1.bf16.msra.mxu0 0
        %831 = vmatprep.subr.bf16.mxu0 0
        %832 = vmatpush1.bf16.msra.mxu0 0
        %833 = vmatprep.subr.bf16.mxu0 0
        %834 = vmatpush1.bf16.msra.mxu0 0
        %835 = vmatprep.subr.bf16.mxu0 0
        %836 = vmatpush1.bf16.msra.mxu0 0
        %837 = vmatprep.subr.bf16.mxu0 0
        %838 = vmatpush1.bf16.msra.mxu0 0
        %839 = vmatprep.subr.bf16.mxu0 0
        %840 = vmatpush1.bf16.msra.mxu0 0
        %841 = vmatprep.subr.bf16.mxu0 0
        %842 = vmatpush1.bf16.msra.mxu0 0
        %843 = vmatprep.subr.bf16.mxu0 0
        %844 = vmatpush1.bf16.msra.mxu0 0
        %845 = vmatprep.subr.bf16.mxu0 0
        %846 = vmatpush1.bf16.msra.mxu0 0
        %847 = vmatprep.subr.bf16.mxu0 0
        %848 = vmatpush1.bf16.msra.mxu0 0
        %849 = vmatprep.subr.bf16.mxu0 0
        %850 = vmatpush1.bf16.msra.mxu0 0
        %851 = vmatprep.subr.bf16.mxu0 0
        %852 = vmatpush1.bf16.msra.mxu0 0
        %853 = vmatprep.mubr.bf16.mxu0 0
        %854 = vmatmul.mubr.bf16.gmra.mrb[0].mxu0 %v570
        %v855 = vpop.f32.mrb[0].mxu0
        %v856 = vadd.f32 %v774, %v855
        %v857 = vpop.f32.mrb[0].mxu0
        %v858 = vadd.f32 %v776, %v857
        %v859 = vpop.f32.mrb[0].mxu0
        %v860 = vpop.f32.mrb[0].mxu0
        %861 = vdwg.mxu0
        %862 = vmatprep.subr.bf16.mxu0 %v463
        %863 = vmatpush1.bf16.msra.mxu0 %v462
        %864 = vmatprep.subr.bf16.mxu0 %v485
        %865 = vmatpush1.bf16.msra.mxu0 %v482
        %866 = vmatprep.subr.bf16.mxu0 0
        %867 = vmatpush1.bf16.msra.mxu0 0
        %868 = vmatprep.subr.bf16.mxu0 0
        %869 = vmatpush1.bf16.msra.mxu0 0
        %870 = vmatprep.subr.bf16.mxu0 0
        %871 = vmatpush1.bf16.msra.mxu0 0
        %872 = vmatprep.subr.bf16.mxu0 0
        %873 = vmatpush1.bf16.msra.mxu0 0
        %874 = vmatprep.subr.bf16.mxu0 0
        %875 = vmatpush1.bf16.msra.mxu0 0
        %876 = vmatprep.subr.bf16.mxu0 0
        %877 = vmatpush1.bf16.msra.mxu0 0
        %878 = vmatprep.subr.bf16.mxu0 0
        %879 = vmatpush1.bf16.msra.mxu0 0
        %880 = vmatprep.subr.bf16.mxu0 0
        %881 = vmatpush1.bf16.msra.mxu0 0
        %882 = vmatprep.subr.bf16.mxu0 0
        %883 = vmatpush1.bf16.msra.mxu0 0
        %884 = vmatprep.subr.bf16.mxu0 0
        %885 = vmatpush1.bf16.msra.mxu0 0
        %886 = vmatprep.subr.bf16.mxu0 0
        %887 = vmatpush1.bf16.msra.mxu0 0
        %888 = vmatprep.subr.bf16.mxu0 0
        %889 = vmatpush1.bf16.msra.mxu0 0
        %890 = vmatprep.subr.bf16.mxu0 0
        %891 = vmatpush1.bf16.msra.mxu0 0
        %892 = vmatprep.subr.bf16.mxu0 0
        %893 = vmatpush1.bf16.msra.mxu0 0
        %894 = vmatprep.mubr.bf16.mxu0 0
        %895 = vmatmul.mubr.bf16.gmra.mrb[0].mxu0 %v570
        %v896 = vpop.f32.mrb[0].mxu0
        %v897 = vadd.f32 %v815, %v896
        %v898 = vpop.f32.mrb[0].mxu0
        %v899 = vadd.f32 %v817, %v898
        %v900 = vpop.f32.mrb[0].mxu0
        %v901 = vpop.f32.mrb[0].mxu0
        %902 = vdwg.mxu0
        %v904 = vunpack.c.l.b16 %v285
        %v905 = vpack.c.b16 %v904, %v904
        %v907 = vshrl.u32 %v905, 16
        %v909 = vshll.u32 %v905, 16
        %v911 = vrot.slane %v909, 1
        %v912 = vor.u32 %v907, %v911
        %v914 = vsel %vm337, %v912, 0
        %916 = vmatprep.subr.bf16.mxu0 %v326
        %917 = vmatpush1.bf16.msra.mxu0 %v325
        %918 = vmatprep.subr.bf16.mxu0 %v346
        %919 = vmatpush1.bf16.msra.mxu0 %v343
        %920 = vmatprep.subr.bf16.mxu0 0
        %921 = vmatpush1.bf16.msra.mxu0 0
        %922 = vmatprep.subr.bf16.mxu0 0
        %923 = vmatpush1.bf16.msra.mxu0 0
        %924 = vmatprep.subr.bf16.mxu0 0
        %925 = vmatpush1.bf16.msra.mxu0 0
        %926 = vmatprep.subr.bf16.mxu0 0
        %927 = vmatpush1.bf16.msra.mxu0 0
        %928 = vmatprep.subr.bf16.mxu0 0
        %929 = vmatpush1.bf16.msra.mxu0 0
        %930 = vmatprep.subr.bf16.mxu0 0
        %931 = vmatpush1.bf16.msra.mxu0 0
        %932 = vmatprep.subr.bf16.mxu0 0
        %933 = vmatpush1.bf16.msra.mxu0 0
        %934 = vmatprep.subr.bf16.mxu0 0
        %935 = vmatpush1.bf16.msra.mxu0 0
        %936 = vmatprep.subr.bf16.mxu0 0
        %937 = vmatpush1.bf16.msra.mxu0 0
        %938 = vmatprep.subr.bf16.mxu0 0
        %939 = vmatpush1.bf16.msra.mxu0 0
        %940 = vmatprep.subr.bf16.mxu0 0
        %941 = vmatpush1.bf16.msra.mxu0 0
        %942 = vmatprep.subr.bf16.mxu0 0
        %943 = vmatpush1.bf16.msra.mxu0 0
        %944 = vmatprep.subr.bf16.mxu0 0
        %945 = vmatpush1.bf16.msra.mxu0 0
        %946 = vmatprep.subr.bf16.mxu0 0
        %947 = vmatpush1.bf16.msra.mxu0 0
        %948 = vmatprep.mubr.bf16.mxu0 0
        %949 = vmatmul.mubr.bf16.gmra.mrb[0].mxu0 %v914
        %v950 = vpop.f32.mrb[0].mxu0
        %v951 = vadd.f32 0.0, %v950
        %v952 = vpop.f32.mrb[0].mxu0
        %v953 = vadd.f32 0.0, %v952
        %v954 = vpop.f32.mrb[0].mxu0
        %v955 = vpop.f32.mrb[0].mxu0
        %956 = vdwg.mxu0
        %957 = vmatprep.subr.bf16.mxu0 %v328
        %958 = vmatpush1.bf16.msra.mxu0 %v327
        %959 = vmatprep.subr.bf16.mxu0 %v352
        %960 = vmatpush1.bf16.msra.mxu0 %v349
        %961 = vmatprep.subr.bf16.mxu0 0
        %962 = vmatpush1.bf16.msra.mxu0 0
        %963 = vmatprep.subr.bf16.mxu0 0
        %964 = vmatpush1.bf16.msra.mxu0 0
        %965 = vmatprep.subr.bf16.mxu0 0
        %966 = vmatpush1.bf16.msra.mxu0 0
        %967 = vmatprep.subr.bf16.mxu0 0
        %968 = vmatpush1.bf16.msra.mxu0 0
        %969 = vmatprep.subr.bf16.mxu0 0
        %970 = vmatpush1.bf16.msra.mxu0 0
        %971 = vmatprep.subr.bf16.mxu0 0
        %972 = vmatpush1.bf16.msra.mxu0 0
        %973 = vmatprep.subr.bf16.mxu0 0
        %974 = vmatpush1.bf16.msra.mxu0 0
        %975 = vmatprep.subr.bf16.mxu0 0
        %976 = vmatpush1.bf16.msra.mxu0 0
        %977 = vmatprep.subr.bf16.mxu0 0
        %978 = vmatpush1.bf16.msra.mxu0 0
        %979 = vmatprep.subr.bf16.mxu0 0
        %980 = vmatpush1.bf16.msra.mxu0 0
        %981 = vmatprep.subr.bf16.mxu0 0
        %982 = vmatpush1.bf16.msra.mxu0 0
        %983 = vmatprep.subr.bf16.mxu0 0
        %984 = vmatpush1.bf16.msra.mxu0 0
        %985 = vmatprep.subr.bf16.mxu0 0
        %986 = vmatpush1.bf16.msra.mxu0 0
        %987 = vmatprep.subr.bf16.mxu0 0
        %988 = vmatpush1.bf16.msra.mxu0 0
        %989 = vmatprep.mubr.bf16.mxu0 0
        %990 = vmatmul.mubr.bf16.gmra.mrb[0].mxu0 %v914
        %v991 = vpop.f32.mrb[0].mxu0
        %v992 = vadd.f32 0.0, %v991
        %v993 = vpop.f32.mrb[0].mxu0
        %v994 = vadd.f32 0.0, %v993
        %v995 = vpop.f32.mrb[0].mxu0
        %v996 = vpop.f32.mrb[0].mxu0
        %997 = vdwg.mxu0
        %998 = vmatprep.subr.bf16.mxu0 %v461
        %999 = vmatpush1.bf16.msra.mxu0 %v460
        %1000 = vmatprep.subr.bf16.mxu0 %v479
        %1001 = vmatpush1.bf16.msra.mxu0 %v476
        %1002 = vmatprep.subr.bf16.mxu0 0
        %1003 = vmatpush1.bf16.msra.mxu0 0
        %1004 = vmatprep.subr.bf16.mxu0 0
        %1005 = vmatpush1.bf16.msra.mxu0 0
        %1006 = vmatprep.subr.bf16.mxu0 0
        %1007 = vmatpush1.bf16.msra.mxu0 0
        %1008 = vmatprep.subr.bf16.mxu0 0
        %1009 = vmatpush1.bf16.msra.mxu0 0
        %1010 = vmatprep.subr.bf16.mxu0 0
        %1011 = vmatpush1.bf16.msra.mxu0 0
        %1012 = vmatprep.subr.bf16.mxu0 0
        %1013 = vmatpush1.bf16.msra.mxu0 0
        %1014 = vmatprep.subr.bf16.mxu0 0
        %1015 = vmatpush1.bf16.msra.mxu0 0
        %1016 = vmatprep.subr.bf16.mxu0 0
        %1017 = vmatpush1.bf16.msra.mxu0 0
        %1018 = vmatprep.subr.bf16.mxu0 0
        %1019 = vmatpush1.bf16.msra.mxu0 0
        %1020 = vmatprep.subr.bf16.mxu0 0
        %1021 = vmatpush1.bf16.msra.mxu0 0
        %1022 = vmatprep.subr.bf16.mxu0 0
        %1023 = vmatpush1.bf16.msra.mxu0 0
        %1024 = vmatprep.subr.bf16.mxu0 0
        %1025 = vmatpush1.bf16.msra.mxu0 0
        %1026 = vmatprep.subr.bf16.mxu0 0
        %1027 = vmatpush1.bf16.msra.mxu0 0
        %1028 = vmatprep.subr.bf16.mxu0 0
        %1029 = vmatpush1.bf16.msra.mxu0 0
        %1030 = vmatprep.mubr.bf16.mxu0 0
        %1031 = vmatmul.mubr.bf16.gmra.mrb[0].mxu0 %v737
        %v1032 = vpop.f32.mrb[0].mxu0
        %v1033 = vadd.f32 %v951, %v1032
        %v1034 = vpop.f32.mrb[0].mxu0
        %v1035 = vadd.f32 %v953, %v1034
        %v1036 = vpop.f32.mrb[0].mxu0
        %v1037 = vpop.f32.mrb[0].mxu0
        %1038 = vdwg.mxu0
        %1039 = vmatprep.subr.bf16.mxu0 %v463
        %1040 = vmatpush1.bf16.msra.mxu0 %v462
        %1041 = vmatprep.subr.bf16.mxu0 %v485
        %1042 = vmatpush1.bf16.msra.mxu0 %v482
        %1043 = vmatprep.subr.bf16.mxu0 0
        %1044 = vmatpush1.bf16.msra.mxu0 0
        %1045 = vmatprep.subr.bf16.mxu0 0
        %1046 = vmatpush1.bf16.msra.mxu0 0
        %1047 = vmatprep.subr.bf16.mxu0 0
        %1048 = vmatpush1.bf16.msra.mxu0 0
        %1049 = vmatprep.subr.bf16.mxu0 0
        %1050 = vmatpush1.bf16.msra.mxu0 0
        %1051 = vmatprep.subr.bf16.mxu0 0
        %1052 = vmatpush1.bf16.msra.mxu0 0
        %1053 = vmatprep.subr.bf16.mxu0 0
        %1054 = vmatpush1.bf16.msra.mxu0 0
        %1055 = vmatprep.subr.bf16.mxu0 0
        %1056 = vmatpush1.bf16.msra.mxu0 0
        %1057 = vmatprep.subr.bf16.mxu0 0
        %1058 = vmatpush1.bf16.msra.mxu0 0
        %1059 = vmatprep.subr.bf16.mxu0 0
        %1060 = vmatpush1.bf16.msra.mxu0 0
        %1061 = vmatprep.subr.bf16.mxu0 0
        %1062 = vmatpush1.bf16.msra.mxu0 0
        %1063 = vmatprep.subr.bf16.mxu0 0
        %1064 = vmatpush1.bf16.msra.mxu0 0
        %1065 = vmatprep.subr.bf16.mxu0 0
        %1066 = vmatpush1.bf16.msra.mxu0 0
        %1067 = vmatprep.subr.bf16.mxu0 0
        %1068 = vmatpush1.bf16.msra.mxu0 0
        %1069 = vmatprep.subr.bf16.mxu0 0
        %1070 = vmatpush1.bf16.msra.mxu0 0
        %1071 = vmatprep.mubr.bf16.mxu0 0
        %1072 = vmatmul.mubr.bf16.gmra.mrb[0].mxu0 %v737
        %v1073 = vpop.f32.mrb[0].mxu0
        %v1074 = vadd.f32 %v992, %v1073
        %v1075 = vpop.f32.mrb[0].mxu0
        %v1076 = vadd.f32 %v994, %v1075
        %v1077 = vpop.f32.mrb[0].mxu0
        %v1078 = vpop.f32.mrb[0].mxu0
        %1079 = vdwg.mxu0
        %s1080 = scalar_lea.vmem %s1, 128
        %v1081 = vld [vmem:[%s1080] sm:$0xff]
        %v1082 = vld [vmem:[%s1080 + $0x8] sm:$0xff]
        %v1083 = vld [vmem:[%s1080 + $0x10] sm:$0xff]
        %v1084 = vld [vmem:[%s1080 + $0x18] sm:$0xff]
        %v1085 = vld [vmem:[%s1080 + $0x20] sm:$0xff]
        %v1086 = vld [vmem:[%s1080 + $0x28] sm:$0xff]
        %v1087 = vld [vmem:[%s1080 + $0x30] sm:$0x33]
        %v1088 = vld [vmem:[%s1080 + $0x38] sm:$0x33]
        %v1097 = vunpack.c.l.b16 %v1081
        %v1098 = vunpack.c.h.b16 %v1081
        %v1099 = vunpack.c.l.b16 %v1082
        %v1100 = vunpack.c.h.b16 %v1082
        %v1101 = vunpack.c.l.b16 %v1083
        %v1102 = vunpack.c.h.b16 %v1083
        %v1103 = vunpack.c.l.b16 %v1084
        %v1104 = vunpack.c.h.b16 %v1084
        %v1105 = vunpack.c.l.b16 %v1085
        %v1106 = vunpack.c.h.b16 %v1085
        %v1107 = vunpack.c.l.b16 %v1086
        %v1108 = vunpack.c.h.b16 %v1086
        %v1109 = vunpack.c.l.b16 %v1087
        %v1110 = vunpack.c.h.b16 %v1087
        %v1111 = vunpack.c.l.b16 %v1088
        %v1112 = vunpack.c.h.b16 %v1088
        %v1113 = vpack.c.b16 %v1101, %v1097
        %v1114 = vpack.c.b16 %v1102, %v1098
        %v1115 = vpack.c.b16 %v1103, %v1099
        %v1116 = vpack.c.b16 %v1104, %v1100
        %v1117 = vpack.c.b16 %v1109, %v1105
        %v1118 = vpack.c.b16 %v1110, %v1106
        %v1119 = vpack.c.b16 %v1111, %v1107
        %v1120 = vpack.c.b16 %v1112, %v1108
        %v1126 = vsel %vm341, %v1117, 0
        %v1129 = vsel %vm341, %v1118, 0
        %v1132 = vsel %vm341, %v1119, 0
        %v1135 = vsel %vm341, %v1120, 0
        %1137 = vmatprep.subr.bf16.mxu0 %v1114
        %1138 = vmatpush1.bf16.msra.mxu0 %v1113
        %1139 = vmatprep.subr.bf16.mxu0 %v1129
        %1140 = vmatpush1.bf16.msra.mxu0 %v1126
        %1141 = vmatprep.subr.bf16.mxu0 0
        %1142 = vmatpush1.bf16.msra.mxu0 0
        %1143 = vmatprep.subr.bf16.mxu0 0
        %1144 = vmatpush1.bf16.msra.mxu0 0
        %1145 = vmatprep.subr.bf16.mxu0 0
        %1146 = vmatpush1.bf16.msra.mxu0 0
        %1147 = vmatprep.subr.bf16.mxu0 0
        %1148 = vmatpush1.bf16.msra.mxu0 0
        %1149 = vmatprep.subr.bf16.mxu0 0
        %1150 = vmatpush1.bf16.msra.mxu0 0
        %1151 = vmatprep.subr.bf16.mxu0 0
        %1152 = vmatpush1.bf16.msra.mxu0 0
        %1153 = vmatprep.subr.bf16.mxu0 0
        %1154 = vmatpush1.bf16.msra.mxu0 0
        %1155 = vmatprep.subr.bf16.mxu0 0
        %1156 = vmatpush1.bf16.msra.mxu0 0
        %1157 = vmatprep.subr.bf16.mxu0 0
        %1158 = vmatpush1.bf16.msra.mxu0 0
        %1159 = vmatprep.subr.bf16.mxu0 0
        %1160 = vmatpush1.bf16.msra.mxu0 0
        %1161 = vmatprep.subr.bf16.mxu0 0
        %1162 = vmatpush1.bf16.msra.mxu0 0
        %1163 = vmatprep.subr.bf16.mxu0 0
        %1164 = vmatpush1.bf16.msra.mxu0 0
        %1165 = vmatprep.subr.bf16.mxu0 0
        %1166 = vmatpush1.bf16.msra.mxu0 0
        %1167 = vmatprep.subr.bf16.mxu0 0
        %1168 = vmatpush1.bf16.msra.mxu0 0
        %1169 = vmatprep.mubr.bf16.mxu0 0
        %1170 = vmatmul.mubr.bf16.gmra.mrb[0].mxu0 %v570
        %v1171 = vpop.f32.mrb[0].mxu0
        %v1172 = vadd.f32 0.0, %v1171
        %v1173 = vpop.f32.mrb[0].mxu0
        %v1174 = vadd.f32 0.0, %v1173
        %v1175 = vpop.f32.mrb[0].mxu0
        %v1176 = vpop.f32.mrb[0].mxu0
        %1177 = vdwg.mxu0
        %1178 = vmatprep.subr.bf16.mxu0 %v1116
        %1179 = vmatpush1.bf16.msra.mxu0 %v1115
        %1180 = vmatprep.subr.bf16.mxu0 %v1135
        %1181 = vmatpush1.bf16.msra.mxu0 %v1132
        %1182 = vmatprep.subr.bf16.mxu0 0
        %1183 = vmatpush1.bf16.msra.mxu0 0
        %1184 = vmatprep.subr.bf16.mxu0 0
        %1185 = vmatpush1.bf16.msra.mxu0 0
        %1186 = vmatprep.subr.bf16.mxu0 0
        %1187 = vmatpush1.bf16.msra.mxu0 0
        %1188 = vmatprep.subr.bf16.mxu0 0
        %1189 = vmatpush1.bf16.msra.mxu0 0
        %1190 = vmatprep.subr.bf16.mxu0 0
        %1191 = vmatpush1.bf16.msra.mxu0 0
        %1192 = vmatprep.subr.bf16.mxu0 0
        %1193 = vmatpush1.bf16.msra.mxu0 0
        %1194 = vmatprep.subr.bf16.mxu0 0
        %1195 = vmatpush1.bf16.msra.mxu0 0
        %1196 = vmatprep.subr.bf16.mxu0 0
        %1197 = vmatpush1.bf16.msra.mxu0 0
        %1198 = vmatprep.subr.bf16.mxu0 0
        %1199 = vmatpush1.bf16.msra.mxu0 0
        %1200 = vmatprep.subr.bf16.mxu0 0
        %1201 = vmatpush1.bf16.msra.mxu0 0
        %1202 = vmatprep.subr.bf16.mxu0 0
        %1203 = vmatpush1.bf16.msra.mxu0 0
        %1204 = vmatprep.subr.bf16.mxu0 0
        %1205 = vmatpush1.bf16.msra.mxu0 0
        %1206 = vmatprep.subr.bf16.mxu0 0
        %1207 = vmatpush1.bf16.msra.mxu0 0
        %1208 = vmatprep.subr.bf16.mxu0 0
        %1209 = vmatpush1.bf16.msra.mxu0 0
        %1210 = vmatprep.mubr.bf16.mxu0 0
        %1211 = vmatmul.mubr.bf16.gmra.mrb[0].mxu0 %v570
        %v1212 = vpop.f32.mrb[0].mxu0
        %v1213 = vadd.f32 0.0, %v1212
        %v1214 = vpop.f32.mrb[0].mxu0
        %v1215 = vadd.f32 0.0, %v1214
        %v1216 = vpop.f32.mrb[0].mxu0
        %v1217 = vpop.f32.mrb[0].mxu0
        %1218 = vdwg.mxu0
        %v1219 = vadd.f32 %v522, %v1172
        %v1220 = vadd.f32 %v524, %v1174
        %v1221 = vadd.f32 %v563, %v1213
        %v1222 = vadd.f32 %v565, %v1215
        %1223 = vmatprep.subr.bf16.mxu0 %v1114
        %1224 = vmatpush1.bf16.msra.mxu0 %v1113
        %1225 = vmatprep.subr.bf16.mxu0 %v1129
        %1226 = vmatpush1.bf16.msra.mxu0 %v1126
        %1227 = vmatprep.subr.bf16.mxu0 0
        %1228 = vmatpush1.bf16.msra.mxu0 0
        %1229 = vmatprep.subr.bf16.mxu0 0
        %1230 = vmatpush1.bf16.msra.mxu0 0
        %1231 = vmatprep.subr.bf16.mxu0 0
        %1232 = vmatpush1.bf16.msra.mxu0 0
        %1233 = vmatprep.subr.bf16.mxu0 0
        %1234 = vmatpush1.bf16.msra.mxu0 0
        %1235 = vmatprep.subr.bf16.mxu0 0
        %1236 = vmatpush1.bf16.msra.mxu0 0
        %1237 = vmatprep.subr.bf16.mxu0 0
        %1238 = vmatpush1.bf16.msra.mxu0 0
        %1239 = vmatprep.subr.bf16.mxu0 0
        %1240 = vmatpush1.bf16.msra.mxu0 0
        %1241 = vmatprep.subr.bf16.mxu0 0
        %1242 = vmatpush1.bf16.msra.mxu0 0
        %1243 = vmatprep.subr.bf16.mxu0 0
        %1244 = vmatpush1.bf16.msra.mxu0 0
        %1245 = vmatprep.subr.bf16.mxu0 0
        %1246 = vmatpush1.bf16.msra.mxu0 0
        %1247 = vmatprep.subr.bf16.mxu0 0
        %1248 = vmatpush1.bf16.msra.mxu0 0
        %1249 = vmatprep.subr.bf16.mxu0 0
        %1250 = vmatpush1.bf16.msra.mxu0 0
        %1251 = vmatprep.subr.bf16.mxu0 0
        %1252 = vmatpush1.bf16.msra.mxu0 0
        %1253 = vmatprep.subr.bf16.mxu0 0
        %1254 = vmatpush1.bf16.msra.mxu0 0
        %1255 = vmatprep.mubr.bf16.mxu0 0
        %1256 = vmatmul.mubr.bf16.gmra.mrb[0].mxu0 %v737
        %v1257 = vpop.f32.mrb[0].mxu0
        %v1258 = vadd.f32 0.0, %v1257
        %v1259 = vpop.f32.mrb[0].mxu0
        %v1260 = vadd.f32 0.0, %v1259
        %v1261 = vpop.f32.mrb[0].mxu0
        %v1262 = vpop.f32.mrb[0].mxu0
        %1263 = vdwg.mxu0
        %1264 = vmatprep.subr.bf16.mxu0 %v1116
        %1265 = vmatpush1.bf16.msra.mxu0 %v1115
        %1266 = vmatprep.subr.bf16.mxu0 %v1135
        %1267 = vmatpush1.bf16.msra.mxu0 %v1132
        %1268 = vmatprep.subr.bf16.mxu0 0
        %1269 = vmatpush1.bf16.msra.mxu0 0
        %1270 = vmatprep.subr.bf16.mxu0 0
        %1271 = vmatpush1.bf16.msra.mxu0 0
        %1272 = vmatprep.subr.bf16.mxu0 0
        %1273 = vmatpush1.bf16.msra.mxu0 0
        %1274 = vmatprep.subr.bf16.mxu0 0
        %1275 = vmatpush1.bf16.msra.mxu0 0
        %1276 = vmatprep.subr.bf16.mxu0 0
        %1277 = vmatpush1.bf16.msra.mxu0 0
        %1278 = vmatprep.subr.bf16.mxu0 0
        %1279 = vmatpush1.bf16.msra.mxu0 0
        %1280 = vmatprep.subr.bf16.mxu0 0
        %1281 = vmatpush1.bf16.msra.mxu0 0
        %1282 = vmatprep.subr.bf16.mxu0 0
        %1283 = vmatpush1.bf16.msra.mxu0 0
        %1284 = vmatprep.subr.bf16.mxu0 0
        %1285 = vmatpush1.bf16.msra.mxu0 0
        %1286 = vmatprep.subr.bf16.mxu0 0
        %1287 = vmatpush1.bf16.msra.mxu0 0
        %1288 = vmatprep.subr.bf16.mxu0 0
        %1289 = vmatpush1.bf16.msra.mxu0 0
        %1290 = vmatprep.subr.bf16.mxu0 0
        %1291 = vmatpush1.bf16.msra.mxu0 0
        %1292 = vmatprep.subr.bf16.mxu0 0
        %1293 = vmatpush1.bf16.msra.mxu0 0
        %1294 = vmatprep.subr.bf16.mxu0 0
        %1295 = vmatpush1.bf16.msra.mxu0 0
        %1296 = vmatprep.mubr.bf16.mxu0 0
        %1297 = vmatmul.mubr.bf16.gmra.mrb[0].mxu0 %v737
        %v1298 = vpop.f32.mrb[0].mxu0
        %v1299 = vadd.f32 0.0, %v1298
        %v1300 = vpop.f32.mrb[0].mxu0
        %v1301 = vadd.f32 0.0, %v1300
        %v1302 = vpop.f32.mrb[0].mxu0
        %v1303 = vpop.f32.mrb[0].mxu0
        %1304 = vdwg.mxu0
        %v1305 = vadd.f32 %v689, %v1258
        %v1306 = vadd.f32 %v691, %v1260
        %v1307 = vadd.f32 %v730, %v1299
        %v1308 = vadd.f32 %v732, %v1301
        %1309 = vmatprep.subr.bf16.mxu0 %v1114
        %1310 = vmatpush1.bf16.msra.mxu0 %v1113
        %1311 = vmatprep.subr.bf16.mxu0 %v1129
        %1312 = vmatpush1.bf16.msra.mxu0 %v1126
        %1313 = vmatprep.subr.bf16.mxu0 0
        %1314 = vmatpush1.bf16.msra.mxu0 0
        %1315 = vmatprep.subr.bf16.mxu0 0
        %1316 = vmatpush1.bf16.msra.mxu0 0
        %1317 = vmatprep.subr.bf16.mxu0 0
        %1318 = vmatpush1.bf16.msra.mxu0 0
        %1319 = vmatprep.subr.bf16.mxu0 0
        %1320 = vmatpush1.bf16.msra.mxu0 0
        %1321 = vmatprep.subr.bf16.mxu0 0
        %1322 = vmatpush1.bf16.msra.mxu0 0
        %1323 = vmatprep.subr.bf16.mxu0 0
        %1324 = vmatpush1.bf16.msra.mxu0 0
        %1325 = vmatprep.subr.bf16.mxu0 0
        %1326 = vmatpush1.bf16.msra.mxu0 0
        %1327 = vmatprep.subr.bf16.mxu0 0
        %1328 = vmatpush1.bf16.msra.mxu0 0
        %1329 = vmatprep.subr.bf16.mxu0 0
        %1330 = vmatpush1.bf16.msra.mxu0 0
        %1331 = vmatprep.subr.bf16.mxu0 0
        %1332 = vmatpush1.bf16.msra.mxu0 0
        %1333 = vmatprep.subr.bf16.mxu0 0
        %1334 = vmatpush1.bf16.msra.mxu0 0
        %1335 = vmatprep.subr.bf16.mxu0 0
        %1336 = vmatpush1.bf16.msra.mxu0 0
        %1337 = vmatprep.subr.bf16.mxu0 0
        %1338 = vmatpush1.bf16.msra.mxu0 0
        %1339 = vmatprep.subr.bf16.mxu0 0
        %1340 = vmatpush1.bf16.msra.mxu0 0
        %1341 = vmatprep.mubr.bf16.mxu0 0
        %1342 = vmatmul.mubr.bf16.gmra.mrb[0].mxu0 %v914
        %v1343 = vpop.f32.mrb[0].mxu0
        %v1344 = vadd.f32 0.0, %v1343
        %v1345 = vpop.f32.mrb[0].mxu0
        %v1346 = vadd.f32 0.0, %v1345
        %v1347 = vpop.f32.mrb[0].mxu0
        %v1348 = vpop.f32.mrb[0].mxu0
        %1349 = vdwg.mxu0
        %1350 = vmatprep.subr.bf16.mxu0 %v1116
        %1351 = vmatpush1.bf16.msra.mxu0 %v1115
        %1352 = vmatprep.subr.bf16.mxu0 %v1135
        %1353 = vmatpush1.bf16.msra.mxu0 %v1132
        %1354 = vmatprep.subr.bf16.mxu0 0
        %1355 = vmatpush1.bf16.msra.mxu0 0
        %1356 = vmatprep.subr.bf16.mxu0 0
        %1357 = vmatpush1.bf16.msra.mxu0 0
        %1358 = vmatprep.subr.bf16.mxu0 0
        %1359 = vmatpush1.bf16.msra.mxu0 0
        %1360 = vmatprep.subr.bf16.mxu0 0
        %1361 = vmatpush1.bf16.msra.mxu0 0
        %1362 = vmatprep.subr.bf16.mxu0 0
        %1363 = vmatpush1.bf16.msra.mxu0 0
        %1364 = vmatprep.subr.bf16.mxu0 0
        %1365 = vmatpush1.bf16.msra.mxu0 0
        %1366 = vmatprep.subr.bf16.mxu0 0
        %1367 = vmatpush1.bf16.msra.mxu0 0
        %1368 = vmatprep.subr.bf16.mxu0 0
        %1369 = vmatpush1.bf16.msra.mxu0 0
        %1370 = vmatprep.subr.bf16.mxu0 0
        %1371 = vmatpush1.bf16.msra.mxu0 0
        %1372 = vmatprep.subr.bf16.mxu0 0
        %1373 = vmatpush1.bf16.msra.mxu0 0
        %1374 = vmatprep.subr.bf16.mxu0 0
        %1375 = vmatpush1.bf16.msra.mxu0 0
        %1376 = vmatprep.subr.bf16.mxu0 0
        %1377 = vmatpush1.bf16.msra.mxu0 0
        %1378 = vmatprep.subr.bf16.mxu0 0
        %1379 = vmatpush1.bf16.msra.mxu0 0
        %1380 = vmatprep.subr.bf16.mxu0 0
        %1381 = vmatpush1.bf16.msra.mxu0 0
        %1382 = vmatprep.mubr.bf16.mxu0 0
        %1383 = vmatmul.mubr.bf16.gmra.mrb[0].mxu0 %v914
        %v1384 = vpop.f32.mrb[0].mxu0
        %v1385 = vadd.f32 0.0, %v1384
        %v1386 = vpop.f32.mrb[0].mxu0
        %v1387 = vadd.f32 0.0, %v1386
        %v1388 = vpop.f32.mrb[0].mxu0
        %v1389 = vpop.f32.mrb[0].mxu0
        %1390 = vdwg.mxu0
        %v1391 = vadd.f32 %v856, %v1344
        %v1392 = vadd.f32 %v858, %v1346
        %v1393 = vadd.f32 %v897, %v1385
        %v1394 = vadd.f32 %v899, %v1387
        %v1396 = vunpack.c.l.b16 %v287
        %v1397 = vpack.c.b16 %v1396, %v1396
        %v1399 = vshrl.u32 %v1397, 16
        %v1401 = vshll.u32 %v1397, 16
        %v1403 = vrot.slane %v1401, 1
        %v1404 = vor.u32 %v1399, %v1403
        %v1406 = vsel %vm337, %v1404, 0
        %1408 = vmatprep.subr.bf16.mxu0 %v1114
        %1409 = vmatpush1.bf16.msra.mxu0 %v1113
        %1410 = vmatprep.subr.bf16.mxu0 %v1129
        %1411 = vmatpush1.bf16.msra.mxu0 %v1126
        %1412 = vmatprep.subr.bf16.mxu0 0
        %1413 = vmatpush1.bf16.msra.mxu0 0
        %1414 = vmatprep.subr.bf16.mxu0 0
        %1415 = vmatpush1.bf16.msra.mxu0 0
        %1416 = vmatprep.subr.bf16.mxu0 0
        %1417 = vmatpush1.bf16.msra.mxu0 0
        %1418 = vmatprep.subr.bf16.mxu0 0
        %1419 = vmatpush1.bf16.msra.mxu0 0
        %1420 = vmatprep.subr.bf16.mxu0 0
        %1421 = vmatpush1.bf16.msra.mxu0 0
        %1422 = vmatprep.subr.bf16.mxu0 0
        %1423 = vmatpush1.bf16.msra.mxu0 0
        %1424 = vmatprep.subr.bf16.mxu0 0
        %1425 = vmatpush1.bf16.msra.mxu0 0
        %1426 = vmatprep.subr.bf16.mxu0 0
        %1427 = vmatpush1.bf16.msra.mxu0 0
        %1428 = vmatprep.subr.bf16.mxu0 0
        %1429 = vmatpush1.bf16.msra.mxu0 0
        %1430 = vmatprep.subr.bf16.mxu0 0
        %1431 = vmatpush1.bf16.msra.mxu0 0
        %1432 = vmatprep.subr.bf16.mxu0 0
        %1433 = vmatpush1.bf16.msra.mxu0 0
        %1434 = vmatprep.subr.bf16.mxu0 0
        %1435 = vmatpush1.bf16.msra.mxu0 0
        %1436 = vmatprep.subr.bf16.mxu0 0
        %1437 = vmatpush1.bf16.msra.mxu0 0
        %1438 = vmatprep.subr.bf16.mxu0 0
        %1439 = vmatpush1.bf16.msra.mxu0 0
        %1440 = vmatprep.mubr.bf16.mxu0 0
        %1441 = vmatmul.mubr.bf16.gmra.mrb[0].mxu0 %v1406
        %v1442 = vpop.f32.mrb[0].mxu0
        %v1443 = vadd.f32 0.0, %v1442
        %v1444 = vpop.f32.mrb[0].mxu0
        %v1445 = vadd.f32 0.0, %v1444
        %v1446 = vpop.f32.mrb[0].mxu0
        %v1447 = vpop.f32.mrb[0].mxu0
        %1448 = vdwg.mxu0
        %1449 = vmatprep.subr.bf16.mxu0 %v1116
        %1450 = vmatpush1.bf16.msra.mxu0 %v1115
        %1451 = vmatprep.subr.bf16.mxu0 %v1135
        %1452 = vmatpush1.bf16.msra.mxu0 %v1132
        %1453 = vmatprep.subr.bf16.mxu0 0
        %1454 = vmatpush1.bf16.msra.mxu0 0
        %1455 = vmatprep.subr.bf16.mxu0 0
        %1456 = vmatpush1.bf16.msra.mxu0 0
        %1457 = vmatprep.subr.bf16.mxu0 0
        %1458 = vmatpush1.bf16.msra.mxu0 0
        %1459 = vmatprep.subr.bf16.mxu0 0
        %1460 = vmatpush1.bf16.msra.mxu0 0
        %1461 = vmatprep.subr.bf16.mxu0 0
        %1462 = vmatpush1.bf16.msra.mxu0 0
        %1463 = vmatprep.subr.bf16.mxu0 0
        %1464 = vmatpush1.bf16.msra.mxu0 0
        %1465 = vmatprep.subr.bf16.mxu0 0
        %1466 = vmatpush1.bf16.msra.mxu0 0
        %1467 = vmatprep.subr.bf16.mxu0 0
        %1468 = vmatpush1.bf16.msra.mxu0 0
        %1469 = vmatprep.subr.bf16.mxu0 0
        %1470 = vmatpush1.bf16.msra.mxu0 0
        %1471 = vmatprep.subr.bf16.mxu0 0
        %1472 = vmatpush1.bf16.msra.mxu0 0
        %1473 = vmatprep.subr.bf16.mxu0 0
        %1474 = vmatpush1.bf16.msra.mxu0 0
        %1475 = vmatprep.subr.bf16.mxu0 0
        %1476 = vmatpush1.bf16.msra.mxu0 0
        %1477 = vmatprep.subr.bf16.mxu0 0
        %1478 = vmatpush1.bf16.msra.mxu0 0
        %1479 = vmatprep.subr.bf16.mxu0 0
        %1480 = vmatpush1.bf16.msra.mxu0 0
        %1481 = vmatprep.mubr.bf16.mxu0 0
        %1482 = vmatmul.mubr.bf16.gmra.mrb[0].mxu0 %v1406
        %v1483 = vpop.f32.mrb[0].mxu0
        %v1484 = vadd.f32 0.0, %v1483
        %v1485 = vpop.f32.mrb[0].mxu0
        %v1486 = vadd.f32 0.0, %v1485
        %v1487 = vpop.f32.mrb[0].mxu0
        %v1488 = vpop.f32.mrb[0].mxu0
        %1489 = vdwg.mxu0
        %v1490 = vadd.f32 %v1033, %v1443
        %v1491 = vadd.f32 %v1035, %v1445
        %v1492 = vadd.f32 %v1074, %v1484
        %v1493 = vadd.f32 %v1076, %v1486
        %s1494 = scalar_lea.vmem %s1, 192
        %v1495 = vld [vmem:[%s1494] sm:$0xff]
        %v1496 = vld [vmem:[%s1494 + $0x8] sm:$0xff]
        %v1497 = vld [vmem:[%s1494 + $0x10] sm:$0xff]
        %v1498 = vld [vmem:[%s1494 + $0x18] sm:$0xff]
        %v1499 = vld [vmem:[%s1494 + $0x20] sm:$0xff]
        %v1500 = vld [vmem:[%s1494 + $0x28] sm:$0xff]
        %v1501 = vld [vmem:[%s1494 + $0x30] sm:$0x33]
        %v1502 = vld [vmem:[%s1494 + $0x38] sm:$0x33]
        %v1511 = vunpack.c.l.b16 %v1495
        %v1512 = vunpack.c.h.b16 %v1495
        %v1513 = vunpack.c.l.b16 %v1496
        %v1514 = vunpack.c.h.b16 %v1496
        %v1515 = vunpack.c.l.b16 %v1497
        %v1516 = vunpack.c.h.b16 %v1497
        %v1517 = vunpack.c.l.b16 %v1498
        %v1518 = vunpack.c.h.b16 %v1498
        %v1519 = vunpack.c.l.b16 %v1499
        %v1520 = vunpack.c.h.b16 %v1499
        %v1521 = vunpack.c.l.b16 %v1500
        %v1522 = vunpack.c.h.b16 %v1500
        %v1523 = vunpack.c.l.b16 %v1501
        %v1524 = vunpack.c.h.b16 %v1501
        %v1525 = vunpack.c.l.b16 %v1502
        %v1526 = vunpack.c.h.b16 %v1502
        %v1527 = vpack.c.b16 %v1515, %v1511
        %v1528 = vpack.c.b16 %v1516, %v1512
        %v1529 = vpack.c.b16 %v1517, %v1513
        %v1530 = vpack.c.b16 %v1518, %v1514
        %v1531 = vpack.c.b16 %v1523, %v1519
        %v1532 = vpack.c.b16 %v1524, %v1520
        %v1533 = vpack.c.b16 %v1525, %v1521
        %v1534 = vpack.c.b16 %v1526, %v1522
        %v1540 = vsel %vm341, %v1531, 0
        %v1543 = vsel %vm341, %v1532, 0
        %v1546 = vsel %vm341, %v1533, 0
        %v1549 = vsel %vm341, %v1534, 0
        %1551 = vmatprep.subr.bf16.mxu0 %v1528
        %1552 = vmatpush1.bf16.msra.mxu0 %v1527
        %1553 = vmatprep.subr.bf16.mxu0 %v1543
        %1554 = vmatpush1.bf16.msra.mxu0 %v1540
        %1555 = vmatprep.subr.bf16.mxu0 0
        %1556 = vmatpush1.bf16.msra.mxu0 0
        %1557 = vmatprep.subr.bf16.mxu0 0
        %1558 = vmatpush1.bf16.msra.mxu0 0
        %1559 = vmatprep.subr.bf16.mxu0 0
        %1560 = vmatpush1.bf16.msra.mxu0 0
        %1561 = vmatprep.subr.bf16.mxu0 0
        %1562 = vmatpush1.bf16.msra.mxu0 0
        %1563 = vmatprep.subr.bf16.mxu0 0
        %1564 = vmatpush1.bf16.msra.mxu0 0
        %1565 = vmatprep.subr.bf16.mxu0 0
        %1566 = vmatpush1.bf16.msra.mxu0 0
        %1567 = vmatprep.subr.bf16.mxu0 0
        %1568 = vmatpush1.bf16.msra.mxu0 0
        %1569 = vmatprep.subr.bf16.mxu0 0
        %1570 = vmatpush1.bf16.msra.mxu0 0
        %1571 = vmatprep.subr.bf16.mxu0 0
        %1572 = vmatpush1.bf16.msra.mxu0 0
        %1573 = vmatprep.subr.bf16.mxu0 0
        %1574 = vmatpush1.bf16.msra.mxu0 0
        %1575 = vmatprep.subr.bf16.mxu0 0
        %1576 = vmatpush1.bf16.msra.mxu0 0
        %1577 = vmatprep.subr.bf16.mxu0 0
        %1578 = vmatpush1.bf16.msra.mxu0 0
        %1579 = vmatprep.subr.bf16.mxu0 0
        %1580 = vmatpush1.bf16.msra.mxu0 0
        %1581 = vmatprep.subr.bf16.mxu0 0
        %1582 = vmatpush1.bf16.msra.mxu0 0
        %1583 = vmatprep.mubr.bf16.mxu0 0
        %1584 = vmatmul.mubr.bf16.gmra.mrb[0].mxu0 %v737
        %v1585 = vpop.f32.mrb[0].mxu0
        %v1586 = vadd.f32 0.0, %v1585
        %v1587 = vpop.f32.mrb[0].mxu0
        %v1588 = vadd.f32 0.0, %v1587
        %v1589 = vpop.f32.mrb[0].mxu0
        %v1590 = vpop.f32.mrb[0].mxu0
        %1591 = vdwg.mxu0
        %1592 = vmatprep.subr.bf16.mxu0 %v1530
        %1593 = vmatpush1.bf16.msra.mxu0 %v1529
        %1594 = vmatprep.subr.bf16.mxu0 %v1549
        %1595 = vmatpush1.bf16.msra.mxu0 %v1546
        %1596 = vmatprep.subr.bf16.mxu0 0
        %1597 = vmatpush1.bf16.msra.mxu0 0
        %1598 = vmatprep.subr.bf16.mxu0 0
        %1599 = vmatpush1.bf16.msra.mxu0 0
        %1600 = vmatprep.subr.bf16.mxu0 0
        %1601 = vmatpush1.bf16.msra.mxu0 0
        %1602 = vmatprep.subr.bf16.mxu0 0
        %1603 = vmatpush1.bf16.msra.mxu0 0
        %1604 = vmatprep.subr.bf16.mxu0 0
        %1605 = vmatpush1.bf16.msra.mxu0 0
        %1606 = vmatprep.subr.bf16.mxu0 0
        %1607 = vmatpush1.bf16.msra.mxu0 0
        %1608 = vmatprep.subr.bf16.mxu0 0
        %1609 = vmatpush1.bf16.msra.mxu0 0
        %1610 = vmatprep.subr.bf16.mxu0 0
        %1611 = vmatpush1.bf16.msra.mxu0 0
        %1612 = vmatprep.subr.bf16.mxu0 0
        %1613 = vmatpush1.bf16.msra.mxu0 0
        %1614 = vmatprep.subr.bf16.mxu0 0
        %1615 = vmatpush1.bf16.msra.mxu0 0
        %1616 = vmatprep.subr.bf16.mxu0 0
        %1617 = vmatpush1.bf16.msra.mxu0 0
        %1618 = vmatprep.subr.bf16.mxu0 0
        %1619 = vmatpush1.bf16.msra.mxu0 0
        %1620 = vmatprep.subr.bf16.mxu0 0
        %1621 = vmatpush1.bf16.msra.mxu0 0
        %1622 = vmatprep.subr.bf16.mxu0 0
        %1623 = vmatpush1.bf16.msra.mxu0 0
        %1624 = vmatprep.mubr.bf16.mxu0 0
        %1625 = vmatmul.mubr.bf16.gmra.mrb[0].mxu0 %v737
        %v1626 = vpop.f32.mrb[0].mxu0
        %v1627 = vadd.f32 0.0, %v1626
        %v1628 = vpop.f32.mrb[0].mxu0
        %v1629 = vadd.f32 0.0, %v1628
        %v1630 = vpop.f32.mrb[0].mxu0
        %v1631 = vpop.f32.mrb[0].mxu0
        %1632 = vdwg.mxu0
        %v1633 = vadd.f32 %v1219, %v1586
        %v1634 = vadd.f32 %v1220, %v1588
        %v1635 = vadd.f32 %v1221, %v1627
        %v1636 = vadd.f32 %v1222, %v1629
        %1637 = vmatprep.subr.bf16.mxu0 %v1528
        %1638 = vmatpush1.bf16.msra.mxu0 %v1527
        %1639 = vmatprep.subr.bf16.mxu0 %v1543
        %1640 = vmatpush1.bf16.msra.mxu0 %v1540
        %1641 = vmatprep.subr.bf16.mxu0 0
        %1642 = vmatpush1.bf16.msra.mxu0 0
        %1643 = vmatprep.subr.bf16.mxu0 0
        %1644 = vmatpush1.bf16.msra.mxu0 0
        %1645 = vmatprep.subr.bf16.mxu0 0
        %1646 = vmatpush1.bf16.msra.mxu0 0
        %1647 = vmatprep.subr.bf16.mxu0 0
        %1648 = vmatpush1.bf16.msra.mxu0 0
        %1649 = vmatprep.subr.bf16.mxu0 0
        %1650 = vmatpush1.bf16.msra.mxu0 0
        %1651 = vmatprep.subr.bf16.mxu0 0
        %1652 = vmatpush1.bf16.msra.mxu0 0
        %1653 = vmatprep.subr.bf16.mxu0 0
        %1654 = vmatpush1.bf16.msra.mxu0 0
        %1655 = vmatprep.subr.bf16.mxu0 0
        %1656 = vmatpush1.bf16.msra.mxu0 0
        %1657 = vmatprep.subr.bf16.mxu0 0
        %1658 = vmatpush1.bf16.msra.mxu0 0
        %1659 = vmatprep.subr.bf16.mxu0 0
        %1660 = vmatpush1.bf16.msra.mxu0 0
        %1661 = vmatprep.subr.bf16.mxu0 0
        %1662 = vmatpush1.bf16.msra.mxu0 0
        %1663 = vmatprep.subr.bf16.mxu0 0
        %1664 = vmatpush1.bf16.msra.mxu0 0
        %1665 = vmatprep.subr.bf16.mxu0 0
        %1666 = vmatpush1.bf16.msra.mxu0 0
        %1667 = vmatprep.subr.bf16.mxu0 0
        %1668 = vmatpush1.bf16.msra.mxu0 0
        %1669 = vmatprep.mubr.bf16.mxu0 0
        %1670 = vmatmul.mubr.bf16.gmra.mrb[0].mxu0 %v914
        %v1671 = vpop.f32.mrb[0].mxu0
        %v1672 = vadd.f32 0.0, %v1671
        %v1673 = vpop.f32.mrb[0].mxu0
        %v1674 = vadd.f32 0.0, %v1673
        %v1675 = vpop.f32.mrb[0].mxu0
        %v1676 = vpop.f32.mrb[0].mxu0
        %1677 = vdwg.mxu0
        %1678 = vmatprep.subr.bf16.mxu0 %v1530
        %1679 = vmatpush1.bf16.msra.mxu0 %v1529
        %1680 = vmatprep.subr.bf16.mxu0 %v1549
        %1681 = vmatpush1.bf16.msra.mxu0 %v1546
        %1682 = vmatprep.subr.bf16.mxu0 0
        %1683 = vmatpush1.bf16.msra.mxu0 0
        %1684 = vmatprep.subr.bf16.mxu0 0
        %1685 = vmatpush1.bf16.msra.mxu0 0
        %1686 = vmatprep.subr.bf16.mxu0 0
        %1687 = vmatpush1.bf16.msra.mxu0 0
        %1688 = vmatprep.subr.bf16.mxu0 0
        %1689 = vmatpush1.bf16.msra.mxu0 0
        %1690 = vmatprep.subr.bf16.mxu0 0
        %1691 = vmatpush1.bf16.msra.mxu0 0
        %1692 = vmatprep.subr.bf16.mxu0 0
        %1693 = vmatpush1.bf16.msra.mxu0 0
        %1694 = vmatprep.subr.bf16.mxu0 0
        %1695 = vmatpush1.bf16.msra.mxu0 0
        %1696 = vmatprep.subr.bf16.mxu0 0
        %1697 = vmatpush1.bf16.msra.mxu0 0
        %1698 = vmatprep.subr.bf16.mxu0 0
        %1699 = vmatpush1.bf16.msra.mxu0 0
        %1700 = vmatprep.subr.bf16.mxu0 0
        %1701 = vmatpush1.bf16.msra.mxu0 0
        %1702 = vmatprep.subr.bf16.mxu0 0
        %1703 = vmatpush1.bf16.msra.mxu0 0
        %1704 = vmatprep.subr.bf16.mxu0 0
        %1705 = vmatpush1.bf16.msra.mxu0 0
        %1706 = vmatprep.subr.bf16.mxu0 0
        %1707 = vmatpush1.bf16.msra.mxu0 0
        %1708 = vmatprep.subr.bf16.mxu0 0
        %1709 = vmatpush1.bf16.msra.mxu0 0
        %1710 = vmatprep.mubr.bf16.mxu0 0
        %1711 = vmatmul.mubr.bf16.gmra.mrb[0].mxu0 %v914
        %v1712 = vpop.f32.mrb[0].mxu0
        %v1713 = vadd.f32 0.0, %v1712
        %v1714 = vpop.f32.mrb[0].mxu0
        %v1715 = vadd.f32 0.0, %v1714
        %v1716 = vpop.f32.mrb[0].mxu0
        %v1717 = vpop.f32.mrb[0].mxu0
        %1718 = vdwg.mxu0
        %v1719 = vadd.f32 %v1305, %v1672
        %v1720 = vadd.f32 %v1306, %v1674
        %v1721 = vadd.f32 %v1307, %v1713
        %v1722 = vadd.f32 %v1308, %v1715
        %1723 = vmatprep.subr.bf16.mxu0 %v1528
        %1724 = vmatpush1.bf16.msra.mxu0 %v1527
        %1725 = vmatprep.subr.bf16.mxu0 %v1543
        %1726 = vmatpush1.bf16.msra.mxu0 %v1540
        %1727 = vmatprep.subr.bf16.mxu0 0
        %1728 = vmatpush1.bf16.msra.mxu0 0
        %1729 = vmatprep.subr.bf16.mxu0 0
        %1730 = vmatpush1.bf16.msra.mxu0 0
        %1731 = vmatprep.subr.bf16.mxu0 0
        %1732 = vmatpush1.bf16.msra.mxu0 0
        %1733 = vmatprep.subr.bf16.mxu0 0
        %1734 = vmatpush1.bf16.msra.mxu0 0
        %1735 = vmatprep.subr.bf16.mxu0 0
        %1736 = vmatpush1.bf16.msra.mxu0 0
        %1737 = vmatprep.subr.bf16.mxu0 0
        %1738 = vmatpush1.bf16.msra.mxu0 0
        %1739 = vmatprep.subr.bf16.mxu0 0
        %1740 = vmatpush1.bf16.msra.mxu0 0
        %1741 = vmatprep.subr.bf16.mxu0 0
        %1742 = vmatpush1.bf16.msra.mxu0 0
        %1743 = vmatprep.subr.bf16.mxu0 0
        %1744 = vmatpush1.bf16.msra.mxu0 0
        %1745 = vmatprep.subr.bf16.mxu0 0
        %1746 = vmatpush1.bf16.msra.mxu0 0
        %1747 = vmatprep.subr.bf16.mxu0 0
        %1748 = vmatpush1.bf16.msra.mxu0 0
        %1749 = vmatprep.subr.bf16.mxu0 0
        %1750 = vmatpush1.bf16.msra.mxu0 0
        %1751 = vmatprep.subr.bf16.mxu0 0
        %1752 = vmatpush1.bf16.msra.mxu0 0
        %1753 = vmatprep.subr.bf16.mxu0 0
        %1754 = vmatpush1.bf16.msra.mxu0 0
        %1755 = vmatprep.mubr.bf16.mxu0 0
        %1756 = vmatmul.mubr.bf16.gmra.mrb[0].mxu0 %v1406
        %v1757 = vpop.f32.mrb[0].mxu0
        %v1758 = vadd.f32 0.0, %v1757
        %v1759 = vpop.f32.mrb[0].mxu0
        %v1760 = vadd.f32 0.0, %v1759
        %v1761 = vpop.f32.mrb[0].mxu0
        %v1762 = vpop.f32.mrb[0].mxu0
        %1763 = vdwg.mxu0
        %1764 = vmatprep.subr.bf16.mxu0 %v1530
        %1765 = vmatpush1.bf16.msra.mxu0 %v1529
        %1766 = vmatprep.subr.bf16.mxu0 %v1549
        %1767 = vmatpush1.bf16.msra.mxu0 %v1546
        %1768 = vmatprep.subr.bf16.mxu0 0
        %1769 = vmatpush1.bf16.msra.mxu0 0
        %1770 = vmatprep.subr.bf16.mxu0 0
        %1771 = vmatpush1.bf16.msra.mxu0 0
        %1772 = vmatprep.subr.bf16.mxu0 0
        %1773 = vmatpush1.bf16.msra.mxu0 0
        %1774 = vmatprep.subr.bf16.mxu0 0
        %1775 = vmatpush1.bf16.msra.mxu0 0
        %1776 = vmatprep.subr.bf16.mxu0 0
        %1777 = vmatpush1.bf16.msra.mxu0 0
        %1778 = vmatprep.subr.bf16.mxu0 0
        %1779 = vmatpush1.bf16.msra.mxu0 0
        %1780 = vmatprep.subr.bf16.mxu0 0
        %1781 = vmatpush1.bf16.msra.mxu0 0
        %1782 = vmatprep.subr.bf16.mxu0 0
        %1783 = vmatpush1.bf16.msra.mxu0 0
        %1784 = vmatprep.subr.bf16.mxu0 0
        %1785 = vmatpush1.bf16.msra.mxu0 0
        %1786 = vmatprep.subr.bf16.mxu0 0
        %1787 = vmatpush1.bf16.msra.mxu0 0
        %1788 = vmatprep.subr.bf16.mxu0 0
        %1789 = vmatpush1.bf16.msra.mxu0 0
        %1790 = vmatprep.subr.bf16.mxu0 0
        %1791 = vmatpush1.bf16.msra.mxu0 0
        %1792 = vmatprep.subr.bf16.mxu0 0
        %1793 = vmatpush1.bf16.msra.mxu0 0
        %1794 = vmatprep.subr.bf16.mxu0 0
        %1795 = vmatpush1.bf16.msra.mxu0 0
        %1796 = vmatprep.mubr.bf16.mxu0 0
        %1797 = vmatmul.mubr.bf16.gmra.mrb[0].mxu0 %v1406
        %v1798 = vpop.f32.mrb[0].mxu0
        %v1799 = vadd.f32 0.0, %v1798
        %v1800 = vpop.f32.mrb[0].mxu0
        %v1801 = vadd.f32 0.0, %v1800
        %v1802 = vpop.f32.mrb[0].mxu0
        %v1803 = vpop.f32.mrb[0].mxu0
        %1804 = vdwg.mxu0
        %v1805 = vadd.f32 %v1391, %v1758
        %v1806 = vadd.f32 %v1392, %v1760
        %v1807 = vadd.f32 %v1393, %v1799
        %v1808 = vadd.f32 %v1394, %v1801
        %v1810 = vunpack.c.l.b16 %v289
        %v1811 = vpack.c.b16 %v1810, %v1810
        %v1813 = vshrl.u32 %v1811, 16
        %v1815 = vshll.u32 %v1811, 16
        %v1817 = vrot.slane %v1815, 1
        %v1818 = vor.u32 %v1813, %v1817
        %v1820 = vsel %vm337, %v1818, 0
        %1822 = vmatprep.subr.bf16.mxu0 %v1528
        %1823 = vmatpush1.bf16.msra.mxu0 %v1527
        %1824 = vmatprep.subr.bf16.mxu0 %v1543
        %1825 = vmatpush1.bf16.msra.mxu0 %v1540
        %1826 = vmatprep.subr.bf16.mxu0 0
        %1827 = vmatpush1.bf16.msra.mxu0 0
        %1828 = vmatprep.subr.bf16.mxu0 0
        %1829 = vmatpush1.bf16.msra.mxu0 0
        %1830 = vmatprep.subr.bf16.mxu0 0
        %1831 = vmatpush1.bf16.msra.mxu0 0
        %1832 = vmatprep.subr.bf16.mxu0 0
        %1833 = vmatpush1.bf16.msra.mxu0 0
        %1834 = vmatprep.subr.bf16.mxu0 0
        %1835 = vmatpush1.bf16.msra.mxu0 0
        %1836 = vmatprep.subr.bf16.mxu0 0
        %1837 = vmatpush1.bf16.msra.mxu0 0
        %1838 = vmatprep.subr.bf16.mxu0 0
        %1839 = vmatpush1.bf16.msra.mxu0 0
        %1840 = vmatprep.subr.bf16.mxu0 0
        %1841 = vmatpush1.bf16.msra.mxu0 0
        %1842 = vmatprep.subr.bf16.mxu0 0
        %1843 = vmatpush1.bf16.msra.mxu0 0
        %1844 = vmatprep.subr.bf16.mxu0 0
        %1845 = vmatpush1.bf16.msra.mxu0 0
        %1846 = vmatprep.subr.bf16.mxu0 0
        %1847 = vmatpush1.bf16.msra.mxu0 0
        %1848 = vmatprep.subr.bf16.mxu0 0
        %1849 = vmatpush1.bf16.msra.mxu0 0
        %1850 = vmatprep.subr.bf16.mxu0 0
        %1851 = vmatpush1.bf16.msra.mxu0 0
        %1852 = vmatprep.subr.bf16.mxu0 0
        %1853 = vmatpush1.bf16.msra.mxu0 0
        %1854 = vmatprep.mubr.bf16.mxu0 0
        %1855 = vmatmul.mubr.bf16.gmra.mrb[0].mxu0 %v1820
        %v1856 = vpop.f32.mrb[0].mxu0
        %v1857 = vadd.f32 0.0, %v1856
        %v1858 = vpop.f32.mrb[0].mxu0
        %v1859 = vadd.f32 0.0, %v1858
        %v1860 = vpop.f32.mrb[0].mxu0
        %v1861 = vpop.f32.mrb[0].mxu0
        %1862 = vdwg.mxu0
        %1863 = vmatprep.subr.bf16.mxu0 %v1530
        %1864 = vmatpush1.bf16.msra.mxu0 %v1529
        %1865 = vmatprep.subr.bf16.mxu0 %v1549
        %1866 = vmatpush1.bf16.msra.mxu0 %v1546
        %1867 = vmatprep.subr.bf16.mxu0 0
        %1868 = vmatpush1.bf16.msra.mxu0 0
        %1869 = vmatprep.subr.bf16.mxu0 0
        %1870 = vmatpush1.bf16.msra.mxu0 0
        %1871 = vmatprep.subr.bf16.mxu0 0
        %1872 = vmatpush1.bf16.msra.mxu0 0
        %1873 = vmatprep.subr.bf16.mxu0 0
        %1874 = vmatpush1.bf16.msra.mxu0 0
        %1875 = vmatprep.subr.bf16.mxu0 0
        %1876 = vmatpush1.bf16.msra.mxu0 0
        %1877 = vmatprep.subr.bf16.mxu0 0
        %1878 = vmatpush1.bf16.msra.mxu0 0
        %1879 = vmatprep.subr.bf16.mxu0 0
        %1880 = vmatpush1.bf16.msra.mxu0 0
        %1881 = vmatprep.subr.bf16.mxu0 0
        %1882 = vmatpush1.bf16.msra.mxu0 0
        %1883 = vmatprep.subr.bf16.mxu0 0
        %1884 = vmatpush1.bf16.msra.mxu0 0
        %1885 = vmatprep.subr.bf16.mxu0 0
        %1886 = vmatpush1.bf16.msra.mxu0 0
        %1887 = vmatprep.subr.bf16.mxu0 0
        %1888 = vmatpush1.bf16.msra.mxu0 0
        %1889 = vmatprep.subr.bf16.mxu0 0
        %1890 = vmatpush1.bf16.msra.mxu0 0
        %1891 = vmatprep.subr.bf16.mxu0 0
        %1892 = vmatpush1.bf16.msra.mxu0 0
        %1893 = vmatprep.subr.bf16.mxu0 0
        %1894 = vmatpush1.bf16.msra.mxu0 0
        %1895 = vmatprep.mubr.bf16.mxu0 0
        %1896 = vmatmul.mubr.bf16.gmra.mrb[0].mxu0 %v1820
        %v1897 = vpop.f32.mrb[0].mxu0
        %v1898 = vadd.f32 0.0, %v1897
        %v1899 = vpop.f32.mrb[0].mxu0
        %v1900 = vadd.f32 0.0, %v1899
        %v1901 = vpop.f32.mrb[0].mxu0
        %v1902 = vpop.f32.mrb[0].mxu0
        %1903 = vdwg.mxu0
        %v1904 = vadd.f32 %v1490, %v1857
        %v1905 = vadd.f32 %v1491, %v1859
        %v1906 = vadd.f32 %v1492, %v1898
        %v1907 = vadd.f32 %v1493, %v1900
        %s1908 = scalar_lea.vmem %s1, 256
        %v1909 = vld [vmem:[%s1908] sm:$0xff]
        %v1910 = vld [vmem:[%s1908 + $0x8] sm:$0xff]
        %v1911 = vld [vmem:[%s1908 + $0x10] sm:$0xff]
        %v1912 = vld [vmem:[%s1908 + $0x18] sm:$0xff]
        %v1913 = vld [vmem:[%s1908 + $0x20] sm:$0xff]
        %v1914 = vld [vmem:[%s1908 + $0x28] sm:$0xff]
        %v1915 = vld [vmem:[%s1908 + $0x30] sm:$0x33]
        %v1916 = vld [vmem:[%s1908 + $0x38] sm:$0x33]
        %v1925 = vunpack.c.l.b16 %v1909
        %v1926 = vunpack.c.h.b16 %v1909
        %v1927 = vunpack.c.l.b16 %v1910
        %v1928 = vunpack.c.h.b16 %v1910
        %v1929 = vunpack.c.l.b16 %v1911
        %v1930 = vunpack.c.h.b16 %v1911
        %v1931 = vunpack.c.l.b16 %v1912
        %v1932 = vunpack.c.h.b16 %v1912
        %v1933 = vunpack.c.l.b16 %v1913
        %v1934 = vunpack.c.h.b16 %v1913
        %v1935 = vunpack.c.l.b16 %v1914
        %v1936 = vunpack.c.h.b16 %v1914
        %v1937 = vunpack.c.l.b16 %v1915
        %v1938 = vunpack.c.h.b16 %v1915
        %v1939 = vunpack.c.l.b16 %v1916
        %v1940 = vunpack.c.h.b16 %v1916
        %v1941 = vpack.c.b16 %v1929, %v1925
        %v1942 = vpack.c.b16 %v1930, %v1926
        %v1943 = vpack.c.b16 %v1931, %v1927
        %v1944 = vpack.c.b16 %v1932, %v1928
        %v1945 = vpack.c.b16 %v1937, %v1933
        %v1946 = vpack.c.b16 %v1938, %v1934
        %v1947 = vpack.c.b16 %v1939, %v1935
        %v1948 = vpack.c.b16 %v1940, %v1936
        %v1954 = vsel %vm341, %v1945, 0
        %v1957 = vsel %vm341, %v1946, 0
        %v1960 = vsel %vm341, %v1947, 0
        %v1963 = vsel %vm341, %v1948, 0
        %1965 = vmatprep.subr.bf16.mxu0 %v1942
        %1966 = vmatpush1.bf16.msra.mxu0 %v1941
        %1967 = vmatprep.subr.bf16.mxu0 %v1957
        %1968 = vmatpush1.bf16.msra.mxu0 %v1954
        %1969 = vmatprep.subr.bf16.mxu0 0
        %1970 = vmatpush1.bf16.msra.mxu0 0
        %1971 = vmatprep.subr.bf16.mxu0 0
        %1972 = vmatpush1.bf16.msra.mxu0 0
        %1973 = vmatprep.subr.bf16.mxu0 0
        %1974 = vmatpush1.bf16.msra.mxu0 0
        %1975 = vmatprep.subr.bf16.mxu0 0
        %1976 = vmatpush1.bf16.msra.mxu0 0
        %1977 = vmatprep.subr.bf16.mxu0 0
        %1978 = vmatpush1.bf16.msra.mxu0 0
        %1979 = vmatprep.subr.bf16.mxu0 0
        %1980 = vmatpush1.bf16.msra.mxu0 0
        %1981 = vmatprep.subr.bf16.mxu0 0
        %1982 = vmatpush1.bf16.msra.mxu0 0
        %1983 = vmatprep.subr.bf16.mxu0 0
        %1984 = vmatpush1.bf16.msra.mxu0 0
        %1985 = vmatprep.subr.bf16.mxu0 0
        %1986 = vmatpush1.bf16.msra.mxu0 0
        %1987 = vmatprep.subr.bf16.mxu0 0
        %1988 = vmatpush1.bf16.msra.mxu0 0
        %1989 = vmatprep.subr.bf16.mxu0 0
        %1990 = vmatpush1.bf16.msra.mxu0 0
        %1991 = vmatprep.subr.bf16.mxu0 0
        %1992 = vmatpush1.bf16.msra.mxu0 0
        %1993 = vmatprep.subr.bf16.mxu0 0
        %1994 = vmatpush1.bf16.msra.mxu0 0
        %1995 = vmatprep.subr.bf16.mxu0 0
        %1996 = vmatpush1.bf16.msra.mxu0 0
        %1997 = vmatprep.mubr.bf16.mxu0 0
        %1998 = vmatmul.mubr.bf16.gmra.mrb[0].mxu0 %v914
        %v1999 = vpop.f32.mrb[0].mxu0
        %v2000 = vadd.f32 0.0, %v1999
        %v2001 = vpop.f32.mrb[0].mxu0
        %v2002 = vadd.f32 0.0, %v2001
        %v2003 = vpop.f32.mrb[0].mxu0
        %v2004 = vpop.f32.mrb[0].mxu0
        %2005 = vdwg.mxu0
        %2006 = vmatprep.subr.bf16.mxu0 %v1944
        %2007 = vmatpush1.bf16.msra.mxu0 %v1943
        %2008 = vmatprep.subr.bf16.mxu0 %v1963
        %2009 = vmatpush1.bf16.msra.mxu0 %v1960
        %2010 = vmatprep.subr.bf16.mxu0 0
        %2011 = vmatpush1.bf16.msra.mxu0 0
        %2012 = vmatprep.subr.bf16.mxu0 0
        %2013 = vmatpush1.bf16.msra.mxu0 0
        %2014 = vmatprep.subr.bf16.mxu0 0
        %2015 = vmatpush1.bf16.msra.mxu0 0
        %2016 = vmatprep.subr.bf16.mxu0 0
        %2017 = vmatpush1.bf16.msra.mxu0 0
        %2018 = vmatprep.subr.bf16.mxu0 0
        %2019 = vmatpush1.bf16.msra.mxu0 0
        %2020 = vmatprep.subr.bf16.mxu0 0
        %2021 = vmatpush1.bf16.msra.mxu0 0
        %2022 = vmatprep.subr.bf16.mxu0 0
        %2023 = vmatpush1.bf16.msra.mxu0 0
        %2024 = vmatprep.subr.bf16.mxu0 0
        %2025 = vmatpush1.bf16.msra.mxu0 0
        %2026 = vmatprep.subr.bf16.mxu0 0
        %2027 = vmatpush1.bf16.msra.mxu0 0
        %2028 = vmatprep.subr.bf16.mxu0 0
        %2029 = vmatpush1.bf16.msra.mxu0 0
        %2030 = vmatprep.subr.bf16.mxu0 0
        %2031 = vmatpush1.bf16.msra.mxu0 0
        %2032 = vmatprep.subr.bf16.mxu0 0
        %2033 = vmatpush1.bf16.msra.mxu0 0
        %2034 = vmatprep.subr.bf16.mxu0 0
        %2035 = vmatpush1.bf16.msra.mxu0 0
        %2036 = vmatprep.subr.bf16.mxu0 0
        %2037 = vmatpush1.bf16.msra.mxu0 0
        %2038 = vmatprep.mubr.bf16.mxu0 0
        %2039 = vmatmul.mubr.bf16.gmra.mrb[0].mxu0 %v914
        %v2040 = vpop.f32.mrb[0].mxu0
        %v2041 = vadd.f32 0.0, %v2040
        %v2042 = vpop.f32.mrb[0].mxu0
        %v2043 = vadd.f32 0.0, %v2042
        %v2044 = vpop.f32.mrb[0].mxu0
        %v2045 = vpop.f32.mrb[0].mxu0
        %2046 = vdwg.mxu0
        %v2047 = vadd.f32 %v1633, %v2000
        %v2048 = vadd.f32 %v1634, %v2002
        %v2049 = vadd.f32 %v1635, %v2041
        %v2050 = vadd.f32 %v1636, %v2043
        %2051 = vmatprep.subr.bf16.mxu0 %v1942
        %2052 = vmatpush1.bf16.msra.mxu0 %v1941
        %2053 = vmatprep.subr.bf16.mxu0 %v1957
        %2054 = vmatpush1.bf16.msra.mxu0 %v1954
        %2055 = vmatprep.subr.bf16.mxu0 0
        %2056 = vmatpush1.bf16.msra.mxu0 0
        %2057 = vmatprep.subr.bf16.mxu0 0
        %2058 = vmatpush1.bf16.msra.mxu0 0
        %2059 = vmatprep.subr.bf16.mxu0 0
        %2060 = vmatpush1.bf16.msra.mxu0 0
        %2061 = vmatprep.subr.bf16.mxu0 0
        %2062 = vmatpush1.bf16.msra.mxu0 0
        %2063 = vmatprep.subr.bf16.mxu0 0
        %2064 = vmatpush1.bf16.msra.mxu0 0
        %2065 = vmatprep.subr.bf16.mxu0 0
        %2066 = vmatpush1.bf16.msra.mxu0 0
        %2067 = vmatprep.subr.bf16.mxu0 0
        %2068 = vmatpush1.bf16.msra.mxu0 0
        %2069 = vmatprep.subr.bf16.mxu0 0
        %2070 = vmatpush1.bf16.msra.mxu0 0
        %2071 = vmatprep.subr.bf16.mxu0 0
        %2072 = vmatpush1.bf16.msra.mxu0 0
        %2073 = vmatprep.subr.bf16.mxu0 0
        %2074 = vmatpush1.bf16.msra.mxu0 0
        %2075 = vmatprep.subr.bf16.mxu0 0
        %2076 = vmatpush1.bf16.msra.mxu0 0
        %2077 = vmatprep.subr.bf16.mxu0 0
        %2078 = vmatpush1.bf16.msra.mxu0 0
        %2079 = vmatprep.subr.bf16.mxu0 0
        %2080 = vmatpush1.bf16.msra.mxu0 0
        %2081 = vmatprep.subr.bf16.mxu0 0
        %2082 = vmatpush1.bf16.msra.mxu0 0
        %2083 = vmatprep.mubr.bf16.mxu0 0
        %2084 = vmatmul.mubr.bf16.gmra.mrb[0].mxu0 %v1406
        %v2085 = vpop.f32.mrb[0].mxu0
        %v2086 = vadd.f32 0.0, %v2085
        %v2087 = vpop.f32.mrb[0].mxu0
        %v2088 = vadd.f32 0.0, %v2087
        %v2089 = vpop.f32.mrb[0].mxu0
        %v2090 = vpop.f32.mrb[0].mxu0
        %2091 = vdwg.mxu0
        %2092 = vmatprep.subr.bf16.mxu0 %v1944
        %2093 = vmatpush1.bf16.msra.mxu0 %v1943
        %2094 = vmatprep.subr.bf16.mxu0 %v1963
        %2095 = vmatpush1.bf16.msra.mxu0 %v1960
        %2096 = vmatprep.subr.bf16.mxu0 0
        %2097 = vmatpush1.bf16.msra.mxu0 0
        %2098 = vmatprep.subr.bf16.mxu0 0
        %2099 = vmatpush1.bf16.msra.mxu0 0
        %2100 = vmatprep.subr.bf16.mxu0 0
        %2101 = vmatpush1.bf16.msra.mxu0 0
        %2102 = vmatprep.subr.bf16.mxu0 0
        %2103 = vmatpush1.bf16.msra.mxu0 0
        %2104 = vmatprep.subr.bf16.mxu0 0
        %2105 = vmatpush1.bf16.msra.mxu0 0
        %2106 = vmatprep.subr.bf16.mxu0 0
        %2107 = vmatpush1.bf16.msra.mxu0 0
        %2108 = vmatprep.subr.bf16.mxu0 0
        %2109 = vmatpush1.bf16.msra.mxu0 0
        %2110 = vmatprep.subr.bf16.mxu0 0
        %2111 = vmatpush1.bf16.msra.mxu0 0
        %2112 = vmatprep.subr.bf16.mxu0 0
        %2113 = vmatpush1.bf16.msra.mxu0 0
        %2114 = vmatprep.subr.bf16.mxu0 0
        %2115 = vmatpush1.bf16.msra.mxu0 0
        %2116 = vmatprep.subr.bf16.mxu0 0
        %2117 = vmatpush1.bf16.msra.mxu0 0
        %2118 = vmatprep.subr.bf16.mxu0 0
        %2119 = vmatpush1.bf16.msra.mxu0 0
        %2120 = vmatprep.subr.bf16.mxu0 0
        %2121 = vmatpush1.bf16.msra.mxu0 0
        %2122 = vmatprep.subr.bf16.mxu0 0
        %2123 = vmatpush1.bf16.msra.mxu0 0
        %2124 = vmatprep.mubr.bf16.mxu0 0
        %2125 = vmatmul.mubr.bf16.gmra.mrb[0].mxu0 %v1406
        %v2126 = vpop.f32.mrb[0].mxu0
        %v2127 = vadd.f32 0.0, %v2126
        %v2128 = vpop.f32.mrb[0].mxu0
        %v2129 = vadd.f32 0.0, %v2128
        %v2130 = vpop.f32.mrb[0].mxu0
        %v2131 = vpop.f32.mrb[0].mxu0
        %2132 = vdwg.mxu0
        %v2133 = vadd.f32 %v1719, %v2086
        %v2134 = vadd.f32 %v1720, %v2088
        %v2135 = vadd.f32 %v1721, %v2127
        %v2136 = vadd.f32 %v1722, %v2129
        %2137 = vmatprep.subr.bf16.mxu0 %v1942
        %2138 = vmatpush1.bf16.msra.mxu0 %v1941
        %2139 = vmatprep.subr.bf16.mxu0 %v1957
        %2140 = vmatpush1.bf16.msra.mxu0 %v1954
        %2141 = vmatprep.subr.bf16.mxu0 0
        %2142 = vmatpush1.bf16.msra.mxu0 0
        %2143 = vmatprep.subr.bf16.mxu0 0
        %2144 = vmatpush1.bf16.msra.mxu0 0
        %2145 = vmatprep.subr.bf16.mxu0 0
        %2146 = vmatpush1.bf16.msra.mxu0 0
        %2147 = vmatprep.subr.bf16.mxu0 0
        %2148 = vmatpush1.bf16.msra.mxu0 0
        %2149 = vmatprep.subr.bf16.mxu0 0
        %2150 = vmatpush1.bf16.msra.mxu0 0
        %2151 = vmatprep.subr.bf16.mxu0 0
        %2152 = vmatpush1.bf16.msra.mxu0 0
        %2153 = vmatprep.subr.bf16.mxu0 0
        %2154 = vmatpush1.bf16.msra.mxu0 0
        %2155 = vmatprep.subr.bf16.mxu0 0
        %2156 = vmatpush1.bf16.msra.mxu0 0
        %2157 = vmatprep.subr.bf16.mxu0 0
        %2158 = vmatpush1.bf16.msra.mxu0 0
        %2159 = vmatprep.subr.bf16.mxu0 0
        %2160 = vmatpush1.bf16.msra.mxu0 0
        %2161 = vmatprep.subr.bf16.mxu0 0
        %2162 = vmatpush1.bf16.msra.mxu0 0
        %2163 = vmatprep.subr.bf16.mxu0 0
        %2164 = vmatpush1.bf16.msra.mxu0 0
        %2165 = vmatprep.subr.bf16.mxu0 0
        %2166 = vmatpush1.bf16.msra.mxu0 0
        %2167 = vmatprep.subr.bf16.mxu0 0
        %2168 = vmatpush1.bf16.msra.mxu0 0
        %2169 = vmatprep.mubr.bf16.mxu0 0
        %2170 = vmatmul.mubr.bf16.gmra.mrb[0].mxu0 %v1820
        %v2171 = vpop.f32.mrb[0].mxu0
        %v2172 = vadd.f32 0.0, %v2171
        %v2173 = vpop.f32.mrb[0].mxu0
        %v2174 = vadd.f32 0.0, %v2173
        %v2175 = vpop.f32.mrb[0].mxu0
        %v2176 = vpop.f32.mrb[0].mxu0
        %2177 = vdwg.mxu0
        %2178 = vmatprep.subr.bf16.mxu0 %v1944
        %2179 = vmatpush1.bf16.msra.mxu0 %v1943
        %2180 = vmatprep.subr.bf16.mxu0 %v1963
        %2181 = vmatpush1.bf16.msra.mxu0 %v1960
        %2182 = vmatprep.subr.bf16.mxu0 0
        %2183 = vmatpush1.bf16.msra.mxu0 0
        %2184 = vmatprep.subr.bf16.mxu0 0
        %2185 = vmatpush1.bf16.msra.mxu0 0
        %2186 = vmatprep.subr.bf16.mxu0 0
        %2187 = vmatpush1.bf16.msra.mxu0 0
        %2188 = vmatprep.subr.bf16.mxu0 0
        %2189 = vmatpush1.bf16.msra.mxu0 0
        %2190 = vmatprep.subr.bf16.mxu0 0
        %2191 = vmatpush1.bf16.msra.mxu0 0
        %2192 = vmatprep.subr.bf16.mxu0 0
        %2193 = vmatpush1.bf16.msra.mxu0 0
        %2194 = vmatprep.subr.bf16.mxu0 0
        %2195 = vmatpush1.bf16.msra.mxu0 0
        %2196 = vmatprep.subr.bf16.mxu0 0
        %2197 = vmatpush1.bf16.msra.mxu0 0
        %2198 = vmatprep.subr.bf16.mxu0 0
        %2199 = vmatpush1.bf16.msra.mxu0 0
        %2200 = vmatprep.subr.bf16.mxu0 0
        %2201 = vmatpush1.bf16.msra.mxu0 0
        %2202 = vmatprep.subr.bf16.mxu0 0
        %2203 = vmatpush1.bf16.msra.mxu0 0
        %2204 = vmatprep.subr.bf16.mxu0 0
        %2205 = vmatpush1.bf16.msra.mxu0 0
        %2206 = vmatprep.subr.bf16.mxu0 0
        %2207 = vmatpush1.bf16.msra.mxu0 0
        %2208 = vmatprep.subr.bf16.mxu0 0
        %2209 = vmatpush1.bf16.msra.mxu0 0
        %2210 = vmatprep.mubr.bf16.mxu0 0
        %2211 = vmatmul.mubr.bf16.gmra.mrb[0].mxu0 %v1820
        %v2212 = vpop.f32.mrb[0].mxu0
        %v2213 = vadd.f32 0.0, %v2212
        %v2214 = vpop.f32.mrb[0].mxu0
        %v2215 = vadd.f32 0.0, %v2214
        %v2216 = vpop.f32.mrb[0].mxu0
        %v2217 = vpop.f32.mrb[0].mxu0
        %2218 = vdwg.mxu0
        %v2219 = vadd.f32 %v1805, %v2172
        %v2220 = vadd.f32 %v1806, %v2174
        %v2221 = vadd.f32 %v1807, %v2213
        %v2222 = vadd.f32 %v1808, %v2215
        %v2224 = vunpack.c.l.b16 %v291
        %v2225 = vpack.c.b16 %v2224, %v2224
        %v2227 = vshrl.u32 %v2225, 16
        %v2229 = vshll.u32 %v2225, 16
        %v2231 = vrot.slane %v2229, 1
        %v2232 = vor.u32 %v2227, %v2231
        %v2234 = vsel %vm337, %v2232, 0
        %2236 = vmatprep.subr.bf16.mxu0 %v1942
        %2237 = vmatpush1.bf16.msra.mxu0 %v1941
        %2238 = vmatprep.subr.bf16.mxu0 %v1957
        %2239 = vmatpush1.bf16.msra.mxu0 %v1954
        %2240 = vmatprep.subr.bf16.mxu0 0
        %2241 = vmatpush1.bf16.msra.mxu0 0
        %2242 = vmatprep.subr.bf16.mxu0 0
        %2243 = vmatpush1.bf16.msra.mxu0 0
        %2244 = vmatprep.subr.bf16.mxu0 0
        %2245 = vmatpush1.bf16.msra.mxu0 0
        %2246 = vmatprep.subr.bf16.mxu0 0
        %2247 = vmatpush1.bf16.msra.mxu0 0
        %2248 = vmatprep.subr.bf16.mxu0 0
        %2249 = vmatpush1.bf16.msra.mxu0 0
        %2250 = vmatprep.subr.bf16.mxu0 0
        %2251 = vmatpush1.bf16.msra.mxu0 0
        %2252 = vmatprep.subr.bf16.mxu0 0
        %2253 = vmatpush1.bf16.msra.mxu0 0
        %2254 = vmatprep.subr.bf16.mxu0 0
        %2255 = vmatpush1.bf16.msra.mxu0 0
        %2256 = vmatprep.subr.bf16.mxu0 0
        %2257 = vmatpush1.bf16.msra.mxu0 0
        %2258 = vmatprep.subr.bf16.mxu0 0
        %2259 = vmatpush1.bf16.msra.mxu0 0
        %2260 = vmatprep.subr.bf16.mxu0 0
        %2261 = vmatpush1.bf16.msra.mxu0 0
        %2262 = vmatprep.subr.bf16.mxu0 0
        %2263 = vmatpush1.bf16.msra.mxu0 0
        %2264 = vmatprep.subr.bf16.mxu0 0
        %2265 = vmatpush1.bf16.msra.mxu0 0
        %2266 = vmatprep.subr.bf16.mxu0 0
        %2267 = vmatpush1.bf16.msra.mxu0 0
        %2268 = vmatprep.mubr.bf16.mxu0 0
        %2269 = vmatmul.mubr.bf16.gmra.mrb[0].mxu0 %v2234
        %v2270 = vpop.f32.mrb[0].mxu0
        %v2271 = vadd.f32 0.0, %v2270
        %v2272 = vpop.f32.mrb[0].mxu0
        %v2273 = vadd.f32 0.0, %v2272
        %v2274 = vpop.f32.mrb[0].mxu0
        %v2275 = vpop.f32.mrb[0].mxu0
        %2276 = vdwg.mxu0
        %2277 = vmatprep.subr.bf16.mxu0 %v1944
        %2278 = vmatpush1.bf16.msra.mxu0 %v1943
        %2279 = vmatprep.subr.bf16.mxu0 %v1963
        %2280 = vmatpush1.bf16.msra.mxu0 %v1960
        %2281 = vmatprep.subr.bf16.mxu0 0
        %2282 = vmatpush1.bf16.msra.mxu0 0
        %2283 = vmatprep.subr.bf16.mxu0 0
        %2284 = vmatpush1.bf16.msra.mxu0 0
        %2285 = vmatprep.subr.bf16.mxu0 0
        %2286 = vmatpush1.bf16.msra.mxu0 0
        %2287 = vmatprep.subr.bf16.mxu0 0
        %2288 = vmatpush1.bf16.msra.mxu0 0
        %2289 = vmatprep.subr.bf16.mxu0 0
        %2290 = vmatpush1.bf16.msra.mxu0 0
        %2291 = vmatprep.subr.bf16.mxu0 0
        %2292 = vmatpush1.bf16.msra.mxu0 0
        %2293 = vmatprep.subr.bf16.mxu0 0
        %2294 = vmatpush1.bf16.msra.mxu0 0
        %2295 = vmatprep.subr.bf16.mxu0 0
        %2296 = vmatpush1.bf16.msra.mxu0 0
        %2297 = vmatprep.subr.bf16.mxu0 0
        %2298 = vmatpush1.bf16.msra.mxu0 0
        %2299 = vmatprep.subr.bf16.mxu0 0
        %2300 = vmatpush1.bf16.msra.mxu0 0
        %2301 = vmatprep.subr.bf16.mxu0 0
        %2302 = vmatpush1.bf16.msra.mxu0 0
        %2303 = vmatprep.subr.bf16.mxu0 0
        %2304 = vmatpush1.bf16.msra.mxu0 0
        %2305 = vmatprep.subr.bf16.mxu0 0
        %2306 = vmatpush1.bf16.msra.mxu0 0
        %2307 = vmatprep.subr.bf16.mxu0 0
        %2308 = vmatpush1.bf16.msra.mxu0 0
        %2309 = vmatprep.mubr.bf16.mxu0 0
        %2310 = vmatmul.mubr.bf16.gmra.mrb[0].mxu0 %v2234
        %v2311 = vpop.f32.mrb[0].mxu0
        %v2312 = vadd.f32 0.0, %v2311
        %v2313 = vpop.f32.mrb[0].mxu0
        %v2314 = vadd.f32 0.0, %v2313
        %v2315 = vpop.f32.mrb[0].mxu0
        %v2316 = vpop.f32.mrb[0].mxu0
        %2317 = vdwg.mxu0
        %v2318 = vadd.f32 %v1904, %v2271
        %v2319 = vadd.f32 %v1905, %v2273
        %v2320 = vadd.f32 %v1906, %v2312
        %v2321 = vadd.f32 %v1907, %v2314
        %v2322 = vmax.f32 %v2047, %v2133
        %v2323 = vmax.f32 %v2048, %v2134
        %v2324 = vmax.f32 %v2049, %v2135
        %v2325 = vmax.f32 %v2050, %v2136
        %v2326 = vmax.f32 %v2322, %v2324
        %v2327 = vmax.f32 %v2323, %v2325
        %v2328 = vld [vmem:[%s2] sm:$0x3]
        %v2330 = vlaneseq
        %v2331 = vshrl.u32 %v2330, 7
        %v2332 = vsub.s32 0, %v2331
        %v2333 = vrot.slane %v2328, %v2332
        %v2334 = vlaneseq
        %v2335 = vshrl.u32 %v2334, 7
        %v2336 = vsub.s32 1, %v2335
        %v2337 = vrot.slane %v2328, %v2336
        %v2340 = vadd.f32 %v2326, %v2333
        %v2341 = vadd.f32 %v2327, %v2337
        %v2342 = vmax.f32 %v2340, 0.0
        %v2343 = vmax.f32 %v2341, 0.0
        %v2344 = vlaneseq
        %vm2345 = vcmp.ge.s32.totalorder %v2344, 0
        %vm2346 = vcmp.lt.s32.totalorder %v2344, 256
        %vm2347 = vmand %vm2345, %vm2346
        %2348 = vst.msk [vmem:[#allocation2] ss:$8 sm:$0x3] %vm2347, 0.0
        %2349 = vst.msk [vmem:[#allocation2] ss:$8 sm:$0x0] %vm2347, 0.0
        %v2352 = vrot.slane %v2342, 7
        %v2353 = vrot.slane %v2343, 7
        %2356 = vst [vmem:[#allocation2] sm:$0xfe] %v2352
        %2357 = vst [vmem:[#allocation2 + $0x8] sm:$0xfe] %v2353
        %s2358 = scalar_lea.vmem [#allocation2], 16
        %2359 = vst.msk [vmem:[%s2358] ss:$8 sm:$0x3] %vm2347, 0.0
        %2360 = vst.msk [vmem:[%s2358] ss:$8 sm:$0x0] %vm2347, 0.0
        %v2361 = vmax.f32 %v2219, %v2318
        %v2362 = vmax.f32 %v2220, %v2319
        %v2363 = vmax.f32 %v2221, %v2320
        %v2364 = vmax.f32 %v2222, %v2321
        %v2365 = vmax.f32 %v2361, %v2363
        %v2366 = vmax.f32 %v2362, %v2364
        %v2367 = vld [vmem:[%s2] sm:$0x3]
        %v2369 = vlaneseq
        %v2370 = vshrl.u32 %v2369, 7
        %v2371 = vsub.s32 0, %v2370
        %v2372 = vrot.slane %v2367, %v2371
        %v2373 = vlaneseq
        %v2374 = vshrl.u32 %v2373, 7
        %v2375 = vsub.s32 1, %v2374
        %v2376 = vrot.slane %v2367, %v2375
        %v2379 = vadd.f32 %v2365, %v2372
        %v2380 = vadd.f32 %v2366, %v2376
        %v2381 = vmax.f32 %v2379, 0.0
        %v2382 = vmax.f32 %v2380, 0.0
        %s2383 = scalar_lea.vmem [#allocation2], 32
        %2384 = vst.msk [vmem:[%s2383] ss:$8 sm:$0x3] %vm2347, 0.0
        %2385 = vst.msk [vmem:[%s2383] ss:$8 sm:$0x0] %vm2347, 0.0
        %v2388 = vrot.slane %v2381, 7
        %v2389 = vrot.slane %v2382, 7
        %2392 = vst [vmem:[%s2383] sm:$0xfe] %v2388
        %2393 = vst [vmem:[%s2383 + $0x8] sm:$0xfe] %v2389
        %s2394 = scalar_lea.vmem %s2383, 16 [#allocation2]
        %2395 = vst.msk [vmem:[%s2394] ss:$8 sm:$0x3] %vm2347, 0.0
        %2396 = vst.msk [vmem:[%s2394] ss:$8 sm:$0x0] %vm2347, 0.0
        %v2397 = vld [vmem:[%s3] sm:$0xff]
        %v2398 = vld [vmem:[%s3 + $0x8] sm:$0xff]
        %v2399 = vld [vmem:[%s3 + $0x10] sm:$0xff]
        %v2400 = vld [vmem:[%s3 + $0x18] sm:$0xff]
        %v2401 = vld [vmem:[%s3 + $0x20] sm:$0xff]
        %v2402 = vld [vmem:[%s3 + $0x28] sm:$0xff]
        %v2403 = vld [vmem:[%s3 + $0x30] sm:$0xff]
        %v2404 = vld [vmem:[%s3 + $0x38] sm:$0xff]
        %v2405 = vld [vmem:[%s3 + $0x40] sm:$0xff]
        %v2406 = vld [vmem:[%s3 + $0x48] sm:$0xff]
        %v2407 = vld [vmem:[%s3 + $0x50] sm:$0xff]
        %v2408 = vld [vmem:[%s3 + $0x58] sm:$0xff]
        %v2409 = vld [vmem:[%s3 + $0x60] sm:$0xff]
        %v2410 = vld [vmem:[%s3 + $0x68] sm:$0xff]
        %v2411 = vld [vmem:[%s3 + $0x70] sm:$0xff]
        %v2412 = vld [vmem:[%s3 + $0x78] sm:$0xff]
        %v2413 = vld [vmem:[%s3 + $0x80] sm:$0xff]
        %v2414 = vld [vmem:[%s3 + $0x88] sm:$0xff]
        %v2415 = vld [vmem:[%s3 + $0x90] sm:$0xff]
        %v2416 = vld [vmem:[%s3 + $0x98] sm:$0xff]
        %v2417 = vld [vmem:[%s3 + $0xa0] sm:$0xff]
        %v2418 = vld [vmem:[%s3 + $0xa8] sm:$0xff]
        %v2419 = vld [vmem:[%s3 + $0xb0] sm:$0xff]
        %v2420 = vld [vmem:[%s3 + $0xb8] sm:$0xff]
        %v2421 = vld [vmem:[%s3 + $0xc0] sm:$0xff]
        %v2422 = vld [vmem:[%s3 + $0xc8] sm:$0xff]
        %v2423 = vld [vmem:[%s3 + $0xd0] sm:$0xff]
        %v2424 = vld [vmem:[%s3 + $0xd8] sm:$0xff]
        %v2425 = vld [vmem:[%s3 + $0xe0] sm:$0xff]
        %v2426 = vld [vmem:[%s3 + $0xe8] sm:$0xff]
        %v2427 = vld [vmem:[%s3 + $0xf0] sm:$0xff]
        %v2428 = vld [vmem:[%s3 + $0xf8] sm:$0xff]
        %v2429 = vld [vmem:[%s3 + $0x100] sm:$0xff]
        %v2430 = vld [vmem:[%s3 + $0x108] sm:$0xff]
        %v2431 = vld [vmem:[%s3 + $0x110] sm:$0xff]
        %v2432 = vld [vmem:[%s3 + $0x118] sm:$0xff]
        %v2433 = vld [vmem:[%s3 + $0x120] sm:$0xff]
        %v2434 = vld [vmem:[%s3 + $0x128] sm:$0xff]
        %v2435 = vld [vmem:[%s3 + $0x130] sm:$0xff]
        %v2436 = vld [vmem:[%s3 + $0x138] sm:$0xff]
        %v2437 = vld [vmem:[%s3 + $0x140] sm:$0xff]
        %v2438 = vld [vmem:[%s3 + $0x148] sm:$0xff]
        %v2439 = vld [vmem:[%s3 + $0x150] sm:$0xff]
        %v2440 = vld [vmem:[%s3 + $0x158] sm:$0xff]
        %v2441 = vld [vmem:[%s3 + $0x160] sm:$0xff]
        %v2442 = vld [vmem:[%s3 + $0x168] sm:$0xff]
        %v2443 = vld [vmem:[%s3 + $0x170] sm:$0xff]
        %v2444 = vld [vmem:[%s3 + $0x178] sm:$0xff]
        %v2445 = vld [vmem:[%s3 + $0x180] sm:$0xff]
        %v2446 = vld [vmem:[%s3 + $0x188] sm:$0xff]
        %v2447 = vld [vmem:[%s3 + $0x190] sm:$0xff]
        %v2448 = vld [vmem:[%s3 + $0x198] sm:$0xff]
        %v2449 = vld [vmem:[%s3 + $0x1a0] sm:$0xff]
        %v2450 = vld [vmem:[%s3 + $0x1a8] sm:$0xff]
        %v2451 = vld [vmem:[%s3 + $0x1b0] sm:$0xff]
        %v2452 = vld [vmem:[%s3 + $0x1b8] sm:$0xff]
        %v2453 = vld [vmem:[%s3 + $0x1c0] sm:$0xff]
        %v2454 = vld [vmem:[%s3 + $0x1c8] sm:$0xff]
        %v2455 = vld [vmem:[%s3 + $0x1d0] sm:$0xff]
        %v2456 = vld [vmem:[%s3 + $0x1d8] sm:$0xff]
        %v2457 = vld [vmem:[%s3 + $0x1e0] sm:$0xff]
        %v2458 = vld [vmem:[%s3 + $0x1e8] sm:$0xff]
        %v2459 = vld [vmem:[%s3 + $0x1f0] sm:$0xff]
        %v2460 = vld [vmem:[%s3 + $0x1f8] sm:$0xff]
        %v2461 = vld [vmem:[#allocation2] sm:$0x7f]
        %v2462 = vld [vmem:[#allocation2 + $0x8] sm:$0x7f]
        %v2463 = vpack.c.bf16 %v2461, %v2461
        %v2464 = vpack.c.bf16 %v2462, %v2462
        %v2465 = vld [vmem:[%s2383] sm:$0x7f]
        %v2466 = vld [vmem:[%s2383 + $0x8] sm:$0x7f]
        %v2467 = vpack.c.bf16 %v2465, %v2465
        %v2468 = vpack.c.bf16 %v2466, %v2466
        %s2469 = scalar_lea.vmem %s3, 512
        %v2470 = vld [vmem:[%s2469] sm:$0xff]
        %v2471 = vld [vmem:[%s2469 + $0x8] sm:$0xff]
        %v2472 = vld [vmem:[%s2469 + $0x10] sm:$0xff]
        %v2473 = vld [vmem:[%s2469 + $0x18] sm:$0xff]
        %v2474 = vld [vmem:[%s2469 + $0x20] sm:$0xff]
        %v2475 = vld [vmem:[%s2469 + $0x28] sm:$0xff]
        %v2476 = vld [vmem:[%s2469 + $0x30] sm:$0xff]
        %v2477 = vld [vmem:[%s2469 + $0x38] sm:$0xff]
        %v2478 = vld [vmem:[%s2469 + $0x40] sm:$0xff]
        %v2479 = vld [vmem:[%s2469 + $0x48] sm:$0xff]
        %v2480 = vld [vmem:[%s2469 + $0x50] sm:$0xff]
        %v2481 = vld [vmem:[%s2469 + $0x58] sm:$0xff]
        %v2482 = vld [vmem:[%s2469 + $0x60] sm:$0xff]
        %v2483 = vld [vmem:[%s2469 + $0x68] sm:$0xff]
        %v2484 = vld [vmem:[%s2469 + $0x70] sm:$0xff]
        %v2485 = vld [vmem:[%s2469 + $0x78] sm:$0xff]
        %v2486 = vld [vmem:[%s2469 + $0x80] sm:$0xff]
        %v2487 = vld [vmem:[%s2469 + $0x88] sm:$0xff]
        %v2488 = vld [vmem:[%s2469 + $0x90] sm:$0xff]
        %v2489 = vld [vmem:[%s2469 + $0x98] sm:$0xff]
        %v2490 = vld [vmem:[%s2469 + $0xa0] sm:$0xff]
        %v2491 = vld [vmem:[%s2469 + $0xa8] sm:$0xff]
        %v2492 = vld [vmem:[%s2469 + $0xb0] sm:$0xff]
        %v2493 = vld [vmem:[%s2469 + $0xb8] sm:$0xff]
        %v2494 = vld [vmem:[%s2469 + $0xc0] sm:$0xff]
        %v2495 = vld [vmem:[%s2469 + $0xc8] sm:$0xff]
        %v2496 = vld [vmem:[%s2469 + $0xd0] sm:$0xff]
        %v2497 = vld [vmem:[%s2469 + $0xd8] sm:$0xff]
        %v2498 = vld [vmem:[%s2469 + $0xe0] sm:$0xff]
        %v2499 = vld [vmem:[%s2469 + $0xe8] sm:$0xff]
        %v2500 = vld [vmem:[%s2469 + $0xf0] sm:$0xff]
        %v2501 = vld [vmem:[%s2469 + $0xf8] sm:$0xff]
        %v2502 = vld [vmem:[%s2469 + $0x100] sm:$0xff]
        %v2503 = vld [vmem:[%s2469 + $0x108] sm:$0xff]
        %v2504 = vld [vmem:[%s2469 + $0x110] sm:$0xff]
        %v2505 = vld [vmem:[%s2469 + $0x118] sm:$0xff]
        %v2506 = vld [vmem:[%s2469 + $0x120] sm:$0xff]
        %v2507 = vld [vmem:[%s2469 + $0x128] sm:$0xff]
        %v2508 = vld [vmem:[%s2469 + $0x130] sm:$0xff]
        %v2509 = vld [vmem:[%s2469 + $0x138] sm:$0xff]
        %v2510 = vld [vmem:[%s2469 + $0x140] sm:$0xff]
        %v2511 = vld [vmem:[%s2469 + $0x148] sm:$0xff]
        %v2512 = vld [vmem:[%s2469 + $0x150] sm:$0xff]
        %v2513 = vld [vmem:[%s2469 + $0x158] sm:$0xff]
        %v2514 = vld [vmem:[%s2469 + $0x160] sm:$0xff]
        %v2515 = vld [vmem:[%s2469 + $0x168] sm:$0xff]
        %v2516 = vld [vmem:[%s2469 + $0x170] sm:$0xff]
        %v2517 = vld [vmem:[%s2469 + $0x178] sm:$0xff]
        %v2518 = vld [vmem:[%s2469 + $0x180] sm:$0xff]
        %v2519 = vld [vmem:[%s2469 + $0x188] sm:$0xff]
        %v2520 = vld [vmem:[%s2469 + $0x190] sm:$0xff]
        %v2521 = vld [vmem:[%s2469 + $0x198] sm:$0xff]
        %v2522 = vld [vmem:[%s2469 + $0x1a0] sm:$0xff]
        %v2523 = vld [vmem:[%s2469 + $0x1a8] sm:$0xff]
        %v2524 = vld [vmem:[%s2469 + $0x1b0] sm:$0xff]
        %v2525 = vld [vmem:[%s2469 + $0x1b8] sm:$0xff]
        %v2526 = vld [vmem:[%s2469 + $0x1c0] sm:$0xff]
        %v2527 = vld [vmem:[%s2469 + $0x1c8] sm:$0xff]
        %v2528 = vld [vmem:[%s2469 + $0x1d0] sm:$0xff]
        %v2529 = vld [vmem:[%s2469 + $0x1d8] sm:$0xff]
        %v2530 = vld [vmem:[%s2469 + $0x1e0] sm:$0xff]
        %v2531 = vld [vmem:[%s2469 + $0x1e8] sm:$0xff]
        %v2532 = vld [vmem:[%s2469 + $0x1f0] sm:$0xff]
        %v2533 = vld [vmem:[%s2469 + $0x1f8] sm:$0xff]
        %v2598 = vunpack.c.l.b16 %v2470
        %v2599 = vunpack.c.h.b16 %v2470
        %v2600 = vunpack.c.l.b16 %v2471
        %v2601 = vunpack.c.h.b16 %v2471
        %v2602 = vunpack.c.l.b16 %v2472
        %v2603 = vunpack.c.h.b16 %v2472
        %v2604 = vunpack.c.l.b16 %v2473
        %v2605 = vunpack.c.h.b16 %v2473
        %v2606 = vunpack.c.l.b16 %v2474
        %v2607 = vunpack.c.h.b16 %v2474
        %v2608 = vunpack.c.l.b16 %v2475
        %v2609 = vunpack.c.h.b16 %v2475
        %v2610 = vunpack.c.l.b16 %v2476
        %v2611 = vunpack.c.h.b16 %v2476
        %v2612 = vunpack.c.l.b16 %v2477
        %v2613 = vunpack.c.h.b16 %v2477
        %v2614 = vunpack.c.l.b16 %v2478
        %v2615 = vunpack.c.h.b16 %v2478
        %v2616 = vunpack.c.l.b16 %v2479
        %v2617 = vunpack.c.h.b16 %v2479
        %v2618 = vunpack.c.l.b16 %v2480
        %v2619 = vunpack.c.h.b16 %v2480
        %v2620 = vunpack.c.l.b16 %v2481
        %v2621 = vunpack.c.h.b16 %v2481
        %v2622 = vunpack.c.l.b16 %v2482
        %v2623 = vunpack.c.h.b16 %v2482
        %v2624 = vunpack.c.l.b16 %v2483
        %v2625 = vunpack.c.h.b16 %v2483
        %v2626 = vunpack.c.l.b16 %v2484
        %v2627 = vunpack.c.h.b16 %v2484
        %v2628 = vunpack.c.l.b16 %v2485
        %v2629 = vunpack.c.h.b16 %v2485
        %v2630 = vunpack.c.l.b16 %v2486
        %v2631 = vunpack.c.h.b16 %v2486
        %v2632 = vunpack.c.l.b16 %v2487
        %v2633 = vunpack.c.h.b16 %v2487
        %v2634 = vunpack.c.l.b16 %v2488
        %v2635 = vunpack.c.h.b16 %v2488
        %v2636 = vunpack.c.l.b16 %v2489
        %v2637 = vunpack.c.h.b16 %v2489
        %v2638 = vunpack.c.l.b16 %v2490
        %v2639 = vunpack.c.h.b16 %v2490
        %v2640 = vunpack.c.l.b16 %v2491
        %v2641 = vunpack.c.h.b16 %v2491
        %v2642 = vunpack.c.l.b16 %v2492
        %v2643 = vunpack.c.h.b16 %v2492
        %v2644 = vunpack.c.l.b16 %v2493
        %v2645 = vunpack.c.h.b16 %v2493
        %v2646 = vunpack.c.l.b16 %v2494
        %v2647 = vunpack.c.h.b16 %v2494
        %v2648 = vunpack.c.l.b16 %v2495
        %v2649 = vunpack.c.h.b16 %v2495
        %v2650 = vunpack.c.l.b16 %v2496
        %v2651 = vunpack.c.h.b16 %v2496
        %v2652 = vunpack.c.l.b16 %v2497
        %v2653 = vunpack.c.h.b16 %v2497
        %v2654 = vunpack.c.l.b16 %v2498
        %v2655 = vunpack.c.h.b16 %v2498
        %v2656 = vunpack.c.l.b16 %v2499
        %v2657 = vunpack.c.h.b16 %v2499
        %v2658 = vunpack.c.l.b16 %v2500
        %v2659 = vunpack.c.h.b16 %v2500
        %v2660 = vunpack.c.l.b16 %v2501
        %v2661 = vunpack.c.h.b16 %v2501
        %v2662 = vunpack.c.l.b16 %v2502
        %v2663 = vunpack.c.h.b16 %v2502
        %v2664 = vunpack.c.l.b16 %v2503
        %v2665 = vunpack.c.h.b16 %v2503
        %v2666 = vunpack.c.l.b16 %v2504
        %v2667 = vunpack.c.h.b16 %v2504
        %v2668 = vunpack.c.l.b16 %v2505
        %v2669 = vunpack.c.h.b16 %v2505
        %v2670 = vunpack.c.l.b16 %v2506
        %v2671 = vunpack.c.h.b16 %v2506
        %v2672 = vunpack.c.l.b16 %v2507
        %v2673 = vunpack.c.h.b16 %v2507
        %v2674 = vunpack.c.l.b16 %v2508
        %v2675 = vunpack.c.h.b16 %v2508
        %v2676 = vunpack.c.l.b16 %v2509
        %v2677 = vunpack.c.h.b16 %v2509
        %v2678 = vunpack.c.l.b16 %v2510
        %v2679 = vunpack.c.h.b16 %v2510
        %v2680 = vunpack.c.l.b16 %v2511
        %v2681 = vunpack.c.h.b16 %v2511
        %v2682 = vunpack.c.l.b16 %v2512
        %v2683 = vunpack.c.h.b16 %v2512
        %v2684 = vunpack.c.l.b16 %v2513
        %v2685 = vunpack.c.h.b16 %v2513
        %v2686 = vunpack.c.l.b16 %v2514
        %v2687 = vunpack.c.h.b16 %v2514
        %v2688 = vunpack.c.l.b16 %v2515
        %v2689 = vunpack.c.h.b16 %v2515
        %v2690 = vunpack.c.l.b16 %v2516
        %v2691 = vunpack.c.h.b16 %v2516
        %v2692 = vunpack.c.l.b16 %v2517
        %v2693 = vunpack.c.h.b16 %v2517
        %v2694 = vunpack.c.l.b16 %v2518
        %v2695 = vunpack.c.h.b16 %v2518
        %v2696 = vunpack.c.l.b16 %v2519
        %v2697 = vunpack.c.h.b16 %v2519
        %v2698 = vunpack.c.l.b16 %v2520
        %v2699 = vunpack.c.h.b16 %v2520
        %v2700 = vunpack.c.l.b16 %v2521
        %v2701 = vunpack.c.h.b16 %v2521
        %v2702 = vunpack.c.l.b16 %v2522
        %v2703 = vunpack.c.h.b16 %v2522
        %v2704 = vunpack.c.l.b16 %v2523
        %v2705 = vunpack.c.h.b16 %v2523
        %v2706 = vunpack.c.l.b16 %v2524
        %v2707 = vunpack.c.h.b16 %v2524
        %v2708 = vunpack.c.l.b16 %v2525
        %v2709 = vunpack.c.h.b16 %v2525
        %v2710 = vunpack.c.l.b16 %v2526
        %v2711 = vunpack.c.h.b16 %v2526
        %v2712 = vunpack.c.l.b16 %v2527
        %v2713 = vunpack.c.h.b16 %v2527
        %v2714 = vunpack.c.l.b16 %v2528
        %v2715 = vunpack.c.h.b16 %v2528
        %v2716 = vunpack.c.l.b16 %v2529
        %v2717 = vunpack.c.h.b16 %v2529
        %v2718 = vunpack.c.l.b16 %v2530
        %v2719 = vunpack.c.h.b16 %v2530
        %v2720 = vunpack.c.l.b16 %v2531
        %v2721 = vunpack.c.h.b16 %v2531
        %v2722 = vunpack.c.l.b16 %v2532
        %v2723 = vunpack.c.h.b16 %v2532
        %v2724 = vunpack.c.l.b16 %v2533
        %v2725 = vunpack.c.h.b16 %v2533
        %v2726 = vpack.c.b16 %v2602, %v2598
        %v2727 = vpack.c.b16 %v2603, %v2599
        %v2728 = vpack.c.b16 %v2604, %v2600
        %v2729 = vpack.c.b16 %v2605, %v2601
        %v2730 = vpack.c.b16 %v2610, %v2606
        %v2731 = vpack.c.b16 %v2611, %v2607
        %v2732 = vpack.c.b16 %v2612, %v2608
        %v2733 = vpack.c.b16 %v2613, %v2609
        %v2734 = vpack.c.b16 %v2618, %v2614
        %v2735 = vpack.c.b16 %v2619, %v2615
        %v2736 = vpack.c.b16 %v2620, %v2616
        %v2737 = vpack.c.b16 %v2621, %v2617
        %v2738 = vpack.c.b16 %v2626, %v2622
        %v2739 = vpack.c.b16 %v2627, %v2623
        %v2740 = vpack.c.b16 %v2628, %v2624
        %v2741 = vpack.c.b16 %v2629, %v2625
        %v2742 = vpack.c.b16 %v2634, %v2630
        %v2743 = vpack.c.b16 %v2635, %v2631
        %v2744 = vpack.c.b16 %v2636, %v2632
        %v2745 = vpack.c.b16 %v2637, %v2633
        %v2746 = vpack.c.b16 %v2642, %v2638
        %v2747 = vpack.c.b16 %v2643, %v2639
        %v2748 = vpack.c.b16 %v2644, %v2640
        %v2749 = vpack.c.b16 %v2645, %v2641
        %v2750 = vpack.c.b16 %v2650, %v2646
        %v2751 = vpack.c.b16 %v2651, %v2647
        %v2752 = vpack.c.b16 %v2652, %v2648
        %v2753 = vpack.c.b16 %v2653, %v2649
        %v2754 = vpack.c.b16 %v2658, %v2654
        %v2755 = vpack.c.b16 %v2659, %v2655
        %v2756 = vpack.c.b16 %v2660, %v2656
        %v2757 = vpack.c.b16 %v2661, %v2657
        %v2758 = vpack.c.b16 %v2666, %v2662
        %v2759 = vpack.c.b16 %v2667, %v2663
        %v2760 = vpack.c.b16 %v2668, %v2664
        %v2761 = vpack.c.b16 %v2669, %v2665
        %v2762 = vpack.c.b16 %v2674, %v2670
        %v2763 = vpack.c.b16 %v2675, %v2671
        %v2764 = vpack.c.b16 %v2676, %v2672
        %v2765 = vpack.c.b16 %v2677, %v2673
        %v2766 = vpack.c.b16 %v2682, %v2678
        %v2767 = vpack.c.b16 %v2683, %v2679
        %v2768 = vpack.c.b16 %v2684, %v2680
        %v2769 = vpack.c.b16 %v2685, %v2681
        %v2770 = vpack.c.b16 %v2690, %v2686
        %v2771 = vpack.c.b16 %v2691, %v2687
        %v2772 = vpack.c.b16 %v2692, %v2688
        %v2773 = vpack.c.b16 %v2693, %v2689
        %v2774 = vpack.c.b16 %v2698, %v2694
        %v2775 = vpack.c.b16 %v2699, %v2695
        %v2776 = vpack.c.b16 %v2700, %v2696
        %v2777 = vpack.c.b16 %v2701, %v2697
        %v2778 = vpack.c.b16 %v2706, %v2702
        %v2779 = vpack.c.b16 %v2707, %v2703
        %v2780 = vpack.c.b16 %v2708, %v2704
        %v2781 = vpack.c.b16 %v2709, %v2705
        %v2782 = vpack.c.b16 %v2714, %v2710
        %v2783 = vpack.c.b16 %v2715, %v2711
        %v2784 = vpack.c.b16 %v2716, %v2712
        %v2785 = vpack.c.b16 %v2717, %v2713
        %v2786 = vpack.c.b16 %v2722, %v2718
        %v2787 = vpack.c.b16 %v2723, %v2719
        %v2788 = vpack.c.b16 %v2724, %v2720
        %v2789 = vpack.c.b16 %v2725, %v2721
        %2854 = vmatprep.subr.bf16.mxu0 %v2727
        %2855 = vmatpush1.bf16.msra.mxu0 %v2726
        %2856 = vmatprep.subr.bf16.mxu0 %v2731
        %2857 = vmatpush1.bf16.msra.mxu0 %v2730
        %2858 = vmatprep.subr.bf16.mxu0 %v2735
        %2859 = vmatpush1.bf16.msra.mxu0 %v2734
        %2860 = vmatprep.subr.bf16.mxu0 %v2739
        %2861 = vmatpush1.bf16.msra.mxu0 %v2738
        %2862 = vmatprep.subr.bf16.mxu0 %v2743
        %2863 = vmatpush1.bf16.msra.mxu0 %v2742
        %2864 = vmatprep.subr.bf16.mxu0 %v2747
        %2865 = vmatpush1.bf16.msra.mxu0 %v2746
        %2866 = vmatprep.subr.bf16.mxu0 %v2751
        %2867 = vmatpush1.bf16.msra.mxu0 %v2750
        %2868 = vmatprep.subr.bf16.mxu0 %v2755
        %2869 = vmatpush1.bf16.msra.mxu0 %v2754
        %2870 = vmatprep.subr.bf16.mxu0 %v2759
        %2871 = vmatpush1.bf16.msra.mxu0 %v2758
        %2872 = vmatprep.subr.bf16.mxu0 %v2763
        %2873 = vmatpush1.bf16.msra.mxu0 %v2762
        %2874 = vmatprep.subr.bf16.mxu0 %v2767
        %2875 = vmatpush1.bf16.msra.mxu0 %v2766
        %2876 = vmatprep.subr.bf16.mxu0 %v2771
        %2877 = vmatpush1.bf16.msra.mxu0 %v2770
        %2878 = vmatprep.subr.bf16.mxu0 %v2775
        %2879 = vmatpush1.bf16.msra.mxu0 %v2774
        %2880 = vmatprep.subr.bf16.mxu0 %v2779
        %2881 = vmatpush1.bf16.msra.mxu0 %v2778
        %2882 = vmatprep.subr.bf16.mxu0 %v2783
        %2883 = vmatpush1.bf16.msra.mxu0 %v2782
        %2884 = vmatprep.subr.bf16.mxu0 %v2787
        %2885 = vmatpush1.bf16.msra.mxu0 %v2786
        %2886 = vmatprep.mubr.bf16.mxu0 %v2468
        %2887 = vmatmul.mubr.bf16.gmra.mrb[0].mxu0 %v2467
        %v2888 = vpop.f32.mrb[0].mxu0
        %v2889 = vadd.f32 0.0, %v2888
        %v2890 = vpop.f32.mrb[0].mxu0
        %v2891 = vadd.f32 0.0, %v2890
        %v2892 = vpop.f32.mrb[0].mxu0
        %v2893 = vpop.f32.mrb[0].mxu0
        %2894 = vdwg.mxu0
        %2895 = vmatprep.subr.bf16.mxu0 %v2729
        %2896 = vmatpush1.bf16.msra.mxu0 %v2728
        %2897 = vmatprep.subr.bf16.mxu0 %v2733
        %2898 = vmatpush1.bf16.msra.mxu0 %v2732
        %2899 = vmatprep.subr.bf16.mxu0 %v2737
        %2900 = vmatpush1.bf16.msra.mxu0 %v2736
        %2901 = vmatprep.subr.bf16.mxu0 %v2741
        %2902 = vmatpush1.bf16.msra.mxu0 %v2740
        %2903 = vmatprep.subr.bf16.mxu0 %v2745
        %2904 = vmatpush1.bf16.msra.mxu0 %v2744
        %2905 = vmatprep.subr.bf16.mxu0 %v2749
        %2906 = vmatpush1.bf16.msra.mxu0 %v2748
        %2907 = vmatprep.subr.bf16.mxu0 %v2753
        %2908 = vmatpush1.bf16.msra.mxu0 %v2752
        %2909 = vmatprep.subr.bf16.mxu0 %v2757
        %2910 = vmatpush1.bf16.msra.mxu0 %v2756
        %2911 = vmatprep.subr.bf16.mxu0 %v2761
        %2912 = vmatpush1.bf16.msra.mxu0 %v2760
        %2913 = vmatprep.subr.bf16.mxu0 %v2765
        %2914 = vmatpush1.bf16.msra.mxu0 %v2764
        %2915 = vmatprep.subr.bf16.mxu0 %v2769
        %2916 = vmatpush1.bf16.msra.mxu0 %v2768
        %2917 = vmatprep.subr.bf16.mxu0 %v2773
        %2918 = vmatpush1.bf16.msra.mxu0 %v2772
        %2919 = vmatprep.subr.bf16.mxu0 %v2777
        %2920 = vmatpush1.bf16.msra.mxu0 %v2776
        %2921 = vmatprep.subr.bf16.mxu0 %v2781
        %2922 = vmatpush1.bf16.msra.mxu0 %v2780
        %2923 = vmatprep.subr.bf16.mxu0 %v2785
        %2924 = vmatpush1.bf16.msra.mxu0 %v2784
        %2925 = vmatprep.subr.bf16.mxu0 %v2789
        %2926 = vmatpush1.bf16.msra.mxu0 %v2788
        %2927 = vmatprep.mubr.bf16.mxu0 %v2468
        %2928 = vmatmul.mubr.bf16.gmra.mrb[0].mxu0 %v2467
        %v2929 = vpop.f32.mrb[0].mxu0
        %v2930 = vadd.f32 0.0, %v2929
        %v2931 = vpop.f32.mrb[0].mxu0
        %v2932 = vadd.f32 0.0, %v2931
        %v2933 = vpop.f32.mrb[0].mxu0
        %v2934 = vpop.f32.mrb[0].mxu0
        %2935 = vdwg.mxu0
        %v3000 = vunpack.c.l.b16 %v2397
        %v3001 = vunpack.c.h.b16 %v2397
        %v3002 = vunpack.c.l.b16 %v2398
        %v3003 = vunpack.c.h.b16 %v2398
        %v3004 = vunpack.c.l.b16 %v2399
        %v3005 = vunpack.c.h.b16 %v2399
        %v3006 = vunpack.c.l.b16 %v2400
        %v3007 = vunpack.c.h.b16 %v2400
        %v3008 = vunpack.c.l.b16 %v2401
        %v3009 = vunpack.c.h.b16 %v2401
        %v3010 = vunpack.c.l.b16 %v2402
        %v3011 = vunpack.c.h.b16 %v2402
        %v3012 = vunpack.c.l.b16 %v2403
        %v3013 = vunpack.c.h.b16 %v2403
        %v3014 = vunpack.c.l.b16 %v2404
        %v3015 = vunpack.c.h.b16 %v2404
        %v3016 = vunpack.c.l.b16 %v2405
        %v3017 = vunpack.c.h.b16 %v2405
        %v3018 = vunpack.c.l.b16 %v2406
        %v3019 = vunpack.c.h.b16 %v2406
        %v3020 = vunpack.c.l.b16 %v2407
        %v3021 = vunpack.c.h.b16 %v2407
        %v3022 = vunpack.c.l.b16 %v2408
        %v3023 = vunpack.c.h.b16 %v2408
        %v3024 = vunpack.c.l.b16 %v2409
        %v3025 = vunpack.c.h.b16 %v2409
        %v3026 = vunpack.c.l.b16 %v2410
        %v3027 = vunpack.c.h.b16 %v2410
        %v3028 = vunpack.c.l.b16 %v2411
        %v3029 = vunpack.c.h.b16 %v2411
        %v3030 = vunpack.c.l.b16 %v2412
        %v3031 = vunpack.c.h.b16 %v2412
        %v3032 = vunpack.c.l.b16 %v2413
        %v3033 = vunpack.c.h.b16 %v2413
        %v3034 = vunpack.c.l.b16 %v2414
        %v3035 = vunpack.c.h.b16 %v2414
        %v3036 = vunpack.c.l.b16 %v2415
        %v3037 = vunpack.c.h.b16 %v2415
        %v3038 = vunpack.c.l.b16 %v2416
        %v3039 = vunpack.c.h.b16 %v2416
        %v3040 = vunpack.c.l.b16 %v2417
        %v3041 = vunpack.c.h.b16 %v2417
        %v3042 = vunpack.c.l.b16 %v2418
        %v3043 = vunpack.c.h.b16 %v2418
        %v3044 = vunpack.c.l.b16 %v2419
        %v3045 = vunpack.c.h.b16 %v2419
        %v3046 = vunpack.c.l.b16 %v2420
        %v3047 = vunpack.c.h.b16 %v2420
        %v3048 = vunpack.c.l.b16 %v2421
        %v3049 = vunpack.c.h.b16 %v2421
        %v3050 = vunpack.c.l.b16 %v2422
        %v3051 = vunpack.c.h.b16 %v2422
        %v3052 = vunpack.c.l.b16 %v2423
        %v3053 = vunpack.c.h.b16 %v2423
        %v3054 = vunpack.c.l.b16 %v2424
        %v3055 = vunpack.c.h.b16 %v2424
        %v3056 = vunpack.c.l.b16 %v2425
        %v3057 = vunpack.c.h.b16 %v2425
        %v3058 = vunpack.c.l.b16 %v2426
        %v3059 = vunpack.c.h.b16 %v2426
        %v3060 = vunpack.c.l.b16 %v2427
        %v3061 = vunpack.c.h.b16 %v2427
        %v3062 = vunpack.c.l.b16 %v2428
        %v3063 = vunpack.c.h.b16 %v2428
        %v3064 = vunpack.c.l.b16 %v2429
        %v3065 = vunpack.c.h.b16 %v2429
        %v3066 = vunpack.c.l.b16 %v2430
        %v3067 = vunpack.c.h.b16 %v2430
        %v3068 = vunpack.c.l.b16 %v2431
        %v3069 = vunpack.c.h.b16 %v2431
        %v3070 = vunpack.c.l.b16 %v2432
        %v3071 = vunpack.c.h.b16 %v2432
        %v3072 = vunpack.c.l.b16 %v2433
        %v3073 = vunpack.c.h.b16 %v2433
        %v3074 = vunpack.c.l.b16 %v2434
        %v3075 = vunpack.c.h.b16 %v2434
        %v3076 = vunpack.c.l.b16 %v2435
        %v3077 = vunpack.c.h.b16 %v2435
        %v3078 = vunpack.c.l.b16 %v2436
        %v3079 = vunpack.c.h.b16 %v2436
        %v3080 = vunpack.c.l.b16 %v2437
        %v3081 = vunpack.c.h.b16 %v2437
        %v3082 = vunpack.c.l.b16 %v2438
        %v3083 = vunpack.c.h.b16 %v2438
        %v3084 = vunpack.c.l.b16 %v2439
        %v3085 = vunpack.c.h.b16 %v2439
        %v3086 = vunpack.c.l.b16 %v2440
        %v3087 = vunpack.c.h.b16 %v2440
        %v3088 = vunpack.c.l.b16 %v2441
        %v3089 = vunpack.c.h.b16 %v2441
        %v3090 = vunpack.c.l.b16 %v2442
        %v3091 = vunpack.c.h.b16 %v2442
        %v3092 = vunpack.c.l.b16 %v2443
        %v3093 = vunpack.c.h.b16 %v2443
        %v3094 = vunpack.c.l.b16 %v2444
        %v3095 = vunpack.c.h.b16 %v2444
        %v3096 = vunpack.c.l.b16 %v2445
        %v3097 = vunpack.c.h.b16 %v2445
        %v3098 = vunpack.c.l.b16 %v2446
        %v3099 = vunpack.c.h.b16 %v2446
        %v3100 = vunpack.c.l.b16 %v2447
        %v3101 = vunpack.c.h.b16 %v2447
        %v3102 = vunpack.c.l.b16 %v2448
        %v3103 = vunpack.c.h.b16 %v2448
        %v3104 = vunpack.c.l.b16 %v2449
        %v3105 = vunpack.c.h.b16 %v2449
        %v3106 = vunpack.c.l.b16 %v2450
        %v3107 = vunpack.c.h.b16 %v2450
        %v3108 = vunpack.c.l.b16 %v2451
        %v3109 = vunpack.c.h.b16 %v2451
        %v3110 = vunpack.c.l.b16 %v2452
        %v3111 = vunpack.c.h.b16 %v2452
        %v3112 = vunpack.c.l.b16 %v2453
        %v3113 = vunpack.c.h.b16 %v2453
        %v3114 = vunpack.c.l.b16 %v2454
        %v3115 = vunpack.c.h.b16 %v2454
        %v3116 = vunpack.c.l.b16 %v2455
        %v3117 = vunpack.c.h.b16 %v2455
        %v3118 = vunpack.c.l.b16 %v2456
        %v3119 = vunpack.c.h.b16 %v2456
        %v3120 = vunpack.c.l.b16 %v2457
        %v3121 = vunpack.c.h.b16 %v2457
        %v3122 = vunpack.c.l.b16 %v2458
        %v3123 = vunpack.c.h.b16 %v2458
        %v3124 = vunpack.c.l.b16 %v2459
        %v3125 = vunpack.c.h.b16 %v2459
        %v3126 = vunpack.c.l.b16 %v2460
        %v3127 = vunpack.c.h.b16 %v2460
        %v3128 = vpack.c.b16 %v3004, %v3000
        %v3129 = vpack.c.b16 %v3005, %v3001
        %v3130 = vpack.c.b16 %v3006, %v3002
        %v3131 = vpack.c.b16 %v3007, %v3003
        %v3132 = vpack.c.b16 %v3012, %v3008
        %v3133 = vpack.c.b16 %v3013, %v3009
        %v3134 = vpack.c.b16 %v3014, %v3010
        %v3135 = vpack.c.b16 %v3015, %v3011
        %v3136 = vpack.c.b16 %v3020, %v3016
        %v3137 = vpack.c.b16 %v3021, %v3017
        %v3138 = vpack.c.b16 %v3022, %v3018
        %v3139 = vpack.c.b16 %v3023, %v3019
        %v3140 = vpack.c.b16 %v3028, %v3024
        %v3141 = vpack.c.b16 %v3029, %v3025
        %v3142 = vpack.c.b16 %v3030, %v3026
        %v3143 = vpack.c.b16 %v3031, %v3027
        %v3144 = vpack.c.b16 %v3036, %v3032
        %v3145 = vpack.c.b16 %v3037, %v3033
        %v3146 = vpack.c.b16 %v3038, %v3034
        %v3147 = vpack.c.b16 %v3039, %v3035
        %v3148 = vpack.c.b16 %v3044, %v3040
        %v3149 = vpack.c.b16 %v3045, %v3041
        %v3150 = vpack.c.b16 %v3046, %v3042
        %v3151 = vpack.c.b16 %v3047, %v3043
        %v3152 = vpack.c.b16 %v3052, %v3048
        %v3153 = vpack.c.b16 %v3053, %v3049
        %v3154 = vpack.c.b16 %v3054, %v3050
        %v3155 = vpack.c.b16 %v3055, %v3051
        %v3156 = vpack.c.b16 %v3060, %v3056
        %v3157 = vpack.c.b16 %v3061, %v3057
        %v3158 = vpack.c.b16 %v3062, %v3058
        %v3159 = vpack.c.b16 %v3063, %v3059
        %v3160 = vpack.c.b16 %v3068, %v3064
        %v3161 = vpack.c.b16 %v3069, %v3065
        %v3162 = vpack.c.b16 %v3070, %v3066
        %v3163 = vpack.c.b16 %v3071, %v3067
        %v3164 = vpack.c.b16 %v3076, %v3072
        %v3165 = vpack.c.b16 %v3077, %v3073
        %v3166 = vpack.c.b16 %v3078, %v3074
        %v3167 = vpack.c.b16 %v3079, %v3075
        %v3168 = vpack.c.b16 %v3084, %v3080
        %v3169 = vpack.c.b16 %v3085, %v3081
        %v3170 = vpack.c.b16 %v3086, %v3082
        %v3171 = vpack.c.b16 %v3087, %v3083
        %v3172 = vpack.c.b16 %v3092, %v3088
        %v3173 = vpack.c.b16 %v3093, %v3089
        %v3174 = vpack.c.b16 %v3094, %v3090
        %v3175 = vpack.c.b16 %v3095, %v3091
        %v3176 = vpack.c.b16 %v3100, %v3096
        %v3177 = vpack.c.b16 %v3101, %v3097
        %v3178 = vpack.c.b16 %v3102, %v3098
        %v3179 = vpack.c.b16 %v3103, %v3099
        %v3180 = vpack.c.b16 %v3108, %v3104
        %v3181 = vpack.c.b16 %v3109, %v3105
        %v3182 = vpack.c.b16 %v3110, %v3106
        %v3183 = vpack.c.b16 %v3111, %v3107
        %v3184 = vpack.c.b16 %v3116, %v3112
        %v3185 = vpack.c.b16 %v3117, %v3113
        %v3186 = vpack.c.b16 %v3118, %v3114
        %v3187 = vpack.c.b16 %v3119, %v3115
        %v3188 = vpack.c.b16 %v3124, %v3120
        %v3189 = vpack.c.b16 %v3125, %v3121
        %v3190 = vpack.c.b16 %v3126, %v3122
        %v3191 = vpack.c.b16 %v3127, %v3123
        %3256 = vmatprep.subr.bf16.mxu0 %v3129
        %3257 = vmatpush1.bf16.msra.mxu0 %v3128
        %3258 = vmatprep.subr.bf16.mxu0 %v3133
        %3259 = vmatpush1.bf16.msra.mxu0 %v3132
        %3260 = vmatprep.subr.bf16.mxu0 %v3137
        %3261 = vmatpush1.bf16.msra.mxu0 %v3136
        %3262 = vmatprep.subr.bf16.mxu0 %v3141
        %3263 = vmatpush1.bf16.msra.mxu0 %v3140
        %3264 = vmatprep.subr.bf16.mxu0 %v3145
        %3265 = vmatpush1.bf16.msra.mxu0 %v3144
        %3266 = vmatprep.subr.bf16.mxu0 %v3149
        %3267 = vmatpush1.bf16.msra.mxu0 %v3148
        %3268 = vmatprep.subr.bf16.mxu0 %v3153
        %3269 = vmatpush1.bf16.msra.mxu0 %v3152
        %3270 = vmatprep.subr.bf16.mxu0 %v3157
        %3271 = vmatpush1.bf16.msra.mxu0 %v3156
        %3272 = vmatprep.subr.bf16.mxu0 %v3161
        %3273 = vmatpush1.bf16.msra.mxu0 %v3160
        %3274 = vmatprep.subr.bf16.mxu0 %v3165
        %3275 = vmatpush1.bf16.msra.mxu0 %v3164
        %3276 = vmatprep.subr.bf16.mxu0 %v3169
        %3277 = vmatpush1.bf16.msra.mxu0 %v3168
        %3278 = vmatprep.subr.bf16.mxu0 %v3173
        %3279 = vmatpush1.bf16.msra.mxu0 %v3172
        %3280 = vmatprep.subr.bf16.mxu0 %v3177
        %3281 = vmatpush1.bf16.msra.mxu0 %v3176
        %3282 = vmatprep.subr.bf16.mxu0 %v3181
        %3283 = vmatpush1.bf16.msra.mxu0 %v3180
        %3284 = vmatprep.subr.bf16.mxu0 %v3185
        %3285 = vmatpush1.bf16.msra.mxu0 %v3184
        %3286 = vmatprep.subr.bf16.mxu0 %v3189
        %3287 = vmatpush1.bf16.msra.mxu0 %v3188
        %3288 = vmatprep.mubr.bf16.mxu0 %v2464
        %3289 = vmatmul.mubr.bf16.gmra.mrb[0].mxu0 %v2463
        %v3290 = vpop.f32.mrb[0].mxu0
        %v3291 = vadd.f32 %v2889, %v3290
        %v3292 = vpop.f32.mrb[0].mxu0
        %v3293 = vadd.f32 %v2891, %v3292
        %v3294 = vpop.f32.mrb[0].mxu0
        %v3295 = vpop.f32.mrb[0].mxu0
        %3296 = vdwg.mxu0
        %3297 = vmatprep.subr.bf16.mxu0 %v3131
        %3298 = vmatpush1.bf16.msra.mxu0 %v3130
        %3299 = vmatprep.subr.bf16.mxu0 %v3135
        %3300 = vmatpush1.bf16.msra.mxu0 %v3134
        %3301 = vmatprep.subr.bf16.mxu0 %v3139
        %3302 = vmatpush1.bf16.msra.mxu0 %v3138
        %3303 = vmatprep.subr.bf16.mxu0 %v3143
        %3304 = vmatpush1.bf16.msra.mxu0 %v3142
        %3305 = vmatprep.subr.bf16.mxu0 %v3147
        %3306 = vmatpush1.bf16.msra.mxu0 %v3146
        %3307 = vmatprep.subr.bf16.mxu0 %v3151
        %3308 = vmatpush1.bf16.msra.mxu0 %v3150
        %3309 = vmatprep.subr.bf16.mxu0 %v3155
        %3310 = vmatpush1.bf16.msra.mxu0 %v3154
        %3311 = vmatprep.subr.bf16.mxu0 %v3159
        %3312 = vmatpush1.bf16.msra.mxu0 %v3158
        %3313 = vmatprep.subr.bf16.mxu0 %v3163
        %3314 = vmatpush1.bf16.msra.mxu0 %v3162
        %3315 = vmatprep.subr.bf16.mxu0 %v3167
        %3316 = vmatpush1.bf16.msra.mxu0 %v3166
        %3317 = vmatprep.subr.bf16.mxu0 %v3171
        %3318 = vmatpush1.bf16.msra.mxu0 %v3170
        %3319 = vmatprep.subr.bf16.mxu0 %v3175
        %3320 = vmatpush1.bf16.msra.mxu0 %v3174
        %3321 = vmatprep.subr.bf16.mxu0 %v3179
        %3322 = vmatpush1.bf16.msra.mxu0 %v3178
        %3323 = vmatprep.subr.bf16.mxu0 %v3183
        %3324 = vmatpush1.bf16.msra.mxu0 %v3182
        %3325 = vmatprep.subr.bf16.mxu0 %v3187
        %3326 = vmatpush1.bf16.msra.mxu0 %v3186
        %3327 = vmatprep.subr.bf16.mxu0 %v3191
        %3328 = vmatpush1.bf16.msra.mxu0 %v3190
        %3329 = vmatprep.mubr.bf16.mxu0 %v2464
        %3330 = vmatmul.mubr.bf16.gmra.mrb[0].mxu0 %v2463
        %v3331 = vpop.f32.mrb[0].mxu0
        %v3332 = vadd.f32 %v2930, %v3331
        %v3333 = vpop.f32.mrb[0].mxu0
        %v3334 = vadd.f32 %v2932, %v3333
        %v3335 = vpop.f32.mrb[0].mxu0
        %v3336 = vpop.f32.mrb[0].mxu0
        %3337 = vdwg.mxu0
        %v3338 = vld [vmem:[#allocation2] sm:$0xfe]
        %v3339 = vld [vmem:[#allocation2 + $0x8] sm:$0xfe]
        %v3340 = vpack.c.bf16 %v3338, %v3338
        %v3341 = vpack.c.bf16 %v3339, %v3339
        %v3343 = vshrl.u32 %v3340, 16
        %v3345 = vshll.u32 %v3340, 16
        %v3347 = vrot.slane %v3345, 1
        %v3348 = vor.u32 %v3343, %v3347
        %v3350 = vshrl.u32 %v3341, 16
        %v3352 = vshll.u32 %v3341, 16
        %v3354 = vrot.slane %v3352, 1
        %v3355 = vor.u32 %v3350, %v3354
        %3358 = vmatprep.subr.bf16.mxu0 %v2727
        %3359 = vmatpush1.bf16.msra.mxu0 %v2726
        %3360 = vmatprep.subr.bf16.mxu0 %v2731
        %3361 = vmatpush1.bf16.msra.mxu0 %v2730
        %3362 = vmatprep.subr.bf16.mxu0 %v2735
        %3363 = vmatpush1.bf16.msra.mxu0 %v2734
        %3364 = vmatprep.subr.bf16.mxu0 %v2739
        %3365 = vmatpush1.bf16.msra.mxu0 %v2738
        %3366 = vmatprep.subr.bf16.mxu0 %v2743
        %3367 = vmatpush1.bf16.msra.mxu0 %v2742
        %3368 = vmatprep.subr.bf16.mxu0 %v2747
        %3369 = vmatpush1.bf16.msra.mxu0 %v2746
        %3370 = vmatprep.subr.bf16.mxu0 %v2751
        %3371 = vmatpush1.bf16.msra.mxu0 %v2750
        %3372 = vmatprep.subr.bf16.mxu0 %v2755
        %3373 = vmatpush1.bf16.msra.mxu0 %v2754
        %3374 = vmatprep.subr.bf16.mxu0 %v2759
        %3375 = vmatpush1.bf16.msra.mxu0 %v2758
        %3376 = vmatprep.subr.bf16.mxu0 %v2763
        %3377 = vmatpush1.bf16.msra.mxu0 %v2762
        %3378 = vmatprep.subr.bf16.mxu0 %v2767
        %3379 = vmatpush1.bf16.msra.mxu0 %v2766
        %3380 = vmatprep.subr.bf16.mxu0 %v2771
        %3381 = vmatpush1.bf16.msra.mxu0 %v2770
        %3382 = vmatprep.subr.bf16.mxu0 %v2775
        %3383 = vmatpush1.bf16.msra.mxu0 %v2774
        %3384 = vmatprep.subr.bf16.mxu0 %v2779
        %3385 = vmatpush1.bf16.msra.mxu0 %v2778
        %3386 = vmatprep.subr.bf16.mxu0 %v2783
        %3387 = vmatpush1.bf16.msra.mxu0 %v2782
        %3388 = vmatprep.subr.bf16.mxu0 %v2787
        %3389 = vmatpush1.bf16.msra.mxu0 %v2786
        %3390 = vmatprep.mubr.bf16.mxu0 %v3355
        %3391 = vmatmul.mubr.bf16.gmra.mrb[0].mxu0 %v3348
        %v3392 = vpop.f32.mrb[0].mxu0
        %v3393 = vadd.f32 0.0, %v3392
        %v3394 = vpop.f32.mrb[0].mxu0
        %v3395 = vadd.f32 0.0, %v3394
        %v3396 = vpop.f32.mrb[0].mxu0
        %v3397 = vpop.f32.mrb[0].mxu0
        %3398 = vdwg.mxu0
        %3399 = vmatprep.subr.bf16.mxu0 %v2729
        %3400 = vmatpush1.bf16.msra.mxu0 %v2728
        %3401 = vmatprep.subr.bf16.mxu0 %v2733
        %3402 = vmatpush1.bf16.msra.mxu0 %v2732
        %3403 = vmatprep.subr.bf16.mxu0 %v2737
        %3404 = vmatpush1.bf16.msra.mxu0 %v2736
        %3405 = vmatprep.subr.bf16.mxu0 %v2741
        %3406 = vmatpush1.bf16.msra.mxu0 %v2740
        %3407 = vmatprep.subr.bf16.mxu0 %v2745
        %3408 = vmatpush1.bf16.msra.mxu0 %v2744
        %3409 = vmatprep.subr.bf16.mxu0 %v2749
        %3410 = vmatpush1.bf16.msra.mxu0 %v2748
        %3411 = vmatprep.subr.bf16.mxu0 %v2753
        %3412 = vmatpush1.bf16.msra.mxu0 %v2752
        %3413 = vmatprep.subr.bf16.mxu0 %v2757
        %3414 = vmatpush1.bf16.msra.mxu0 %v2756
        %3415 = vmatprep.subr.bf16.mxu0 %v2761
        %3416 = vmatpush1.bf16.msra.mxu0 %v2760
        %3417 = vmatprep.subr.bf16.mxu0 %v2765
        %3418 = vmatpush1.bf16.msra.mxu0 %v2764
        %3419 = vmatprep.subr.bf16.mxu0 %v2769
        %3420 = vmatpush1.bf16.msra.mxu0 %v2768
        %3421 = vmatprep.subr.bf16.mxu0 %v2773
        %3422 = vmatpush1.bf16.msra.mxu0 %v2772
        %3423 = vmatprep.subr.bf16.mxu0 %v2777
        %3424 = vmatpush1.bf16.msra.mxu0 %v2776
        %3425 = vmatprep.subr.bf16.mxu0 %v2781
        %3426 = vmatpush1.bf16.msra.mxu0 %v2780
        %3427 = vmatprep.subr.bf16.mxu0 %v2785
        %3428 = vmatpush1.bf16.msra.mxu0 %v2784
        %3429 = vmatprep.subr.bf16.mxu0 %v2789
        %3430 = vmatpush1.bf16.msra.mxu0 %v2788
        %3431 = vmatprep.mubr.bf16.mxu0 %v3355
        %3432 = vmatmul.mubr.bf16.gmra.mrb[0].mxu0 %v3348
        %v3433 = vpop.f32.mrb[0].mxu0
        %v3434 = vadd.f32 0.0, %v3433
        %v3435 = vpop.f32.mrb[0].mxu0
        %v3436 = vadd.f32 0.0, %v3435
        %v3437 = vpop.f32.mrb[0].mxu0
        %v3438 = vpop.f32.mrb[0].mxu0
        %3439 = vdwg.mxu0
        %3440 = vmatprep.subr.bf16.mxu0 %v3129
        %3441 = vmatpush1.bf16.msra.mxu0 %v3128
        %3442 = vmatprep.subr.bf16.mxu0 %v3133
        %3443 = vmatpush1.bf16.msra.mxu0 %v3132
        %3444 = vmatprep.subr.bf16.mxu0 %v3137
        %3445 = vmatpush1.bf16.msra.mxu0 %v3136
        %3446 = vmatprep.subr.bf16.mxu0 %v3141
        %3447 = vmatpush1.bf16.msra.mxu0 %v3140
        %3448 = vmatprep.subr.bf16.mxu0 %v3145
        %3449 = vmatpush1.bf16.msra.mxu0 %v3144
        %3450 = vmatprep.subr.bf16.mxu0 %v3149
        %3451 = vmatpush1.bf16.msra.mxu0 %v3148
        %3452 = vmatprep.subr.bf16.mxu0 %v3153
        %3453 = vmatpush1.bf16.msra.mxu0 %v3152
        %3454 = vmatprep.subr.bf16.mxu0 %v3157
        %3455 = vmatpush1.bf16.msra.mxu0 %v3156
        %3456 = vmatprep.subr.bf16.mxu0 %v3161
        %3457 = vmatpush1.bf16.msra.mxu0 %v3160
        %3458 = vmatprep.subr.bf16.mxu0 %v3165
        %3459 = vmatpush1.bf16.msra.mxu0 %v3164
        %3460 = vmatprep.subr.bf16.mxu0 %v3169
        %3461 = vmatpush1.bf16.msra.mxu0 %v3168
        %3462 = vmatprep.subr.bf16.mxu0 %v3173
        %3463 = vmatpush1.bf16.msra.mxu0 %v3172
        %3464 = vmatprep.subr.bf16.mxu0 %v3177
        %3465 = vmatpush1.bf16.msra.mxu0 %v3176
        %3466 = vmatprep.subr.bf16.mxu0 %v3181
        %3467 = vmatpush1.bf16.msra.mxu0 %v3180
        %3468 = vmatprep.subr.bf16.mxu0 %v3185
        %3469 = vmatpush1.bf16.msra.mxu0 %v3184
        %3470 = vmatprep.subr.bf16.mxu0 %v3189
        %3471 = vmatpush1.bf16.msra.mxu0 %v3188
        %3472 = vmatprep.mubr.bf16.mxu0 %v2468
        %3473 = vmatmul.mubr.bf16.gmra.mrb[0].mxu0 %v2467
        %v3474 = vpop.f32.mrb[0].mxu0
        %v3475 = vadd.f32 %v3393, %v3474
        %v3476 = vpop.f32.mrb[0].mxu0
        %v3477 = vadd.f32 %v3395, %v3476
        %v3478 = vpop.f32.mrb[0].mxu0
        %v3479 = vpop.f32.mrb[0].mxu0
        %3480 = vdwg.mxu0
        %3481 = vmatprep.subr.bf16.mxu0 %v3131
        %3482 = vmatpush1.bf16.msra.mxu0 %v3130
        %3483 = vmatprep.subr.bf16.mxu0 %v3135
        %3484 = vmatpush1.bf16.msra.mxu0 %v3134
        %3485 = vmatprep.subr.bf16.mxu0 %v3139
        %3486 = vmatpush1.bf16.msra.mxu0 %v3138
        %3487 = vmatprep.subr.bf16.mxu0 %v3143
        %3488 = vmatpush1.bf16.msra.mxu0 %v3142
        %3489 = vmatprep.subr.bf16.mxu0 %v3147
        %3490 = vmatpush1.bf16.msra.mxu0 %v3146
        %3491 = vmatprep.subr.bf16.mxu0 %v3151
        %3492 = vmatpush1.bf16.msra.mxu0 %v3150
        %3493 = vmatprep.subr.bf16.mxu0 %v3155
        %3494 = vmatpush1.bf16.msra.mxu0 %v3154
        %3495 = vmatprep.subr.bf16.mxu0 %v3159
        %3496 = vmatpush1.bf16.msra.mxu0 %v3158
        %3497 = vmatprep.subr.bf16.mxu0 %v3163
        %3498 = vmatpush1.bf16.msra.mxu0 %v3162
        %3499 = vmatprep.subr.bf16.mxu0 %v3167
        %3500 = vmatpush1.bf16.msra.mxu0 %v3166
        %3501 = vmatprep.subr.bf16.mxu0 %v3171
        %3502 = vmatpush1.bf16.msra.mxu0 %v3170
        %3503 = vmatprep.subr.bf16.mxu0 %v3175
        %3504 = vmatpush1.bf16.msra.mxu0 %v3174
        %3505 = vmatprep.subr.bf16.mxu0 %v3179
        %3506 = vmatpush1.bf16.msra.mxu0 %v3178
        %3507 = vmatprep.subr.bf16.mxu0 %v3183
        %3508 = vmatpush1.bf16.msra.mxu0 %v3182
        %3509 = vmatprep.subr.bf16.mxu0 %v3187
        %3510 = vmatpush1.bf16.msra.mxu0 %v3186
        %3511 = vmatprep.subr.bf16.mxu0 %v3191
        %3512 = vmatpush1.bf16.msra.mxu0 %v3190
        %3513 = vmatprep.mubr.bf16.mxu0 %v2468
        %3514 = vmatmul.mubr.bf16.gmra.mrb[0].mxu0 %v2467
        %v3515 = vpop.f32.mrb[0].mxu0
        %v3516 = vadd.f32 %v3434, %v3515
        %v3517 = vpop.f32.mrb[0].mxu0
        %v3518 = vadd.f32 %v3436, %v3517
        %v3519 = vpop.f32.mrb[0].mxu0
        %v3520 = vpop.f32.mrb[0].mxu0
        %3521 = vdwg.mxu0
        %s3522 = scalar_lea.vmem %s3, 1024
        %v3523 = vld [vmem:[%s3522] sm:$0xff]
        %v3524 = vld [vmem:[%s3522 + $0x8] sm:$0xff]
        %v3525 = vld [vmem:[%s3522 + $0x10] sm:$0xff]
        %v3526 = vld [vmem:[%s3522 + $0x18] sm:$0xff]
        %v3527 = vld [vmem:[%s3522 + $0x20] sm:$0xff]
        %v3528 = vld [vmem:[%s3522 + $0x28] sm:$0xff]
        %v3529 = vld [vmem:[%s3522 + $0x30] sm:$0xff]
        %v3530 = vld [vmem:[%s3522 + $0x38] sm:$0xff]
        %v3531 = vld [vmem:[%s3522 + $0x40] sm:$0xff]
        %v3532 = vld [vmem:[%s3522 + $0x48] sm:$0xff]
        %v3533 = vld [vmem:[%s3522 + $0x50] sm:$0xff]
        %v3534 = vld [vmem:[%s3522 + $0x58] sm:$0xff]
        %v3535 = vld [vmem:[%s3522 + $0x60] sm:$0xff]
        %v3536 = vld [vmem:[%s3522 + $0x68] sm:$0xff]
        %v3537 = vld [vmem:[%s3522 + $0x70] sm:$0xff]
        %v3538 = vld [vmem:[%s3522 + $0x78] sm:$0xff]
        %v3539 = vld [vmem:[%s3522 + $0x80] sm:$0xff]
        %v3540 = vld [vmem:[%s3522 + $0x88] sm:$0xff]
        %v3541 = vld [vmem:[%s3522 + $0x90] sm:$0xff]
        %v3542 = vld [vmem:[%s3522 + $0x98] sm:$0xff]
        %v3543 = vld [vmem:[%s3522 + $0xa0] sm:$0xff]
        %v3544 = vld [vmem:[%s3522 + $0xa8] sm:$0xff]
        %v3545 = vld [vmem:[%s3522 + $0xb0] sm:$0xff]
        %v3546 = vld [vmem:[%s3522 + $0xb8] sm:$0xff]
        %v3547 = vld [vmem:[%s3522 + $0xc0] sm:$0xff]
        %v3548 = vld [vmem:[%s3522 + $0xc8] sm:$0xff]
        %v3549 = vld [vmem:[%s3522 + $0xd0] sm:$0xff]
        %v3550 = vld [vmem:[%s3522 + $0xd8] sm:$0xff]
        %v3551 = vld [vmem:[%s3522 + $0xe0] sm:$0xff]
        %v3552 = vld [vmem:[%s3522 + $0xe8] sm:$0xff]
        %v3553 = vld [vmem:[%s3522 + $0xf0] sm:$0xff]
        %v3554 = vld [vmem:[%s3522 + $0xf8] sm:$0xff]
        %v3555 = vld [vmem:[%s3522 + $0x100] sm:$0xff]
        %v3556 = vld [vmem:[%s3522 + $0x108] sm:$0xff]
        %v3557 = vld [vmem:[%s3522 + $0x110] sm:$0xff]
        %v3558 = vld [vmem:[%s3522 + $0x118] sm:$0xff]
        %v3559 = vld [vmem:[%s3522 + $0x120] sm:$0xff]
        %v3560 = vld [vmem:[%s3522 + $0x128] sm:$0xff]
        %v3561 = vld [vmem:[%s3522 + $0x130] sm:$0xff]
        %v3562 = vld [vmem:[%s3522 + $0x138] sm:$0xff]
        %v3563 = vld [vmem:[%s3522 + $0x140] sm:$0xff]
        %v3564 = vld [vmem:[%s3522 + $0x148] sm:$0xff]
        %v3565 = vld [vmem:[%s3522 + $0x150] sm:$0xff]
        %v3566 = vld [vmem:[%s3522 + $0x158] sm:$0xff]
        %v3567 = vld [vmem:[%s3522 + $0x160] sm:$0xff]
        %v3568 = vld [vmem:[%s3522 + $0x168] sm:$0xff]
        %v3569 = vld [vmem:[%s3522 + $0x170] sm:$0xff]
        %v3570 = vld [vmem:[%s3522 + $0x178] sm:$0xff]
        %v3571 = vld [vmem:[%s3522 + $0x180] sm:$0xff]
        %v3572 = vld [vmem:[%s3522 + $0x188] sm:$0xff]
        %v3573 = vld [vmem:[%s3522 + $0x190] sm:$0xff]
        %v3574 = vld [vmem:[%s3522 + $0x198] sm:$0xff]
        %v3575 = vld [vmem:[%s3522 + $0x1a0] sm:$0xff]
        %v3576 = vld [vmem:[%s3522 + $0x1a8] sm:$0xff]
        %v3577 = vld [vmem:[%s3522 + $0x1b0] sm:$0xff]
        %v3578 = vld [vmem:[%s3522 + $0x1b8] sm:$0xff]
        %v3579 = vld [vmem:[%s3522 + $0x1c0] sm:$0xff]
        %v3580 = vld [vmem:[%s3522 + $0x1c8] sm:$0xff]
        %v3581 = vld [vmem:[%s3522 + $0x1d0] sm:$0xff]
        %v3582 = vld [vmem:[%s3522 + $0x1d8] sm:$0xff]
        %v3583 = vld [vmem:[%s3522 + $0x1e0] sm:$0xff]
        %v3584 = vld [vmem:[%s3522 + $0x1e8] sm:$0xff]
        %v3585 = vld [vmem:[%s3522 + $0x1f0] sm:$0xff]
        %v3586 = vld [vmem:[%s3522 + $0x1f8] sm:$0xff]
        %v3651 = vunpack.c.l.b16 %v3523
        %v3652 = vunpack.c.h.b16 %v3523
        %v3653 = vunpack.c.l.b16 %v3524
        %v3654 = vunpack.c.h.b16 %v3524
        %v3655 = vunpack.c.l.b16 %v3525
        %v3656 = vunpack.c.h.b16 %v3525
        %v3657 = vunpack.c.l.b16 %v3526
        %v3658 = vunpack.c.h.b16 %v3526
        %v3659 = vunpack.c.l.b16 %v3527
        %v3660 = vunpack.c.h.b16 %v3527
        %v3661 = vunpack.c.l.b16 %v3528
        %v3662 = vunpack.c.h.b16 %v3528
        %v3663 = vunpack.c.l.b16 %v3529
        %v3664 = vunpack.c.h.b16 %v3529
        %v3665 = vunpack.c.l.b16 %v3530
        %v3666 = vunpack.c.h.b16 %v3530
        %v3667 = vunpack.c.l.b16 %v3531
        %v3668 = vunpack.c.h.b16 %v3531
        %v3669 = vunpack.c.l.b16 %v3532
        %v3670 = vunpack.c.h.b16 %v3532
        %v3671 = vunpack.c.l.b16 %v3533
        %v3672 = vunpack.c.h.b16 %v3533
        %v3673 = vunpack.c.l.b16 %v3534
        %v3674 = vunpack.c.h.b16 %v3534
        %v3675 = vunpack.c.l.b16 %v3535
        %v3676 = vunpack.c.h.b16 %v3535
        %v3677 = vunpack.c.l.b16 %v3536
        %v3678 = vunpack.c.h.b16 %v3536
        %v3679 = vunpack.c.l.b16 %v3537
        %v3680 = vunpack.c.h.b16 %v3537
        %v3681 = vunpack.c.l.b16 %v3538
        %v3682 = vunpack.c.h.b16 %v3538
        %v3683 = vunpack.c.l.b16 %v3539
        %v3684 = vunpack.c.h.b16 %v3539
        %v3685 = vunpack.c.l.b16 %v3540
        %v3686 = vunpack.c.h.b16 %v3540
        %v3687 = vunpack.c.l.b16 %v3541
        %v3688 = vunpack.c.h.b16 %v3541
        %v3689 = vunpack.c.l.b16 %v3542
        %v3690 = vunpack.c.h.b16 %v3542
        %v3691 = vunpack.c.l.b16 %v3543
        %v3692 = vunpack.c.h.b16 %v3543
        %v3693 = vunpack.c.l.b16 %v3544
        %v3694 = vunpack.c.h.b16 %v3544
        %v3695 = vunpack.c.l.b16 %v3545
        %v3696 = vunpack.c.h.b16 %v3545
        %v3697 = vunpack.c.l.b16 %v3546
        %v3698 = vunpack.c.h.b16 %v3546
        %v3699 = vunpack.c.l.b16 %v3547
        %v3700 = vunpack.c.h.b16 %v3547
        %v3701 = vunpack.c.l.b16 %v3548
        %v3702 = vunpack.c.h.b16 %v3548
        %v3703 = vunpack.c.l.b16 %v3549
        %v3704 = vunpack.c.h.b16 %v3549
        %v3705 = vunpack.c.l.b16 %v3550
        %v3706 = vunpack.c.h.b16 %v3550
        %v3707 = vunpack.c.l.b16 %v3551
        %v3708 = vunpack.c.h.b16 %v3551
        %v3709 = vunpack.c.l.b16 %v3552
        %v3710 = vunpack.c.h.b16 %v3552
        %v3711 = vunpack.c.l.b16 %v3553
        %v3712 = vunpack.c.h.b16 %v3553
        %v3713 = vunpack.c.l.b16 %v3554
        %v3714 = vunpack.c.h.b16 %v3554
        %v3715 = vunpack.c.l.b16 %v3555
        %v3716 = vunpack.c.h.b16 %v3555
        %v3717 = vunpack.c.l.b16 %v3556
        %v3718 = vunpack.c.h.b16 %v3556
        %v3719 = vunpack.c.l.b16 %v3557
        %v3720 = vunpack.c.h.b16 %v3557
        %v3721 = vunpack.c.l.b16 %v3558
        %v3722 = vunpack.c.h.b16 %v3558
        %v3723 = vunpack.c.l.b16 %v3559
        %v3724 = vunpack.c.h.b16 %v3559
        %v3725 = vunpack.c.l.b16 %v3560
        %v3726 = vunpack.c.h.b16 %v3560
        %v3727 = vunpack.c.l.b16 %v3561
        %v3728 = vunpack.c.h.b16 %v3561
        %v3729 = vunpack.c.l.b16 %v3562
        %v3730 = vunpack.c.h.b16 %v3562
        %v3731 = vunpack.c.l.b16 %v3563
        %v3732 = vunpack.c.h.b16 %v3563
        %v3733 = vunpack.c.l.b16 %v3564
        %v3734 = vunpack.c.h.b16 %v3564
        %v3735 = vunpack.c.l.b16 %v3565
        %v3736 = vunpack.c.h.b16 %v3565
        %v3737 = vunpack.c.l.b16 %v3566
        %v3738 = vunpack.c.h.b16 %v3566
        %v3739 = vunpack.c.l.b16 %v3567
        %v3740 = vunpack.c.h.b16 %v3567
        %v3741 = vunpack.c.l.b16 %v3568
        %v3742 = vunpack.c.h.b16 %v3568
        %v3743 = vunpack.c.l.b16 %v3569
        %v3744 = vunpack.c.h.b16 %v3569
        %v3745 = vunpack.c.l.b16 %v3570
        %v3746 = vunpack.c.h.b16 %v3570
        %v3747 = vunpack.c.l.b16 %v3571
        %v3748 = vunpack.c.h.b16 %v3571
        %v3749 = vunpack.c.l.b16 %v3572
        %v3750 = vunpack.c.h.b16 %v3572
        %v3751 = vunpack.c.l.b16 %v3573
        %v3752 = vunpack.c.h.b16 %v3573
        %v3753 = vunpack.c.l.b16 %v3574
        %v3754 = vunpack.c.h.b16 %v3574
        %v3755 = vunpack.c.l.b16 %v3575
        %v3756 = vunpack.c.h.b16 %v3575
        %v3757 = vunpack.c.l.b16 %v3576
        %v3758 = vunpack.c.h.b16 %v3576
        %v3759 = vunpack.c.l.b16 %v3577
        %v3760 = vunpack.c.h.b16 %v3577
        %v3761 = vunpack.c.l.b16 %v3578
        %v3762 = vunpack.c.h.b16 %v3578
        %v3763 = vunpack.c.l.b16 %v3579
        %v3764 = vunpack.c.h.b16 %v3579
        %v3765 = vunpack.c.l.b16 %v3580
        %v3766 = vunpack.c.h.b16 %v3580
        %v3767 = vunpack.c.l.b16 %v3581
        %v3768 = vunpack.c.h.b16 %v3581
        %v3769 = vunpack.c.l.b16 %v3582
        %v3770 = vunpack.c.h.b16 %v3582
        %v3771 = vunpack.c.l.b16 %v3583
        %v3772 = vunpack.c.h.b16 %v3583
        %v3773 = vunpack.c.l.b16 %v3584
        %v3774 = vunpack.c.h.b16 %v3584
        %v3775 = vunpack.c.l.b16 %v3585
        %v3776 = vunpack.c.h.b16 %v3585
        %v3777 = vunpack.c.l.b16 %v3586
        %v3778 = vunpack.c.h.b16 %v3586
        %v3779 = vpack.c.b16 %v3655, %v3651
        %v3780 = vpack.c.b16 %v3656, %v3652
        %v3781 = vpack.c.b16 %v3657, %v3653
        %v3782 = vpack.c.b16 %v3658, %v3654
        %v3783 = vpack.c.b16 %v3663, %v3659
        %v3784 = vpack.c.b16 %v3664, %v3660
        %v3785 = vpack.c.b16 %v3665, %v3661
        %v3786 = vpack.c.b16 %v3666, %v3662
        %v3787 = vpack.c.b16 %v3671, %v3667
        %v3788 = vpack.c.b16 %v3672, %v3668
        %v3789 = vpack.c.b16 %v3673, %v3669
        %v3790 = vpack.c.b16 %v3674, %v3670
        %v3791 = vpack.c.b16 %v3679, %v3675
        %v3792 = vpack.c.b16 %v3680, %v3676
        %v3793 = vpack.c.b16 %v3681, %v3677
        %v3794 = vpack.c.b16 %v3682, %v3678
        %v3795 = vpack.c.b16 %v3687, %v3683
        %v3796 = vpack.c.b16 %v3688, %v3684
        %v3797 = vpack.c.b16 %v3689, %v3685
        %v3798 = vpack.c.b16 %v3690, %v3686
        %v3799 = vpack.c.b16 %v3695, %v3691
        %v3800 = vpack.c.b16 %v3696, %v3692
        %v3801 = vpack.c.b16 %v3697, %v3693
        %v3802 = vpack.c.b16 %v3698, %v3694
        %v3803 = vpack.c.b16 %v3703, %v3699
        %v3804 = vpack.c.b16 %v3704, %v3700
        %v3805 = vpack.c.b16 %v3705, %v3701
        %v3806 = vpack.c.b16 %v3706, %v3702
        %v3807 = vpack.c.b16 %v3711, %v3707
        %v3808 = vpack.c.b16 %v3712, %v3708
        %v3809 = vpack.c.b16 %v3713, %v3709
        %v3810 = vpack.c.b16 %v3714, %v3710
        %v3811 = vpack.c.b16 %v3719, %v3715
        %v3812 = vpack.c.b16 %v3720, %v3716
        %v3813 = vpack.c.b16 %v3721, %v3717
        %v3814 = vpack.c.b16 %v3722, %v3718
        %v3815 = vpack.c.b16 %v3727, %v3723
        %v3816 = vpack.c.b16 %v3728, %v3724
        %v3817 = vpack.c.b16 %v3729, %v3725
        %v3818 = vpack.c.b16 %v3730, %v3726
        %v3819 = vpack.c.b16 %v3735, %v3731
        %v3820 = vpack.c.b16 %v3736, %v3732
        %v3821 = vpack.c.b16 %v3737, %v3733
        %v3822 = vpack.c.b16 %v3738, %v3734
        %v3823 = vpack.c.b16 %v3743, %v3739
        %v3824 = vpack.c.b16 %v3744, %v3740
        %v3825 = vpack.c.b16 %v3745, %v3741
        %v3826 = vpack.c.b16 %v3746, %v3742
        %v3827 = vpack.c.b16 %v3751, %v3747
        %v3828 = vpack.c.b16 %v3752, %v3748
        %v3829 = vpack.c.b16 %v3753, %v3749
        %v3830 = vpack.c.b16 %v3754, %v3750
        %v3831 = vpack.c.b16 %v3759, %v3755
        %v3832 = vpack.c.b16 %v3760, %v3756
        %v3833 = vpack.c.b16 %v3761, %v3757
        %v3834 = vpack.c.b16 %v3762, %v3758
        %v3835 = vpack.c.b16 %v3767, %v3763
        %v3836 = vpack.c.b16 %v3768, %v3764
        %v3837 = vpack.c.b16 %v3769, %v3765
        %v3838 = vpack.c.b16 %v3770, %v3766
        %v3839 = vpack.c.b16 %v3775, %v3771
        %v3840 = vpack.c.b16 %v3776, %v3772
        %v3841 = vpack.c.b16 %v3777, %v3773
        %v3842 = vpack.c.b16 %v3778, %v3774
        %3907 = vmatprep.subr.bf16.mxu0 %v3780
        %3908 = vmatpush1.bf16.msra.mxu0 %v3779
        %3909 = vmatprep.subr.bf16.mxu0 %v3784
        %3910 = vmatpush1.bf16.msra.mxu0 %v3783
        %3911 = vmatprep.subr.bf16.mxu0 %v3788
        %3912 = vmatpush1.bf16.msra.mxu0 %v3787
        %3913 = vmatprep.subr.bf16.mxu0 %v3792
        %3914 = vmatpush1.bf16.msra.mxu0 %v3791
        %3915 = vmatprep.subr.bf16.mxu0 %v3796
        %3916 = vmatpush1.bf16.msra.mxu0 %v3795
        %3917 = vmatprep.subr.bf16.mxu0 %v3800
        %3918 = vmatpush1.bf16.msra.mxu0 %v3799
        %3919 = vmatprep.subr.bf16.mxu0 %v3804
        %3920 = vmatpush1.bf16.msra.mxu0 %v3803
        %3921 = vmatprep.subr.bf16.mxu0 %v3808
        %3922 = vmatpush1.bf16.msra.mxu0 %v3807
        %3923 = vmatprep.subr.bf16.mxu0 %v3812
        %3924 = vmatpush1.bf16.msra.mxu0 %v3811
        %3925 = vmatprep.subr.bf16.mxu0 %v3816
        %3926 = vmatpush1.bf16.msra.mxu0 %v3815
        %3927 = vmatprep.subr.bf16.mxu0 %v3820
        %3928 = vmatpush1.bf16.msra.mxu0 %v3819
        %3929 = vmatprep.subr.bf16.mxu0 %v3824
        %3930 = vmatpush1.bf16.msra.mxu0 %v3823
        %3931 = vmatprep.subr.bf16.mxu0 %v3828
        %3932 = vmatpush1.bf16.msra.mxu0 %v3827
        %3933 = vmatprep.subr.bf16.mxu0 %v3832
        %3934 = vmatpush1.bf16.msra.mxu0 %v3831
        %3935 = vmatprep.subr.bf16.mxu0 %v3836
        %3936 = vmatpush1.bf16.msra.mxu0 %v3835
        %3937 = vmatprep.subr.bf16.mxu0 %v3840
        %3938 = vmatpush1.bf16.msra.mxu0 %v3839
        %3939 = vmatprep.mubr.bf16.mxu0 %v3355
        %3940 = vmatmul.mubr.bf16.gmra.mrb[0].mxu0 %v3348
        %v3941 = vpop.f32.mrb[0].mxu0
        %v3942 = vadd.f32 0.0, %v3941
        %v3943 = vpop.f32.mrb[0].mxu0
        %v3944 = vadd.f32 0.0, %v3943
        %v3945 = vpop.f32.mrb[0].mxu0
        %v3946 = vpop.f32.mrb[0].mxu0
        %3947 = vdwg.mxu0
        %3948 = vmatprep.subr.bf16.mxu0 %v3782
        %3949 = vmatpush1.bf16.msra.mxu0 %v3781
        %3950 = vmatprep.subr.bf16.mxu0 %v3786
        %3951 = vmatpush1.bf16.msra.mxu0 %v3785
        %3952 = vmatprep.subr.bf16.mxu0 %v3790
        %3953 = vmatpush1.bf16.msra.mxu0 %v3789
        %3954 = vmatprep.subr.bf16.mxu0 %v3794
        %3955 = vmatpush1.bf16.msra.mxu0 %v3793
        %3956 = vmatprep.subr.bf16.mxu0 %v3798
        %3957 = vmatpush1.bf16.msra.mxu0 %v3797
        %3958 = vmatprep.subr.bf16.mxu0 %v3802
        %3959 = vmatpush1.bf16.msra.mxu0 %v3801
        %3960 = vmatprep.subr.bf16.mxu0 %v3806
        %3961 = vmatpush1.bf16.msra.mxu0 %v3805
        %3962 = vmatprep.subr.bf16.mxu0 %v3810
        %3963 = vmatpush1.bf16.msra.mxu0 %v3809
        %3964 = vmatprep.subr.bf16.mxu0 %v3814
        %3965 = vmatpush1.bf16.msra.mxu0 %v3813
        %3966 = vmatprep.subr.bf16.mxu0 %v3818
        %3967 = vmatpush1.bf16.msra.mxu0 %v3817
        %3968 = vmatprep.subr.bf16.mxu0 %v3822
        %3969 = vmatpush1.bf16.msra.mxu0 %v3821
        %3970 = vmatprep.subr.bf16.mxu0 %v3826
        %3971 = vmatpush1.bf16.msra.mxu0 %v3825
        %3972 = vmatprep.subr.bf16.mxu0 %v3830
        %3973 = vmatpush1.bf16.msra.mxu0 %v3829
        %3974 = vmatprep.subr.bf16.mxu0 %v3834
        %3975 = vmatpush1.bf16.msra.mxu0 %v3833
        %3976 = vmatprep.subr.bf16.mxu0 %v3838
        %3977 = vmatpush1.bf16.msra.mxu0 %v3837
        %3978 = vmatprep.subr.bf16.mxu0 %v3842
        %3979 = vmatpush1.bf16.msra.mxu0 %v3841
        %3980 = vmatprep.mubr.bf16.mxu0 %v3355
        %3981 = vmatmul.mubr.bf16.gmra.mrb[0].mxu0 %v3348
        %v3982 = vpop.f32.mrb[0].mxu0
        %v3983 = vadd.f32 0.0, %v3982
        %v3984 = vpop.f32.mrb[0].mxu0
        %v3985 = vadd.f32 0.0, %v3984
        %v3986 = vpop.f32.mrb[0].mxu0
        %v3987 = vpop.f32.mrb[0].mxu0
        %3988 = vdwg.mxu0
        %v3989 = vadd.f32 %v3291, %v3942
        %v3990 = vadd.f32 %v3293, %v3944
        %v3991 = vadd.f32 %v3332, %v3983
        %v3992 = vadd.f32 %v3334, %v3985
        %v3993 = vld [vmem:[%s2383] sm:$0xfe]
        %v3994 = vld [vmem:[%s2383 + $0x8] sm:$0xfe]
        %v3995 = vpack.c.bf16 %v3993, %v3993
        %v3996 = vpack.c.bf16 %v3994, %v3994
        %v3998 = vshrl.u32 %v3995, 16
        %v4000 = vshll.u32 %v3995, 16
        %v4002 = vrot.slane %v4000, 1
        %v4003 = vor.u32 %v3998, %v4002
        %v4005 = vshrl.u32 %v3996, 16
        %v4007 = vshll.u32 %v3996, 16
        %v4009 = vrot.slane %v4007, 1
        %v4010 = vor.u32 %v4005, %v4009
        %4013 = vmatprep.subr.bf16.mxu0 %v3780
        %4014 = vmatpush1.bf16.msra.mxu0 %v3779
        %4015 = vmatprep.subr.bf16.mxu0 %v3784
        %4016 = vmatpush1.bf16.msra.mxu0 %v3783
        %4017 = vmatprep.subr.bf16.mxu0 %v3788
        %4018 = vmatpush1.bf16.msra.mxu0 %v3787
        %4019 = vmatprep.subr.bf16.mxu0 %v3792
        %4020 = vmatpush1.bf16.msra.mxu0 %v3791
        %4021 = vmatprep.subr.bf16.mxu0 %v3796
        %4022 = vmatpush1.bf16.msra.mxu0 %v3795
        %4023 = vmatprep.subr.bf16.mxu0 %v3800
        %4024 = vmatpush1.bf16.msra.mxu0 %v3799
        %4025 = vmatprep.subr.bf16.mxu0 %v3804
        %4026 = vmatpush1.bf16.msra.mxu0 %v3803
        %4027 = vmatprep.subr.bf16.mxu0 %v3808
        %4028 = vmatpush1.bf16.msra.mxu0 %v3807
        %4029 = vmatprep.subr.bf16.mxu0 %v3812
        %4030 = vmatpush1.bf16.msra.mxu0 %v3811
        %4031 = vmatprep.subr.bf16.mxu0 %v3816
        %4032 = vmatpush1.bf16.msra.mxu0 %v3815
        %4033 = vmatprep.subr.bf16.mxu0 %v3820
        %4034 = vmatpush1.bf16.msra.mxu0 %v3819
        %4035 = vmatprep.subr.bf16.mxu0 %v3824
        %4036 = vmatpush1.bf16.msra.mxu0 %v3823
        %4037 = vmatprep.subr.bf16.mxu0 %v3828
        %4038 = vmatpush1.bf16.msra.mxu0 %v3827
        %4039 = vmatprep.subr.bf16.mxu0 %v3832
        %4040 = vmatpush1.bf16.msra.mxu0 %v3831
        %4041 = vmatprep.subr.bf16.mxu0 %v3836
        %4042 = vmatpush1.bf16.msra.mxu0 %v3835
        %4043 = vmatprep.subr.bf16.mxu0 %v3840
        %4044 = vmatpush1.bf16.msra.mxu0 %v3839
        %4045 = vmatprep.mubr.bf16.mxu0 %v4010
        %4046 = vmatmul.mubr.bf16.gmra.mrb[0].mxu0 %v4003
        %v4047 = vpop.f32.mrb[0].mxu0
        %v4048 = vadd.f32 0.0, %v4047
        %v4049 = vpop.f32.mrb[0].mxu0
        %v4050 = vadd.f32 0.0, %v4049
        %v4051 = vpop.f32.mrb[0].mxu0
        %v4052 = vpop.f32.mrb[0].mxu0
        %4053 = vdwg.mxu0
        %4054 = vmatprep.subr.bf16.mxu0 %v3782
        %4055 = vmatpush1.bf16.msra.mxu0 %v3781
        %4056 = vmatprep.subr.bf16.mxu0 %v3786
        %4057 = vmatpush1.bf16.msra.mxu0 %v3785
        %4058 = vmatprep.subr.bf16.mxu0 %v3790
        %4059 = vmatpush1.bf16.msra.mxu0 %v3789
        %4060 = vmatprep.subr.bf16.mxu0 %v3794
        %4061 = vmatpush1.bf16.msra.mxu0 %v3793
        %4062 = vmatprep.subr.bf16.mxu0 %v3798
        %4063 = vmatpush1.bf16.msra.mxu0 %v3797
        %4064 = vmatprep.subr.bf16.mxu0 %v3802
        %4065 = vmatpush1.bf16.msra.mxu0 %v3801
        %4066 = vmatprep.subr.bf16.mxu0 %v3806
        %4067 = vmatpush1.bf16.msra.mxu0 %v3805
        %4068 = vmatprep.subr.bf16.mxu0 %v3810
        %4069 = vmatpush1.bf16.msra.mxu0 %v3809
        %4070 = vmatprep.subr.bf16.mxu0 %v3814
        %4071 = vmatpush1.bf16.msra.mxu0 %v3813
        %4072 = vmatprep.subr.bf16.mxu0 %v3818
        %4073 = vmatpush1.bf16.msra.mxu0 %v3817
        %4074 = vmatprep.subr.bf16.mxu0 %v3822
        %4075 = vmatpush1.bf16.msra.mxu0 %v3821
        %4076 = vmatprep.subr.bf16.mxu0 %v3826
        %4077 = vmatpush1.bf16.msra.mxu0 %v3825
        %4078 = vmatprep.subr.bf16.mxu0 %v3830
        %4079 = vmatpush1.bf16.msra.mxu0 %v3829
        %4080 = vmatprep.subr.bf16.mxu0 %v3834
        %4081 = vmatpush1.bf16.msra.mxu0 %v3833
        %4082 = vmatprep.subr.bf16.mxu0 %v3838
        %4083 = vmatpush1.bf16.msra.mxu0 %v3837
        %4084 = vmatprep.subr.bf16.mxu0 %v3842
        %4085 = vmatpush1.bf16.msra.mxu0 %v3841
        %4086 = vmatprep.mubr.bf16.mxu0 %v4010
        %4087 = vmatmul.mubr.bf16.gmra.mrb[0].mxu0 %v4003
        %v4088 = vpop.f32.mrb[0].mxu0
        %v4089 = vadd.f32 0.0, %v4088
        %v4090 = vpop.f32.mrb[0].mxu0
        %v4091 = vadd.f32 0.0, %v4090
        %v4092 = vpop.f32.mrb[0].mxu0
        %v4093 = vpop.f32.mrb[0].mxu0
        %4094 = vdwg.mxu0
        %v4095 = vadd.f32 %v3475, %v4048
        %v4096 = vadd.f32 %v3477, %v4050
        %v4097 = vadd.f32 %v3516, %v4089
        %v4098 = vadd.f32 %v3518, %v4091
        %s4099 = scalar_lea.vmem %s3, 1536
        %v4100 = vld [vmem:[%s4099] sm:$0xff]
        %v4101 = vld [vmem:[%s4099 + $0x8] sm:$0xff]
        %v4102 = vld [vmem:[%s4099 + $0x10] sm:$0xff]
        %v4103 = vld [vmem:[%s4099 + $0x18] sm:$0xff]
        %v4104 = vld [vmem:[%s4099 + $0x20] sm:$0xff]
        %v4105 = vld [vmem:[%s4099 + $0x28] sm:$0xff]
        %v4106 = vld [vmem:[%s4099 + $0x30] sm:$0xff]
        %v4107 = vld [vmem:[%s4099 + $0x38] sm:$0xff]
        %v4108 = vld [vmem:[%s4099 + $0x40] sm:$0xff]
        %v4109 = vld [vmem:[%s4099 + $0x48] sm:$0xff]
        %v4110 = vld [vmem:[%s4099 + $0x50] sm:$0xff]
        %v4111 = vld [vmem:[%s4099 + $0x58] sm:$0xff]
        %v4112 = vld [vmem:[%s4099 + $0x60] sm:$0xff]
        %v4113 = vld [vmem:[%s4099 + $0x68] sm:$0xff]
        %v4114 = vld [vmem:[%s4099 + $0x70] sm:$0xff]
        %v4115 = vld [vmem:[%s4099 + $0x78] sm:$0xff]
        %v4116 = vld [vmem:[%s4099 + $0x80] sm:$0xff]
        %v4117 = vld [vmem:[%s4099 + $0x88] sm:$0xff]
        %v4118 = vld [vmem:[%s4099 + $0x90] sm:$0xff]
        %v4119 = vld [vmem:[%s4099 + $0x98] sm:$0xff]
        %v4120 = vld [vmem:[%s4099 + $0xa0] sm:$0xff]
        %v4121 = vld [vmem:[%s4099 + $0xa8] sm:$0xff]
        %v4122 = vld [vmem:[%s4099 + $0xb0] sm:$0xff]
        %v4123 = vld [vmem:[%s4099 + $0xb8] sm:$0xff]
        %v4124 = vld [vmem:[%s4099 + $0xc0] sm:$0xff]
        %v4125 = vld [vmem:[%s4099 + $0xc8] sm:$0xff]
        %v4126 = vld [vmem:[%s4099 + $0xd0] sm:$0xff]
        %v4127 = vld [vmem:[%s4099 + $0xd8] sm:$0xff]
        %v4128 = vld [vmem:[%s4099 + $0xe0] sm:$0xff]
        %v4129 = vld [vmem:[%s4099 + $0xe8] sm:$0xff]
        %v4130 = vld [vmem:[%s4099 + $0xf0] sm:$0xff]
        %v4131 = vld [vmem:[%s4099 + $0xf8] sm:$0xff]
        %v4132 = vld [vmem:[%s4099 + $0x100] sm:$0xff]
        %v4133 = vld [vmem:[%s4099 + $0x108] sm:$0xff]
        %v4134 = vld [vmem:[%s4099 + $0x110] sm:$0xff]
        %v4135 = vld [vmem:[%s4099 + $0x118] sm:$0xff]
        %v4136 = vld [vmem:[%s4099 + $0x120] sm:$0xff]
        %v4137 = vld [vmem:[%s4099 + $0x128] sm:$0xff]
        %v4138 = vld [vmem:[%s4099 + $0x130] sm:$0xff]
        %v4139 = vld [vmem:[%s4099 + $0x138] sm:$0xff]
        %v4140 = vld [vmem:[%s4099 + $0x140] sm:$0xff]
        %v4141 = vld [vmem:[%s4099 + $0x148] sm:$0xff]
        %v4142 = vld [vmem:[%s4099 + $0x150] sm:$0xff]
        %v4143 = vld [vmem:[%s4099 + $0x158] sm:$0xff]
        %v4144 = vld [vmem:[%s4099 + $0x160] sm:$0xff]
        %v4145 = vld [vmem:[%s4099 + $0x168] sm:$0xff]
        %v4146 = vld [vmem:[%s4099 + $0x170] sm:$0xff]
        %v4147 = vld [vmem:[%s4099 + $0x178] sm:$0xff]
        %v4148 = vld [vmem:[%s4099 + $0x180] sm:$0xff]
        %v4149 = vld [vmem:[%s4099 + $0x188] sm:$0xff]
        %v4150 = vld [vmem:[%s4099 + $0x190] sm:$0xff]
        %v4151 = vld [vmem:[%s4099 + $0x198] sm:$0xff]
        %v4152 = vld [vmem:[%s4099 + $0x1a0] sm:$0xff]
        %v4153 = vld [vmem:[%s4099 + $0x1a8] sm:$0xff]
        %v4154 = vld [vmem:[%s4099 + $0x1b0] sm:$0xff]
        %v4155 = vld [vmem:[%s4099 + $0x1b8] sm:$0xff]
        %v4156 = vld [vmem:[%s4099 + $0x1c0] sm:$0xff]
        %v4157 = vld [vmem:[%s4099 + $0x1c8] sm:$0xff]
        %v4158 = vld [vmem:[%s4099 + $0x1d0] sm:$0xff]
        %v4159 = vld [vmem:[%s4099 + $0x1d8] sm:$0xff]
        %v4160 = vld [vmem:[%s4099 + $0x1e0] sm:$0xff]
        %v4161 = vld [vmem:[%s4099 + $0x1e8] sm:$0xff]
        %v4162 = vld [vmem:[%s4099 + $0x1f0] sm:$0xff]
        %v4163 = vld [vmem:[%s4099 + $0x1f8] sm:$0xff]
        %v4228 = vunpack.c.l.b16 %v4100
        %v4229 = vunpack.c.h.b16 %v4100
        %v4230 = vunpack.c.l.b16 %v4101
        %v4231 = vunpack.c.h.b16 %v4101
        %v4232 = vunpack.c.l.b16 %v4102
        %v4233 = vunpack.c.h.b16 %v4102
        %v4234 = vunpack.c.l.b16 %v4103
        %v4235 = vunpack.c.h.b16 %v4103
        %v4236 = vunpack.c.l.b16 %v4104
        %v4237 = vunpack.c.h.b16 %v4104
        %v4238 = vunpack.c.l.b16 %v4105
        %v4239 = vunpack.c.h.b16 %v4105
        %v4240 = vunpack.c.l.b16 %v4106
        %v4241 = vunpack.c.h.b16 %v4106
        %v4242 = vunpack.c.l.b16 %v4107
        %v4243 = vunpack.c.h.b16 %v4107
        %v4244 = vunpack.c.l.b16 %v4108
        %v4245 = vunpack.c.h.b16 %v4108
        %v4246 = vunpack.c.l.b16 %v4109
        %v4247 = vunpack.c.h.b16 %v4109
        %v4248 = vunpack.c.l.b16 %v4110
        %v4249 = vunpack.c.h.b16 %v4110
        %v4250 = vunpack.c.l.b16 %v4111
        %v4251 = vunpack.c.h.b16 %v4111
        %v4252 = vunpack.c.l.b16 %v4112
        %v4253 = vunpack.c.h.b16 %v4112
        %v4254 = vunpack.c.l.b16 %v4113
        %v4255 = vunpack.c.h.b16 %v4113
        %v4256 = vunpack.c.l.b16 %v4114
        %v4257 = vunpack.c.h.b16 %v4114
        %v4258 = vunpack.c.l.b16 %v4115
        %v4259 = vunpack.c.h.b16 %v4115
        %v4260 = vunpack.c.l.b16 %v4116
        %v4261 = vunpack.c.h.b16 %v4116
        %v4262 = vunpack.c.l.b16 %v4117
        %v4263 = vunpack.c.h.b16 %v4117
        %v4264 = vunpack.c.l.b16 %v4118
        %v4265 = vunpack.c.h.b16 %v4118
        %v4266 = vunpack.c.l.b16 %v4119
        %v4267 = vunpack.c.h.b16 %v4119
        %v4268 = vunpack.c.l.b16 %v4120
        %v4269 = vunpack.c.h.b16 %v4120
        %v4270 = vunpack.c.l.b16 %v4121
        %v4271 = vunpack.c.h.b16 %v4121
        %v4272 = vunpack.c.l.b16 %v4122
        %v4273 = vunpack.c.h.b16 %v4122
        %v4274 = vunpack.c.l.b16 %v4123
        %v4275 = vunpack.c.h.b16 %v4123
        %v4276 = vunpack.c.l.b16 %v4124
        %v4277 = vunpack.c.h.b16 %v4124
        %v4278 = vunpack.c.l.b16 %v4125
        %v4279 = vunpack.c.h.b16 %v4125
        %v4280 = vunpack.c.l.b16 %v4126
        %v4281 = vunpack.c.h.b16 %v4126
        %v4282 = vunpack.c.l.b16 %v4127
        %v4283 = vunpack.c.h.b16 %v4127
        %v4284 = vunpack.c.l.b16 %v4128
        %v4285 = vunpack.c.h.b16 %v4128
        %v4286 = vunpack.c.l.b16 %v4129
        %v4287 = vunpack.c.h.b16 %v4129
        %v4288 = vunpack.c.l.b16 %v4130
        %v4289 = vunpack.c.h.b16 %v4130
        %v4290 = vunpack.c.l.b16 %v4131
        %v4291 = vunpack.c.h.b16 %v4131
        %v4292 = vunpack.c.l.b16 %v4132
        %v4293 = vunpack.c.h.b16 %v4132
        %v4294 = vunpack.c.l.b16 %v4133
        %v4295 = vunpack.c.h.b16 %v4133
        %v4296 = vunpack.c.l.b16 %v4134
        %v4297 = vunpack.c.h.b16 %v4134
        %v4298 = vunpack.c.l.b16 %v4135
        %v4299 = vunpack.c.h.b16 %v4135
        %v4300 = vunpack.c.l.b16 %v4136
        %v4301 = vunpack.c.h.b16 %v4136
        %v4302 = vunpack.c.l.b16 %v4137
        %v4303 = vunpack.c.h.b16 %v4137
        %v4304 = vunpack.c.l.b16 %v4138
        %v4305 = vunpack.c.h.b16 %v4138
        %v4306 = vunpack.c.l.b16 %v4139
        %v4307 = vunpack.c.h.b16 %v4139
        %v4308 = vunpack.c.l.b16 %v4140
        %v4309 = vunpack.c.h.b16 %v4140
        %v4310 = vunpack.c.l.b16 %v4141
        %v4311 = vunpack.c.h.b16 %v4141
        %v4312 = vunpack.c.l.b16 %v4142
        %v4313 = vunpack.c.h.b16 %v4142
        %v4314 = vunpack.c.l.b16 %v4143
        %v4315 = vunpack.c.h.b16 %v4143
        %v4316 = vunpack.c.l.b16 %v4144
        %v4317 = vunpack.c.h.b16 %v4144
        %v4318 = vunpack.c.l.b16 %v4145
        %v4319 = vunpack.c.h.b16 %v4145
        %v4320 = vunpack.c.l.b16 %v4146
        %v4321 = vunpack.c.h.b16 %v4146
        %v4322 = vunpack.c.l.b16 %v4147
        %v4323 = vunpack.c.h.b16 %v4147
        %v4324 = vunpack.c.l.b16 %v4148
        %v4325 = vunpack.c.h.b16 %v4148
        %v4326 = vunpack.c.l.b16 %v4149
        %v4327 = vunpack.c.h.b16 %v4149
        %v4328 = vunpack.c.l.b16 %v4150
        %v4329 = vunpack.c.h.b16 %v4150
        %v4330 = vunpack.c.l.b16 %v4151
        %v4331 = vunpack.c.h.b16 %v4151
        %v4332 = vunpack.c.l.b16 %v4152
        %v4333 = vunpack.c.h.b16 %v4152
        %v4334 = vunpack.c.l.b16 %v4153
        %v4335 = vunpack.c.h.b16 %v4153
        %v4336 = vunpack.c.l.b16 %v4154
        %v4337 = vunpack.c.h.b16 %v4154
        %v4338 = vunpack.c.l.b16 %v4155
        %v4339 = vunpack.c.h.b16 %v4155
        %v4340 = vunpack.c.l.b16 %v4156
        %v4341 = vunpack.c.h.b16 %v4156
        %v4342 = vunpack.c.l.b16 %v4157
        %v4343 = vunpack.c.h.b16 %v4157
        %v4344 = vunpack.c.l.b16 %v4158
        %v4345 = vunpack.c.h.b16 %v4158
        %v4346 = vunpack.c.l.b16 %v4159
        %v4347 = vunpack.c.h.b16 %v4159
        %v4348 = vunpack.c.l.b16 %v4160
        %v4349 = vunpack.c.h.b16 %v4160
        %v4350 = vunpack.c.l.b16 %v4161
        %v4351 = vunpack.c.h.b16 %v4161
        %v4352 = vunpack.c.l.b16 %v4162
        %v4353 = vunpack.c.h.b16 %v4162
        %v4354 = vunpack.c.l.b16 %v4163
        %v4355 = vunpack.c.h.b16 %v4163
        %v4356 = vpack.c.b16 %v4232, %v4228
        %v4357 = vpack.c.b16 %v4233, %v4229
        %v4358 = vpack.c.b16 %v4234, %v4230
        %v4359 = vpack.c.b16 %v4235, %v4231
        %v4360 = vpack.c.b16 %v4240, %v4236
        %v4361 = vpack.c.b16 %v4241, %v4237
        %v4362 = vpack.c.b16 %v4242, %v4238
        %v4363 = vpack.c.b16 %v4243, %v4239
        %v4364 = vpack.c.b16 %v4248, %v4244
        %v4365 = vpack.c.b16 %v4249, %v4245
        %v4366 = vpack.c.b16 %v4250, %v4246
        %v4367 = vpack.c.b16 %v4251, %v4247
        %v4368 = vpack.c.b16 %v4256, %v4252
        %v4369 = vpack.c.b16 %v4257, %v4253
        %v4370 = vpack.c.b16 %v4258, %v4254
        %v4371 = vpack.c.b16 %v4259, %v4255
        %v4372 = vpack.c.b16 %v4264, %v4260
        %v4373 = vpack.c.b16 %v4265, %v4261
        %v4374 = vpack.c.b16 %v4266, %v4262
        %v4375 = vpack.c.b16 %v4267, %v4263
        %v4376 = vpack.c.b16 %v4272, %v4268
        %v4377 = vpack.c.b16 %v4273, %v4269
        %v4378 = vpack.c.b16 %v4274, %v4270
        %v4379 = vpack.c.b16 %v4275, %v4271
        %v4380 = vpack.c.b16 %v4280, %v4276
        %v4381 = vpack.c.b16 %v4281, %v4277
        %v4382 = vpack.c.b16 %v4282, %v4278
        %v4383 = vpack.c.b16 %v4283, %v4279
        %v4384 = vpack.c.b16 %v4288, %v4284
        %v4385 = vpack.c.b16 %v4289, %v4285
        %v4386 = vpack.c.b16 %v4290, %v4286
        %v4387 = vpack.c.b16 %v4291, %v4287
        %v4388 = vpack.c.b16 %v4296, %v4292
        %v4389 = vpack.c.b16 %v4297, %v4293
        %v4390 = vpack.c.b16 %v4298, %v4294
        %v4391 = vpack.c.b16 %v4299, %v4295
        %v4392 = vpack.c.b16 %v4304, %v4300
        %v4393 = vpack.c.b16 %v4305, %v4301
        %v4394 = vpack.c.b16 %v4306, %v4302
        %v4395 = vpack.c.b16 %v4307, %v4303
        %v4396 = vpack.c.b16 %v4312, %v4308
        %v4397 = vpack.c.b16 %v4313, %v4309
        %v4398 = vpack.c.b16 %v4314, %v4310
        %v4399 = vpack.c.b16 %v4315, %v4311
        %v4400 = vpack.c.b16 %v4320, %v4316
        %v4401 = vpack.c.b16 %v4321, %v4317
        %v4402 = vpack.c.b16 %v4322, %v4318
        %v4403 = vpack.c.b16 %v4323, %v4319
        %v4404 = vpack.c.b16 %v4328, %v4324
        %v4405 = vpack.c.b16 %v4329, %v4325
        %v4406 = vpack.c.b16 %v4330, %v4326
        %v4407 = vpack.c.b16 %v4331, %v4327
        %v4408 = vpack.c.b16 %v4336, %v4332
        %v4409 = vpack.c.b16 %v4337, %v4333
        %v4410 = vpack.c.b16 %v4338, %v4334
        %v4411 = vpack.c.b16 %v4339, %v4335
        %v4412 = vpack.c.b16 %v4344, %v4340
        %v4413 = vpack.c.b16 %v4345, %v4341
        %v4414 = vpack.c.b16 %v4346, %v4342
        %v4415 = vpack.c.b16 %v4347, %v4343
        %v4416 = vpack.c.b16 %v4352, %v4348
        %v4417 = vpack.c.b16 %v4353, %v4349
        %v4418 = vpack.c.b16 %v4354, %v4350
        %v4419 = vpack.c.b16 %v4355, %v4351
        %4484 = vmatprep.subr.bf16.mxu0 %v4357
        %4485 = vmatpush1.bf16.msra.mxu0 %v4356
        %4486 = vmatprep.subr.bf16.mxu0 %v4361
        %4487 = vmatpush1.bf16.msra.mxu0 %v4360
        %4488 = vmatprep.subr.bf16.mxu0 %v4365
        %4489 = vmatpush1.bf16.msra.mxu0 %v4364
        %4490 = vmatprep.subr.bf16.mxu0 %v4369
        %4491 = vmatpush1.bf16.msra.mxu0 %v4368
        %4492 = vmatprep.subr.bf16.mxu0 %v4373
        %4493 = vmatpush1.bf16.msra.mxu0 %v4372
        %4494 = vmatprep.subr.bf16.mxu0 %v4377
        %4495 = vmatpush1.bf16.msra.mxu0 %v4376
        %4496 = vmatprep.subr.bf16.mxu0 %v4381
        %4497 = vmatpush1.bf16.msra.mxu0 %v4380
        %4498 = vmatprep.subr.bf16.mxu0 %v4385
        %4499 = vmatpush1.bf16.msra.mxu0 %v4384
        %4500 = vmatprep.subr.bf16.mxu0 %v4389
        %4501 = vmatpush1.bf16.msra.mxu0 %v4388
        %4502 = vmatprep.subr.bf16.mxu0 %v4393
        %4503 = vmatpush1.bf16.msra.mxu0 %v4392
        %4504 = vmatprep.subr.bf16.mxu0 %v4397
        %4505 = vmatpush1.bf16.msra.mxu0 %v4396
        %4506 = vmatprep.subr.bf16.mxu0 %v4401
        %4507 = vmatpush1.bf16.msra.mxu0 %v4400
        %4508 = vmatprep.subr.bf16.mxu0 %v4405
        %4509 = vmatpush1.bf16.msra.mxu0 %v4404
        %4510 = vmatprep.subr.bf16.mxu0 %v4409
        %4511 = vmatpush1.bf16.msra.mxu0 %v4408
        %4512 = vmatprep.subr.bf16.mxu0 %v4413
        %4513 = vmatpush1.bf16.msra.mxu0 %v4412
        %4514 = vmatprep.subr.bf16.mxu0 %v4417
        %4515 = vmatpush1.bf16.msra.mxu0 %v4416
        %4516 = vmatprep.mubr.bf16.mxu0 %v4010
        %4517 = vmatmul.mubr.bf16.gmra.mrb[0].mxu0 %v4003
        %v4518 = vpop.f32.mrb[0].mxu0
        %v4519 = vadd.f32 0.0, %v4518
        %v4520 = vpop.f32.mrb[0].mxu0
        %v4521 = vadd.f32 0.0, %v4520
        %v4522 = vpop.f32.mrb[0].mxu0
        %v4523 = vpop.f32.mrb[0].mxu0
        %4524 = vdwg.mxu0
        %4525 = vmatprep.subr.bf16.mxu0 %v4359
        %4526 = vmatpush1.bf16.msra.mxu0 %v4358
        %4527 = vmatprep.subr.bf16.mxu0 %v4363
        %4528 = vmatpush1.bf16.msra.mxu0 %v4362
        %4529 = vmatprep.subr.bf16.mxu0 %v4367
        %4530 = vmatpush1.bf16.msra.mxu0 %v4366
        %4531 = vmatprep.subr.bf16.mxu0 %v4371
        %4532 = vmatpush1.bf16.msra.mxu0 %v4370
        %4533 = vmatprep.subr.bf16.mxu0 %v4375
        %4534 = vmatpush1.bf16.msra.mxu0 %v4374
        %4535 = vmatprep.subr.bf16.mxu0 %v4379
        %4536 = vmatpush1.bf16.msra.mxu0 %v4378
        %4537 = vmatprep.subr.bf16.mxu0 %v4383
        %4538 = vmatpush1.bf16.msra.mxu0 %v4382
        %4539 = vmatprep.subr.bf16.mxu0 %v4387
        %4540 = vmatpush1.bf16.msra.mxu0 %v4386
        %4541 = vmatprep.subr.bf16.mxu0 %v4391
        %4542 = vmatpush1.bf16.msra.mxu0 %v4390
        %4543 = vmatprep.subr.bf16.mxu0 %v4395
        %4544 = vmatpush1.bf16.msra.mxu0 %v4394
        %4545 = vmatprep.subr.bf16.mxu0 %v4399
        %4546 = vmatpush1.bf16.msra.mxu0 %v4398
        %4547 = vmatprep.subr.bf16.mxu0 %v4403
        %4548 = vmatpush1.bf16.msra.mxu0 %v4402
        %4549 = vmatprep.subr.bf16.mxu0 %v4407
        %4550 = vmatpush1.bf16.msra.mxu0 %v4406
        %4551 = vmatprep.subr.bf16.mxu0 %v4411
        %4552 = vmatpush1.bf16.msra.mxu0 %v4410
        %4553 = vmatprep.subr.bf16.mxu0 %v4415
        %4554 = vmatpush1.bf16.msra.mxu0 %v4414
        %4555 = vmatprep.subr.bf16.mxu0 %v4419
        %4556 = vmatpush1.bf16.msra.mxu0 %v4418
        %4557 = vmatprep.mubr.bf16.mxu0 %v4010
        %4558 = vmatmul.mubr.bf16.gmra.mrb[0].mxu0 %v4003
        %v4559 = vpop.f32.mrb[0].mxu0
        %v4560 = vadd.f32 0.0, %v4559
        %v4561 = vpop.f32.mrb[0].mxu0
        %v4562 = vadd.f32 0.0, %v4561
        %v4563 = vpop.f32.mrb[0].mxu0
        %v4564 = vpop.f32.mrb[0].mxu0
        %4565 = vdwg.mxu0
        %v4566 = vadd.f32 %v3989, %v4519
        %v4567 = vadd.f32 %v3990, %v4521
        %v4568 = vadd.f32 %v3991, %v4560
        %v4569 = vadd.f32 %v3992, %v4562
        %v4570 = vld [vmem:[#allocation2] sm:$0xfc]
        %v4571 = vld [vmem:[#allocation2 + $0x8] sm:$0xfc]
        %v4572 = vld [vmem:[#allocation2 + $0x10] sm:$0x1]
        %v4573 = vld [vmem:[#allocation2 + $0x18] sm:$0x1]
        %v4574 = vpack.c.bf16 %v4572, %v4570
        %v4575 = vpack.c.bf16 %v4573, %v4571
        %v4578 = vrot.slane %v4574, 1
        %v4579 = vrot.slane %v4575, 1
        %4582 = vmatprep.subr.bf16.mxu0 %v4357
        %4583 = vmatpush1.bf16.msra.mxu0 %v4356
        %4584 = vmatprep.subr.bf16.mxu0 %v4361
        %4585 = vmatpush1.bf16.msra.mxu0 %v4360
        %4586 = vmatprep.subr.bf16.mxu0 %v4365
        %4587 = vmatpush1.bf16.msra.mxu0 %v4364
        %4588 = vmatprep.subr.bf16.mxu0 %v4369
        %4589 = vmatpush1.bf16.msra.mxu0 %v4368
        %4590 = vmatprep.subr.bf16.mxu0 %v4373
        %4591 = vmatpush1.bf16.msra.mxu0 %v4372
        %4592 = vmatprep.subr.bf16.mxu0 %v4377
        %4593 = vmatpush1.bf16.msra.mxu0 %v4376
        %4594 = vmatprep.subr.bf16.mxu0 %v4381
        %4595 = vmatpush1.bf16.msra.mxu0 %v4380
        %4596 = vmatprep.subr.bf16.mxu0 %v4385
        %4597 = vmatpush1.bf16.msra.mxu0 %v4384
        %4598 = vmatprep.subr.bf16.mxu0 %v4389
        %4599 = vmatpush1.bf16.msra.mxu0 %v4388
        %4600 = vmatprep.subr.bf16.mxu0 %v4393
        %4601 = vmatpush1.bf16.msra.mxu0 %v4392
        %4602 = vmatprep.subr.bf16.mxu0 %v4397
        %4603 = vmatpush1.bf16.msra.mxu0 %v4396
        %4604 = vmatprep.subr.bf16.mxu0 %v4401
        %4605 = vmatpush1.bf16.msra.mxu0 %v4400
        %4606 = vmatprep.subr.bf16.mxu0 %v4405
        %4607 = vmatpush1.bf16.msra.mxu0 %v4404
        %4608 = vmatprep.subr.bf16.mxu0 %v4409
        %4609 = vmatpush1.bf16.msra.mxu0 %v4408
        %4610 = vmatprep.subr.bf16.mxu0 %v4413
        %4611 = vmatpush1.bf16.msra.mxu0 %v4412
        %4612 = vmatprep.subr.bf16.mxu0 %v4417
        %4613 = vmatpush1.bf16.msra.mxu0 %v4416
        %4614 = vmatprep.mubr.bf16.mxu0 %v4579
        %4615 = vmatmul.mubr.bf16.gmra.mrb[0].mxu0 %v4578
        %v4616 = vpop.f32.mrb[0].mxu0
        %v4617 = vadd.f32 0.0, %v4616
        %v4618 = vpop.f32.mrb[0].mxu0
        %v4619 = vadd.f32 0.0, %v4618
        %v4620 = vpop.f32.mrb[0].mxu0
        %v4621 = vpop.f32.mrb[0].mxu0
        %4622 = vdwg.mxu0
        %4623 = vmatprep.subr.bf16.mxu0 %v4359
        %4624 = vmatpush1.bf16.msra.mxu0 %v4358
        %4625 = vmatprep.subr.bf16.mxu0 %v4363
        %4626 = vmatpush1.bf16.msra.mxu0 %v4362
        %4627 = vmatprep.subr.bf16.mxu0 %v4367
        %4628 = vmatpush1.bf16.msra.mxu0 %v4366
        %4629 = vmatprep.subr.bf16.mxu0 %v4371
        %4630 = vmatpush1.bf16.msra.mxu0 %v4370
        %4631 = vmatprep.subr.bf16.mxu0 %v4375
        %4632 = vmatpush1.bf16.msra.mxu0 %v4374
        %4633 = vmatprep.subr.bf16.mxu0 %v4379
        %4634 = vmatpush1.bf16.msra.mxu0 %v4378
        %4635 = vmatprep.subr.bf16.mxu0 %v4383
        %4636 = vmatpush1.bf16.msra.mxu0 %v4382
        %4637 = vmatprep.subr.bf16.mxu0 %v4387
        %4638 = vmatpush1.bf16.msra.mxu0 %v4386
        %4639 = vmatprep.subr.bf16.mxu0 %v4391
        %4640 = vmatpush1.bf16.msra.mxu0 %v4390
        %4641 = vmatprep.subr.bf16.mxu0 %v4395
        %4642 = vmatpush1.bf16.msra.mxu0 %v4394
        %4643 = vmatprep.subr.bf16.mxu0 %v4399
        %4644 = vmatpush1.bf16.msra.mxu0 %v4398
        %4645 = vmatprep.subr.bf16.mxu0 %v4403
        %4646 = vmatpush1.bf16.msra.mxu0 %v4402
        %4647 = vmatprep.subr.bf16.mxu0 %v4407
        %4648 = vmatpush1.bf16.msra.mxu0 %v4406
        %4649 = vmatprep.subr.bf16.mxu0 %v4411
        %4650 = vmatpush1.bf16.msra.mxu0 %v4410
        %4651 = vmatprep.subr.bf16.mxu0 %v4415
        %4652 = vmatpush1.bf16.msra.mxu0 %v4414
        %4653 = vmatprep.subr.bf16.mxu0 %v4419
        %4654 = vmatpush1.bf16.msra.mxu0 %v4418
        %4655 = vmatprep.mubr.bf16.mxu0 %v4579
        %4656 = vmatmul.mubr.bf16.gmra.mrb[0].mxu0 %v4578
        %v4657 = vpop.f32.mrb[0].mxu0
        %v4658 = vadd.f32 0.0, %v4657
        %v4659 = vpop.f32.mrb[0].mxu0
        %v4660 = vadd.f32 0.0, %v4659
        %v4661 = vpop.f32.mrb[0].mxu0
        %v4662 = vpop.f32.mrb[0].mxu0
        %4663 = vdwg.mxu0
        %v4664 = vadd.f32 %v4095, %v4617
        %v4665 = vadd.f32 %v4096, %v4619
        %v4666 = vadd.f32 %v4097, %v4658
        %v4667 = vadd.f32 %v4098, %v4660
        %s4668 = scalar_lea.vmem %s3, 2048
        %v4669 = vld [vmem:[%s4668] sm:$0xff]
        %v4670 = vld [vmem:[%s4668 + $0x8] sm:$0xff]
        %v4671 = vld [vmem:[%s4668 + $0x10] sm:$0xff]
        %v4672 = vld [vmem:[%s4668 + $0x18] sm:$0xff]
        %v4673 = vld [vmem:[%s4668 + $0x20] sm:$0xff]
        %v4674 = vld [vmem:[%s4668 + $0x28] sm:$0xff]
        %v4675 = vld [vmem:[%s4668 + $0x30] sm:$0xff]
        %v4676 = vld [vmem:[%s4668 + $0x38] sm:$0xff]
        %v4677 = vld [vmem:[%s4668 + $0x40] sm:$0xff]
        %v4678 = vld [vmem:[%s4668 + $0x48] sm:$0xff]
        %v4679 = vld [vmem:[%s4668 + $0x50] sm:$0xff]
        %v4680 = vld [vmem:[%s4668 + $0x58] sm:$0xff]
        %v4681 = vld [vmem:[%s4668 + $0x60] sm:$0xff]
        %v4682 = vld [vmem:[%s4668 + $0x68] sm:$0xff]
        %v4683 = vld [vmem:[%s4668 + $0x70] sm:$0xff]
        %v4684 = vld [vmem:[%s4668 + $0x78] sm:$0xff]
        %v4685 = vld [vmem:[%s4668 + $0x80] sm:$0xff]
        %v4686 = vld [vmem:[%s4668 + $0x88] sm:$0xff]
        %v4687 = vld [vmem:[%s4668 + $0x90] sm:$0xff]
        %v4688 = vld [vmem:[%s4668 + $0x98] sm:$0xff]
        %v4689 = vld [vmem:[%s4668 + $0xa0] sm:$0xff]
        %v4690 = vld [vmem:[%s4668 + $0xa8] sm:$0xff]
        %v4691 = vld [vmem:[%s4668 + $0xb0] sm:$0xff]
        %v4692 = vld [vmem:[%s4668 + $0xb8] sm:$0xff]
        %v4693 = vld [vmem:[%s4668 + $0xc0] sm:$0xff]
        %v4694 = vld [vmem:[%s4668 + $0xc8] sm:$0xff]
        %v4695 = vld [vmem:[%s4668 + $0xd0] sm:$0xff]
        %v4696 = vld [vmem:[%s4668 + $0xd8] sm:$0xff]
        %v4697 = vld [vmem:[%s4668 + $0xe0] sm:$0xff]
        %v4698 = vld [vmem:[%s4668 + $0xe8] sm:$0xff]
        %v4699 = vld [vmem:[%s4668 + $0xf0] sm:$0xff]
        %v4700 = vld [vmem:[%s4668 + $0xf8] sm:$0xff]
        %v4701 = vld [vmem:[%s4668 + $0x100] sm:$0xff]
        %v4702 = vld [vmem:[%s4668 + $0x108] sm:$0xff]
        %v4703 = vld [vmem:[%s4668 + $0x110] sm:$0xff]
        %v4704 = vld [vmem:[%s4668 + $0x118] sm:$0xff]
        %v4705 = vld [vmem:[%s4668 + $0x120] sm:$0xff]
        %v4706 = vld [vmem:[%s4668 + $0x128] sm:$0xff]
        %v4707 = vld [vmem:[%s4668 + $0x130] sm:$0xff]
        %v4708 = vld [vmem:[%s4668 + $0x138] sm:$0xff]
        %v4709 = vld [vmem:[%s4668 + $0x140] sm:$0xff]
        %v4710 = vld [vmem:[%s4668 + $0x148] sm:$0xff]
        %v4711 = vld [vmem:[%s4668 + $0x150] sm:$0xff]
        %v4712 = vld [vmem:[%s4668 + $0x158] sm:$0xff]
        %v4713 = vld [vmem:[%s4668 + $0x160] sm:$0xff]
        %v4714 = vld [vmem:[%s4668 + $0x168] sm:$0xff]
        %v4715 = vld [vmem:[%s4668 + $0x170] sm:$0xff]
        %v4716 = vld [vmem:[%s4668 + $0x178] sm:$0xff]
        %v4717 = vld [vmem:[%s4668 + $0x180] sm:$0xff]
        %v4718 = vld [vmem:[%s4668 + $0x188] sm:$0xff]
        %v4719 = vld [vmem:[%s4668 + $0x190] sm:$0xff]
        %v4720 = vld [vmem:[%s4668 + $0x198] sm:$0xff]
        %v4721 = vld [vmem:[%s4668 + $0x1a0] sm:$0xff]
        %v4722 = vld [vmem:[%s4668 + $0x1a8] sm:$0xff]
        %v4723 = vld [vmem:[%s4668 + $0x1b0] sm:$0xff]
        %v4724 = vld [vmem:[%s4668 + $0x1b8] sm:$0xff]
        %v4725 = vld [vmem:[%s4668 + $0x1c0] sm:$0xff]
        %v4726 = vld [vmem:[%s4668 + $0x1c8] sm:$0xff]
        %v4727 = vld [vmem:[%s4668 + $0x1d0] sm:$0xff]
        %v4728 = vld [vmem:[%s4668 + $0x1d8] sm:$0xff]
        %v4729 = vld [vmem:[%s4668 + $0x1e0] sm:$0xff]
        %v4730 = vld [vmem:[%s4668 + $0x1e8] sm:$0xff]
        %v4731 = vld [vmem:[%s4668 + $0x1f0] sm:$0xff]
        %v4732 = vld [vmem:[%s4668 + $0x1f8] sm:$0xff]
        %v4797 = vunpack.c.l.b16 %v4669
        %v4798 = vunpack.c.h.b16 %v4669
        %v4799 = vunpack.c.l.b16 %v4670
        %v4800 = vunpack.c.h.b16 %v4670
        %v4801 = vunpack.c.l.b16 %v4671
        %v4802 = vunpack.c.h.b16 %v4671
        %v4803 = vunpack.c.l.b16 %v4672
        %v4804 = vunpack.c.h.b16 %v4672
        %v4805 = vunpack.c.l.b16 %v4673
        %v4806 = vunpack.c.h.b16 %v4673
        %v4807 = vunpack.c.l.b16 %v4674
        %v4808 = vunpack.c.h.b16 %v4674
        %v4809 = vunpack.c.l.b16 %v4675
        %v4810 = vunpack.c.h.b16 %v4675
        %v4811 = vunpack.c.l.b16 %v4676
        %v4812 = vunpack.c.h.b16 %v4676
        %v4813 = vunpack.c.l.b16 %v4677
        %v4814 = vunpack.c.h.b16 %v4677
        %v4815 = vunpack.c.l.b16 %v4678
        %v4816 = vunpack.c.h.b16 %v4678
        %v4817 = vunpack.c.l.b16 %v4679
        %v4818 = vunpack.c.h.b16 %v4679
        %v4819 = vunpack.c.l.b16 %v4680
        %v4820 = vunpack.c.h.b16 %v4680
        %v4821 = vunpack.c.l.b16 %v4681
        %v4822 = vunpack.c.h.b16 %v4681
        %v4823 = vunpack.c.l.b16 %v4682
        %v4824 = vunpack.c.h.b16 %v4682
        %v4825 = vunpack.c.l.b16 %v4683
        %v4826 = vunpack.c.h.b16 %v4683
        %v4827 = vunpack.c.l.b16 %v4684
        %v4828 = vunpack.c.h.b16 %v4684
        %v4829 = vunpack.c.l.b16 %v4685
        %v4830 = vunpack.c.h.b16 %v4685
        %v4831 = vunpack.c.l.b16 %v4686
        %v4832 = vunpack.c.h.b16 %v4686
        %v4833 = vunpack.c.l.b16 %v4687
        %v4834 = vunpack.c.h.b16 %v4687
        %v4835 = vunpack.c.l.b16 %v4688
        %v4836 = vunpack.c.h.b16 %v4688
        %v4837 = vunpack.c.l.b16 %v4689
        %v4838 = vunpack.c.h.b16 %v4689
        %v4839 = vunpack.c.l.b16 %v4690
        %v4840 = vunpack.c.h.b16 %v4690
        %v4841 = vunpack.c.l.b16 %v4691
        %v4842 = vunpack.c.h.b16 %v4691
        %v4843 = vunpack.c.l.b16 %v4692
        %v4844 = vunpack.c.h.b16 %v4692
        %v4845 = vunpack.c.l.b16 %v4693
        %v4846 = vunpack.c.h.b16 %v4693
        %v4847 = vunpack.c.l.b16 %v4694
        %v4848 = vunpack.c.h.b16 %v4694
        %v4849 = vunpack.c.l.b16 %v4695
        %v4850 = vunpack.c.h.b16 %v4695
        %v4851 = vunpack.c.l.b16 %v4696
        %v4852 = vunpack.c.h.b16 %v4696
        %v4853 = vunpack.c.l.b16 %v4697
        %v4854 = vunpack.c.h.b16 %v4697
        %v4855 = vunpack.c.l.b16 %v4698
        %v4856 = vunpack.c.h.b16 %v4698
        %v4857 = vunpack.c.l.b16 %v4699
        %v4858 = vunpack.c.h.b16 %v4699
        %v4859 = vunpack.c.l.b16 %v4700
        %v4860 = vunpack.c.h.b16 %v4700
        %v4861 = vunpack.c.l.b16 %v4701
        %v4862 = vunpack.c.h.b16 %v4701
        %v4863 = vunpack.c.l.b16 %v4702
        %v4864 = vunpack.c.h.b16 %v4702
        %v4865 = vunpack.c.l.b16 %v4703
        %v4866 = vunpack.c.h.b16 %v4703
        %v4867 = vunpack.c.l.b16 %v4704
        %v4868 = vunpack.c.h.b16 %v4704
        %v4869 = vunpack.c.l.b16 %v4705
        %v4870 = vunpack.c.h.b16 %v4705
        %v4871 = vunpack.c.l.b16 %v4706
        %v4872 = vunpack.c.h.b16 %v4706
        %v4873 = vunpack.c.l.b16 %v4707
        %v4874 = vunpack.c.h.b16 %v4707
        %v4875 = vunpack.c.l.b16 %v4708
        %v4876 = vunpack.c.h.b16 %v4708
        %v4877 = vunpack.c.l.b16 %v4709
        %v4878 = vunpack.c.h.b16 %v4709
        %v4879 = vunpack.c.l.b16 %v4710
        %v4880 = vunpack.c.h.b16 %v4710
        %v4881 = vunpack.c.l.b16 %v4711
        %v4882 = vunpack.c.h.b16 %v4711
        %v4883 = vunpack.c.l.b16 %v4712
        %v4884 = vunpack.c.h.b16 %v4712
        %v4885 = vunpack.c.l.b16 %v4713
        %v4886 = vunpack.c.h.b16 %v4713
        %v4887 = vunpack.c.l.b16 %v4714
        %v4888 = vunpack.c.h.b16 %v4714
        %v4889 = vunpack.c.l.b16 %v4715
        %v4890 = vunpack.c.h.b16 %v4715
        %v4891 = vunpack.c.l.b16 %v4716
        %v4892 = vunpack.c.h.b16 %v4716
        %v4893 = vunpack.c.l.b16 %v4717
        %v4894 = vunpack.c.h.b16 %v4717
        %v4895 = vunpack.c.l.b16 %v4718
        %v4896 = vunpack.c.h.b16 %v4718
        %v4897 = vunpack.c.l.b16 %v4719
        %v4898 = vunpack.c.h.b16 %v4719
        %v4899 = vunpack.c.l.b16 %v4720
        %v4900 = vunpack.c.h.b16 %v4720
        %v4901 = vunpack.c.l.b16 %v4721
        %v4902 = vunpack.c.h.b16 %v4721
        %v4903 = vunpack.c.l.b16 %v4722
        %v4904 = vunpack.c.h.b16 %v4722
        %v4905 = vunpack.c.l.b16 %v4723
        %v4906 = vunpack.c.h.b16 %v4723
        %v4907 = vunpack.c.l.b16 %v4724
        %v4908 = vunpack.c.h.b16 %v4724
        %v4909 = vunpack.c.l.b16 %v4725
        %v4910 = vunpack.c.h.b16 %v4725
        %v4911 = vunpack.c.l.b16 %v4726
        %v4912 = vunpack.c.h.b16 %v4726
        %v4913 = vunpack.c.l.b16 %v4727
        %v4914 = vunpack.c.h.b16 %v4727
        %v4915 = vunpack.c.l.b16 %v4728
        %v4916 = vunpack.c.h.b16 %v4728
        %v4917 = vunpack.c.l.b16 %v4729
        %v4918 = vunpack.c.h.b16 %v4729
        %v4919 = vunpack.c.l.b16 %v4730
        %v4920 = vunpack.c.h.b16 %v4730
        %v4921 = vunpack.c.l.b16 %v4731
        %v4922 = vunpack.c.h.b16 %v4731
        %v4923 = vunpack.c.l.b16 %v4732
        %v4924 = vunpack.c.h.b16 %v4732
        %v4925 = vpack.c.b16 %v4801, %v4797
        %v4926 = vpack.c.b16 %v4802, %v4798
        %v4927 = vpack.c.b16 %v4803, %v4799
        %v4928 = vpack.c.b16 %v4804, %v4800
        %v4929 = vpack.c.b16 %v4809, %v4805
        %v4930 = vpack.c.b16 %v4810, %v4806
        %v4931 = vpack.c.b16 %v4811, %v4807
        %v4932 = vpack.c.b16 %v4812, %v4808
        %v4933 = vpack.c.b16 %v4817, %v4813
        %v4934 = vpack.c.b16 %v4818, %v4814
        %v4935 = vpack.c.b16 %v4819, %v4815
        %v4936 = vpack.c.b16 %v4820, %v4816
        %v4937 = vpack.c.b16 %v4825, %v4821
        %v4938 = vpack.c.b16 %v4826, %v4822
        %v4939 = vpack.c.b16 %v4827, %v4823
        %v4940 = vpack.c.b16 %v4828, %v4824
        %v4941 = vpack.c.b16 %v4833, %v4829
        %v4942 = vpack.c.b16 %v4834, %v4830
        %v4943 = vpack.c.b16 %v4835, %v4831
        %v4944 = vpack.c.b16 %v4836, %v4832
        %v4945 = vpack.c.b16 %v4841, %v4837
        %v4946 = vpack.c.b16 %v4842, %v4838
        %v4947 = vpack.c.b16 %v4843, %v4839
        %v4948 = vpack.c.b16 %v4844, %v4840
        %v4949 = vpack.c.b16 %v4849, %v4845
        %v4950 = vpack.c.b16 %v4850, %v4846
        %v4951 = vpack.c.b16 %v4851, %v4847
        %v4952 = vpack.c.b16 %v4852, %v4848
        %v4953 = vpack.c.b16 %v4857, %v4853
        %v4954 = vpack.c.b16 %v4858, %v4854
        %v4955 = vpack.c.b16 %v4859, %v4855
        %v4956 = vpack.c.b16 %v4860, %v4856
        %v4957 = vpack.c.b16 %v4865, %v4861
        %v4958 = vpack.c.b16 %v4866, %v4862
        %v4959 = vpack.c.b16 %v4867, %v4863
        %v4960 = vpack.c.b16 %v4868, %v4864
        %v4961 = vpack.c.b16 %v4873, %v4869
        %v4962 = vpack.c.b16 %v4874, %v4870
        %v4963 = vpack.c.b16 %v4875, %v4871
        %v4964 = vpack.c.b16 %v4876, %v4872
        %v4965 = vpack.c.b16 %v4881, %v4877
        %v4966 = vpack.c.b16 %v4882, %v4878
        %v4967 = vpack.c.b16 %v4883, %v4879
        %v4968 = vpack.c.b16 %v4884, %v4880
        %v4969 = vpack.c.b16 %v4889, %v4885
        %v4970 = vpack.c.b16 %v4890, %v4886
        %v4971 = vpack.c.b16 %v4891, %v4887
        %v4972 = vpack.c.b16 %v4892, %v4888
        %v4973 = vpack.c.b16 %v4897, %v4893
        %v4974 = vpack.c.b16 %v4898, %v4894
        %v4975 = vpack.c.b16 %v4899, %v4895
        %v4976 = vpack.c.b16 %v4900, %v4896
        %v4977 = vpack.c.b16 %v4905, %v4901
        %v4978 = vpack.c.b16 %v4906, %v4902
        %v4979 = vpack.c.b16 %v4907, %v4903
        %v4980 = vpack.c.b16 %v4908, %v4904
        %v4981 = vpack.c.b16 %v4913, %v4909
        %v4982 = vpack.c.b16 %v4914, %v4910
        %v4983 = vpack.c.b16 %v4915, %v4911
        %v4984 = vpack.c.b16 %v4916, %v4912
        %v4985 = vpack.c.b16 %v4921, %v4917
        %v4986 = vpack.c.b16 %v4922, %v4918
        %v4987 = vpack.c.b16 %v4923, %v4919
        %v4988 = vpack.c.b16 %v4924, %v4920
        %5053 = vmatprep.subr.bf16.mxu0 %v4926
        %5054 = vmatpush1.bf16.msra.mxu0 %v4925
        %5055 = vmatprep.subr.bf16.mxu0 %v4930
        %5056 = vmatpush1.bf16.msra.mxu0 %v4929
        %5057 = vmatprep.subr.bf16.mxu0 %v4934
        %5058 = vmatpush1.bf16.msra.mxu0 %v4933
        %5059 = vmatprep.subr.bf16.mxu0 %v4938
        %5060 = vmatpush1.bf16.msra.mxu0 %v4937
        %5061 = vmatprep.subr.bf16.mxu0 %v4942
        %5062 = vmatpush1.bf16.msra.mxu0 %v4941
        %5063 = vmatprep.subr.bf16.mxu0 %v4946
        %5064 = vmatpush1.bf16.msra.mxu0 %v4945
        %5065 = vmatprep.subr.bf16.mxu0 %v4950
        %5066 = vmatpush1.bf16.msra.mxu0 %v4949
        %5067 = vmatprep.subr.bf16.mxu0 %v4954
        %5068 = vmatpush1.bf16.msra.mxu0 %v4953
        %5069 = vmatprep.subr.bf16.mxu0 %v4958
        %5070 = vmatpush1.bf16.msra.mxu0 %v4957
        %5071 = vmatprep.subr.bf16.mxu0 %v4962
        %5072 = vmatpush1.bf16.msra.mxu0 %v4961
        %5073 = vmatprep.subr.bf16.mxu0 %v4966
        %5074 = vmatpush1.bf16.msra.mxu0 %v4965
        %5075 = vmatprep.subr.bf16.mxu0 %v4970
        %5076 = vmatpush1.bf16.msra.mxu0 %v4969
        %5077 = vmatprep.subr.bf16.mxu0 %v4974
        %5078 = vmatpush1.bf16.msra.mxu0 %v4973
        %5079 = vmatprep.subr.bf16.mxu0 %v4978
        %5080 = vmatpush1.bf16.msra.mxu0 %v4977
        %5081 = vmatprep.subr.bf16.mxu0 %v4982
        %5082 = vmatpush1.bf16.msra.mxu0 %v4981
        %5083 = vmatprep.subr.bf16.mxu0 %v4986
        %5084 = vmatpush1.bf16.msra.mxu0 %v4985
        %5085 = vmatprep.mubr.bf16.mxu0 %v4579
        %5086 = vmatmul.mubr.bf16.gmra.mrb[0].mxu0 %v4578
        %v5087 = vpop.f32.mrb[0].mxu0
        %v5088 = vadd.f32 0.0, %v5087
        %v5089 = vpop.f32.mrb[0].mxu0
        %v5090 = vadd.f32 0.0, %v5089
        %v5091 = vpop.f32.mrb[0].mxu0
        %v5092 = vpop.f32.mrb[0].mxu0
        %5093 = vdwg.mxu0
        %5094 = vmatprep.subr.bf16.mxu0 %v4928
        %5095 = vmatpush1.bf16.msra.mxu0 %v4927
        %5096 = vmatprep.subr.bf16.mxu0 %v4932
        %5097 = vmatpush1.bf16.msra.mxu0 %v4931
        %5098 = vmatprep.subr.bf16.mxu0 %v4936
        %5099 = vmatpush1.bf16.msra.mxu0 %v4935
        %5100 = vmatprep.subr.bf16.mxu0 %v4940
        %5101 = vmatpush1.bf16.msra.mxu0 %v4939
        %5102 = vmatprep.subr.bf16.mxu0 %v4944
        %5103 = vmatpush1.bf16.msra.mxu0 %v4943
        %5104 = vmatprep.subr.bf16.mxu0 %v4948
        %5105 = vmatpush1.bf16.msra.mxu0 %v4947
        %5106 = vmatprep.subr.bf16.mxu0 %v4952
        %5107 = vmatpush1.bf16.msra.mxu0 %v4951
        %5108 = vmatprep.subr.bf16.mxu0 %v4956
        %5109 = vmatpush1.bf16.msra.mxu0 %v4955
        %5110 = vmatprep.subr.bf16.mxu0 %v4960
        %5111 = vmatpush1.bf16.msra.mxu0 %v4959
        %5112 = vmatprep.subr.bf16.mxu0 %v4964
        %5113 = vmatpush1.bf16.msra.mxu0 %v4963
        %5114 = vmatprep.subr.bf16.mxu0 %v4968
        %5115 = vmatpush1.bf16.msra.mxu0 %v4967
        %5116 = vmatprep.subr.bf16.mxu0 %v4972
        %5117 = vmatpush1.bf16.msra.mxu0 %v4971
        %5118 = vmatprep.subr.bf16.mxu0 %v4976
        %5119 = vmatpush1.bf16.msra.mxu0 %v4975
        %5120 = vmatprep.subr.bf16.mxu0 %v4980
        %5121 = vmatpush1.bf16.msra.mxu0 %v4979
        %5122 = vmatprep.subr.bf16.mxu0 %v4984
        %5123 = vmatpush1.bf16.msra.mxu0 %v4983
        %5124 = vmatprep.subr.bf16.mxu0 %v4988
        %5125 = vmatpush1.bf16.msra.mxu0 %v4987
        %5126 = vmatprep.mubr.bf16.mxu0 %v4579
        %5127 = vmatmul.mubr.bf16.gmra.mrb[0].mxu0 %v4578
        %v5128 = vpop.f32.mrb[0].mxu0
        %v5129 = vadd.f32 0.0, %v5128
        %v5130 = vpop.f32.mrb[0].mxu0
        %v5131 = vadd.f32 0.0, %v5130
        %v5132 = vpop.f32.mrb[0].mxu0
        %v5133 = vpop.f32.mrb[0].mxu0
        %5134 = vdwg.mxu0
        %v5135 = vadd.f32 %v4566, %v5088
        %v5136 = vadd.f32 %v4567, %v5090
        %v5137 = vadd.f32 %v4568, %v5129
        %v5138 = vadd.f32 %v4569, %v5131
        %v5139 = vld [vmem:[%s2383] sm:$0xfc]
        %v5140 = vld [vmem:[%s2383 + $0x8] sm:$0xfc]
        %v5141 = vld [vmem:[%s2383 + $0x10] sm:$0x1]
        %v5142 = vld [vmem:[%s2383 + $0x18] sm:$0x1]
        %v5143 = vpack.c.bf16 %v5141, %v5139
        %v5144 = vpack.c.bf16 %v5142, %v5140
        %v5147 = vrot.slane %v5143, 1
        %v5148 = vrot.slane %v5144, 1
        %5151 = vmatprep.subr.bf16.mxu0 %v4926
        %5152 = vmatpush1.bf16.msra.mxu0 %v4925
        %5153 = vmatprep.subr.bf16.mxu0 %v4930
        %5154 = vmatpush1.bf16.msra.mxu0 %v4929
        %5155 = vmatprep.subr.bf16.mxu0 %v4934
        %5156 = vmatpush1.bf16.msra.mxu0 %v4933
        %5157 = vmatprep.subr.bf16.mxu0 %v4938
        %5158 = vmatpush1.bf16.msra.mxu0 %v4937
        %5159 = vmatprep.subr.bf16.mxu0 %v4942
        %5160 = vmatpush1.bf16.msra.mxu0 %v4941
        %5161 = vmatprep.subr.bf16.mxu0 %v4946
        %5162 = vmatpush1.bf16.msra.mxu0 %v4945
        %5163 = vmatprep.subr.bf16.mxu0 %v4950
        %5164 = vmatpush1.bf16.msra.mxu0 %v4949
        %5165 = vmatprep.subr.bf16.mxu0 %v4954
        %5166 = vmatpush1.bf16.msra.mxu0 %v4953
        %5167 = vmatprep.subr.bf16.mxu0 %v4958
        %5168 = vmatpush1.bf16.msra.mxu0 %v4957
        %5169 = vmatprep.subr.bf16.mxu0 %v4962
        %5170 = vmatpush1.bf16.msra.mxu0 %v4961
        %5171 = vmatprep.subr.bf16.mxu0 %v4966
        %5172 = vmatpush1.bf16.msra.mxu0 %v4965
        %5173 = vmatprep.subr.bf16.mxu0 %v4970
        %5174 = vmatpush1.bf16.msra.mxu0 %v4969
        %5175 = vmatprep.subr.bf16.mxu0 %v4974
        %5176 = vmatpush1.bf16.msra.mxu0 %v4973
        %5177 = vmatprep.subr.bf16.mxu0 %v4978
        %5178 = vmatpush1.bf16.msra.mxu0 %v4977
        %5179 = vmatprep.subr.bf16.mxu0 %v4982
        %5180 = vmatpush1.bf16.msra.mxu0 %v4981
        %5181 = vmatprep.subr.bf16.mxu0 %v4986
        %5182 = vmatpush1.bf16.msra.mxu0 %v4985
        %5183 = vmatprep.mubr.bf16.mxu0 %v5148
        %5184 = vmatmul.mubr.bf16.gmra.mrb[0].mxu0 %v5147
        %v5185 = vpop.f32.mrb[0].mxu0
        %v5186 = vadd.f32 0.0, %v5185
        %v5187 = vpop.f32.mrb[0].mxu0
        %v5188 = vadd.f32 0.0, %v5187
        %v5189 = vpop.f32.mrb[0].mxu0
        %v5190 = vpop.f32.mrb[0].mxu0
        %5191 = vdwg.mxu0
        %5192 = vmatprep.subr.bf16.mxu0 %v4928
        %5193 = vmatpush1.bf16.msra.mxu0 %v4927
        %5194 = vmatprep.subr.bf16.mxu0 %v4932
        %5195 = vmatpush1.bf16.msra.mxu0 %v4931
        %5196 = vmatprep.subr.bf16.mxu0 %v4936
        %5197 = vmatpush1.bf16.msra.mxu0 %v4935
        %5198 = vmatprep.subr.bf16.mxu0 %v4940
        %5199 = vmatpush1.bf16.msra.mxu0 %v4939
        %5200 = vmatprep.subr.bf16.mxu0 %v4944
        %5201 = vmatpush1.bf16.msra.mxu0 %v4943
        %5202 = vmatprep.subr.bf16.mxu0 %v4948
        %5203 = vmatpush1.bf16.msra.mxu0 %v4947
        %5204 = vmatprep.subr.bf16.mxu0 %v4952
        %5205 = vmatpush1.bf16.msra.mxu0 %v4951
        %5206 = vmatprep.subr.bf16.mxu0 %v4956
        %5207 = vmatpush1.bf16.msra.mxu0 %v4955
        %5208 = vmatprep.subr.bf16.mxu0 %v4960
        %5209 = vmatpush1.bf16.msra.mxu0 %v4959
        %5210 = vmatprep.subr.bf16.mxu0 %v4964
        %5211 = vmatpush1.bf16.msra.mxu0 %v4963
        %5212 = vmatprep.subr.bf16.mxu0 %v4968
        %5213 = vmatpush1.bf16.msra.mxu0 %v4967
        %5214 = vmatprep.subr.bf16.mxu0 %v4972
        %5215 = vmatpush1.bf16.msra.mxu0 %v4971
        %5216 = vmatprep.subr.bf16.mxu0 %v4976
        %5217 = vmatpush1.bf16.msra.mxu0 %v4975
        %5218 = vmatprep.subr.bf16.mxu0 %v4980
        %5219 = vmatpush1.bf16.msra.mxu0 %v4979
        %5220 = vmatprep.subr.bf16.mxu0 %v4984
        %5221 = vmatpush1.bf16.msra.mxu0 %v4983
        %5222 = vmatprep.subr.bf16.mxu0 %v4988
        %5223 = vmatpush1.bf16.msra.mxu0 %v4987
        %5224 = vmatprep.mubr.bf16.mxu0 %v5148
        %5225 = vmatmul.mubr.bf16.gmra.mrb[0].mxu0 %v5147
        %v5226 = vpop.f32.mrb[0].mxu0
        %v5227 = vadd.f32 0.0, %v5226
        %v5228 = vpop.f32.mrb[0].mxu0
        %v5229 = vadd.f32 0.0, %v5228
        %v5230 = vpop.f32.mrb[0].mxu0
        %v5231 = vpop.f32.mrb[0].mxu0
        %5232 = vdwg.mxu0
        %v5233 = vadd.f32 %v4664, %v5186
        %v5234 = vadd.f32 %v4665, %v5188
        %v5235 = vadd.f32 %v4666, %v5227
        %v5236 = vadd.f32 %v4667, %v5229
        %v5237 = vmax.f32 %v5135, %v5233
        %v5238 = vmax.f32 %v5136, %v5234
        %v5239 = vmax.f32 %v5137, %v5235
        %v5240 = vmax.f32 %v5138, %v5236
        %v5241 = vmax.f32 %v5237, %v5239
        %v5242 = vmax.f32 %v5238, %v5240
        %v5243 = vld [vmem:[%s4] sm:$0x3]
        %v5245 = vlaneseq
        %v5246 = vshrl.u32 %v5245, 7
        %v5247 = vsub.s32 0, %v5246
        %v5248 = vrot.slane %v5243, %v5247
        %v5249 = vlaneseq
        %v5250 = vshrl.u32 %v5249, 7
        %v5251 = vsub.s32 1, %v5250
        %v5252 = vrot.slane %v5243, %v5251
        %v5255 = vadd.f32 %v5241, %v5248
        %v5256 = vadd.f32 %v5242, %v5252
        %v5257 = vmax.f32 %v5255, 0.0
        %v5258 = vmax.f32 %v5256, 0.0
        %v5259 = vpack.c.bf16 %v5257, %v5257
        %v5260 = vpack.c.bf16 %v5258, %v5258
        %v5261 = vld [vmem:[%s6] sm:$0x1]
        %v5262 = vld [vmem:[%s5] sm:$0xf]
        %v5263 = vld [vmem:[%s5 + $0x4] sm:$0xf]
        %v5264 = vld [vmem:[%s5 + $0x8] sm:$0xf]
        %v5265 = vld [vmem:[%s5 + $0xc] sm:$0xf]
        %v5266 = vld [vmem:[%s5 + $0x10] sm:$0xf]
        %v5267 = vld [vmem:[%s5 + $0x14] sm:$0xf]
        %v5268 = vld [vmem:[%s5 + $0x18] sm:$0xf]
        %v5269 = vld [vmem:[%s5 + $0x1c] sm:$0xf]
        %v5270 = vld [vmem:[%s5 + $0x20] sm:$0xf]
        %v5271 = vld [vmem:[%s5 + $0x24] sm:$0xf]
        %v5272 = vld [vmem:[%s5 + $0x28] sm:$0xf]
        %v5273 = vld [vmem:[%s5 + $0x2c] sm:$0xf]
        %v5274 = vld [vmem:[%s5 + $0x30] sm:$0xf]
        %v5275 = vld [vmem:[%s5 + $0x34] sm:$0xf]
        %v5276 = vld [vmem:[%s5 + $0x38] sm:$0xf]
        %v5277 = vld [vmem:[%s5 + $0x3c] sm:$0xf]
        %v5278 = vld [vmem:[%s5 + $0x40] sm:$0xf]
        %v5279 = vld [vmem:[%s5 + $0x44] sm:$0xf]
        %v5280 = vld [vmem:[%s5 + $0x48] sm:$0xf]
        %v5281 = vld [vmem:[%s5 + $0x4c] sm:$0xf]
        %v5282 = vld [vmem:[%s5 + $0x50] sm:$0xf]
        %v5283 = vld [vmem:[%s5 + $0x54] sm:$0xf]
        %v5284 = vld [vmem:[%s5 + $0x58] sm:$0xf]
        %v5285 = vld [vmem:[%s5 + $0x5c] sm:$0xf]
        %v5286 = vld [vmem:[%s5 + $0x60] sm:$0xf]
        %v5287 = vld [vmem:[%s5 + $0x64] sm:$0xf]
        %v5288 = vld [vmem:[%s5 + $0x68] sm:$0xf]
        %v5289 = vld [vmem:[%s5 + $0x6c] sm:$0xf]
        %v5290 = vld [vmem:[%s5 + $0x70] sm:$0xf]
        %v5291 = vld [vmem:[%s5 + $0x74] sm:$0xf]
        %v5292 = vld [vmem:[%s5 + $0x78] sm:$0xf]
        %v5293 = vld [vmem:[%s5 + $0x7c] sm:$0xf]
        %v5326 = vunpack.c.l.b16 %v5262
        %v5327 = vunpack.c.l.b16 %v5263
        %v5328 = vunpack.c.l.b16 %v5264
        %v5329 = vunpack.c.l.b16 %v5265
        %v5330 = vunpack.c.l.b16 %v5266
        %v5331 = vunpack.c.l.b16 %v5267
        %v5332 = vunpack.c.l.b16 %v5268
        %v5333 = vunpack.c.l.b16 %v5269
        %v5334 = vunpack.c.l.b16 %v5270
        %v5335 = vunpack.c.l.b16 %v5271
        %v5336 = vunpack.c.l.b16 %v5272
        %v5337 = vunpack.c.l.b16 %v5273
        %v5338 = vunpack.c.l.b16 %v5274
        %v5339 = vunpack.c.l.b16 %v5275
        %v5340 = vunpack.c.l.b16 %v5276
        %v5341 = vunpack.c.l.b16 %v5277
        %v5342 = vunpack.c.l.b16 %v5278
        %v5343 = vunpack.c.l.b16 %v5279
        %v5344 = vunpack.c.l.b16 %v5280
        %v5345 = vunpack.c.l.b16 %v5281
        %v5346 = vunpack.c.l.b16 %v5282
        %v5347 = vunpack.c.l.b16 %v5283
        %v5348 = vunpack.c.l.b16 %v5284
        %v5349 = vunpack.c.l.b16 %v5285
        %v5350 = vunpack.c.l.b16 %v5286
        %v5351 = vunpack.c.l.b16 %v5287
        %v5352 = vunpack.c.l.b16 %v5288
        %v5353 = vunpack.c.l.b16 %v5289
        %v5354 = vunpack.c.l.b16 %v5290
        %v5355 = vunpack.c.l.b16 %v5291
        %v5356 = vunpack.c.l.b16 %v5292
        %v5357 = vunpack.c.l.b16 %v5293
        %v5358 = vpack.c.b16 %v5327, %v5326
        %v5359 = vpack.c.b16 %v5329, %v5328
        %v5360 = vpack.c.b16 %v5331, %v5330
        %v5361 = vpack.c.b16 %v5333, %v5332
        %v5362 = vpack.c.b16 %v5335, %v5334
        %v5363 = vpack.c.b16 %v5337, %v5336
        %v5364 = vpack.c.b16 %v5339, %v5338
        %v5365 = vpack.c.b16 %v5341, %v5340
        %v5366 = vpack.c.b16 %v5343, %v5342
        %v5367 = vpack.c.b16 %v5345, %v5344
        %v5368 = vpack.c.b16 %v5347, %v5346
        %v5369 = vpack.c.b16 %v5349, %v5348
        %v5370 = vpack.c.b16 %v5351, %v5350
        %v5371 = vpack.c.b16 %v5353, %v5352
        %v5372 = vpack.c.b16 %v5355, %v5354
        %v5373 = vpack.c.b16 %v5357, %v5356
        %5390 = vmatprep.subr.bf16.mxu0 0
        %5391 = vmatpush1.bf16.msra.mxu0 %v5358
        %5392 = vmatprep.subr.bf16.mxu0 0
        %5393 = vmatpush1.bf16.msra.mxu0 %v5359
        %5394 = vmatprep.subr.bf16.mxu0 0
        %5395 = vmatpush1.bf16.msra.mxu0 %v5360
        %5396 = vmatprep.subr.bf16.mxu0 0
        %5397 = vmatpush1.bf16.msra.mxu0 %v5361
        %5398 = vmatprep.subr.bf16.mxu0 0
        %5399 = vmatpush1.bf16.msra.mxu0 %v5362
        %5400 = vmatprep.subr.bf16.mxu0 0
        %5401 = vmatpush1.bf16.msra.mxu0 %v5363
        %5402 = vmatprep.subr.bf16.mxu0 0
        %5403 = vmatpush1.bf16.msra.mxu0 %v5364
        %5404 = vmatprep.subr.bf16.mxu0 0
        %5405 = vmatpush1.bf16.msra.mxu0 %v5365
        %5406 = vmatprep.subr.bf16.mxu0 0
        %5407 = vmatpush1.bf16.msra.mxu0 %v5366
        %5408 = vmatprep.subr.bf16.mxu0 0
        %5409 = vmatpush1.bf16.msra.mxu0 %v5367
        %5410 = vmatprep.subr.bf16.mxu0 0
        %5411 = vmatpush1.bf16.msra.mxu0 %v5368
        %5412 = vmatprep.subr.bf16.mxu0 0
        %5413 = vmatpush1.bf16.msra.mxu0 %v5369
        %5414 = vmatprep.subr.bf16.mxu0 0
        %5415 = vmatpush1.bf16.msra.mxu0 %v5370
        %5416 = vmatprep.subr.bf16.mxu0 0
        %5417 = vmatpush1.bf16.msra.mxu0 %v5371
        %5418 = vmatprep.subr.bf16.mxu0 0
        %5419 = vmatpush1.bf16.msra.mxu0 %v5372
        %5420 = vmatprep.subr.bf16.mxu0 0
        %5421 = vmatpush1.bf16.msra.mxu0 %v5373
        %5422 = vmatprep.mubr.bf16.mxu0 %v5260
        %5423 = vmatmul.mubr.bf16.gmra.mrb[0].mxu0 %v5259
        %v5424 = vpop.f32.mrb[0].mxu0
        %v5425 = vadd.f32 0.0, %v5424
        %v5426 = vpop.f32.mrb[0].mxu0
        %v5427 = vpop.f32.mrb[0].mxu0
        %v5428 = vpop.f32.mrb[0].mxu0
        %5429 = vdwg.mxu0
        %v5430 = vadd.f32 %v5261, %v5425
        %s5431 = scalar_lea.vmem %s5, 128
        %v5432 = vld [vmem:[%s5431] sm:$0xf]
        %v5433 = vld [vmem:[%s5431 + $0x4] sm:$0xf]
        %v5434 = vld [vmem:[%s5431 + $0x8] sm:$0xf]
        %v5435 = vld [vmem:[%s5431 + $0xc] sm:$0xf]
        %v5436 = vld [vmem:[%s5431 + $0x10] sm:$0xf]
        %v5437 = vld [vmem:[%s5431 + $0x14] sm:$0xf]
        %v5438 = vld [vmem:[%s5431 + $0x18] sm:$0xf]
        %v5439 = vld [vmem:[%s5431 + $0x1c] sm:$0xf]
        %v5440 = vld [vmem:[%s5431 + $0x20] sm:$0xf]
        %v5441 = vld [vmem:[%s5431 + $0x24] sm:$0xf]
        %v5442 = vld [vmem:[%s5431 + $0x28] sm:$0xf]
        %v5443 = vld [vmem:[%s5431 + $0x2c] sm:$0xf]
        %v5444 = vld [vmem:[%s5431 + $0x30] sm:$0xf]
        %v5445 = vld [vmem:[%s5431 + $0x34] sm:$0xf]
        %v5446 = vld [vmem:[%s5431 + $0x38] sm:$0xf]
        %v5447 = vld [vmem:[%s5431 + $0x3c] sm:$0xf]
        %v5448 = vld [vmem:[%s5431 + $0x40] sm:$0xf]
        %v5449 = vld [vmem:[%s5431 + $0x44] sm:$0xf]
        %v5450 = vld [vmem:[%s5431 + $0x48] sm:$0xf]
        %v5451 = vld [vmem:[%s5431 + $0x4c] sm:$0xf]
        %v5452 = vld [vmem:[%s5431 + $0x50] sm:$0xf]
        %v5453 = vld [vmem:[%s5431 + $0x54] sm:$0xf]
        %v5454 = vld [vmem:[%s5431 + $0x58] sm:$0xf]
        %v5455 = vld [vmem:[%s5431 + $0x5c] sm:$0xf]
        %v5456 = vld [vmem:[%s5431 + $0x60] sm:$0xf]
        %v5457 = vld [vmem:[%s5431 + $0x64] sm:$0xf]
        %v5458 = vld [vmem:[%s5431 + $0x68] sm:$0xf]
        %v5459 = vld [vmem:[%s5431 + $0x6c] sm:$0xf]
        %v5460 = vld [vmem:[%s5431 + $0x70] sm:$0xf]
        %v5461 = vld [vmem:[%s5431 + $0x74] sm:$0xf]
        %v5462 = vld [vmem:[%s5431 + $0x78] sm:$0xf]
        %v5463 = vld [vmem:[%s5431 + $0x7c] sm:$0xf]
        %v5465 = vshrl.u32 %v5259, 16
        %v5468 = vshrl.u32 %v5260, 16
        %v5504 = vunpack.c.l.b16 %v5432
        %v5505 = vunpack.c.l.b16 %v5433
        %v5506 = vunpack.c.l.b16 %v5434
        %v5507 = vunpack.c.l.b16 %v5435
        %v5508 = vunpack.c.l.b16 %v5436
        %v5509 = vunpack.c.l.b16 %v5437
        %v5510 = vunpack.c.l.b16 %v5438
        %v5511 = vunpack.c.l.b16 %v5439
        %v5512 = vunpack.c.l.b16 %v5440
        %v5513 = vunpack.c.l.b16 %v5441
        %v5514 = vunpack.c.l.b16 %v5442
        %v5515 = vunpack.c.l.b16 %v5443
        %v5516 = vunpack.c.l.b16 %v5444
        %v5517 = vunpack.c.l.b16 %v5445
        %v5518 = vunpack.c.l.b16 %v5446
        %v5519 = vunpack.c.l.b16 %v5447
        %v5520 = vunpack.c.l.b16 %v5448
        %v5521 = vunpack.c.l.b16 %v5449
        %v5522 = vunpack.c.l.b16 %v5450
        %v5523 = vunpack.c.l.b16 %v5451
        %v5524 = vunpack.c.l.b16 %v5452
        %v5525 = vunpack.c.l.b16 %v5453
        %v5526 = vunpack.c.l.b16 %v5454
        %v5527 = vunpack.c.l.b16 %v5455
        %v5528 = vunpack.c.l.b16 %v5456
        %v5529 = vunpack.c.l.b16 %v5457
        %v5530 = vunpack.c.l.b16 %v5458
        %v5531 = vunpack.c.l.b16 %v5459
        %v5532 = vunpack.c.l.b16 %v5460
        %v5533 = vunpack.c.l.b16 %v5461
        %v5534 = vunpack.c.l.b16 %v5462
        %v5535 = vunpack.c.l.b16 %v5463
        %v5536 = vpack.c.b16 %v5505, %v5504
        %v5537 = vpack.c.b16 %v5507, %v5506
        %v5538 = vpack.c.b16 %v5509, %v5508
        %v5539 = vpack.c.b16 %v5511, %v5510
        %v5540 = vpack.c.b16 %v5513, %v5512
        %v5541 = vpack.c.b16 %v5515, %v5514
        %v5542 = vpack.c.b16 %v5517, %v5516
        %v5543 = vpack.c.b16 %v5519, %v5518
        %v5544 = vpack.c.b16 %v5521, %v5520
        %v5545 = vpack.c.b16 %v5523, %v5522
        %v5546 = vpack.c.b16 %v5525, %v5524
        %v5547 = vpack.c.b16 %v5527, %v5526
        %v5548 = vpack.c.b16 %v5529, %v5528
        %v5549 = vpack.c.b16 %v5531, %v5530
        %v5550 = vpack.c.b16 %v5533, %v5532
        %v5551 = vpack.c.b16 %v5535, %v5534
        %5568 = vmatprep.subr.bf16.mxu0 0
        %5569 = vmatpush1.bf16.msra.mxu0 %v5536
        %5570 = vmatprep.subr.bf16.mxu0 0
        %5571 = vmatpush1.bf16.msra.mxu0 %v5537
        %5572 = vmatprep.subr.bf16.mxu0 0
        %5573 = vmatpush1.bf16.msra.mxu0 %v5538
        %5574 = vmatprep.subr.bf16.mxu0 0
        %5575 = vmatpush1.bf16.msra.mxu0 %v5539
        %5576 = vmatprep.subr.bf16.mxu0 0
        %5577 = vmatpush1.bf16.msra.mxu0 %v5540
        %5578 = vmatprep.subr.bf16.mxu0 0
        %5579 = vmatpush1.bf16.msra.mxu0 %v5541
        %5580 = vmatprep.subr.bf16.mxu0 0
        %5581 = vmatpush1.bf16.msra.mxu0 %v5542
        %5582 = vmatprep.subr.bf16.mxu0 0
        %5583 = vmatpush1.bf16.msra.mxu0 %v5543
        %5584 = vmatprep.subr.bf16.mxu0 0
        %5585 = vmatpush1.bf16.msra.mxu0 %v5544
        %5586 = vmatprep.subr.bf16.mxu0 0
        %5587 = vmatpush1.bf16.msra.mxu0 %v5545
        %5588 = vmatprep.subr.bf16.mxu0 0
        %5589 = vmatpush1.bf16.msra.mxu0 %v5546
        %5590 = vmatprep.subr.bf16.mxu0 0
        %5591 = vmatpush1.bf16.msra.mxu0 %v5547
        %5592 = vmatprep.subr.bf16.mxu0 0
        %5593 = vmatpush1.bf16.msra.mxu0 %v5548
        %5594 = vmatprep.subr.bf16.mxu0 0
        %5595 = vmatpush1.bf16.msra.mxu0 %v5549
        %5596 = vmatprep.subr.bf16.mxu0 0
        %5597 = vmatpush1.bf16.msra.mxu0 %v5550
        %5598 = vmatprep.subr.bf16.mxu0 0
        %5599 = vmatpush1.bf16.msra.mxu0 %v5551
        %5600 = vmatprep.mubr.bf16.mxu0 %v5468
        %5601 = vmatmul.mubr.bf16.gmra.mrb[0].mxu0 %v5465
        %v5602 = vpop.f32.mrb[0].mxu0
        %v5603 = vadd.f32 0.0, %v5602
        %v5604 = vpop.f32.mrb[0].mxu0
        %v5605 = vpop.f32.mrb[0].mxu0
        %v5606 = vpop.f32.mrb[0].mxu0
        %5607 = vdwg.mxu0
        %v5608 = vadd.f32 %v5430, %v5603
        %s5609 = scalar_lea.vmem %s5, 256
        %v5610 = vld [vmem:[%s5609] sm:$0xf]
        %v5611 = vld [vmem:[%s5609 + $0x4] sm:$0xf]
        %v5612 = vld [vmem:[%s5609 + $0x8] sm:$0xf]
        %v5613 = vld [vmem:[%s5609 + $0xc] sm:$0xf]
        %v5614 = vld [vmem:[%s5609 + $0x10] sm:$0xf]
        %v5615 = vld [vmem:[%s5609 + $0x14] sm:$0xf]
        %v5616 = vld [vmem:[%s5609 + $0x18] sm:$0xf]
        %v5617 = vld [vmem:[%s5609 + $0x1c] sm:$0xf]
        %v5618 = vld [vmem:[%s5609 + $0x20] sm:$0xf]
        %v5619 = vld [vmem:[%s5609 + $0x24] sm:$0xf]
        %v5620 = vld [vmem:[%s5609 + $0x28] sm:$0xf]
        %v5621 = vld [vmem:[%s5609 + $0x2c] sm:$0xf]
        %v5622 = vld [vmem:[%s5609 + $0x30] sm:$0xf]
        %v5623 = vld [vmem:[%s5609 + $0x34] sm:$0xf]
        %v5624 = vld [vmem:[%s5609 + $0x38] sm:$0xf]
        %v5625 = vld [vmem:[%s5609 + $0x3c] sm:$0xf]
        %v5626 = vld [vmem:[%s5609 + $0x40] sm:$0xf]
        %v5627 = vld [vmem:[%s5609 + $0x44] sm:$0xf]
        %v5628 = vld [vmem:[%s5609 + $0x48] sm:$0xf]
        %v5629 = vld [vmem:[%s5609 + $0x4c] sm:$0xf]
        %v5630 = vld [vmem:[%s5609 + $0x50] sm:$0xf]
        %v5631 = vld [vmem:[%s5609 + $0x54] sm:$0xf]
        %v5632 = vld [vmem:[%s5609 + $0x58] sm:$0xf]
        %v5633 = vld [vmem:[%s5609 + $0x5c] sm:$0xf]
        %v5634 = vld [vmem:[%s5609 + $0x60] sm:$0xf]
        %v5635 = vld [vmem:[%s5609 + $0x64] sm:$0xf]
        %v5636 = vld [vmem:[%s5609 + $0x68] sm:$0xf]
        %v5637 = vld [vmem:[%s5609 + $0x6c] sm:$0xf]
        %v5638 = vld [vmem:[%s5609 + $0x70] sm:$0xf]
        %v5639 = vld [vmem:[%s5609 + $0x74] sm:$0xf]
        %v5640 = vld [vmem:[%s5609 + $0x78] sm:$0xf]
        %v5641 = vld [vmem:[%s5609 + $0x7c] sm:$0xf]
        %v5644 = vrot.slane %v5259, 1
        %v5645 = vrot.slane %v5260, 1
        %v5680 = vunpack.c.l.b16 %v5610
        %v5681 = vunpack.c.l.b16 %v5611
        %v5682 = vunpack.c.l.b16 %v5612
        %v5683 = vunpack.c.l.b16 %v5613
        %v5684 = vunpack.c.l.b16 %v5614
        %v5685 = vunpack.c.l.b16 %v5615
        %v5686 = vunpack.c.l.b16 %v5616
        %v5687 = vunpack.c.l.b16 %v5617
        %v5688 = vunpack.c.l.b16 %v5618
        %v5689 = vunpack.c.l.b16 %v5619
        %v5690 = vunpack.c.l.b16 %v5620
        %v5691 = vunpack.c.l.b16 %v5621
        %v5692 = vunpack.c.l.b16 %v5622
        %v5693 = vunpack.c.l.b16 %v5623
        %v5694 = vunpack.c.l.b16 %v5624
        %v5695 = vunpack.c.l.b16 %v5625
        %v5696 = vunpack.c.l.b16 %v5626
        %v5697 = vunpack.c.l.b16 %v5627
        %v5698 = vunpack.c.l.b16 %v5628
        %v5699 = vunpack.c.l.b16 %v5629
        %v5700 = vunpack.c.l.b16 %v5630
        %v5701 = vunpack.c.l.b16 %v5631
        %v5702 = vunpack.c.l.b16 %v5632
        %v5703 = vunpack.c.l.b16 %v5633
        %v5704 = vunpack.c.l.b16 %v5634
        %v5705 = vunpack.c.l.b16 %v5635
        %v5706 = vunpack.c.l.b16 %v5636
        %v5707 = vunpack.c.l.b16 %v5637
        %v5708 = vunpack.c.l.b16 %v5638
        %v5709 = vunpack.c.l.b16 %v5639
        %v5710 = vunpack.c.l.b16 %v5640
        %v5711 = vunpack.c.l.b16 %v5641
        %v5712 = vpack.c.b16 %v5681, %v5680
        %v5713 = vpack.c.b16 %v5683, %v5682
        %v5714 = vpack.c.b16 %v5685, %v5684
        %v5715 = vpack.c.b16 %v5687, %v5686
        %v5716 = vpack.c.b16 %v5689, %v5688
        %v5717 = vpack.c.b16 %v5691, %v5690
        %v5718 = vpack.c.b16 %v5693, %v5692
        %v5719 = vpack.c.b16 %v5695, %v5694
        %v5720 = vpack.c.b16 %v5697, %v5696
        %v5721 = vpack.c.b16 %v5699, %v5698
        %v5722 = vpack.c.b16 %v5701, %v5700
        %v5723 = vpack.c.b16 %v5703, %v5702
        %v5724 = vpack.c.b16 %v5705, %v5704
        %v5725 = vpack.c.b16 %v5707, %v5706
        %v5726 = vpack.c.b16 %v5709, %v5708
        %v5727 = vpack.c.b16 %v5711, %v5710
        %5744 = vmatprep.subr.bf16.mxu0 0
        %5745 = vmatpush1.bf16.msra.mxu0 %v5712
        %5746 = vmatprep.subr.bf16.mxu0 0
        %5747 = vmatpush1.bf16.msra.mxu0 %v5713
        %5748 = vmatprep.subr.bf16.mxu0 0
        %5749 = vmatpush1.bf16.msra.mxu0 %v5714
        %5750 = vmatprep.subr.bf16.mxu0 0
        %5751 = vmatpush1.bf16.msra.mxu0 %v5715
        %5752 = vmatprep.subr.bf16.mxu0 0
        %5753 = vmatpush1.bf16.msra.mxu0 %v5716
        %5754 = vmatprep.subr.bf16.mxu0 0
        %5755 = vmatpush1.bf16.msra.mxu0 %v5717
        %5756 = vmatprep.subr.bf16.mxu0 0
        %5757 = vmatpush1.bf16.msra.mxu0 %v5718
        %5758 = vmatprep.subr.bf16.mxu0 0
        %5759 = vmatpush1.bf16.msra.mxu0 %v5719
        %5760 = vmatprep.subr.bf16.mxu0 0
        %5761 = vmatpush1.bf16.msra.mxu0 %v5720
        %5762 = vmatprep.subr.bf16.mxu0 0
        %5763 = vmatpush1.bf16.msra.mxu0 %v5721
        %5764 = vmatprep.subr.bf16.mxu0 0
        %5765 = vmatpush1.bf16.msra.mxu0 %v5722
        %5766 = vmatprep.subr.bf16.mxu0 0
        %5767 = vmatpush1.bf16.msra.mxu0 %v5723
        %5768 = vmatprep.subr.bf16.mxu0 0
        %5769 = vmatpush1.bf16.msra.mxu0 %v5724
        %5770 = vmatprep.subr.bf16.mxu0 0
        %5771 = vmatpush1.bf16.msra.mxu0 %v5725
        %5772 = vmatprep.subr.bf16.mxu0 0
        %5773 = vmatpush1.bf16.msra.mxu0 %v5726
        %5774 = vmatprep.subr.bf16.mxu0 0
        %5775 = vmatpush1.bf16.msra.mxu0 %v5727
        %5776 = vmatprep.mubr.bf16.mxu0 %v5645
        %5777 = vmatmul.mubr.bf16.gmra.mrb[0].mxu0 %v5644
        %v5778 = vpop.f32.mrb[0].mxu0
        %v5779 = vadd.f32 0.0, %v5778
        %v5780 = vpop.f32.mrb[0].mxu0
        %v5781 = vpop.f32.mrb[0].mxu0
        %v5782 = vpop.f32.mrb[0].mxu0
        %5783 = vdwg.mxu0
        %v5784 = vadd.f32 %v5608, %v5779
        %s5785 = scalar_lea.vmem %s5, 384
        %v5786 = vld [vmem:[%s5785] sm:$0xf]
        %v5787 = vld [vmem:[%s5785 + $0x4] sm:$0xf]
        %v5788 = vld [vmem:[%s5785 + $0x8] sm:$0xf]
        %v5789 = vld [vmem:[%s5785 + $0xc] sm:$0xf]
        %v5790 = vld [vmem:[%s5785 + $0x10] sm:$0xf]
        %v5791 = vld [vmem:[%s5785 + $0x14] sm:$0xf]
        %v5792 = vld [vmem:[%s5785 + $0x18] sm:$0xf]
        %v5793 = vld [vmem:[%s5785 + $0x1c] sm:$0xf]
        %v5794 = vld [vmem:[%s5785 + $0x20] sm:$0xf]
        %v5795 = vld [vmem:[%s5785 + $0x24] sm:$0xf]
        %v5796 = vld [vmem:[%s5785 + $0x28] sm:$0xf]
        %v5797 = vld [vmem:[%s5785 + $0x2c] sm:$0xf]
        %v5798 = vld [vmem:[%s5785 + $0x30] sm:$0xf]
        %v5799 = vld [vmem:[%s5785 + $0x34] sm:$0xf]
        %v5800 = vld [vmem:[%s5785 + $0x38] sm:$0xf]
        %v5801 = vld [vmem:[%s5785 + $0x3c] sm:$0xf]
        %v5802 = vld [vmem:[%s5785 + $0x40] sm:$0xf]
        %v5803 = vld [vmem:[%s5785 + $0x44] sm:$0xf]
        %v5804 = vld [vmem:[%s5785 + $0x48] sm:$0xf]
        %v5805 = vld [vmem:[%s5785 + $0x4c] sm:$0xf]
        %v5806 = vld [vmem:[%s5785 + $0x50] sm:$0xf]
        %v5807 = vld [vmem:[%s5785 + $0x54] sm:$0xf]
        %v5808 = vld [vmem:[%s5785 + $0x58] sm:$0xf]
        %v5809 = vld [vmem:[%s5785 + $0x5c] sm:$0xf]
        %v5810 = vld [vmem:[%s5785 + $0x60] sm:$0xf]
        %v5811 = vld [vmem:[%s5785 + $0x64] sm:$0xf]
        %v5812 = vld [vmem:[%s5785 + $0x68] sm:$0xf]
        %v5813 = vld [vmem:[%s5785 + $0x6c] sm:$0xf]
        %v5814 = vld [vmem:[%s5785 + $0x70] sm:$0xf]
        %v5815 = vld [vmem:[%s5785 + $0x74] sm:$0xf]
        %v5816 = vld [vmem:[%s5785 + $0x78] sm:$0xf]
        %v5817 = vld [vmem:[%s5785 + $0x7c] sm:$0xf]
        %v5818 = vrot.slane %v5465, 1
        %v5819 = vrot.slane %v5468, 1
        %v5854 = vunpack.c.l.b16 %v5786
        %v5855 = vunpack.c.l.b16 %v5787
        %v5856 = vunpack.c.l.b16 %v5788
        %v5857 = vunpack.c.l.b16 %v5789
        %v5858 = vunpack.c.l.b16 %v5790
        %v5859 = vunpack.c.l.b16 %v5791
        %v5860 = vunpack.c.l.b16 %v5792
        %v5861 = vunpack.c.l.b16 %v5793
        %v5862 = vunpack.c.l.b16 %v5794
        %v5863 = vunpack.c.l.b16 %v5795
        %v5864 = vunpack.c.l.b16 %v5796
        %v5865 = vunpack.c.l.b16 %v5797
        %v5866 = vunpack.c.l.b16 %v5798
        %v5867 = vunpack.c.l.b16 %v5799
        %v5868 = vunpack.c.l.b16 %v5800
        %v5869 = vunpack.c.l.b16 %v5801
        %v5870 = vunpack.c.l.b16 %v5802
        %v5871 = vunpack.c.l.b16 %v5803
        %v5872 = vunpack.c.l.b16 %v5804
        %v5873 = vunpack.c.l.b16 %v5805
        %v5874 = vunpack.c.l.b16 %v5806
        %v5875 = vunpack.c.l.b16 %v5807
        %v5876 = vunpack.c.l.b16 %v5808
        %v5877 = vunpack.c.l.b16 %v5809
        %v5878 = vunpack.c.l.b16 %v5810
        %v5879 = vunpack.c.l.b16 %v5811
        %v5880 = vunpack.c.l.b16 %v5812
        %v5881 = vunpack.c.l.b16 %v5813
        %v5882 = vunpack.c.l.b16 %v5814
        %v5883 = vunpack.c.l.b16 %v5815
        %v5884 = vunpack.c.l.b16 %v5816
        %v5885 = vunpack.c.l.b16 %v5817
        %v5886 = vpack.c.b16 %v5855, %v5854
        %v5887 = vpack.c.b16 %v5857, %v5856
        %v5888 = vpack.c.b16 %v5859, %v5858
        %v5889 = vpack.c.b16 %v5861, %v5860
        %v5890 = vpack.c.b16 %v5863, %v5862
        %v5891 = vpack.c.b16 %v5865, %v5864
        %v5892 = vpack.c.b16 %v5867, %v5866
        %v5893 = vpack.c.b16 %v5869, %v5868
        %v5894 = vpack.c.b16 %v5871, %v5870
        %v5895 = vpack.c.b16 %v5873, %v5872
        %v5896 = vpack.c.b16 %v5875, %v5874
        %v5897 = vpack.c.b16 %v5877, %v5876
        %v5898 = vpack.c.b16 %v5879, %v5878
        %v5899 = vpack.c.b16 %v5881, %v5880
        %v5900 = vpack.c.b16 %v5883, %v5882
        %v5901 = vpack.c.b16 %v5885, %v5884
        %5918 = vmatprep.subr.bf16.mxu0 0
        %5919 = vmatpush1.bf16.msra.mxu0 %v5886
        %5920 = vmatprep.subr.bf16.mxu0 0
        %5921 = vmatpush1.bf16.msra.mxu0 %v5887
        %5922 = vmatprep.subr.bf16.mxu0 0
        %5923 = vmatpush1.bf16.msra.mxu0 %v5888
        %5924 = vmatprep.subr.bf16.mxu0 0
        %5925 = vmatpush1.bf16.msra.mxu0 %v5889
        %5926 = vmatprep.subr.bf16.mxu0 0
        %5927 = vmatpush1.bf16.msra.mxu0 %v5890
        %5928 = vmatprep.subr.bf16.mxu0 0
        %5929 = vmatpush1.bf16.msra.mxu0 %v5891
        %5930 = vmatprep.subr.bf16.mxu0 0
        %5931 = vmatpush1.bf16.msra.mxu0 %v5892
        %5932 = vmatprep.subr.bf16.mxu0 0
        %5933 = vmatpush1.bf16.msra.mxu0 %v5893
        %5934 = vmatprep.subr.bf16.mxu0 0
        %5935 = vmatpush1.bf16.msra.mxu0 %v5894
        %5936 = vmatprep.subr.bf16.mxu0 0
        %5937 = vmatpush1.bf16.msra.mxu0 %v5895
        %5938 = vmatprep.subr.bf16.mxu0 0
        %5939 = vmatpush1.bf16.msra.mxu0 %v5896
        %5940 = vmatprep.subr.bf16.mxu0 0
        %5941 = vmatpush1.bf16.msra.mxu0 %v5897
        %5942 = vmatprep.subr.bf16.mxu0 0
        %5943 = vmatpush1.bf16.msra.mxu0 %v5898
        %5944 = vmatprep.subr.bf16.mxu0 0
        %5945 = vmatpush1.bf16.msra.mxu0 %v5899
        %5946 = vmatprep.subr.bf16.mxu0 0
        %5947 = vmatpush1.bf16.msra.mxu0 %v5900
        %5948 = vmatprep.subr.bf16.mxu0 0
        %5949 = vmatpush1.bf16.msra.mxu0 %v5901
        %5950 = vmatprep.mubr.bf16.mxu0 %v5819
        %5951 = vmatmul.mubr.bf16.gmra.mrb[0].mxu0 %v5818
        %v5952 = vpop.f32.mrb[0].mxu0
        %v5953 = vadd.f32 0.0, %v5952
        %v5954 = vpop.f32.mrb[0].mxu0
        %v5955 = vpop.f32.mrb[0].mxu0
        %v5956 = vpop.f32.mrb[0].mxu0
        %5957 = vdwg.mxu0
        %v5958 = vadd.f32 %v5784, %v5953
        %s5959 = scalar_lea.vmem %s5, 512
        %v5960 = vld [vmem:[%s5959] sm:$0xf]
        %v5961 = vld [vmem:[%s5959 + $0x4] sm:$0xf]
        %v5962 = vld [vmem:[%s5959 + $0x8] sm:$0xf]
        %v5963 = vld [vmem:[%s5959 + $0xc] sm:$0xf]
        %v5964 = vld [vmem:[%s5959 + $0x10] sm:$0xf]
        %v5965 = vld [vmem:[%s5959 + $0x14] sm:$0xf]
        %v5966 = vld [vmem:[%s5959 + $0x18] sm:$0xf]
        %v5967 = vld [vmem:[%s5959 + $0x1c] sm:$0xf]
        %v5968 = vld [vmem:[%s5959 + $0x20] sm:$0xf]
        %v5969 = vld [vmem:[%s5959 + $0x24] sm:$0xf]
        %v5970 = vld [vmem:[%s5959 + $0x28] sm:$0xf]
        %v5971 = vld [vmem:[%s5959 + $0x2c] sm:$0xf]
        %v5972 = vld [vmem:[%s5959 + $0x30] sm:$0xf]
        %v5973 = vld [vmem:[%s5959 + $0x34] sm:$0xf]
        %v5974 = vld [vmem:[%s5959 + $0x38] sm:$0xf]
        %v5975 = vld [vmem:[%s5959 + $0x3c] sm:$0xf]
        %v5976 = vld [vmem:[%s5959 + $0x40] sm:$0xf]
        %v5977 = vld [vmem:[%s5959 + $0x44] sm:$0xf]
        %v5978 = vld [vmem:[%s5959 + $0x48] sm:$0xf]
        %v5979 = vld [vmem:[%s5959 + $0x4c] sm:$0xf]
        %v5980 = vld [vmem:[%s5959 + $0x50] sm:$0xf]
        %v5981 = vld [vmem:[%s5959 + $0x54] sm:$0xf]
        %v5982 = vld [vmem:[%s5959 + $0x58] sm:$0xf]
        %v5983 = vld [vmem:[%s5959 + $0x5c] sm:$0xf]
        %v5984 = vld [vmem:[%s5959 + $0x60] sm:$0xf]
        %v5985 = vld [vmem:[%s5959 + $0x64] sm:$0xf]
        %v5986 = vld [vmem:[%s5959 + $0x68] sm:$0xf]
        %v5987 = vld [vmem:[%s5959 + $0x6c] sm:$0xf]
        %v5988 = vld [vmem:[%s5959 + $0x70] sm:$0xf]
        %v5989 = vld [vmem:[%s5959 + $0x74] sm:$0xf]
        %v5990 = vld [vmem:[%s5959 + $0x78] sm:$0xf]
        %v5991 = vld [vmem:[%s5959 + $0x7c] sm:$0xf]
        %v5992 = vrot.slane %v5259, 2
        %v5993 = vrot.slane %v5260, 2
        %v6028 = vunpack.c.l.b16 %v5960
        %v6029 = vunpack.c.l.b16 %v5961
        %v6030 = vunpack.c.l.b16 %v5962
        %v6031 = vunpack.c.l.b16 %v5963
        %v6032 = vunpack.c.l.b16 %v5964
        %v6033 = vunpack.c.l.b16 %v5965
        %v6034 = vunpack.c.l.b16 %v5966
        %v6035 = vunpack.c.l.b16 %v5967
        %v6036 = vunpack.c.l.b16 %v5968
        %v6037 = vunpack.c.l.b16 %v5969
        %v6038 = vunpack.c.l.b16 %v5970
        %v6039 = vunpack.c.l.b16 %v5971
        %v6040 = vunpack.c.l.b16 %v5972
        %v6041 = vunpack.c.l.b16 %v5973
        %v6042 = vunpack.c.l.b16 %v5974
        %v6043 = vunpack.c.l.b16 %v5975
        %v6044 = vunpack.c.l.b16 %v5976
        %v6045 = vunpack.c.l.b16 %v5977
        %v6046 = vunpack.c.l.b16 %v5978
        %v6047 = vunpack.c.l.b16 %v5979
        %v6048 = vunpack.c.l.b16 %v5980
        %v6049 = vunpack.c.l.b16 %v5981
        %v6050 = vunpack.c.l.b16 %v5982
        %v6051 = vunpack.c.l.b16 %v5983
        %v6052 = vunpack.c.l.b16 %v5984
        %v6053 = vunpack.c.l.b16 %v5985
        %v6054 = vunpack.c.l.b16 %v5986
        %v6055 = vunpack.c.l.b16 %v5987
        %v6056 = vunpack.c.l.b16 %v5988
        %v6057 = vunpack.c.l.b16 %v5989
        %v6058 = vunpack.c.l.b16 %v5990
        %v6059 = vunpack.c.l.b16 %v5991
        %v6060 = vpack.c.b16 %v6029, %v6028
        %v6061 = vpack.c.b16 %v6031, %v6030
        %v6062 = vpack.c.b16 %v6033, %v6032
        %v6063 = vpack.c.b16 %v6035, %v6034
        %v6064 = vpack.c.b16 %v6037, %v6036
        %v6065 = vpack.c.b16 %v6039, %v6038
        %v6066 = vpack.c.b16 %v6041, %v6040
        %v6067 = vpack.c.b16 %v6043, %v6042
        %v6068 = vpack.c.b16 %v6045, %v6044
        %v6069 = vpack.c.b16 %v6047, %v6046
        %v6070 = vpack.c.b16 %v6049, %v6048
        %v6071 = vpack.c.b16 %v6051, %v6050
        %v6072 = vpack.c.b16 %v6053, %v6052
        %v6073 = vpack.c.b16 %v6055, %v6054
        %v6074 = vpack.c.b16 %v6057, %v6056
        %v6075 = vpack.c.b16 %v6059, %v6058
        %6092 = vmatprep.subr.bf16.mxu0 0
        %6093 = vmatpush1.bf16.msra.mxu0 %v6060
        %6094 = vmatprep.subr.bf16.mxu0 0
        %6095 = vmatpush1.bf16.msra.mxu0 %v6061
        %6096 = vmatprep.subr.bf16.mxu0 0
        %6097 = vmatpush1.bf16.msra.mxu0 %v6062
        %6098 = vmatprep.subr.bf16.mxu0 0
        %6099 = vmatpush1.bf16.msra.mxu0 %v6063
        %6100 = vmatprep.subr.bf16.mxu0 0
        %6101 = vmatpush1.bf16.msra.mxu0 %v6064
        %6102 = vmatprep.subr.bf16.mxu0 0
        %6103 = vmatpush1.bf16.msra.mxu0 %v6065
        %6104 = vmatprep.subr.bf16.mxu0 0
        %6105 = vmatpush1.bf16.msra.mxu0 %v6066
        %6106 = vmatprep.subr.bf16.mxu0 0
        %6107 = vmatpush1.bf16.msra.mxu0 %v6067
        %6108 = vmatprep.subr.bf16.mxu0 0
        %6109 = vmatpush1.bf16.msra.mxu0 %v6068
        %6110 = vmatprep.subr.bf16.mxu0 0
        %6111 = vmatpush1.bf16.msra.mxu0 %v6069
        %6112 = vmatprep.subr.bf16.mxu0 0
        %6113 = vmatpush1.bf16.msra.mxu0 %v6070
        %6114 = vmatprep.subr.bf16.mxu0 0
        %6115 = vmatpush1.bf16.msra.mxu0 %v6071
        %6116 = vmatprep.subr.bf16.mxu0 0
        %6117 = vmatpush1.bf16.msra.mxu0 %v6072
        %6118 = vmatprep.subr.bf16.mxu0 0
        %6119 = vmatpush1.bf16.msra.mxu0 %v6073
        %6120 = vmatprep.subr.bf16.mxu0 0
        %6121 = vmatpush1.bf16.msra.mxu0 %v6074
        %6122 = vmatprep.subr.bf16.mxu0 0
        %6123 = vmatpush1.bf16.msra.mxu0 %v6075
        %6124 = vmatprep.mubr.bf16.mxu0 %v5993
        %6125 = vmatmul.mubr.bf16.gmra.mrb[0].mxu0 %v5992
        %v6126 = vpop.f32.mrb[0].mxu0
        %v6127 = vadd.f32 0.0, %v6126
        %v6128 = vpop.f32.mrb[0].mxu0
        %v6129 = vpop.f32.mrb[0].mxu0
        %v6130 = vpop.f32.mrb[0].mxu0
        %6131 = vdwg.mxu0
        %v6132 = vadd.f32 %v5958, %v6127
        %s6133 = scalar_lea.vmem %s5, 640
        %v6134 = vld [vmem:[%s6133] sm:$0xf]
        %v6135 = vld [vmem:[%s6133 + $0x4] sm:$0xf]
        %v6136 = vld [vmem:[%s6133 + $0x8] sm:$0xf]
        %v6137 = vld [vmem:[%s6133 + $0xc] sm:$0xf]
        %v6138 = vld [vmem:[%s6133 + $0x10] sm:$0xf]
        %v6139 = vld [vmem:[%s6133 + $0x14] sm:$0xf]
        %v6140 = vld [vmem:[%s6133 + $0x18] sm:$0xf]
        %v6141 = vld [vmem:[%s6133 + $0x1c] sm:$0xf]
        %v6142 = vld [vmem:[%s6133 + $0x20] sm:$0xf]
        %v6143 = vld [vmem:[%s6133 + $0x24] sm:$0xf]
        %v6144 = vld [vmem:[%s6133 + $0x28] sm:$0xf]
        %v6145 = vld [vmem:[%s6133 + $0x2c] sm:$0xf]
        %v6146 = vld [vmem:[%s6133 + $0x30] sm:$0xf]
        %v6147 = vld [vmem:[%s6133 + $0x34] sm:$0xf]
        %v6148 = vld [vmem:[%s6133 + $0x38] sm:$0xf]
        %v6149 = vld [vmem:[%s6133 + $0x3c] sm:$0xf]
        %v6150 = vld [vmem:[%s6133 + $0x40] sm:$0xf]
        %v6151 = vld [vmem:[%s6133 + $0x44] sm:$0xf]
        %v6152 = vld [vmem:[%s6133 + $0x48] sm:$0xf]
        %v6153 = vld [vmem:[%s6133 + $0x4c] sm:$0xf]
        %v6154 = vld [vmem:[%s6133 + $0x50] sm:$0xf]
        %v6155 = vld [vmem:[%s6133 + $0x54] sm:$0xf]
        %v6156 = vld [vmem:[%s6133 + $0x58] sm:$0xf]
        %v6157 = vld [vmem:[%s6133 + $0x5c] sm:$0xf]
        %v6158 = vld [vmem:[%s6133 + $0x60] sm:$0xf]
        %v6159 = vld [vmem:[%s6133 + $0x64] sm:$0xf]
        %v6160 = vld [vmem:[%s6133 + $0x68] sm:$0xf]
        %v6161 = vld [vmem:[%s6133 + $0x6c] sm:$0xf]
        %v6162 = vld [vmem:[%s6133 + $0x70] sm:$0xf]
        %v6163 = vld [vmem:[%s6133 + $0x74] sm:$0xf]
        %v6164 = vld [vmem:[%s6133 + $0x78] sm:$0xf]
        %v6165 = vld [vmem:[%s6133 + $0x7c] sm:$0xf]
        %v6166 = vrot.slane %v5465, 2
        %v6167 = vrot.slane %v5468, 2
        %v6202 = vunpack.c.l.b16 %v6134
        %v6203 = vunpack.c.l.b16 %v6135
        %v6204 = vunpack.c.l.b16 %v6136
        %v6205 = vunpack.c.l.b16 %v6137
        %v6206 = vunpack.c.l.b16 %v6138
        %v6207 = vunpack.c.l.b16 %v6139
        %v6208 = vunpack.c.l.b16 %v6140
        %v6209 = vunpack.c.l.b16 %v6141
        %v6210 = vunpack.c.l.b16 %v6142
        %v6211 = vunpack.c.l.b16 %v6143
        %v6212 = vunpack.c.l.b16 %v6144
        %v6213 = vunpack.c.l.b16 %v6145
        %v6214 = vunpack.c.l.b16 %v6146
        %v6215 = vunpack.c.l.b16 %v6147
        %v6216 = vunpack.c.l.b16 %v6148
        %v6217 = vunpack.c.l.b16 %v6149
        %v6218 = vunpack.c.l.b16 %v6150
        %v6219 = vunpack.c.l.b16 %v6151
        %v6220 = vunpack.c.l.b16 %v6152
        %v6221 = vunpack.c.l.b16 %v6153
        %v6222 = vunpack.c.l.b16 %v6154
        %v6223 = vunpack.c.l.b16 %v6155
        %v6224 = vunpack.c.l.b16 %v6156
        %v6225 = vunpack.c.l.b16 %v6157
        %v6226 = vunpack.c.l.b16 %v6158
        %v6227 = vunpack.c.l.b16 %v6159
        %v6228 = vunpack.c.l.b16 %v6160
        %v6229 = vunpack.c.l.b16 %v6161
        %v6230 = vunpack.c.l.b16 %v6162
        %v6231 = vunpack.c.l.b16 %v6163
        %v6232 = vunpack.c.l.b16 %v6164
        %v6233 = vunpack.c.l.b16 %v6165
        %v6234 = vpack.c.b16 %v6203, %v6202
        %v6235 = vpack.c.b16 %v6205, %v6204
        %v6236 = vpack.c.b16 %v6207, %v6206
        %v6237 = vpack.c.b16 %v6209, %v6208
        %v6238 = vpack.c.b16 %v6211, %v6210
        %v6239 = vpack.c.b16 %v6213, %v6212
        %v6240 = vpack.c.b16 %v6215, %v6214
        %v6241 = vpack.c.b16 %v6217, %v6216
        %v6242 = vpack.c.b16 %v6219, %v6218
        %v6243 = vpack.c.b16 %v6221, %v6220
        %v6244 = vpack.c.b16 %v6223, %v6222
        %v6245 = vpack.c.b16 %v6225, %v6224
        %v6246 = vpack.c.b16 %v6227, %v6226
        %v6247 = vpack.c.b16 %v6229, %v6228
        %v6248 = vpack.c.b16 %v6231, %v6230
        %v6249 = vpack.c.b16 %v6233, %v6232
        %6266 = vmatprep.subr.bf16.mxu0 0
        %6267 = vmatpush1.bf16.msra.mxu0 %v6234
        %6268 = vmatprep.subr.bf16.mxu0 0
        %6269 = vmatpush1.bf16.msra.mxu0 %v6235
        %6270 = vmatprep.subr.bf16.mxu0 0
        %6271 = vmatpush1.bf16.msra.mxu0 %v6236
        %6272 = vmatprep.subr.bf16.mxu0 0
        %6273 = vmatpush1.bf16.msra.mxu0 %v6237
        %6274 = vmatprep.subr.bf16.mxu0 0
        %6275 = vmatpush1.bf16.msra.mxu0 %v6238
        %6276 = vmatprep.subr.bf16.mxu0 0
        %6277 = vmatpush1.bf16.msra.mxu0 %v6239
        %6278 = vmatprep.subr.bf16.mxu0 0
        %6279 = vmatpush1.bf16.msra.mxu0 %v6240
        %6280 = vmatprep.subr.bf16.mxu0 0
        %6281 = vmatpush1.bf16.msra.mxu0 %v6241
        %6282 = vmatprep.subr.bf16.mxu0 0
        %6283 = vmatpush1.bf16.msra.mxu0 %v6242
        %6284 = vmatprep.subr.bf16.mxu0 0
        %6285 = vmatpush1.bf16.msra.mxu0 %v6243
        %6286 = vmatprep.subr.bf16.mxu0 0
        %6287 = vmatpush1.bf16.msra.mxu0 %v6244
        %6288 = vmatprep.subr.bf16.mxu0 0
        %6289 = vmatpush1.bf16.msra.mxu0 %v6245
        %6290 = vmatprep.subr.bf16.mxu0 0
        %6291 = vmatpush1.bf16.msra.mxu0 %v6246
        %6292 = vmatprep.subr.bf16.mxu0 0
        %6293 = vmatpush1.bf16.msra.mxu0 %v6247
        %6294 = vmatprep.subr.bf16.mxu0 0
        %6295 = vmatpush1.bf16.msra.mxu0 %v6248
        %6296 = vmatprep.subr.bf16.mxu0 0
        %6297 = vmatpush1.bf16.msra.mxu0 %v6249
        %6298 = vmatprep.mubr.bf16.mxu0 %v6167
        %6299 = vmatmul.mubr.bf16.gmra.mrb[0].mxu0 %v6166
        %v6300 = vpop.f32.mrb[0].mxu0
        %v6301 = vadd.f32 0.0, %v6300
        %v6302 = vpop.f32.mrb[0].mxu0
        %v6303 = vpop.f32.mrb[0].mxu0
        %v6304 = vpop.f32.mrb[0].mxu0
        %6305 = vdwg.mxu0
        %v6306 = vadd.f32 %v6132, %v6301
        %s6307 = scalar_lea.vmem %s5, 768
        %v6308 = vld [vmem:[%s6307] sm:$0xf]
        %v6309 = vld [vmem:[%s6307 + $0x4] sm:$0xf]
        %v6310 = vld [vmem:[%s6307 + $0x8] sm:$0xf]
        %v6311 = vld [vmem:[%s6307 + $0xc] sm:$0xf]
        %v6312 = vld [vmem:[%s6307 + $0x10] sm:$0xf]
        %v6313 = vld [vmem:[%s6307 + $0x14] sm:$0xf]
        %v6314 = vld [vmem:[%s6307 + $0x18] sm:$0xf]
        %v6315 = vld [vmem:[%s6307 + $0x1c] sm:$0xf]
        %v6316 = vld [vmem:[%s6307 + $0x20] sm:$0xf]
        %v6317 = vld [vmem:[%s6307 + $0x24] sm:$0xf]
        %v6318 = vld [vmem:[%s6307 + $0x28] sm:$0xf]
        %v6319 = vld [vmem:[%s6307 + $0x2c] sm:$0xf]
        %v6320 = vld [vmem:[%s6307 + $0x30] sm:$0xf]
        %v6321 = vld [vmem:[%s6307 + $0x34] sm:$0xf]
        %v6322 = vld [vmem:[%s6307 + $0x38] sm:$0xf]
        %v6323 = vld [vmem:[%s6307 + $0x3c] sm:$0xf]
        %v6324 = vld [vmem:[%s6307 + $0x40] sm:$0xf]
        %v6325 = vld [vmem:[%s6307 + $0x44] sm:$0xf]
        %v6326 = vld [vmem:[%s6307 + $0x48] sm:$0xf]
        %v6327 = vld [vmem:[%s6307 + $0x4c] sm:$0xf]
        %v6328 = vld [vmem:[%s6307 + $0x50] sm:$0xf]
        %v6329 = vld [vmem:[%s6307 + $0x54] sm:$0xf]
        %v6330 = vld [vmem:[%s6307 + $0x58] sm:$0xf]
        %v6331 = vld [vmem:[%s6307 + $0x5c] sm:$0xf]
        %v6332 = vld [vmem:[%s6307 + $0x60] sm:$0xf]
        %v6333 = vld [vmem:[%s6307 + $0x64] sm:$0xf]
        %v6334 = vld [vmem:[%s6307 + $0x68] sm:$0xf]
        %v6335 = vld [vmem:[%s6307 + $0x6c] sm:$0xf]
        %v6336 = vld [vmem:[%s6307 + $0x70] sm:$0xf]
        %v6337 = vld [vmem:[%s6307 + $0x74] sm:$0xf]
        %v6338 = vld [vmem:[%s6307 + $0x78] sm:$0xf]
        %v6339 = vld [vmem:[%s6307 + $0x7c] sm:$0xf]
        %v6340 = vrot.slane %v5259, 3
        %v6341 = vrot.slane %v5260, 3
        %v6376 = vunpack.c.l.b16 %v6308
        %v6377 = vunpack.c.l.b16 %v6309
        %v6378 = vunpack.c.l.b16 %v6310
        %v6379 = vunpack.c.l.b16 %v6311
        %v6380 = vunpack.c.l.b16 %v6312
        %v6381 = vunpack.c.l.b16 %v6313
        %v6382 = vunpack.c.l.b16 %v6314
        %v6383 = vunpack.c.l.b16 %v6315
        %v6384 = vunpack.c.l.b16 %v6316
        %v6385 = vunpack.c.l.b16 %v6317
        %v6386 = vunpack.c.l.b16 %v6318
        %v6387 = vunpack.c.l.b16 %v6319
        %v6388 = vunpack.c.l.b16 %v6320
        %v6389 = vunpack.c.l.b16 %v6321
        %v6390 = vunpack.c.l.b16 %v6322
        %v6391 = vunpack.c.l.b16 %v6323
        %v6392 = vunpack.c.l.b16 %v6324
        %v6393 = vunpack.c.l.b16 %v6325
        %v6394 = vunpack.c.l.b16 %v6326
        %v6395 = vunpack.c.l.b16 %v6327
        %v6396 = vunpack.c.l.b16 %v6328
        %v6397 = vunpack.c.l.b16 %v6329
        %v6398 = vunpack.c.l.b16 %v6330
        %v6399 = vunpack.c.l.b16 %v6331
        %v6400 = vunpack.c.l.b16 %v6332
        %v6401 = vunpack.c.l.b16 %v6333
        %v6402 = vunpack.c.l.b16 %v6334
        %v6403 = vunpack.c.l.b16 %v6335
        %v6404 = vunpack.c.l.b16 %v6336
        %v6405 = vunpack.c.l.b16 %v6337
        %v6406 = vunpack.c.l.b16 %v6338
        %v6407 = vunpack.c.l.b16 %v6339
        %v6408 = vpack.c.b16 %v6377, %v6376
        %v6409 = vpack.c.b16 %v6379, %v6378
        %v6410 = vpack.c.b16 %v6381, %v6380
        %v6411 = vpack.c.b16 %v6383, %v6382
        %v6412 = vpack.c.b16 %v6385, %v6384
        %v6413 = vpack.c.b16 %v6387, %v6386
        %v6414 = vpack.c.b16 %v6389, %v6388
        %v6415 = vpack.c.b16 %v6391, %v6390
        %v6416 = vpack.c.b16 %v6393, %v6392
        %v6417 = vpack.c.b16 %v6395, %v6394
        %v6418 = vpack.c.b16 %v6397, %v6396
        %v6419 = vpack.c.b16 %v6399, %v6398
        %v6420 = vpack.c.b16 %v6401, %v6400
        %v6421 = vpack.c.b16 %v6403, %v6402
        %v6422 = vpack.c.b16 %v6405, %v6404
        %v6423 = vpack.c.b16 %v6407, %v6406
        %6440 = vmatprep.subr.bf16.mxu0 0
        %6441 = vmatpush1.bf16.msra.mxu0 %v6408
        %6442 = vmatprep.subr.bf16.mxu0 0
        %6443 = vmatpush1.bf16.msra.mxu0 %v6409
        %6444 = vmatprep.subr.bf16.mxu0 0
        %6445 = vmatpush1.bf16.msra.mxu0 %v6410
        %6446 = vmatprep.subr.bf16.mxu0 0
        %6447 = vmatpush1.bf16.msra.mxu0 %v6411
        %6448 = vmatprep.subr.bf16.mxu0 0
        %6449 = vmatpush1.bf16.msra.mxu0 %v6412
        %6450 = vmatprep.subr.bf16.mxu0 0
        %6451 = vmatpush1.bf16.msra.mxu0 %v6413
        %6452 = vmatprep.subr.bf16.mxu0 0
        %6453 = vmatpush1.bf16.msra.mxu0 %v6414
        %6454 = vmatprep.subr.bf16.mxu0 0
        %6455 = vmatpush1.bf16.msra.mxu0 %v6415
        %6456 = vmatprep.subr.bf16.mxu0 0
        %6457 = vmatpush1.bf16.msra.mxu0 %v6416
        %6458 = vmatprep.subr.bf16.mxu0 0
        %6459 = vmatpush1.bf16.msra.mxu0 %v6417
        %6460 = vmatprep.subr.bf16.mxu0 0
        %6461 = vmatpush1.bf16.msra.mxu0 %v6418
        %6462 = vmatprep.subr.bf16.mxu0 0
        %6463 = vmatpush1.bf16.msra.mxu0 %v6419
        %6464 = vmatprep.subr.bf16.mxu0 0
        %6465 = vmatpush1.bf16.msra.mxu0 %v6420
        %6466 = vmatprep.subr.bf16.mxu0 0
        %6467 = vmatpush1.bf16.msra.mxu0 %v6421
        %6468 = vmatprep.subr.bf16.mxu0 0
        %6469 = vmatpush1.bf16.msra.mxu0 %v6422
        %6470 = vmatprep.subr.bf16.mxu0 0
        %6471 = vmatpush1.bf16.msra.mxu0 %v6423
        %6472 = vmatprep.mubr.bf16.mxu0 %v6341
        %6473 = vmatmul.mubr.bf16.gmra.mrb[0].mxu0 %v6340
        %v6474 = vpop.f32.mrb[0].mxu0
        %v6475 = vadd.f32 0.0, %v6474
        %v6476 = vpop.f32.mrb[0].mxu0
        %v6477 = vpop.f32.mrb[0].mxu0
        %v6478 = vpop.f32.mrb[0].mxu0
        %6479 = vdwg.mxu0
        %v6480 = vadd.f32 %v6306, %v6475
        %6481 = vst [vmem:[%s270] sm:$0x1] %v6480
        %s6482 = sand.u32 %s181, 1
        %s6483 = scalar_lea.sflag [#allocation4], %s6482
        %s6484 = sand.u32 %s181, 1
        %s6485 = scalar_lea.vmem [#allocation3], %s6484
        // Predicated region
        $region49: #{convnet_forward.1} parent=47 // pred_check
          %p6486 = pneg %p191
        $region50: #{convnet_forward.1} parent=47 // pred_check_branch
          %6488 = sbr.rel (%p6486) target = $region52
        $region51: #{convnet_forward.1} parent=47 // pred_region
          %s6490 = ssub.s32 16, 16
          %6491 = vsyncadd %s6483, %s6490
          %s6492 = smul.addr %s21, 16
          %s6493 = scalar_lea.hbm %s7, %s6492
          %s6495 = sshll.u32 %s6485, 4
          %s6496 = int_to_ptr.vmem [resolvable:$true] %s6495
          %6498 = dma.vmem_to_hbm [thread:$0]  %s6496, 16, %s6493, %s6483
        $region52: #{convnet_forward.1} parent=47 // pred_fallthru
          _
      $region48: #{convnet_forward.1} parent=5 // pred_fallthru
        _
      %p6499 = scmp.le.s32.totalorder 2, %s16
      // Predicated region
      $region53: #{convnet_forward.1} parent=5 // pred_check
        %p6500 = pneg %p6499
      $region54: #{convnet_forward.1} parent=5 // pred_check_branch
        %6502 = sbr.rel (%p6500) target = $region56
      $region55: #{convnet_forward.1} parent=5 // pred_region
        %s6503 = ssub.s32 %s16, 2
        // Predicated region
        $region57: #{convnet_forward.1} parent=55 // pred_check
          %p6504 = pneg %p197
        $region58: #{convnet_forward.1} parent=55 // pred_check_branch
          %6506 = sbr.rel (%p6504) target = $region60
        $region59: #{convnet_forward.1} parent=55 // pred_region
          %s6507 = sand.u32 %s182, 1
          %s6508 = scalar_lea.sflag [#allocation4], %s6507
          %s6509 = sand.u32 %s182, 1
          %s6510 = scalar_lea.vmem [#allocation3], %s6509
          %6511 = dma.done %s6508, 16
        $region60: #{convnet_forward.1} parent=55 // pred_fallthru
          _
      $region56: #{convnet_forward.1} parent=5 // pred_fallthru
        _
    $region6: #{convnet_forward.1} parent=1 // loop_footer
      %s20 = sadd.s32 1, %s16
    $region7: #{convnet_forward.1} parent=1 // loop_footer_branch
      %15 = sbr.rel target = $region3
    $region8: #{convnet_forward.1} parent=1 // loop_exit
      _
    %6512 = vsyncpa [#allocation4], 1
    %s6513 = scalar_lea.sflag [#allocation4], 1
    %6514 = vsyncpa %s6513, 1

</llo_original>
